<compile_context>
chip_gen: v7x
topology: tpu7x:2x2x1
jax: 0.10.0
libtpu: 0.0.40
codegen_flags: <defaults>
</compile_context>

<pallas_src>
import functools
import math

import jax
import jax.numpy as jnp
from jax import lax
from jax.experimental import pallas as pl
from jax.experimental.pallas import tpu as pltpu


# ----------------------------- small math helpers -----------------------------

def _softplus(v):
    # matches torch.nn.functional.softplus (threshold=20) to fp32 precision
    return jnp.where(v > 20.0, v, jnp.log(1.0 + jnp.exp(jnp.minimum(v, 20.0))))


def _silu(v):
    return v * (1.0 / (1.0 + jnp.exp(-v)))


# --------------------------------- the kernel ---------------------------------

def mamba2_chunk_kernel(x_ref, wz_ref, wxbc_ref, wdt_ref, conv_w_ref, conv_b_ref,
                        dt_bias_ref, A_ref, Dexp_ref, norm_w_ref, E_ref, w_out_ref,
                        o_ref,
                        carry_ref, state_ref, y_ref, xdt_ref, cumc_ref, cumT_ref,
                        *, d_inner, d_state, pad_state, d_conv, nheads, headdim,
                        chunk, eps):
    f32 = jnp.float32
    bf16 = jnp.bfloat16
    T = chunk
    conv_dim = d_inner + 2 * pad_state
    two_hd = 2 * headdim

    # Cross-chunk carries (conv tail + SSM state) rely on the chunk axis being
    # the innermost, sequential ("arbitrary") grid axis.  Do not reorder.
    c = pl.program_id(1)

    @pl.when(c == 0)
    def _():
        carry_ref[...] = jnp.zeros_like(carry_ref)
        state_ref[...] = jnp.zeros_like(state_ref)

    xb = x_ref[...]                                                  # (T, d_model) bf16
    xf = xb.astype(f32)

    # ---- in_proj, pre-split into lane-aligned pieces: z | xBC | dt ----
    z = jnp.dot(xb, wz_ref[...], preferred_element_type=f32)        # (T, d_inner)
    xBC = jnp.dot(xb, wxbc_ref[...], preferred_element_type=f32)    # (T, conv_dim)
    dt_raw = jnp.dot(xf, wdt_ref[...], preferred_element_type=f32)  # (T, nheads)

    # ---- causal depthwise conv1d + SiLU, cross-chunk tail carried in VMEM ----
    # Shifted taps are slices of one in-register window (register shifts on
    # the XLU slot), not per-tap VMEM re-loads of the whole slab.
    prev = carry_ref[0:d_conv - 1, :]                                # (d_conv-1, conv_dim)
    window = jnp.concatenate([prev, xBC], axis=0)                    # (T+d_conv-1, conv_dim)
    cw = conv_w_ref[...]
    acc = jnp.broadcast_to(conv_b_ref[...], (T, conv_dim))
    for k in range(d_conv):
        acc = acc + cw[k:k + 1, :] * window[k:k + T, :]
    carry_ref[0:d_conv - 1, :] = xBC[T - (d_conv - 1):, :]
    xBC_a = _silu(acc)

    # padded column layout: x | B (pad to 128) | C (pad to 128)
    x_ssm = xBC_a[:, :d_inner]                                       # (T, d_inner)
    Bm = xBC_a[:, d_inner:d_inner + d_state]                         # (T, d_state)
    Cm = xBC_a[:, d_inner + pad_state:d_inner + pad_state + d_state] # (T, d_state)

    # ---- quantities shared by all heads ----
    dt_all = _softplus(dt_raw + dt_bias_ref[...])                    # (T, nheads)
    dtA = dt_all * A_ref[...]                                        # <= 0

    row = lax.broadcasted_iota(jnp.int32, (T, T), 0)
    col = lax.broadcasted_iota(jnp.int32, (T, T), 1)
    causal_f = (col <= row).astype(f32)
    upper_f = (row <= col).astype(f32)

    # inclusive cumsum of dt*A for every head at once, plus its transposed
    # (row) view -- both via one full-width matmul (no per-head skinny matmuls,
    # no XLU transpose in the head loop).
    cum = jnp.dot(causal_f, dtA, preferred_element_type=f32)         # (T, nheads)
    cumT = lax.dot_general(dtA, upper_f, (((0,), (0,)), ((), ())),
                           preferred_element_type=f32)               # (nheads, T)
    seg = cum[T - 1:T, :]                                            # (1, nheads)

    # per-channel (head -> headdim lanes) expansions via 0/1 matmuls; exp() is
    # only ever evaluated at (T, nheads) size here.
    E = E_ref[...]                                                   # (nheads, d_inner)
    dt_chan = jnp.dot(dt_all, E, preferred_element_type=f32)         # (T, d_inner)
    cum_chan = jnp.dot(cum, E, preferred_element_type=f32)           # (T, d_inner)
    ecum_chan = jnp.dot(jnp.exp(cum), E, preferred_element_type=f32) # (T, d_inner)
    w_chan = jnp.dot(jnp.exp(seg - cum) * dt_all, E,
                     preferred_element_type=f32)                     # (T, d_inner)
    eseg_chan = ecum_chan[T - 1:T, :]                                # (1, d_inner)

    # hoisted dt scaling + bf16 cast of the SSD input, for all heads at once
    xdt_ref[...] = (x_ssm * dt_chan).astype(bf16)
    cumc_ref[...] = cum_chan
    cumT_ref[...] = cumT

    # C.B^T is head-independent (ngroups == 1): compute and mask it once.
    CBm = jnp.where(col <= row,
                    lax.dot_general(Cm, Bm, (((1,), (1,)), ((), ())),
                                    preferred_element_type=f32),
                    0.0)                                             # (T, T)

    # ---- intra-chunk SSD: two heads (= 128 lanes) per loop iteration ----
    def pair_body(p, carry):
        lane0 = pl.multiple_of(p * two_hd, two_hd)                   # 128-aligned
        rows = cumT_ref[pl.ds(pl.multiple_of(2 * p, 2), 2), :]       # (2, T)
        cum_pair = cumc_ref[:, pl.ds(lane0, two_hd)]                 # (T, 128)
        xdt_pair = xdt_ref[:, pl.ds(lane0, two_hd)]                  # (T, 128) bf16
        ys = []
        for j in range(2):
            ccol = cum_pair[:, j * headdim:j * headdim + 1]          # (T, 1)
            crow = rows[j:j + 1, :]                                  # (1, T)
            # single select removed: arg clamped <= 0, mask lives in CBm
            decay = jnp.exp(jnp.minimum(ccol - crow, 0.0))           # (T, T)
            scores = (CBm * decay).astype(bf16)
            ys.append(jnp.dot(scores, xdt_pair[:, j * headdim:(j + 1) * headdim],
                              preferred_element_type=f32))           # (T, headdim)
        # one unmasked 128-lane store per pair
        y_ref[:, pl.ds(lane0, two_hd)] = jnp.concatenate(ys, axis=-1)
        return carry

    lax.fori_loop(0, nheads // 2, pair_body, 0, unroll=2)

    # ---- inter-chunk term, D skip and state carry: all heads in one shot ----
    S_old = state_ref[...]                                           # (d_state, d_inner)
    y = y_ref[...] + ecum_chan * jnp.dot(Cm, S_old, preferred_element_type=f32)
    y = y + x_ssm * Dexp_ref[...]
    state_ref[...] = eseg_chan * S_old + lax.dot_general(
        Bm, x_ssm * w_chan, (((0,), (0,)), ((), ())),
        preferred_element_type=f32)                                  # (d_state, d_inner)

    # ---- gated RMSNorm (norm_before_gate=False): rmsnorm(y * silu(z)) * w ----
    yg = y * _silu(z)
    var = jnp.mean(yg * yg, axis=-1, keepdims=True)
    yn = yg * lax.rsqrt(var + eps) * norm_w_ref[...]

    # ---- out_proj ----
    o_ref[...] = jnp.dot(yn.astype(bf16), w_out_ref[...],
                         preferred_element_type=f32).astype(o_ref.dtype)


# --------------------------------- wrappers -----------------------------------

def mamba2_layer_pallas(x, p, cfg):
    B, L, d_model = x.shape
    d_inner = cfg["expand"] * d_model
    d_state = cfg["d_state"]
    d_conv = cfg["d_conv"]
    headdim = cfg["headdim"]
    assert d_inner % headdim == 0
    nheads = d_inner // headdim
    # TODO(synk): odd head counts would need a padded dummy head for pairing.
    assert nheads % 2 == 0, "head pairing assumes an even number of heads"
    assert 2 * headdim == 128, "head pairing assumes headdim == 64"
    conv_dim_raw = d_inner + 2 * d_state
    pad_state = 128                        # lane-align the B and C column groups
    assert d_state <= pad_state
    conv_dim = d_inner + 2 * pad_state

    chunk = int(cfg.get("chunk", min(L, 128)))
    assert L % chunk == 0, "sequence length must be a multiple of the chunk size"
    assert chunk % 8 == 0 or chunk == L
    n_chunks = L // chunk

    f32, bf16 = jnp.float32, jnp.bfloat16
    W_in = p["W_in"]
    W_z = W_in[:, :d_inner].astype(bf16)
    W_xbc_raw = W_in[:, d_inner:d_inner + conv_dim_raw]
    W_dt = W_in[:, d_inner + conv_dim_raw:].astype(f32)

    def pad_cols(w):
        # [x | B | C] -> [x | B | 0pad | C | 0pad]  (B, C start at 128-multiples)
        zpad = jnp.zeros(w.shape[:-1] + (pad_state - d_state,), w.dtype)
        return jnp.concatenate(
            [w[..., :d_inner + d_state], zpad, w[..., d_inner + d_state:], zpad],
            axis=-1)

    W_xBC = pad_cols(W_xbc_raw).astype(bf16)
    conv_w = pad_cols(p["conv_w"]).astype(f32)
    conv_b = pad_cols(p["conv_b"].reshape(1, conv_dim_raw)).astype(f32)
    W_out = p["W_out"].astype(bf16)
    dt_bias = p["dt_bias"].reshape(1, nheads).astype(f32)
    A = p["A"].reshape(1, nheads).astype(f32)
    D_exp = jnp.repeat(p["D"], headdim).reshape(1, d_inner).astype(f32)
    norm_w = p["norm_w"].reshape(1, d_inner).astype(f32)
    # head -> per-channel expansion (0/1), used by the in-kernel MXU expansions
    E = jnp.repeat(jnp.eye(nheads, dtype=f32), headdim, axis=1)      # (nheads, d_inner)

    kern = functools.partial(
        mamba2_chunk_kernel, d_inner=d_inner, d_state=d_state, pad_state=pad_state,
        d_conv=d_conv, nheads=nheads, headdim=headdim, chunk=chunk, eps=1e-5)

    def vspec(shape):
        nd = len(shape)
        return pl.BlockSpec(shape, lambda b, c, _nd=nd: (0,) * _nd)

    x = x.astype(bf16)                     # bf16 inter-layer activations

    in_specs = [
        pl.BlockSpec((None, chunk, d_model), lambda b, c: (b, c, 0)),   # x
        vspec((d_model, d_inner)),       # W_z      (bf16)
        vspec((d_model, conv_dim)),      # W_xBC    (bf16, padded layout)
        vspec((d_model, nheads)),        # W_dt     (f32)
        vspec((d_conv, conv_dim)),       # conv weight
        vspec((1, conv_dim)),            # conv bias
        vspec((1, nheads)),              # dt_bias
        vspec((1, nheads)),              # A
        vspec((1, d_inner)),             # D expanded per channel
        vspec((1, d_inner)),             # rmsnorm weight
        vspec((nheads, d_inner)),        # head->channel expansion matrix
        vspec((d_inner, d_model)),       # W_out    (bf16)
    ]

    scratch_defs = [
        ((8, conv_dim), f32),            # conv tail carry (first d_conv-1 rows)
        ((d_state, d_inner), f32),       # SSM state, (d_state, d_inner) layout
        ((chunk, d_inner), f32),         # intra-chunk y accumulator
        ((chunk, d_inner), bf16),        # dt-scaled x (bf16, sliced per pair)
        ((chunk, d_inner), f32),         # per-channel cum (column view)
        ((nheads, chunk), f32),          # transposed cum (row view)
    ]
    scratch_shapes = [pltpu.VMEM(s, d) for s, d in scratch_defs]

    def _nbytes(shape, dt):
        return math.prod(shape) * jnp.dtype(dt).itemsize

    # explicit VMEM budget: double-buffered inputs + outputs + scratch + slack.
    # TODO(synk): at large d_model use pl.Buffered(1)/output-dim tiling for the
    # resident weight slabs (required to fit v7x's 64 MiB VMEM).
    w_bytes = (_nbytes((d_model, d_inner), bf16) + _nbytes((d_model, conv_dim), bf16)
               + _nbytes((d_model, nheads), f32) + _nbytes((d_conv, conv_dim), f32)
               + _nbytes((nheads, d_inner), f32) + _nbytes((d_inner, d_model), bf16)
               + 4 * _nbytes((1, d_inner), f32) + 3 * _nbytes((1, nheads), f32))
    io_bytes = 4 * _nbytes((chunk, d_model), bf16)
    scr_bytes = sum(_nbytes(s, d) for s, d in scratch_defs)
    vmem_limit = min(int(2 * w_bytes + io_bytes + scr_bytes) + (32 << 20), 128 << 20)

    return pl.pallas_call(
        kern,
        out_shape=jax.ShapeDtypeStruct((B, L, d_model), bf16),
        grid=(B, n_chunks),
        in_specs=in_specs,
        out_specs=pl.BlockSpec((None, chunk, d_model), lambda b, c: (b, c, 0)),
        scratch_shapes=scratch_shapes,
        compiler_params=pltpu.CompilerParams(
            dimension_semantics=("parallel", "arbitrary"),
            vmem_limit_bytes=vmem_limit),
    )(x, W_z, W_xBC, W_dt, conv_w, conv_b, dt_bias, A, D_exp, norm_w, E, W_out)


def mamba_model_pallas(x, layer_params, cfg):
    x = x.astype(jnp.bfloat16)             # inter-layer activations in bf16
    for p in layer_params:
        x = mamba2_layer_pallas(x, p, cfg)
    return x


# ------------------------- plain-JAX reference (check) -------------------------

def mamba2_layer_ref(x, p, cfg):
    B, L, d_model = x.shape
    d_inner = cfg["expand"] * d_model
    d_state = cfg["d_state"]
    d_conv = cfg["d_conv"]
    headdim = cfg["headdim"]
    nheads = d_inner // headdim
    conv_dim = d_inner + 2 * d_state

    zxbcdt = x @ p["W_in"]
    z = zxbcdt[..., :d_inner]
    xBC = zxbcdt[..., d_inner:d_inner + conv_dim]
    dt = _softplus(zxbcdt[..., d_inner + conv_dim:] + p["dt_bias"])   # (B, L, H)

    xpad = jnp.pad(xBC, ((0, 0), (d_conv - 1, 0), (0, 0)))
    conv = p["conv_b"][None, None, :]
    for k in range(d_conv):
        conv = conv + p["conv_w"][k][None, None, :] * xpad[:, k:k + L, :]
    xBC_a = _silu(conv)

    xs = xBC_a[..., :d_inner].reshape(B, L, nheads, headdim)
    Bm = xBC_a[..., d_inner:d_inner + d_state]
    Cm = xBC_a[..., d_inner + d_state:]

    A, D = p["A"], p["D"]

    def step(S, inp):                                                 # sequential recurrence
        dt_t, x_t, B_t, C_t = inp
        dA = jnp.exp(dt_t * A[None, :])
        S = S * dA[:, :, None, None] + \
            (dt_t[..., None] * x_t)[..., None] * B_t[:, None, None, :]
        y_t = jnp.einsum("bhpn,bn->bhp", S, C_t) + D[None, :, None] * x_t
        return S, y_t

    S0 = jnp.zeros((B, nheads, headdim, d_state), jnp.float32)
    _, ys = lax.scan(step, S0, (jnp.moveaxis(dt, 1, 0), jnp.moveaxis(xs, 1, 0),
                                jnp.moveaxis(Bm, 1, 0), jnp.moveaxis(Cm, 1, 0)))
    y = jnp.moveaxis(ys, 0, 1).reshape(B, L, d_inner)

    yg = y * _silu(z)
    yn = yg * lax.rsqrt(jnp.mean(yg * yg, -1, keepdims=True) + 1e-5) * p["norm_w"]
    return yn @ p["W_out"]


def mamba_model_ref(x, layer_params, cfg):
    for p in layer_params:
        x = mamba2_layer_ref(x, p, cfg)
    return x


# --------------------------- deterministic parameters --------------------------

def init_layer(key, cfg):
    d_model = cfg["d_model"]
    d_inner = cfg["expand"] * d_model
    d_state = cfg["d_state"]
    d_conv = cfg["d_conv"]
    headdim = cfg["headdim"]
    nheads = d_inner // headdim
    conv_dim = d_inner + 2 * d_state
    d_in_proj = 2 * d_inner + 2 * d_state + nheads

    k1, k2, k3, k4, k5, k6 = jax.random.split(key, 6)
    # Projection weights stored at bf16 precision (the kernel feeds the MXU in
    # bf16); the reference uses the same rounded values so the check isolates
    # kernel math rather than weight quantization.
    W_in = (jax.random.normal(k1, (d_model, d_in_proj), jnp.float32) * 0.05
            ).astype(jnp.bfloat16).astype(jnp.float32)
    conv_w = jax.random.normal(k2, (d_conv, conv_dim), jnp.float32) * 0.2
    conv_b = jax.random.normal(k3, (conv_dim,), jnp.float32) * 0.1
    dt_bias = jax.random.uniform(k4, (nheads,), jnp.float32, minval=-4.0, maxval=-1.0)
    A_log = jnp.log(jax.random.uniform(k5, (nheads,), jnp.float32, minval=1.0, maxval=16.0))
    A = -jnp.exp(A_log)
    D = jnp.ones((nheads,), jnp.float32)
    norm_w = jnp.ones((d_inner,), jnp.float32)
    W_out = (jax.random.normal(k6, (d_inner, d_model), jnp.float32) * 0.05
             ).astype(jnp.bfloat16).astype(jnp.float32)
    return dict(W_in=W_in, conv_w=conv_w, conv_b=conv_b, dt_bias=dt_bias,
                A=A, D=D, norm_w=norm_w, W_out=W_out)


# ------------------------------------ main -------------------------------------

if __name__ == "__main__":
    # d_model=128 -> d_inner=256, nheads=4 (2 head pairs); length=256 with
    # chunk=128 exercises the cross-chunk conv + SSM state carry at realistic
    # tile shapes.
    cfg = dict(d_model=128, d_state=16, d_conv=4, expand=2, headdim=64,
               num_layers=2, chunk=128)
    batch, length = 2, 256

    key = jax.random.PRNGKey(0)
    keys = jax.random.split(key, cfg["num_layers"] + 1)
    x = jax.random.normal(keys[0], (batch, length, cfg["d_model"]), jnp.float32)
    layer_params = [init_layer(k, cfg) for k in keys[1:]]

    y = mamba_model_pallas(x, layer_params, cfg)
    y = jax.block_until_ready(y)
    y_f32 = y.astype(jnp.float32)

    y_ref = mamba_model_ref(x, layer_params, cfg)
    assert y.shape == (batch, length, cfg["d_model"])
    assert bool(jnp.isfinite(y_f32).all())
    # Error budget dominated by bf16 operand rounding at the MXU boundaries and
    # the bf16 inter-layer activation storage; accumulation stays f32.
    rel = float(jnp.max(jnp.abs(y_f32 - y_ref))) / (float(jnp.max(jnp.abs(y_ref))) + 1e-6)
    if rel > 3e-2:
        raise SystemExit(f"kernel/reference mismatch, rel max err = {rel}")

    print("KERNEL_OK")
</pallas_src>

<mosaic_0001>
module attributes {stable_mosaic.version = 11 : i64} {
  func.func @mamba2_chunk_kernel(%arg0: i32, %arg1: i32, %arg2: memref<1x128x128xbf16, #tpu.memory_space<vmem>>, %arg3: memref<128x256xbf16, #tpu.memory_space<vmem>>, %arg4: memref<128x512xbf16, #tpu.memory_space<vmem>>, %arg5: memref<128x4xf32, #tpu.memory_space<vmem>>, %arg6: memref<4x512xf32, #tpu.memory_space<vmem>>, %arg7: memref<1x512xf32, #tpu.memory_space<vmem>>, %arg8: memref<1x4xf32, #tpu.memory_space<vmem>>, %arg9: memref<1x4xf32, #tpu.memory_space<vmem>>, %arg10: memref<1x256xf32, #tpu.memory_space<vmem>>, %arg11: memref<1x256xf32, #tpu.memory_space<vmem>>, %arg12: memref<4x256xf32, #tpu.memory_space<vmem>>, %arg13: memref<256x128xbf16, #tpu.memory_space<vmem>>, %arg14: memref<1x128x128xbf16, #tpu.memory_space<vmem>>, %arg15: memref<8x512xf32, #tpu.memory_space<vmem>>, %arg16: memref<16x256xf32, #tpu.memory_space<vmem>>, %arg17: memref<128x256xf32, #tpu.memory_space<vmem>>, %arg18: memref<128x256xbf16, #tpu.memory_space<vmem>>, %arg19: memref<128x256xf32, #tpu.memory_space<vmem>>, %arg20: memref<4x128xf32, #tpu.memory_space<vmem>>) attributes {dimension_semantics = [#tpu.dimension_semantics<parallel>, #tpu.dimension_semantics<arbitrary>], iteration_bounds = array<i64: 2, 2>, scalar_prefetch = 0 : i64, scratch_operands = 6 : i64, tpu.core_type = #tpu.core_type<tc>, window_params = [{transform_indices = @transform_0, window_bounds = array<i64: 1, 128, 128>}, {pipeline_mode = #tpu.pipeline_mode<synchronous>, transform_indices = @transform_1, window_bounds = array<i64: 128, 256>}, {pipeline_mode = #tpu.pipeline_mode<synchronous>, transform_indices = @transform_2, window_bounds = array<i64: 128, 512>}, {pipeline_mode = #tpu.pipeline_mode<synchronous>, transform_indices = @transform_3, window_bounds = array<i64: 128, 4>}, {pipeline_mode = #tpu.pipeline_mode<synchronous>, transform_indices = @transform_4, window_bounds = array<i64: 4, 512>}, {pipeline_mode = #tpu.pipeline_mode<synchronous>, transform_indices = @transform_5, window_bounds = array<i64: 1, 512>}, {pipeline_mode = #tpu.pipeline_mode<synchronous>, transform_indices = @transform_6, window_bounds = array<i64: 1, 4>}, {pipeline_mode = #tpu.pipeline_mode<synchronous>, transform_indices = @transform_7, window_bounds = array<i64: 1, 4>}, {pipeline_mode = #tpu.pipeline_mode<synchronous>, transform_indices = @transform_8, window_bounds = array<i64: 1, 256>}, {pipeline_mode = #tpu.pipeline_mode<synchronous>, transform_indices = @transform_9, window_bounds = array<i64: 1, 256>}, {pipeline_mode = #tpu.pipeline_mode<synchronous>, transform_indices = @transform_10, window_bounds = array<i64: 4, 256>}, {pipeline_mode = #tpu.pipeline_mode<synchronous>, transform_indices = @transform_11, window_bounds = array<i64: 256, 128>}, {transform_indices = @transform_12, window_bounds = array<i64: 1, 128, 128>}]} {
    %c0_i32 = arith.constant 0 : i32
    %0 = arith.cmpi eq, %arg1, %c0_i32 : i32
    %1 = arith.extui %0 : i1 to i32
    %c0_i32_0 = arith.constant 0 : i32
    %2 = arith.cmpi ne, %1, %c0_i32_0 : i32
    scf.if %2 {
      %cst_89 = arith.constant 0.000000e+00 : f32
      %215 = vector.broadcast %cst_89 : f32 to vector<8x512xf32>
      %c0_90 = arith.constant 0 : index
      %c0_91 = arith.constant 0 : index
      %216 = vector.load %arg15[%c0_90, %c0_91] : memref<8x512xf32, #tpu.memory_space<vmem>>, vector<8x512xf32>
      tpu.vector_store %arg15[%c0_90, %c0_91], %215 {strides = array<i32>} : memref<8x512xf32, #tpu.memory_space<vmem>>, vector<8x512xf32>,
      %cst_92 = arith.constant 0.000000e+00 : f32
      %217 = vector.broadcast %cst_92 : f32 to vector<16x256xf32>
      %c0_93 = arith.constant 0 : index
      %c0_94 = arith.constant 0 : index
      %218 = vector.load %arg16[%c0_93, %c0_94] : memref<16x256xf32, #tpu.memory_space<vmem>>, vector<16x256xf32>
      tpu.vector_store %arg16[%c0_93, %c0_94], %217 {strides = array<i32>} : memref<16x256xf32, #tpu.memory_space<vmem>>, vector<16x256xf32>,
    } else {
    }
    %c0 = arith.constant 0 : index
    %c0_1 = arith.constant 0 : index
    %c0_2 = arith.constant 0 : index
    %3 = vector.load %arg2[%c0, %c0_1, %c0_2] : memref<1x128x128xbf16, #tpu.memory_space<vmem>>, vector<1x128x128xbf16>
    %4 = vector.shape_cast %3 : vector<1x128x128xbf16> to vector<128x128xbf16>
    %5 = arith.extf %4 : vector<128x128xbf16> to vector<128x128xf32>
    %c0_3 = arith.constant 0 : index
    %c0_4 = arith.constant 0 : index
    %6 = vector.load %arg3[%c0_3, %c0_4] : memref<128x256xbf16, #tpu.memory_space<vmem>>, vector<128x256xbf16>
    %cst = arith.constant dense<0.000000e+00> : vector<128x256xf32>
    %7 = tpu.matmul %4, %6, %cst {dimension_numbers = #tpu.dot_dimension_numbers<[1], [0], [0], [1], [0, 0, 1, 1], [], []>} : vector<128x128xbf16>, vector<128x256xbf16>, vector<128x256xf32> -> vector<128x256xf32>
    %c0_5 = arith.constant 0 : index
    %c0_6 = arith.constant 0 : index
    %8 = vector.load %arg4[%c0_5, %c0_6] : memref<128x512xbf16, #tpu.memory_space<vmem>>, vector<128x512xbf16>
    %cst_7 = arith.constant dense<0.000000e+00> : vector<128x512xf32>
    %9 = tpu.matmul %4, %8, %cst_7 {dimension_numbers = #tpu.dot_dimension_numbers<[1], [0], [0], [1], [0, 0, 1, 1], [], []>} : vector<128x128xbf16>, vector<128x512xbf16>, vector<128x512xf32> -> vector<128x512xf32>
    %c0_8 = arith.constant 0 : index
    %c0_9 = arith.constant 0 : index
    %10 = vector.load %arg5[%c0_8, %c0_9] : memref<128x4xf32, #tpu.memory_space<vmem>>, vector<128x4xf32>
    %cst_10 = arith.constant dense<0.000000e+00> : vector<128x4xf32>
    %11 = tpu.matmul %5, %10, %cst_10 {dimension_numbers = #tpu.dot_dimension_numbers<[1], [0], [0], [1], [0, 0, 1, 1], [], []>} : vector<128x128xf32>, vector<128x4xf32>, vector<128x4xf32> -> vector<128x4xf32>
    %c0_11 = arith.constant 0 : index
    %c0_12 = arith.constant 0 : index
    %12 = vector.load %arg15[%c0_11, %c0_12] : memref<8x512xf32, #tpu.memory_space<vmem>>, vector<3x512xf32>
    %13 = tpu.concatenate %12, %9 in 0 : vector<3x512xf32>, vector<128x512xf32> -> vector<131x512xf32>
    %c0_13 = arith.constant 0 : index
    %c0_14 = arith.constant 0 : index
    %14 = vector.load %arg6[%c0_13, %c0_14] : memref<4x512xf32, #tpu.memory_space<vmem>>, vector<4x512xf32>
    %c0_15 = arith.constant 0 : index
    %c0_16 = arith.constant 0 : index
    %15 = vector.load %arg7[%c0_15, %c0_16] : memref<1x512xf32, #tpu.memory_space<vmem>>, vector<1x512xf32>
    %16 = vector.shape_cast %15 : vector<1x512xf32> to vector<1x512xf32>
    %17 = vector.broadcast %16 : vector<1x512xf32> to vector<128x512xf32>
    %18 = vector.extract_strided_slice %14 {offsets = [0, 0], sizes = [1, 512], strides = [1, 1]} : vector<4x512xf32> to vector<1x512xf32>
    %19 = vector.extract_strided_slice %13 {offsets = [0, 0], sizes = [128, 512], strides = [1, 1]} : vector<131x512xf32> to vector<128x512xf32>
    %20 = vector.broadcast %18 : vector<1x512xf32> to vector<128x512xf32>
    %21 = arith.mulf %20, %19 : vector<128x512xf32>
    %22 = arith.addf %17, %21 : vector<128x512xf32>
    %23 = vector.extract_strided_slice %14 {offsets = [1, 0], sizes = [1, 512], strides = [1, 1]} : vector<4x512xf32> to vector<1x512xf32>
    %24 = vector.extract_strided_slice %13 {offsets = [1, 0], sizes = [128, 512], strides = [1, 1]} : vector<131x512xf32> to vector<128x512xf32>
    %25 = vector.broadcast %23 : vector<1x512xf32> to vector<128x512xf32>
    %26 = arith.mulf %25, %24 : vector<128x512xf32>
    %27 = arith.addf %22, %26 : vector<128x512xf32>
    %28 = vector.extract_strided_slice %14 {offsets = [2, 0], sizes = [1, 512], strides = [1, 1]} : vector<4x512xf32> to vector<1x512xf32>
    %29 = vector.extract_strided_slice %13 {offsets = [2, 0], sizes = [128, 512], strides = [1, 1]} : vector<131x512xf32> to vector<128x512xf32>
    %30 = vector.broadcast %28 : vector<1x512xf32> to vector<128x512xf32>
    %31 = arith.mulf %30, %29 : vector<128x512xf32>
    %32 = arith.addf %27, %31 : vector<128x512xf32>
    %33 = vector.extract_strided_slice %14 {offsets = [3, 0], sizes = [1, 512], strides = [1, 1]} : vector<4x512xf32> to vector<1x512xf32>
    %34 = vector.extract_strided_slice %13 {offsets = [3, 0], sizes = [128, 512], strides = [1, 1]} : vector<131x512xf32> to vector<128x512xf32>
    %35 = vector.broadcast %33 : vector<1x512xf32> to vector<128x512xf32>
    %36 = arith.mulf %35, %34 : vector<128x512xf32>
    %37 = arith.addf %32, %36 : vector<128x512xf32>
    %38 = vector.extract_strided_slice %9 {offsets = [125, 0], sizes = [3, 512], strides = [1, 1]} : vector<128x512xf32> to vector<3x512xf32>
    %c0_17 = arith.constant 0 : index
    %c0_18 = arith.constant 0 : index
    %39 = vector.load %arg15[%c0_17, %c0_18] : memref<8x512xf32, #tpu.memory_space<vmem>>, vector<3x512xf32>
    tpu.vector_store %arg15[%c0_17, %c0_18], %38 {strides = array<i32>} : memref<8x512xf32, #tpu.memory_space<vmem>>, vector<3x512xf32>,
    %cst_19 = arith.constant 0.000000e+00 : f32
    %40 = vector.broadcast %cst_19 : f32 to vector<128x512xf32>
    %41 = arith.subf %40, %37 : vector<128x512xf32>
    %42 = math.exp %41 : vector<128x512xf32>
    %cst_20 = arith.constant 1.000000e+00 : f32
    %43 = vector.broadcast %cst_20 : f32 to vector<128x512xf32>
    %44 = arith.addf %43, %42 : vector<128x512xf32>
    %cst_21 = arith.constant 1.000000e+00 : f32
    %45 = vector.broadcast %cst_21 : f32 to vector<128x512xf32>
    %46 = arith.divf %45, %44 : vector<128x512xf32>
    %47 = arith.mulf %37, %46 : vector<128x512xf32>
    %48 = vector.extract_strided_slice %47 {offsets = [0, 0], sizes = [128, 256], strides = [1, 1]} : vector<128x512xf32> to vector<128x256xf32>
    %49 = vector.extract_strided_slice %47 {offsets = [0, 256], sizes = [128, 16], strides = [1, 1]} : vector<128x512xf32> to vector<128x16xf32>
    %50 = vector.extract_strided_slice %47 {offsets = [0, 384], sizes = [128, 16], strides = [1, 1]} : vector<128x512xf32> to vector<128x16xf32>
    %c0_22 = arith.constant 0 : index
    %c0_23 = arith.constant 0 : index
    %51 = vector.load %arg8[%c0_22, %c0_23] : memref<1x4xf32, #tpu.memory_space<vmem>>, vector<1x4xf32>
    %52 = vector.broadcast %51 : vector<1x4xf32> to vector<128x4xf32>
    %53 = arith.addf %11, %52 : vector<128x4xf32>
    %cst_24 = arith.constant 2.000000e+01 : f32
    %54 = vector.broadcast %cst_24 : f32 to vector<128x4xf32>
    %55 = arith.cmpf ogt, %53, %54 : vector<128x4xf32>
    %cst_25 = arith.constant 2.000000e+01 : f32
    %56 = vector.broadcast %cst_25 : f32 to vector<128x4xf32>
    %57 = arith.minimumf %53, %56 : vector<128x4xf32>
    %58 = math.exp %57 : vector<128x4xf32>
    %cst_26 = arith.constant 1.000000e+00 : f32
    %59 = vector.broadcast %cst_26 : f32 to vector<128x4xf32>
    %60 = arith.addf %59, %58 : vector<128x4xf32>
    %61 = math.log %60 : vector<128x4xf32>
    %62 = arith.select %55, %53, %61 : vector<128x4xi1>, vector<128x4xf32>
    %c0_27 = arith.constant 0 : index
    %c0_28 = arith.constant 0 : index
    %63 = vector.load %arg9[%c0_27, %c0_28] : memref<1x4xf32, #tpu.memory_space<vmem>>, vector<1x4xf32>
    %64 = vector.broadcast %63 : vector<1x4xf32> to vector<128x4xf32>
    %65 = arith.mulf %62, %64 : vector<128x4xf32>
    %66 = tpu.iota {dimensions = array<i32: 0>} : vector<128x128xi32>
    %67 = tpu.iota {dimensions = array<i32: 1>} : vector<128x128xi32>
    %68 = arith.cmpi sle, %67, %66 : vector<128x128xi32>
    %69 = arith.extui %68 : vector<128x128xi1> to vector<128x128xi32>
    %70 = arith.sitofp %69 : vector<128x128xi32> to vector<128x128xf32>
    %71 = arith.cmpi sle, %66, %67 : vector<128x128xi32>
    %72 = arith.extui %71 : vector<128x128xi1> to vector<128x128xi32>
    %73 = arith.sitofp %72 : vector<128x128xi32> to vector<128x128xf32>
    %cst_29 = arith.constant dense<0.000000e+00> : vector<128x4xf32>
    %74 = tpu.matmul %70, %65, %cst_29 {dimension_numbers = #tpu.dot_dimension_numbers<[1], [0], [0], [1], [0, 0, 1, 1], [], []>} : vector<128x128xf32>, vector<128x4xf32>, vector<128x4xf32> -> vector<128x4xf32>
    %cst_30 = arith.constant dense<0.000000e+00> : vector<4x128xf32>
    %75 = tpu.matmul %65, %73, %cst_30 {dimension_numbers = #tpu.dot_dimension_numbers<[0], [0], [1], [1], [0, 1, 1, 1], [], []>} : vector<128x4xf32>, vector<128x128xf32>, vector<4x128xf32> -> vector<4x128xf32>
    %76 = vector.extract_strided_slice %74 {offsets = [127, 0], sizes = [1, 4], strides = [1, 1]} : vector<128x4xf32> to vector<1x4xf32>
    %c0_31 = arith.constant 0 : index
    %c0_32 = arith.constant 0 : index
    %77 = vector.load %arg12[%c0_31, %c0_32] : memref<4x256xf32, #tpu.memory_space<vmem>>, vector<4x256xf32>
    %cst_33 = arith.constant dense<0.000000e+00> : vector<128x256xf32>
    %78 = tpu.matmul %62, %77, %cst_33 {dimension_numbers = #tpu.dot_dimension_numbers<[1], [0], [0], [1], [0, 0, 1, 1], [], []>} : vector<128x4xf32>, vector<4x256xf32>, vector<128x256xf32> -> vector<128x256xf32>
    %cst_34 = arith.constant dense<0.000000e+00> : vector<128x256xf32>
    %79 = tpu.matmul %74, %77, %cst_34 {dimension_numbers = #tpu.dot_dimension_numbers<[1], [0], [0], [1], [0, 0, 1, 1], [], []>} : vector<128x4xf32>, vector<4x256xf32>, vector<128x256xf32> -> vector<128x256xf32>
    %80 = math.exp %74 : vector<128x4xf32>
    %cst_35 = arith.constant dense<0.000000e+00> : vector<128x256xf32>
    %81 = tpu.matmul %80, %77, %cst_35 {dimension_numbers = #tpu.dot_dimension_numbers<[1], [0], [0], [1], [0, 0, 1, 1], [], []>} : vector<128x4xf32>, vector<4x256xf32>, vector<128x256xf32> -> vector<128x256xf32>
    %82 = vector.broadcast %76 : vector<1x4xf32> to vector<128x4xf32>
    %83 = arith.subf %82, %74 : vector<128x4xf32>
    %84 = math.exp %83 : vector<128x4xf32>
    %85 = arith.mulf %84, %62 : vector<128x4xf32>
    %cst_36 = arith.constant dense<0.000000e+00> : vector<128x256xf32>
    %86 = tpu.matmul %85, %77, %cst_36 {dimension_numbers = #tpu.dot_dimension_numbers<[1], [0], [0], [1], [0, 0, 1, 1], [], []>} : vector<128x4xf32>, vector<4x256xf32>, vector<128x256xf32> -> vector<128x256xf32>
    %87 = vector.extract_strided_slice %81 {offsets = [127, 0], sizes = [1, 256], strides = [1, 1]} : vector<128x256xf32> to vector<1x256xf32>
    %88 = arith.mulf %48, %78 : vector<128x256xf32>
    %89 = arith.truncf %88 : vector<128x256xf32> to vector<128x256xbf16>
    %c0_37 = arith.constant 0 : index
    %c0_38 = arith.constant 0 : index
    %90 = vector.load %arg18[%c0_37, %c0_38] : memref<128x256xbf16, #tpu.memory_space<vmem>>, vector<128x256xbf16>
    tpu.vector_store %arg18[%c0_37, %c0_38], %89 {strides = array<i32>} : memref<128x256xbf16, #tpu.memory_space<vmem>>, vector<128x256xbf16>,
    %c0_39 = arith.constant 0 : index
    %c0_40 = arith.constant 0 : index
    %91 = vector.load %arg19[%c0_39, %c0_40] : memref<128x256xf32, #tpu.memory_space<vmem>>, vector<128x256xf32>
    tpu.vector_store %arg19[%c0_39, %c0_40], %79 {strides = array<i32>} : memref<128x256xf32, #tpu.memory_space<vmem>>, vector<128x256xf32>,
    %c0_41 = arith.constant 0 : index
    %c0_42 = arith.constant 0 : index
    %92 = vector.load %arg20[%c0_41, %c0_42] : memref<4x128xf32, #tpu.memory_space<vmem>>, vector<4x128xf32>
    tpu.vector_store %arg20[%c0_41, %c0_42], %75 {strides = array<i32>} : memref<4x128xf32, #tpu.memory_space<vmem>>, vector<4x128xf32>,
    %93 = arith.cmpi sle, %67, %66 : vector<128x128xi32>
    %cst_43 = arith.constant dense<0.000000e+00> : vector<128x128xf32>
    %94 = tpu.matmul %50, %49, %cst_43 {dimension_numbers = #tpu.dot_dimension_numbers<[1], [1], [0], [0], [0, 0, 1, 0], [], []>} : vector<128x16xf32>, vector<128x16xf32>, vector<128x128xf32> -> vector<128x128xf32>
    %cst_44 = arith.constant 0.000000e+00 : f32
    %95 = vector.broadcast %cst_44 : f32 to vector<128x128xf32>
    %96 = arith.select %93, %94, %95 : vector<128x128xi1>, vector<128x128xf32>
    %c0_i32_45 = arith.constant 0 : i32
    %c128_i32 = arith.constant 128 : i32
    %97 = arith.muli %c0_i32_45, %c128_i32 : i32
    %98 = tpu.assume_multiple %97, 128 : i32
    %c2_i32 = arith.constant 2 : i32
    %99 = arith.muli %c2_i32, %c0_i32_45 : i32
    %100 = tpu.assume_multiple %99, 2 : i32
    %101 = arith.index_cast %100 : i32 to index
    %c0_46 = arith.constant 0 : index
    %102 = vector.load %arg20[%101, %c0_46] : memref<4x128xf32, #tpu.memory_space<vmem>>, vector<2x128xf32>
    %c0_47 = arith.constant 0 : index
    %103 = arith.index_cast %98 : i32 to index
    %104 = vector.load %arg19[%c0_47, %103] : memref<128x256xf32, #tpu.memory_space<vmem>>, vector<128x128xf32>
    %c0_48 = arith.constant 0 : index
    %105 = arith.index_cast %98 : i32 to index
    %106 = vector.load %arg18[%c0_48, %105] : memref<128x256xbf16, #tpu.memory_space<vmem>>, vector<128x128xbf16>
    %107 = vector.extract_strided_slice %104 {offsets = [0, 0], sizes = [128, 1], strides = [1, 1]} : vector<128x128xf32> to vector<128x1xf32>
    %108 = vector.extract_strided_slice %102 {offsets = [0, 0], sizes = [1, 128], strides = [1, 1]} : vector<2x128xf32> to vector<1x128xf32>
    %109 = vector.broadcast %107 : vector<128x1xf32> to vector<128x128xf32>
    %110 = vector.broadcast %108 : vector<1x128xf32> to vector<128x128xf32>
    %111 = arith.subf %109, %110 : vector<128x128xf32>
    %cst_49 = arith.constant 0.000000e+00 : f32
    %112 = vector.broadcast %cst_49 : f32 to vector<128x128xf32>
    %113 = arith.minimumf %111, %112 : vector<128x128xf32>
    %114 = math.exp %113 : vector<128x128xf32>
    %115 = arith.mulf %96, %114 : vector<128x128xf32>
    %116 = arith.truncf %115 : vector<128x128xf32> to vector<128x128xbf16>
    %117 = vector.extract_strided_slice %106 {offsets = [0, 0], sizes = [128, 64], strides = [1, 1]} : vector<128x128xbf16> to vector<128x64xbf16>
    %cst_50 = arith.constant dense<0.000000e+00> : vector<128x64xf32>
    %118 = tpu.matmul %116, %117, %cst_50 {dimension_numbers = #tpu.dot_dimension_numbers<[1], [0], [0], [1], [0, 0, 1, 1], [], []>} : vector<128x128xbf16>, vector<128x64xbf16>, vector<128x64xf32> -> vector<128x64xf32>
    %119 = vector.extract_strided_slice %104 {offsets = [0, 64], sizes = [128, 1], strides = [1, 1]} : vector<128x128xf32> to vector<128x1xf32>
    %120 = vector.extract_strided_slice %102 {offsets = [1, 0], sizes = [1, 128], strides = [1, 1]} : vector<2x128xf32> to vector<1x128xf32>
    %121 = vector.broadcast %119 : vector<128x1xf32> to vector<128x128xf32>
    %122 = vector.broadcast %120 : vector<1x128xf32> to vector<128x128xf32>
    %123 = arith.subf %121, %122 : vector<128x128xf32>
    %cst_51 = arith.constant 0.000000e+00 : f32
    %124 = vector.broadcast %cst_51 : f32 to vector<128x128xf32>
    %125 = arith.minimumf %123, %124 : vector<128x128xf32>
    %126 = math.exp %125 : vector<128x128xf32>
    %127 = arith.mulf %96, %126 : vector<128x128xf32>
    %128 = arith.truncf %127 : vector<128x128xf32> to vector<128x128xbf16>
    %129 = vector.extract_strided_slice %106 {offsets = [0, 64], sizes = [128, 64], strides = [1, 1]} : vector<128x128xbf16> to vector<128x64xbf16>
    %cst_52 = arith.constant dense<0.000000e+00> : vector<128x64xf32>
    %130 = tpu.matmul %128, %129, %cst_52 {dimension_numbers = #tpu.dot_dimension_numbers<[1], [0], [0], [1], [0, 0, 1, 1], [], []>} : vector<128x128xbf16>, vector<128x64xbf16>, vector<128x64xf32> -> vector<128x64xf32>
    %131 = tpu.concatenate %118, %130 in 1 : vector<128x64xf32>, vector<128x64xf32> -> vector<128x128xf32>
    %c0_53 = arith.constant 0 : index
    %132 = arith.index_cast %98 : i32 to index
    %133 = vector.load %arg17[%c0_53, %132] : memref<128x256xf32, #tpu.memory_space<vmem>>, vector<128x128xf32>
    tpu.vector_store %arg17[%c0_53, %132], %131 {strides = array<i32>} : memref<128x256xf32, #tpu.memory_space<vmem>>, vector<128x128xf32>,
    %c1_i32 = arith.constant 1 : i32
    %c128_i32_54 = arith.constant 128 : i32
    %134 = arith.muli %c1_i32, %c128_i32_54 : i32
    %135 = tpu.assume_multiple %134, 128 : i32
    %c2_i32_55 = arith.constant 2 : i32
    %136 = arith.muli %c2_i32_55, %c1_i32 : i32
    %137 = tpu.assume_multiple %136, 2 : i32
    %138 = arith.index_cast %137 : i32 to index
    %c0_56 = arith.constant 0 : index
    %139 = vector.load %arg20[%138, %c0_56] : memref<4x128xf32, #tpu.memory_space<vmem>>, vector<2x128xf32>
    %c0_57 = arith.constant 0 : index
    %140 = arith.index_cast %135 : i32 to index
    %141 = vector.load %arg19[%c0_57, %140] : memref<128x256xf32, #tpu.memory_space<vmem>>, vector<128x128xf32>
    %c0_58 = arith.constant 0 : index
    %142 = arith.index_cast %135 : i32 to index
    %143 = vector.load %arg18[%c0_58, %142] : memref<128x256xbf16, #tpu.memory_space<vmem>>, vector<128x128xbf16>
    %144 = vector.extract_strided_slice %141 {offsets = [0, 0], sizes = [128, 1], strides = [1, 1]} : vector<128x128xf32> to vector<128x1xf32>
    %145 = vector.extract_strided_slice %139 {offsets = [0, 0], sizes = [1, 128], strides = [1, 1]} : vector<2x128xf32> to vector<1x128xf32>
    %146 = vector.broadcast %144 : vector<128x1xf32> to vector<128x128xf32>
    %147 = vector.broadcast %145 : vector<1x128xf32> to vector<128x128xf32>
    %148 = arith.subf %146, %147 : vector<128x128xf32>
    %cst_59 = arith.constant 0.000000e+00 : f32
    %149 = vector.broadcast %cst_59 : f32 to vector<128x128xf32>
    %150 = arith.minimumf %148, %149 : vector<128x128xf32>
    %151 = math.exp %150 : vector<128x128xf32>
    %152 = arith.mulf %96, %151 : vector<128x128xf32>
    %153 = arith.truncf %152 : vector<128x128xf32> to vector<128x128xbf16>
    %154 = vector.extract_strided_slice %143 {offsets = [0, 0], sizes = [128, 64], strides = [1, 1]} : vector<128x128xbf16> to vector<128x64xbf16>
    %cst_60 = arith.constant dense<0.000000e+00> : vector<128x64xf32>
    %155 = tpu.matmul %153, %154, %cst_60 {dimension_numbers = #tpu.dot_dimension_numbers<[1], [0], [0], [1], [0, 0, 1, 1], [], []>} : vector<128x128xbf16>, vector<128x64xbf16>, vector<128x64xf32> -> vector<128x64xf32>
    %156 = vector.extract_strided_slice %141 {offsets = [0, 64], sizes = [128, 1], strides = [1, 1]} : vector<128x128xf32> to vector<128x1xf32>
    %157 = vector.extract_strided_slice %139 {offsets = [1, 0], sizes = [1, 128], strides = [1, 1]} : vector<2x128xf32> to vector<1x128xf32>
    %158 = vector.broadcast %156 : vector<128x1xf32> to vector<128x128xf32>
    %159 = vector.broadcast %157 : vector<1x128xf32> to vector<128x128xf32>
    %160 = arith.subf %158, %159 : vector<128x128xf32>
    %cst_61 = arith.constant 0.000000e+00 : f32
    %161 = vector.broadcast %cst_61 : f32 to vector<128x128xf32>
    %162 = arith.minimumf %160, %161 : vector<128x128xf32>
    %163 = math.exp %162 : vector<128x128xf32>
    %164 = arith.mulf %96, %163 : vector<128x128xf32>
    %165 = arith.truncf %164 : vector<128x128xf32> to vector<128x128xbf16>
    %166 = vector.extract_strided_slice %143 {offsets = [0, 64], sizes = [128, 64], strides = [1, 1]} : vector<128x128xbf16> to vector<128x64xbf16>
    %cst_62 = arith.constant dense<0.000000e+00> : vector<128x64xf32>
    %167 = tpu.matmul %165, %166, %cst_62 {dimension_numbers = #tpu.dot_dimension_numbers<[1], [0], [0], [1], [0, 0, 1, 1], [], []>} : vector<128x128xbf16>, vector<128x64xbf16>, vector<128x64xf32> -> vector<128x64xf32>
    %168 = tpu.concatenate %155, %167 in 1 : vector<128x64xf32>, vector<128x64xf32> -> vector<128x128xf32>
    %c0_63 = arith.constant 0 : index
    %169 = arith.index_cast %135 : i32 to index
    %170 = vector.load %arg17[%c0_63, %169] : memref<128x256xf32, #tpu.memory_space<vmem>>, vector<128x128xf32>
    tpu.vector_store %arg17[%c0_63, %169], %168 {strides = array<i32>} : memref<128x256xf32, #tpu.memory_space<vmem>>, vector<128x128xf32>,
    %c2_i32_64 = arith.constant 2 : i32
    %c0_65 = arith.constant 0 : index
    %c0_66 = arith.constant 0 : index
    %171 = vector.load %arg16[%c0_65, %c0_66] : memref<16x256xf32, #tpu.memory_space<vmem>>, vector<16x256xf32>
    %c0_67 = arith.constant 0 : index
    %c0_68 = arith.constant 0 : index
    %172 = vector.load %arg17[%c0_67, %c0_68] : memref<128x256xf32, #tpu.memory_space<vmem>>, vector<128x256xf32>
    %cst_69 = arith.constant dense<0.000000e+00> : vector<128x256xf32>
    %173 = tpu.matmul %50, %171, %cst_69 {dimension_numbers = #tpu.dot_dimension_numbers<[1], [0], [0], [1], [0, 0, 1, 1], [], []>} : vector<128x16xf32>, vector<16x256xf32>, vector<128x256xf32> -> vector<128x256xf32>
    %174 = arith.mulf %81, %173 : vector<128x256xf32>
    %175 = arith.addf %172, %174 : vector<128x256xf32>
    %c0_70 = arith.constant 0 : index
    %c0_71 = arith.constant 0 : index
    %176 = vector.load %arg10[%c0_70, %c0_71] : memref<1x256xf32, #tpu.memory_space<vmem>>, vector<1x256xf32>
    %177 = vector.broadcast %176 : vector<1x256xf32> to vector<128x256xf32>
    %178 = arith.mulf %48, %177 : vector<128x256xf32>
    %179 = arith.addf %175, %178 : vector<128x256xf32>
    %180 = vector.broadcast %87 : vector<1x256xf32> to vector<16x256xf32>
    %181 = arith.mulf %180, %171 : vector<16x256xf32>
    %182 = arith.mulf %48, %86 : vector<128x256xf32>
    %cst_72 = arith.constant dense<0.000000e+00> : vector<16x256xf32>
    %183 = tpu.matmul %49, %182, %cst_72 {dimension_numbers = #tpu.dot_dimension_numbers<[0], [0], [1], [1], [0, 1, 1, 1], [], []>} : vector<128x16xf32>, vector<128x256xf32>, vector<16x256xf32> -> vector<16x256xf32>
    %184 = arith.addf %181, %183 : vector<16x256xf32>
    %c0_73 = arith.constant 0 : index
    %c0_74 = arith.constant 0 : index
    %185 = vector.load %arg16[%c0_73, %c0_74] : memref<16x256xf32, #tpu.memory_space<vmem>>, vector<16x256xf32>
    tpu.vector_store %arg16[%c0_73, %c0_74], %184 {strides = array<i32>} : memref<16x256xf32, #tpu.memory_space<vmem>>, vector<16x256xf32>,
    %cst_75 = arith.constant 0.000000e+00 : f32
    %186 = vector.broadcast %cst_75 : f32 to vector<128x256xf32>
    %187 = arith.subf %186, %7 : vector<128x256xf32>
    %188 = math.exp %187 : vector<128x256xf32>
    %cst_76 = arith.constant 1.000000e+00 : f32
    %189 = vector.broadcast %cst_76 : f32 to vector<128x256xf32>
    %190 = arith.addf %189, %188 : vector<128x256xf32>
    %cst_77 = arith.constant 1.000000e+00 : f32
    %191 = vector.broadcast %cst_77 : f32 to vector<128x256xf32>
    %192 = arith.divf %191, %190 : vector<128x256xf32>
    %193 = arith.mulf %7, %192 : vector<128x256xf32>
    %194 = arith.mulf %179, %193 : vector<128x256xf32>
    %195 = arith.mulf %194, %194 : vector<128x256xf32>
    %cst_78 = arith.constant dense<0.000000e+00> : vector<128xf32>
    %196 = vector.multi_reduction <add>, %195, %cst_78 [1] : vector<128x256xf32> to vector<128xf32>
    %197 = vector.shape_cast %196 : vector<128xf32> to vector<128x1xf32>
    %cst_79 = arith.constant 2.560000e+02 : f32
    %198 = vector.broadcast %cst_79 : f32 to vector<128x1xf32>
    %199 = arith.divf %197, %198 : vector<128x1xf32>
    %cst_80 = arith.constant 9.99999974E-6 : f32
    %200 = vector.broadcast %cst_80 : f32 to vector<128x1xf32>
    %201 = arith.addf %199, %200 : vector<128x1xf32>
    %202 = math.rsqrt %201 : vector<128x1xf32>
    %203 = vector.broadcast %202 : vector<128x1xf32> to vector<128x256xf32>
    %204 = arith.mulf %194, %203 : vector<128x256xf32>
    %c0_81 = arith.constant 0 : index
    %c0_82 = arith.constant 0 : index
    %205 = vector.load %arg11[%c0_81, %c0_82] : memref<1x256xf32, #tpu.memory_space<vmem>>, vector<1x256xf32>
    %206 = vector.broadcast %205 : vector<1x256xf32> to vector<128x256xf32>
    %207 = arith.mulf %204, %206 : vector<128x256xf32>
    %208 = arith.truncf %207 : vector<128x256xf32> to vector<128x256xbf16>
    %c0_83 = arith.constant 0 : index
    %c0_84 = arith.constant 0 : index
    %209 = vector.load %arg13[%c0_83, %c0_84] : memref<256x128xbf16, #tpu.memory_space<vmem>>, vector<256x128xbf16>
    %cst_85 = arith.constant dense<0.000000e+00> : vector<128x128xf32>
    %210 = tpu.matmul %208, %209, %cst_85 {dimension_numbers = #tpu.dot_dimension_numbers<[1], [0], [0], [1], [0, 0, 1, 1], [], []>} : vector<128x256xbf16>, vector<256x128xbf16>, vector<128x128xf32> -> vector<128x128xf32>
    %211 = arith.truncf %210 : vector<128x128xf32> to vector<128x128xbf16>
    %c0_86 = arith.constant 0 : index
    %c0_87 = arith.constant 0 : index
    %c0_88 = arith.constant 0 : index
    %212 = vector.load %arg14[%c0_86, %c0_87, %c0_88] : memref<1x128x128xbf16, #tpu.memory_space<vmem>>, vector<1x128x128xbf16>
    %213 = vector.shape_cast %212 : vector<1x128x128xbf16> to vector<128x128xbf16>
    %214 = vector.shape_cast %211 : vector<128x128xbf16> to vector<1x128x128xbf16>
    tpu.vector_store %arg14[%c0_86, %c0_87, %c0_88], %214 {strides = array<i32>} : memref<1x128x128xbf16, #tpu.memory_space<vmem>>, vector<1x128x128xbf16>,
    return
  }
  func.func @transform_0(%arg0: i32, %arg1: i32) -> (i32, i32, i32) {
    %c0_i32 = arith.constant 0 : i32
    %c0_i32_0 = arith.constant 0 : i32
    return %arg0, %arg1, %c0_i32 : i32, i32, i32
  }
  func.func @transform_1(%arg0: i32, %arg1: i32) -> (i32, i32) {
    %c0_i32 = arith.constant 0 : i32
    %c0_i32_0 = arith.constant 0 : i32
    %c0_i32_1 = arith.constant 0 : i32
    return %c0_i32, %c0_i32_0 : i32, i32
  }
  func.func @transform_2(%arg0: i32, %arg1: i32) -> (i32, i32) {
    %c0_i32 = arith.constant 0 : i32
    %c0_i32_0 = arith.constant 0 : i32
    %c0_i32_1 = arith.constant 0 : i32
    return %c0_i32, %c0_i32_0 : i32, i32
  }
  func.func @transform_3(%arg0: i32, %arg1: i32) -> (i32, i32) {
    %c0_i32 = arith.constant 0 : i32
    %c0_i32_0 = arith.constant 0 : i32
    %c0_i32_1 = arith.constant 0 : i32
    return %c0_i32, %c0_i32_0 : i32, i32
  }
  func.func @transform_4(%arg0: i32, %arg1: i32) -> (i32, i32) {
    %c0_i32 = arith.constant 0 : i32
    %c0_i32_0 = arith.constant 0 : i32
    %c0_i32_1 = arith.constant 0 : i32
    return %c0_i32, %c0_i32_0 : i32, i32
  }
  func.func @transform_5(%arg0: i32, %arg1: i32) -> (i32, i32) {
    %c0_i32 = arith.constant 0 : i32
    %c0_i32_0 = arith.constant 0 : i32
    %c0_i32_1 = arith.constant 0 : i32
    return %c0_i32, %c0_i32_0 : i32, i32
  }
  func.func @transform_6(%arg0: i32, %arg1: i32) -> (i32, i32) {
    %c0_i32 = arith.constant 0 : i32
    %c0_i32_0 = arith.constant 0 : i32
    %c0_i32_1 = arith.constant 0 : i32
    return %c0_i32, %c0_i32_0 : i32, i32
  }
  func.func @transform_7(%arg0: i32, %arg1: i32) -> (i32, i32) {
    %c0_i32 = arith.constant 0 : i32
    %c0_i32_0 = arith.constant 0 : i32
    %c0_i32_1 = arith.constant 0 : i32
    return %c0_i32, %c0_i32_0 : i32, i32
  }
  func.func @transform_8(%arg0: i32, %arg1: i32) -> (i32, i32) {
    %c0_i32 = arith.constant 0 : i32
    %c0_i32_0 = arith.constant 0 : i32
    %c0_i32_1 = arith.constant 0 : i32
    return %c0_i32, %c0_i32_0 : i32, i32
  }
  func.func @transform_9(%arg0: i32, %arg1: i32) -> (i32, i32) {
    %c0_i32 = arith.constant 0 : i32
    %c0_i32_0 = arith.constant 0 : i32
    %c0_i32_1 = arith.constant 0 : i32
    return %c0_i32, %c0_i32_0 : i32, i32
  }
  func.func @transform_10(%arg0: i32, %arg1: i32) -> (i32, i32) {
    %c0_i32 = arith.constant 0 : i32
    %c0_i32_0 = arith.constant 0 : i32
    %c0_i32_1 = arith.constant 0 : i32
    return %c0_i32, %c0_i32_0 : i32, i32
  }
  func.func @transform_11(%arg0: i32, %arg1: i32) -> (i32, i32) {
    %c0_i32 = arith.constant 0 : i32
    %c0_i32_0 = arith.constant 0 : i32
    %c0_i32_1 = arith.constant 0 : i32
    return %c0_i32, %c0_i32_0 : i32, i32
  }
  func.func @transform_12(%arg0: i32, %arg1: i32) -> (i32, i32, i32) {
    %c0_i32 = arith.constant 0 : i32
    %c0_i32_0 = arith.constant 0 : i32
    return %arg0, %arg1, %c0_i32 : i32, i32, i32
  }
}

</mosaic_0001>

<llo_original>
// kernel: tpu_custom_call.1
$region0: #{tpu_custom_call.1}
  #allocation0 [shape = 'u32[]', space=smem, size = 0x4, offset = 0x4, fixed_abs, tag = 'smem constant byte address 0x4 - core index']
  #allocation1 [shape = 'u32[144,128]{1,0:T(1,128)}', space=vmem, size = 0x12000, scoped, tag = 'internal scratch']
  #allocation2 [shape = 'f32[8,512]{1,0:T(8,128)}', space=vmem, size = 0x4000, scoped, tag = 'scratch operand']
  #allocation3 [shape = 'f32[16,256]{1,0:T(8,128)}', space=vmem, size = 0x4000, scoped, tag = 'scratch operand']
  #allocation4 [shape = 'f32[128,256]{1,0:T(8,128)}', space=vmem, size = 0x20000, scoped, tag = 'scratch operand']
  #allocation5 [shape = 'bf16[128,256]{1,0:T(16,128)(2,1)}', space=vmem, size = 0x10000, scoped, tag = 'scratch operand']
  #allocation6 [shape = 'f32[128,256]{1,0:T(8,128)}', space=vmem, size = 0x20000, scoped, tag = 'scratch operand']
  #allocation7 [shape = 'f32[4,128]{1,0:T(4,128)}', space=vmem, size = 0x800, scoped, tag = 'scratch operand']
  %s0 = inlined_call_operand.hbm [shape: bf16[2,256,128], index: 0, kind: input, shape index: {}]
  %s1 = inlined_call_operand.vmem [shape: bf16[128,256], index: 1, kind: input, shape index: {}]
  %s2 = inlined_call_operand.hbm [shape: bf16[128,512], index: 2, kind: input, shape index: {}]
  %s3 = inlined_call_operand.vmem [shape: f32[128,4], index: 3, kind: input, shape index: {}]
  %s4 = inlined_call_operand.vmem [shape: f32[4,512], index: 4, kind: input, shape index: {}]
  %s5 = inlined_call_operand.hbm [shape: f32[1,512], index: 5, kind: input, shape index: {}]
  %s6 = inlined_call_operand.hbm [shape: f32[1,4], index: 6, kind: input, shape index: {}]
  %s7 = inlined_call_operand.vmem [shape: f32[1,4], index: 7, kind: input, shape index: {}]
  %s8 = inlined_call_operand.vmem [shape: f32[1,256], index: 8, kind: input, shape index: {}]
  %s9 = inlined_call_operand.vmem [shape: f32[1,256], index: 9, kind: input, shape index: {}]
  %s10 = inlined_call_operand.vmem [shape: f32[4,256], index: 10, kind: input, shape index: {}]
  %s11 = inlined_call_operand.hbm [shape: bf16[256,128], index: 11, kind: input, shape index: {}]
  %s12 = inlined_call_operand.hbm [shape: bf16[2,256,128], index: 12, kind: output, shape index: {}]
  %s13 = sld [smem:[#allocation0]]
  $region105: #{tpu_custom_call.1} parent=0
    _
  %s15 = ssub.s32 1, %s13
  %s16 = scalar_select 0, %s15, %s13
  $region1: #{tpu_custom_call.1} parent=0
    #allocation8 [shape = 'u8[65536]{0}', space=vmem, size = 0x10000, scoped, tag = 'input window, operand 0']
    #allocation9 [shape = 's32[2]{0}', space=sflag, size = 0x8, scoped, tag = 'scoped memory for tpu_custom_call.1']
    #allocation10 [shape = 's32[2]{0}', space=sflag, size = 0x8, scoped, tag = 'scoped memory for tpu_custom_call.1']
    #allocation11 [shape = 'u8[131072]{0}', space=vmem, size = 0x20000, scoped, tag = 'input window, operand 2, single buffered']
    #allocation12 [shape = 's32[1]{0}', space=sflag, size = 0x4, scoped, tag = 'scoped memory for tpu_custom_call.1']
    #allocation13 [shape = 'u8[2048]{0}', space=vmem, size = 0x800, scoped, tag = 'input window, operand 5, single buffered']
    #allocation14 [shape = 'u8[512]{0}', space=vmem, size = 0x400, scoped, tag = 'input window, operand 6, single buffered']
    #allocation15 [shape = 's32[1]{0}', space=sflag, size = 0x4, scoped, tag = 'scoped memory for tpu_custom_call.1']
    #allocation16 [shape = 'u8[65536]{0}', space=vmem, size = 0x10000, scoped, tag = 'input window, operand 11, single buffered']
    #allocation17 [shape = 'u8[65536]{0}', space=vmem, size = 0x10000, scoped, tag = 'output window, operand 0']
    %17 = vsyncpa [#allocation9], 0
    %s18 = scalar_lea.sflag [#allocation9], 1
    %19 = vsyncpa %s18, 0
    %20 = vsyncpa [#allocation12], 0
    %21 = vsyncpa [#allocation15], 0
    %22 = vsyncpa [#allocation10], 0
    %s23 = scalar_lea.sflag [#allocation10], 1
    %24 = vsyncpa %s23, 0
    loop: start=0, step=1, limit=6
    $region2: #{tpu_custom_call.1} parent=1 // loop_pre_header
      _
    $region3: #{tpu_custom_call.1} parent=1 // loop_header
      %s26 = sphi 0, %s30
      %p27 = scmp.ge.s32.totalorder %s26, 6
      %s33 = sphi 0, %s45
      %s34 = sphi 0, %s41
      %s35 = sphi 0, %s33
      %s36 = sphi 0, %s34
      %s37 = sphi 0, %s35
      %s38 = sphi 0, %s36
      %s50 = sphi 0, %s52
      %s53 = sphi 0, %s50
      %s54 = sphi 0, %s53
      %s70 = sphi 0, %s54
      %s74 = sphi 0, %s74
      %s76 = sphi 0, %s74
      %s77 = sphi 0, %s76
      %s91 = sphi 0, %s77
      %s95 = sphi 0, %s95
      %s97 = sphi 0, %s95
      %s98 = sphi 0, %s97
      %s112 = sphi 0, %s98
      %s116 = sphi 0, %s116
      %s118 = sphi 0, %s116
      %s119 = sphi 0, %s118
      %s133 = sphi 0, %s119
      %s137 = sphi 0, %s137
      %s139 = sphi 0, %s137
      %s140 = sphi 0, %s139
      %s154 = sphi 0, %s140
      %s158 = sphi 0, %s158
      %s160 = sphi 0, %s158
      %s161 = sphi 0, %s160
      %s175 = sphi 0, %s161
      %s179 = sphi 0, %s179
      %s181 = sphi 0, %s179
      %s182 = sphi 0, %s181
      %s196 = sphi 0, %s182
      %s200 = sphi 0, %s200
      %s202 = sphi 0, %s200
      %s203 = sphi 0, %s202
      %s217 = sphi 0, %s203
      %s221 = sphi 0, %s221
      %s223 = sphi 0, %s221
      %s224 = sphi 0, %s223
      %s238 = sphi 0, %s224
      %s242 = sphi 0, %s242
      %s244 = sphi 0, %s242
      %s245 = sphi 0, %s244
      %s259 = sphi 0, %s245
      %s263 = sphi 0, %s263
      %s265 = sphi 0, %s263
      %s266 = sphi 0, %s265
      %s280 = sphi 0, %s266
      %s284 = sphi 0, %s284
      %s286 = sphi 0, %s284
      %s287 = sphi 0, %s286
      %s301 = sphi 0, %s287
      %s309 = sphi 0, %s311
      %s312 = sphi 0, %s309
      %s313 = sphi 0, %s312
      %s329 = sphi 0, %s313
    $region4: #{tpu_custom_call.1} parent=1 // loop_header_branch
      %29 = sbr.rel (%p27) target = $region8
    $region5: #{tpu_custom_call.1} parent=1 // loop_body
      %s31 = ssub.s32 %s26, 1
      %s32 = ssub.s32 %s26, 2
      %s39 = sadd.s32 1, %s34
      %p40 = scmp.ge.s32.totalorder %s39, 2
      %s41 = scalar_select %p40, 0, %s39
      %s42 = sadd.s32 1, %s33
      %s43 = scalar_select %p40, %s42, %s33
      %p44 = scmp.ge.s32.totalorder %s43, 2
      %s45 = scalar_select %p44, 0, %s43
      %s46 = ssub.s32 %s33, %s45
      %s47 = ssub.s32 %s34, %s41
      %s48 = sor.u32 %s46, %s47
      %p49 = scmp.eq.s32.totalorder %s48, 0
      %s51 = sadd.s32 %s50, 1
      %s52 = scalar_select %p49, %s50, %s51
      %p55 = pneg %p49
      %p56 = scmp.eq.s32.totalorder %s26, 3
      %p57 = por %p55, %p56
      %p58 = scmp.ne.s32.totalorder %s50, %s53
      %p59 = scmp.eq.s32.totalorder %s26, 0
      %p60 = por %p58, %p59
      %p61 = scmp.ne.s32.totalorder %s50, %s53
      %p62 = scmp.eq.s32.totalorder %s31, 3
      %p63 = por %p61, %p62
      %p64 = scmp.ne.s32.totalorder %s53, %s54
      %p65 = scmp.eq.s32.totalorder %s31, 0
      %p66 = por %p64, %p65
      %p67 = scmp.ne.s32.totalorder %s53, %s54
      %p68 = scmp.eq.s32.totalorder %s32, 3
      %p69 = por %p67, %p68
      %p71 = scmp.ne.s32.totalorder %s54, %s70
      %p72 = scmp.eq.s32.totalorder %s32, 0
      %p73 = por %p71, %p72
      %s75 = sadd.s32 %s74, 1
      %p78 = scmp.eq.s32.totalorder %s26, 3
      %p79 = scmp.ne.s32.totalorder %s74, %s76
      %p80 = scmp.eq.s32.totalorder %s26, 0
      %p81 = por %p79, %p80
      %p82 = scmp.ne.s32.totalorder %s74, %s76
      %p83 = scmp.eq.s32.totalorder %s31, 3
      %p84 = por %p82, %p83
      %p85 = scmp.ne.s32.totalorder %s76, %s77
      %p86 = scmp.eq.s32.totalorder %s31, 0
      %p87 = por %p85, %p86
      %p88 = scmp.ne.s32.totalorder %s76, %s77
      %p89 = scmp.eq.s32.totalorder %s32, 3
      %p90 = por %p88, %p89
      %p92 = scmp.ne.s32.totalorder %s77, %s91
      %p93 = scmp.eq.s32.totalorder %s32, 0
      %p94 = por %p92, %p93
      %s96 = sadd.s32 %s95, 1
      %p99 = scmp.eq.s32.totalorder %s26, 3
      %p100 = scmp.ne.s32.totalorder %s95, %s97
      %p101 = scmp.eq.s32.totalorder %s26, 0
      %p102 = por %p100, %p101
      %p103 = scmp.ne.s32.totalorder %s95, %s97
      %p104 = scmp.eq.s32.totalorder %s31, 3
      %p105 = por %p103, %p104
      %p106 = scmp.ne.s32.totalorder %s97, %s98
      %p107 = scmp.eq.s32.totalorder %s31, 0
      %p108 = por %p106, %p107
      %p109 = scmp.ne.s32.totalorder %s97, %s98
      %p110 = scmp.eq.s32.totalorder %s32, 3
      %p111 = por %p109, %p110
      %p113 = scmp.ne.s32.totalorder %s98, %s112
      %p114 = scmp.eq.s32.totalorder %s32, 0
      %p115 = por %p113, %p114
      %s117 = sadd.s32 %s116, 1
      %p120 = scmp.eq.s32.totalorder %s26, 3
      %p121 = scmp.ne.s32.totalorder %s116, %s118
      %p122 = scmp.eq.s32.totalorder %s26, 0
      %p123 = por %p121, %p122
      %p124 = scmp.ne.s32.totalorder %s116, %s118
      %p125 = scmp.eq.s32.totalorder %s31, 3
      %p126 = por %p124, %p125
      %p127 = scmp.ne.s32.totalorder %s118, %s119
      %p128 = scmp.eq.s32.totalorder %s31, 0
      %p129 = por %p127, %p128
      %p130 = scmp.ne.s32.totalorder %s118, %s119
      %p131 = scmp.eq.s32.totalorder %s32, 3
      %p132 = por %p130, %p131
      %p134 = scmp.ne.s32.totalorder %s119, %s133
      %p135 = scmp.eq.s32.totalorder %s32, 0
      %p136 = por %p134, %p135
      %s138 = sadd.s32 %s137, 1
      %p141 = scmp.eq.s32.totalorder %s26, 3
      %p142 = scmp.ne.s32.totalorder %s137, %s139
      %p143 = scmp.eq.s32.totalorder %s26, 0
      %p144 = por %p142, %p143
      %p145 = scmp.ne.s32.totalorder %s137, %s139
      %p146 = scmp.eq.s32.totalorder %s31, 3
      %p147 = por %p145, %p146
      %p148 = scmp.ne.s32.totalorder %s139, %s140
      %p149 = scmp.eq.s32.totalorder %s31, 0
      %p150 = por %p148, %p149
      %p151 = scmp.ne.s32.totalorder %s139, %s140
      %p152 = scmp.eq.s32.totalorder %s32, 3
      %p153 = por %p151, %p152
      %p155 = scmp.ne.s32.totalorder %s140, %s154
      %p156 = scmp.eq.s32.totalorder %s32, 0
      %p157 = por %p155, %p156
      %s159 = sadd.s32 %s158, 1
      %p162 = scmp.eq.s32.totalorder %s26, 3
      %p163 = scmp.ne.s32.totalorder %s158, %s160
      %p164 = scmp.eq.s32.totalorder %s26, 0
      %p165 = por %p163, %p164
      %p166 = scmp.ne.s32.totalorder %s158, %s160
      %p167 = scmp.eq.s32.totalorder %s31, 3
      %p168 = por %p166, %p167
      %p169 = scmp.ne.s32.totalorder %s160, %s161
      %p170 = scmp.eq.s32.totalorder %s31, 0
      %p171 = por %p169, %p170
      %p172 = scmp.ne.s32.totalorder %s160, %s161
      %p173 = scmp.eq.s32.totalorder %s32, 3
      %p174 = por %p172, %p173
      %p176 = scmp.ne.s32.totalorder %s161, %s175
      %p177 = scmp.eq.s32.totalorder %s32, 0
      %p178 = por %p176, %p177
      %s180 = sadd.s32 %s179, 1
      %p183 = scmp.eq.s32.totalorder %s26, 3
      %p184 = scmp.ne.s32.totalorder %s179, %s181
      %p185 = scmp.eq.s32.totalorder %s26, 0
      %p186 = por %p184, %p185
      %p187 = scmp.ne.s32.totalorder %s179, %s181
      %p188 = scmp.eq.s32.totalorder %s31, 3
      %p189 = por %p187, %p188
      %p190 = scmp.ne.s32.totalorder %s181, %s182
      %p191 = scmp.eq.s32.totalorder %s31, 0
      %p192 = por %p190, %p191
      %p193 = scmp.ne.s32.totalorder %s181, %s182
      %p194 = scmp.eq.s32.totalorder %s32, 3
      %p195 = por %p193, %p194
      %p197 = scmp.ne.s32.totalorder %s182, %s196
      %p198 = scmp.eq.s32.totalorder %s32, 0
      %p199 = por %p197, %p198
      %s201 = sadd.s32 %s200, 1
      %p204 = scmp.eq.s32.totalorder %s26, 3
      %p205 = scmp.ne.s32.totalorder %s200, %s202
      %p206 = scmp.eq.s32.totalorder %s26, 0
      %p207 = por %p205, %p206
      %p208 = scmp.ne.s32.totalorder %s200, %s202
      %p209 = scmp.eq.s32.totalorder %s31, 3
      %p210 = por %p208, %p209
      %p211 = scmp.ne.s32.totalorder %s202, %s203
      %p212 = scmp.eq.s32.totalorder %s31, 0
      %p213 = por %p211, %p212
      %p214 = scmp.ne.s32.totalorder %s202, %s203
      %p215 = scmp.eq.s32.totalorder %s32, 3
      %p216 = por %p214, %p215
      %p218 = scmp.ne.s32.totalorder %s203, %s217
      %p219 = scmp.eq.s32.totalorder %s32, 0
      %p220 = por %p218, %p219
      %s222 = sadd.s32 %s221, 1
      %p225 = scmp.eq.s32.totalorder %s26, 3
      %p226 = scmp.ne.s32.totalorder %s221, %s223
      %p227 = scmp.eq.s32.totalorder %s26, 0
      %p228 = por %p226, %p227
      %p229 = scmp.ne.s32.totalorder %s221, %s223
      %p230 = scmp.eq.s32.totalorder %s31, 3
      %p231 = por %p229, %p230
      %p232 = scmp.ne.s32.totalorder %s223, %s224
      %p233 = scmp.eq.s32.totalorder %s31, 0
      %p234 = por %p232, %p233
      %p235 = scmp.ne.s32.totalorder %s223, %s224
      %p236 = scmp.eq.s32.totalorder %s32, 3
      %p237 = por %p235, %p236
      %p239 = scmp.ne.s32.totalorder %s224, %s238
      %p240 = scmp.eq.s32.totalorder %s32, 0
      %p241 = por %p239, %p240
      %s243 = sadd.s32 %s242, 1
      %p246 = scmp.eq.s32.totalorder %s26, 3
      %p247 = scmp.ne.s32.totalorder %s242, %s244
      %p248 = scmp.eq.s32.totalorder %s26, 0
      %p249 = por %p247, %p248
      %p250 = scmp.ne.s32.totalorder %s242, %s244
      %p251 = scmp.eq.s32.totalorder %s31, 3
      %p252 = por %p250, %p251
      %p253 = scmp.ne.s32.totalorder %s244, %s245
      %p254 = scmp.eq.s32.totalorder %s31, 0
      %p255 = por %p253, %p254
      %p256 = scmp.ne.s32.totalorder %s244, %s245
      %p257 = scmp.eq.s32.totalorder %s32, 3
      %p258 = por %p256, %p257
      %p260 = scmp.ne.s32.totalorder %s245, %s259
      %p261 = scmp.eq.s32.totalorder %s32, 0
      %p262 = por %p260, %p261
      %s264 = sadd.s32 %s263, 1
      %p267 = scmp.eq.s32.totalorder %s26, 3
      %p268 = scmp.ne.s32.totalorder %s263, %s265
      %p269 = scmp.eq.s32.totalorder %s26, 0
      %p270 = por %p268, %p269
      %p271 = scmp.ne.s32.totalorder %s263, %s265
      %p272 = scmp.eq.s32.totalorder %s31, 3
      %p273 = por %p271, %p272
      %p274 = scmp.ne.s32.totalorder %s265, %s266
      %p275 = scmp.eq.s32.totalorder %s31, 0
      %p276 = por %p274, %p275
      %p277 = scmp.ne.s32.totalorder %s265, %s266
      %p278 = scmp.eq.s32.totalorder %s32, 3
      %p279 = por %p277, %p278
      %p281 = scmp.ne.s32.totalorder %s266, %s280
      %p282 = scmp.eq.s32.totalorder %s32, 0
      %p283 = por %p281, %p282
      %s285 = sadd.s32 %s284, 1
      %p288 = scmp.eq.s32.totalorder %s26, 3
      %p289 = scmp.ne.s32.totalorder %s284, %s286
      %p290 = scmp.eq.s32.totalorder %s26, 0
      %p291 = por %p289, %p290
      %p292 = scmp.ne.s32.totalorder %s284, %s286
      %p293 = scmp.eq.s32.totalorder %s31, 3
      %p294 = por %p292, %p293
      %p295 = scmp.ne.s32.totalorder %s286, %s287
      %p296 = scmp.eq.s32.totalorder %s31, 0
      %p297 = por %p295, %p296
      %p298 = scmp.ne.s32.totalorder %s286, %s287
      %p299 = scmp.eq.s32.totalorder %s32, 3
      %p300 = por %p298, %p299
      %p302 = scmp.ne.s32.totalorder %s287, %s301
      %p303 = scmp.eq.s32.totalorder %s32, 0
      %p304 = por %p302, %p303
      %s305 = ssub.s32 %s33, %s45
      %s306 = ssub.s32 %s34, %s41
      %s307 = sor.u32 %s305, %s306
      %p308 = scmp.eq.s32.totalorder %s307, 0
      %s310 = sadd.s32 %s309, 1
      %s311 = scalar_select %p308, %s309, %s310
      %p314 = pneg %p308
      %p315 = scmp.eq.s32.totalorder %s26, 3
      %p316 = por %p314, %p315
      %p317 = scmp.ne.s32.totalorder %s309, %s312
      %p318 = scmp.eq.s32.totalorder %s26, 0
      %p319 = por %p317, %p318
      %p320 = scmp.ne.s32.totalorder %s309, %s312
      %p321 = scmp.eq.s32.totalorder %s31, 3
      %p322 = por %p320, %p321
      %p323 = scmp.ne.s32.totalorder %s312, %s313
      %p324 = scmp.eq.s32.totalorder %s31, 0
      %p325 = por %p323, %p324
      %p326 = scmp.ne.s32.totalorder %s312, %s313
      %p327 = scmp.eq.s32.totalorder %s32, 3
      %p328 = por %p326, %p327
      %p330 = scmp.ne.s32.totalorder %s313, %s329
      %p331 = scmp.eq.s32.totalorder %s32, 0
      %p332 = por %p330, %p331
      %p333 = scmp.le.s32.totalorder 1, %s26
      %p334 = scmp.lt.s32.totalorder %s26, 5
      %p335 = pnand %p333, %p334
      %p336 = pneg %p335
      // Predicated region
      $region9: #{tpu_custom_call.1} parent=5 // pred_check
        _
      $region10: #{tpu_custom_call.1} parent=5 // pred_check_branch
        %338 = sbr.rel (%p335) target = $region12
      $region11: #{tpu_custom_call.1} parent=5 // pred_region
        %s339 = ssub.s32 %s26, 1
        // Predicated region
        $region13: #{tpu_custom_call.1} parent=11 // pred_check
          %p340 = pneg %p87
        $region14: #{tpu_custom_call.1} parent=11 // pred_check_branch
          %342 = sbr.rel (%p340) target = $region16
        $region15: #{tpu_custom_call.1} parent=11 // pred_region
          _
        $region16: #{tpu_custom_call.1} parent=11 // pred_fallthru
          _
        // Predicated region
        $region17: #{tpu_custom_call.1} parent=11 // pred_check
          %p343 = pneg %p108
        $region18: #{tpu_custom_call.1} parent=11 // pred_check_branch
          %345 = sbr.rel (%p343) target = $region20
        $region19: #{tpu_custom_call.1} parent=11 // pred_region
          %s347 = ssub.s32 4096, 4096
          %348 = vsyncadd [#allocation12], %s347
          %s349 = sshll.u32 [#allocation11], 4
          %s350 = int_to_ptr.vmem [resolvable:$true] %s349
          %355 = dma.hbm_to_vmem [thread:$0]  %s2, 4096, %s350, [#allocation12], 256, 256, 16
        $region20: #{tpu_custom_call.1} parent=11 // pred_fallthru
          _
        // Predicated region
        $region21: #{tpu_custom_call.1} parent=11 // pred_check
          %p356 = pneg %p129
        $region22: #{tpu_custom_call.1} parent=11 // pred_check_branch
          %358 = sbr.rel (%p356) target = $region24
        $region23: #{tpu_custom_call.1} parent=11 // pred_region
          _
        $region24: #{tpu_custom_call.1} parent=11 // pred_fallthru
          _
        // Predicated region
        $region25: #{tpu_custom_call.1} parent=11 // pred_check
          %p359 = pneg %p150
        $region26: #{tpu_custom_call.1} parent=11 // pred_check_branch
          %361 = sbr.rel (%p359) target = $region28
        $region27: #{tpu_custom_call.1} parent=11 // pred_region
          _
        $region28: #{tpu_custom_call.1} parent=11 // pred_fallthru
          _
        // Predicated region
        $region29: #{tpu_custom_call.1} parent=11 // pred_check
          %p362 = pneg %p171
        $region30: #{tpu_custom_call.1} parent=11 // pred_check_branch
          %364 = sbr.rel (%p362) target = $region32
        $region31: #{tpu_custom_call.1} parent=11 // pred_region
          %s366 = ssub.s32 64, 64
          %367 = vsyncadd [#allocation12], %s366
          %s369 = sshll.u32 [#allocation13], 4
          %s370 = int_to_ptr.vmem [resolvable:$true] %s369
          %372 = dma.hbm_to_vmem [thread:$0]  %s5, 64, %s370, [#allocation12]
        $region32: #{tpu_custom_call.1} parent=11 // pred_fallthru
          _
        // Predicated region
        $region33: #{tpu_custom_call.1} parent=11 // pred_check
          %p373 = pneg %p192
        $region34: #{tpu_custom_call.1} parent=11 // pred_check_branch
          %375 = sbr.rel (%p373) target = $region36
        $region35: #{tpu_custom_call.1} parent=11 // pred_region
          %s377 = ssub.s32 16, 16
          %378 = vsyncadd [#allocation15], %s377
          %s380 = sshll.u32 [#allocation14], 4
          %s381 = int_to_ptr.vmem [resolvable:$true] %s380
          %383 = dma.hbm_to_vmem [thread:$0]  %s6, 16, %s381, [#allocation15]
        $region36: #{tpu_custom_call.1} parent=11 // pred_fallthru
          _
        // Predicated region
        $region37: #{tpu_custom_call.1} parent=11 // pred_check
          %p384 = pneg %p213
        $region38: #{tpu_custom_call.1} parent=11 // pred_check_branch
          %386 = sbr.rel (%p384) target = $region40
        $region39: #{tpu_custom_call.1} parent=11 // pred_region
          _
        $region40: #{tpu_custom_call.1} parent=11 // pred_fallthru
          _
        // Predicated region
        $region41: #{tpu_custom_call.1} parent=11 // pred_check
          %p387 = pneg %p234
        $region42: #{tpu_custom_call.1} parent=11 // pred_check_branch
          %389 = sbr.rel (%p387) target = $region44
        $region43: #{tpu_custom_call.1} parent=11 // pred_region
          _
        $region44: #{tpu_custom_call.1} parent=11 // pred_fallthru
          _
        // Predicated region
        $region45: #{tpu_custom_call.1} parent=11 // pred_check
          %p390 = pneg %p255
        $region46: #{tpu_custom_call.1} parent=11 // pred_check_branch
          %392 = sbr.rel (%p390) target = $region48
        $region47: #{tpu_custom_call.1} parent=11 // pred_region
          _
        $region48: #{tpu_custom_call.1} parent=11 // pred_fallthru
          _
        // Predicated region
        $region49: #{tpu_custom_call.1} parent=11 // pred_check
          %p393 = pneg %p276
        $region50: #{tpu_custom_call.1} parent=11 // pred_check_branch
          %395 = sbr.rel (%p393) target = $region52
        $region51: #{tpu_custom_call.1} parent=11 // pred_region
          _
        $region52: #{tpu_custom_call.1} parent=11 // pred_fallthru
          _
        // Predicated region
        $region53: #{tpu_custom_call.1} parent=11 // pred_check
          %p396 = pneg %p297
        $region54: #{tpu_custom_call.1} parent=11 // pred_check_branch
          %398 = sbr.rel (%p396) target = $region56
        $region55: #{tpu_custom_call.1} parent=11 // pred_region
          %s400 = ssub.s32 2048, 2048
          %401 = vsyncadd [#allocation15], %s400
          %s402 = sshll.u32 [#allocation16], 4
          %s403 = int_to_ptr.vmem [resolvable:$true] %s402
          %408 = dma.hbm_to_vmem [thread:$0]  %s11, 2048, %s403, [#allocation15], 64, 64, 4
        $region56: #{tpu_custom_call.1} parent=11 // pred_fallthru
          _
      $region12: #{tpu_custom_call.1} parent=5 // pred_fallthru
        _
      %p409 = scmp.lt.s32.totalorder %s26, 4
      // Predicated region
      $region57: #{tpu_custom_call.1} parent=5 // pred_check
        %p410 = pneg %p409
      $region58: #{tpu_custom_call.1} parent=5 // pred_check_branch
        %412 = sbr.rel (%p410) target = $region60
      $region59: #{tpu_custom_call.1} parent=5 // pred_region
        // Predicated region
        $region61: #{tpu_custom_call.1} parent=59 // pred_check
          %p413 = pneg %p60
        $region62: #{tpu_custom_call.1} parent=59 // pred_check_branch
          %415 = sbr.rel (%p413) target = $region64
        $region63: #{tpu_custom_call.1} parent=59 // pred_region
          %s416 = sand.u32 %s50, 1
          %s417 = scalar_lea.sflag [#allocation9], %s416
          %s418 = sand.u32 %s50, 1
          %s419 = smul.addr %s418, 64
          %s420 = scalar_lea.vmem [#allocation8], %s419
          %s421 = smul.u32 16, %s34
          %s423 = ssub.s32 1024, 1024
          %424 = vsyncadd %s417, %s423
          %s425 = smul.addr %s33, 32
          %s426 = sadd.s32 %s421, %s425
          %s427 = smul.addr %s426, 64
          %s428 = scalar_lea.hbm %s0, %s427
          %s429 = sshll.u32 %s420, 4
          %s430 = int_to_ptr.vmem [resolvable:$true] %s429
          %435 = dma.hbm_to_vmem [thread:$0]  %s428, 1024, %s430, %s417, 64, 64, 4
        $region64: #{tpu_custom_call.1} parent=59 // pred_fallthru
          _
      $region60: #{tpu_custom_call.1} parent=5 // pred_fallthru
        _
      %p436 = scmp.le.s32.totalorder 1, %s26
      %p437 = scmp.lt.s32.totalorder %s26, 5
      %p438 = pnand %p436, %p437
      %p439 = pneg %p438
      // Predicated region
      $region65: #{tpu_custom_call.1} parent=5 // pred_check
        _
      $region66: #{tpu_custom_call.1} parent=5 // pred_check_branch
        %441 = sbr.rel (%p438) target = $region68
      $region67: #{tpu_custom_call.1} parent=5 // pred_region
        %s442 = ssub.s32 %s26, 1
        %s443 = sand.u32 %s53, 1
        %s444 = scalar_lea.sflag [#allocation9], %s443
        %s445 = sand.u32 %s53, 1
        %s446 = smul.addr %s445, 64
        %s447 = scalar_lea.vmem [#allocation8], %s446
        // Predicated region
        $region69: #{tpu_custom_call.1} parent=67 // pred_check
          %p448 = pneg %p66
        $region70: #{tpu_custom_call.1} parent=67 // pred_check_branch
          %450 = sbr.rel (%p448) target = $region72
        $region71: #{tpu_custom_call.1} parent=67 // pred_region
          %451 = dma.done %s444, 1024
        $region72: #{tpu_custom_call.1} parent=67 // pred_fallthru
          _
        // Predicated region
        $region73: #{tpu_custom_call.1} parent=67 // pred_check
          %p452 = pneg %p108
        $region74: #{tpu_custom_call.1} parent=67 // pred_check_branch
          %454 = sbr.rel (%p452) target = $region76
        $region75: #{tpu_custom_call.1} parent=67 // pred_region
          %455 = dma.done [#allocation12], 4096
        $region76: #{tpu_custom_call.1} parent=67 // pred_fallthru
          _
        // Predicated region
        $region77: #{tpu_custom_call.1} parent=67 // pred_check
          %p456 = pneg %p171
        $region78: #{tpu_custom_call.1} parent=67 // pred_check_branch
          %458 = sbr.rel (%p456) target = $region80
        $region79: #{tpu_custom_call.1} parent=67 // pred_region
          %459 = dma.done [#allocation12], 64
        $region80: #{tpu_custom_call.1} parent=67 // pred_fallthru
          _
        // Predicated region
        $region81: #{tpu_custom_call.1} parent=67 // pred_check
          %p460 = pneg %p192
        $region82: #{tpu_custom_call.1} parent=67 // pred_check_branch
          %462 = sbr.rel (%p460) target = $region84
        $region83: #{tpu_custom_call.1} parent=67 // pred_region
          %463 = dma.done [#allocation15], 16
        $region84: #{tpu_custom_call.1} parent=67 // pred_fallthru
          _
        // Predicated region
        $region85: #{tpu_custom_call.1} parent=67 // pred_check
          %p464 = pneg %p297
        $region86: #{tpu_custom_call.1} parent=67 // pred_check_branch
          %466 = sbr.rel (%p464) target = $region88
        $region87: #{tpu_custom_call.1} parent=67 // pred_region
          %467 = dma.done [#allocation15], 2048
        $region88: #{tpu_custom_call.1} parent=67 // pred_fallthru
          _
        %s468 = sand.u32 %s53, 1
        %s469 = scalar_lea.sflag [#allocation9], %s468
        %s470 = sand.u32 %s53, 1
        %s471 = smul.addr %s470, 64
        %s472 = scalar_lea.vmem [#allocation8], %s471
        %p473 = pneg %p66
        %p474 = pneg %p63
        %p475 = pneg %p87
        %p476 = pneg %p84
        %p477 = pneg %p108
        %p478 = pneg %p105
        %p479 = pneg %p129
        %p480 = pneg %p126
        %p481 = pneg %p150
        %p482 = pneg %p147
        %p483 = pneg %p171
        %p484 = pneg %p168
        %p485 = pneg %p192
        %p486 = pneg %p189
        %p487 = pneg %p213
        %p488 = pneg %p210
        %p489 = pneg %p234
        %p490 = pneg %p231
        %p491 = pneg %p255
        %p492 = pneg %p252
        %p493 = pneg %p276
        %p494 = pneg %p273
        %p495 = pneg %p297
        %p496 = pneg %p294
        %p497 = pneg %p325
        %p498 = pneg %p322
        %s499 = sand.u32 %s312, 1
        %s500 = scalar_lea.sflag [#allocation10], %s499
        %s501 = sand.u32 %s312, 1
        %s502 = smul.addr %s501, 64
        %s503 = scalar_lea.vmem [#allocation17], %s502
        %s504 = smul.u32 16, %s36
        %s505 = smul.u32 16, %s36
        %p507 = scmp.eq.s32.totalorder %s36, 0
        // Predicated region
        $region89: #{tpu_custom_call.1} parent=67 // pred_check
          %p508 = pneg %p507
        $region90: #{tpu_custom_call.1} parent=67 // pred_check_branch
          %510 = sbr.rel (%p508) target = $region92
        $region91: #{tpu_custom_call.1} parent=67 // pred_region
          %511 = vst [vmem:[#allocation2] sm:$0xff] 0.0
          %512 = vst [vmem:[#allocation2 + $0x8] sm:$0xff] 0.0
          %513 = vst [vmem:[#allocation2 + $0x10] sm:$0xff] 0.0
          %514 = vst [vmem:[#allocation2 + $0x18] sm:$0xff] 0.0
          %515 = vst [vmem:[#allocation3] sm:$0xff] 0.0
          %516 = vst [vmem:[#allocation3 + $0x8] sm:$0xff] 0.0
          %517 = vst [vmem:[#allocation3 + $0x10] sm:$0xff] 0.0
          %518 = vst [vmem:[#allocation3 + $0x18] sm:$0xff] 0.0
        $region92: #{tpu_custom_call.1} parent=67 // pred_fallthru
          _
        %v519 = vld [vmem:[%s447] sm:$0xf]
        %v520 = vld [vmem:[%s447 + $0x4] sm:$0xf]
        %v521 = vld [vmem:[%s447 + $0x8] sm:$0xf]
        %v522 = vld [vmem:[%s447 + $0xc] sm:$0xf]
        %v523 = vld [vmem:[%s447 + $0x10] sm:$0xf]
        %v524 = vld [vmem:[%s447 + $0x14] sm:$0xf]
        %v525 = vld [vmem:[%s447 + $0x18] sm:$0xf]
        %v526 = vld [vmem:[%s447 + $0x1c] sm:$0xf]
        %v527 = vld [vmem:[%s447 + $0x20] sm:$0xf]
        %v528 = vld [vmem:[%s447 + $0x24] sm:$0xf]
        %v529 = vld [vmem:[%s447 + $0x28] sm:$0xf]
        %v530 = vld [vmem:[%s447 + $0x2c] sm:$0xf]
        %v531 = vld [vmem:[%s447 + $0x30] sm:$0xf]
        %v532 = vld [vmem:[%s447 + $0x34] sm:$0xf]
        %v533 = vld [vmem:[%s447 + $0x38] sm:$0xf]
        %v534 = vld [vmem:[%s447 + $0x3c] sm:$0xf]
        %v535 = vunpack.c.l.bf16 %v519
        %v536 = vunpack.c.l.bf16 %v520
        %v537 = vunpack.c.l.bf16 %v521
        %v538 = vunpack.c.l.bf16 %v522
        %v539 = vunpack.c.l.bf16 %v523
        %v540 = vunpack.c.l.bf16 %v524
        %v541 = vunpack.c.l.bf16 %v525
        %v542 = vunpack.c.l.bf16 %v526
        %v543 = vunpack.c.l.bf16 %v527
        %v544 = vunpack.c.l.bf16 %v528
        %v545 = vunpack.c.l.bf16 %v529
        %v546 = vunpack.c.l.bf16 %v530
        %v547 = vunpack.c.l.bf16 %v531
        %v548 = vunpack.c.l.bf16 %v532
        %v549 = vunpack.c.l.bf16 %v533
        %v550 = vunpack.c.l.bf16 %v534
        %v551 = vld [vmem:[%s1] sm:$0xff]
        %v552 = vld [vmem:[%s1 + $0x8] sm:$0xff]
        %v553 = vld [vmem:[%s1 + $0x10] sm:$0xff]
        %v554 = vld [vmem:[%s1 + $0x18] sm:$0xff]
        %v555 = vld [vmem:[%s1 + $0x20] sm:$0xff]
        %v556 = vld [vmem:[%s1 + $0x28] sm:$0xff]
        %v557 = vld [vmem:[%s1 + $0x30] sm:$0xff]
        %v558 = vld [vmem:[%s1 + $0x38] sm:$0xff]
        %v559 = vld [vmem:[%s1 + $0x40] sm:$0xff]
        %v560 = vld [vmem:[%s1 + $0x48] sm:$0xff]
        %v561 = vld [vmem:[%s1 + $0x50] sm:$0xff]
        %v562 = vld [vmem:[%s1 + $0x58] sm:$0xff]
        %v563 = vld [vmem:[%s1 + $0x60] sm:$0xff]
        %v564 = vld [vmem:[%s1 + $0x68] sm:$0xff]
        %v565 = vld [vmem:[%s1 + $0x70] sm:$0xff]
        %v566 = vld [vmem:[%s1 + $0x78] sm:$0xff]
        %v583 = vunpack.c.l.b16 %v519
        %v584 = vunpack.c.l.b16 %v520
        %v585 = vunpack.c.l.b16 %v521
        %v586 = vunpack.c.l.b16 %v522
        %v587 = vunpack.c.l.b16 %v523
        %v588 = vunpack.c.l.b16 %v524
        %v589 = vunpack.c.l.b16 %v525
        %v590 = vunpack.c.l.b16 %v526
        %v591 = vunpack.c.l.b16 %v527
        %v592 = vunpack.c.l.b16 %v528
        %v593 = vunpack.c.l.b16 %v529
        %v594 = vunpack.c.l.b16 %v530
        %v595 = vunpack.c.l.b16 %v531
        %v596 = vunpack.c.l.b16 %v532
        %v597 = vunpack.c.l.b16 %v533
        %v598 = vunpack.c.l.b16 %v534
        %v599 = vpack.c.b16 %v584, %v583
        %v600 = vpack.c.b16 %v586, %v585
        %v601 = vpack.c.b16 %v588, %v587
        %v602 = vpack.c.b16 %v590, %v589
        %v603 = vpack.c.b16 %v592, %v591
        %v604 = vpack.c.b16 %v594, %v593
        %v605 = vpack.c.b16 %v596, %v595
        %v606 = vpack.c.b16 %v598, %v597
        %v631 = vunpack.c.l.b16 %v551
        %v632 = vunpack.c.h.b16 %v551
        %v633 = vunpack.c.l.b16 %v552
        %v634 = vunpack.c.h.b16 %v552
        %v635 = vunpack.c.l.b16 %v553
        %v636 = vunpack.c.h.b16 %v553
        %v637 = vunpack.c.l.b16 %v554
        %v638 = vunpack.c.h.b16 %v554
        %v639 = vunpack.c.l.b16 %v555
        %v640 = vunpack.c.h.b16 %v555
        %v641 = vunpack.c.l.b16 %v556
        %v642 = vunpack.c.h.b16 %v556
        %v643 = vunpack.c.l.b16 %v557
        %v644 = vunpack.c.h.b16 %v557
        %v645 = vunpack.c.l.b16 %v558
        %v646 = vunpack.c.h.b16 %v558
        %v647 = vunpack.c.l.b16 %v559
        %v648 = vunpack.c.h.b16 %v559
        %v649 = vunpack.c.l.b16 %v560
        %v650 = vunpack.c.h.b16 %v560
        %v651 = vunpack.c.l.b16 %v561
        %v652 = vunpack.c.h.b16 %v561
        %v653 = vunpack.c.l.b16 %v562
        %v654 = vunpack.c.h.b16 %v562
        %v655 = vunpack.c.l.b16 %v563
        %v656 = vunpack.c.h.b16 %v563
        %v657 = vunpack.c.l.b16 %v564
        %v658 = vunpack.c.h.b16 %v564
        %v659 = vunpack.c.l.b16 %v565
        %v660 = vunpack.c.h.b16 %v565
        %v661 = vunpack.c.l.b16 %v566
        %v662 = vunpack.c.h.b16 %v566
        %v663 = vpack.c.b16 %v633, %v631
        %v664 = vpack.c.b16 %v634, %v632
        %v665 = vpack.c.b16 %v637, %v635
        %v666 = vpack.c.b16 %v638, %v636
        %v667 = vpack.c.b16 %v641, %v639
        %v668 = vpack.c.b16 %v642, %v640
        %v669 = vpack.c.b16 %v645, %v643
        %v670 = vpack.c.b16 %v646, %v644
        %v671 = vpack.c.b16 %v649, %v647
        %v672 = vpack.c.b16 %v650, %v648
        %v673 = vpack.c.b16 %v653, %v651
        %v674 = vpack.c.b16 %v654, %v652
        %v675 = vpack.c.b16 %v657, %v655
        %v676 = vpack.c.b16 %v658, %v656
        %v677 = vpack.c.b16 %v661, %v659
        %v678 = vpack.c.b16 %v662, %v660
        %695 = vmatprep.subr.bf16.mxu0 %v664
        %696 = vmatpush1.bf16.msra.mxu0 %v663
        %697 = vmatprep.subr.bf16.mxu0 %v666
        %698 = vmatpush1.bf16.msra.mxu0 %v665
        %699 = vmatprep.subr.bf16.mxu0 %v668
        %700 = vmatpush1.bf16.msra.mxu0 %v667
        %701 = vmatprep.subr.bf16.mxu0 %v670
        %702 = vmatpush1.bf16.msra.mxu0 %v669
        %703 = vmatprep.subr.bf16.mxu0 %v672
        %704 = vmatpush1.bf16.msra.mxu0 %v671
        %705 = vmatprep.subr.bf16.mxu0 %v674
        %706 = vmatpush1.bf16.msra.mxu0 %v673
        %707 = vmatprep.subr.bf16.mxu0 %v676
        %708 = vmatpush1.bf16.msra.mxu0 %v675
        %709 = vmatprep.subr.bf16.mxu0 %v678
        %710 = vmatpush1.bf16.msra.mxu0 %v677
        %711 = vmatprep.subr.bf16.mxu0 0
        %712 = vmatpush1.bf16.msra.mxu0 0
        %713 = vmatprep.subr.bf16.mxu0 0
        %714 = vmatpush1.bf16.msra.mxu0 0
        %715 = vmatprep.subr.bf16.mxu0 0
        %716 = vmatpush1.bf16.msra.mxu0 0
        %717 = vmatprep.subr.bf16.mxu0 0
        %718 = vmatpush1.bf16.msra.mxu0 0
        %719 = vmatprep.subr.bf16.mxu0 0
        %720 = vmatpush1.bf16.msra.mxu0 0
        %721 = vmatprep.subr.bf16.mxu0 0
        %722 = vmatpush1.bf16.msra.mxu0 0
        %723 = vmatprep.subr.bf16.mxu0 0
        %724 = vmatpush1.bf16.msra.mxu0 0
        %725 = vmatprep.subr.bf16.mxu0 0
        %726 = vmatpush1.bf16.msra.mxu0 0
        %727 = vmatprep.mubr.bf16.mxu0 0
        %728 = vmatmul.mubr.bf16.gmra.mrb[0].mxu0 %v599
        %v729 = vpop.f32.mrb[0].mxu0
        %v730 = vadd.f32 0.0, %v729
        %v731 = vpop.f32.mrb[0].mxu0
        %v732 = vadd.f32 0.0, %v731
        %v733 = vpop.f32.mrb[0].mxu0
        %v734 = vadd.f32 0.0, %v733
        %v735 = vpop.f32.mrb[0].mxu0
        %v736 = vadd.f32 0.0, %v735
        %737 = vmatprep.mubr.bf16.mxu0 0
        %738 = vmatmul.mubr.bf16.gmra.mrb[0].mxu0 %v600
        %v739 = vpop.f32.mrb[0].mxu0
        %v740 = vadd.f32 0.0, %v739
        %v741 = vpop.f32.mrb[0].mxu0
        %v742 = vadd.f32 0.0, %v741
        %v743 = vpop.f32.mrb[0].mxu0
        %v744 = vadd.f32 0.0, %v743
        %v745 = vpop.f32.mrb[0].mxu0
        %v746 = vadd.f32 0.0, %v745
        %747 = vmatprep.mubr.bf16.mxu0 0
        %748 = vmatmul.mubr.bf16.gmra.mrb[0].mxu0 %v601
        %v749 = vpop.f32.mrb[0].mxu0
        %v750 = vadd.f32 0.0, %v749
        %v751 = vpop.f32.mrb[0].mxu0
        %v752 = vadd.f32 0.0, %v751
        %v753 = vpop.f32.mrb[0].mxu0
        %v754 = vadd.f32 0.0, %v753
        %v755 = vpop.f32.mrb[0].mxu0
        %v756 = vadd.f32 0.0, %v755
        %757 = vmatprep.mubr.bf16.mxu0 0
        %758 = vmatmul.mubr.bf16.gmra.mrb[0].mxu0 %v602
        %v759 = vpop.f32.mrb[0].mxu0
        %v760 = vadd.f32 0.0, %v759
        %v761 = vpop.f32.mrb[0].mxu0
        %v762 = vadd.f32 0.0, %v761
        %v763 = vpop.f32.mrb[0].mxu0
        %v764 = vadd.f32 0.0, %v763
        %v765 = vpop.f32.mrb[0].mxu0
        %v766 = vadd.f32 0.0, %v765
        %767 = vmatprep.mubr.bf16.mxu0 0
        %768 = vmatmul.mubr.bf16.gmra.mrb[0].mxu0 %v603
        %v769 = vpop.f32.mrb[0].mxu0
        %v770 = vadd.f32 0.0, %v769
        %v771 = vpop.f32.mrb[0].mxu0
        %v772 = vadd.f32 0.0, %v771
        %v773 = vpop.f32.mrb[0].mxu0
        %v774 = vadd.f32 0.0, %v773
        %v775 = vpop.f32.mrb[0].mxu0
        %v776 = vadd.f32 0.0, %v775
        %777 = vmatprep.mubr.bf16.mxu0 0
        %778 = vmatmul.mubr.bf16.gmra.mrb[0].mxu0 %v604
        %v779 = vpop.f32.mrb[0].mxu0
        %v780 = vadd.f32 0.0, %v779
        %v781 = vpop.f32.mrb[0].mxu0
        %v782 = vadd.f32 0.0, %v781
        %v783 = vpop.f32.mrb[0].mxu0
        %v784 = vadd.f32 0.0, %v783
        %v785 = vpop.f32.mrb[0].mxu0
        %v786 = vadd.f32 0.0, %v785
        %787 = vmatprep.mubr.bf16.mxu0 0
        %788 = vmatmul.mubr.bf16.gmra.mrb[0].mxu0 %v605
        %v789 = vpop.f32.mrb[0].mxu0
        %v790 = vadd.f32 0.0, %v789
        %v791 = vpop.f32.mrb[0].mxu0
        %v792 = vadd.f32 0.0, %v791
        %v793 = vpop.f32.mrb[0].mxu0
        %v794 = vadd.f32 0.0, %v793
        %v795 = vpop.f32.mrb[0].mxu0
        %v796 = vadd.f32 0.0, %v795
        %797 = vmatprep.mubr.bf16.mxu0 0
        %798 = vmatmul.mubr.bf16.gmra.mrb[0].mxu0 %v606
        %v799 = vpop.f32.mrb[0].mxu0
        %v800 = vadd.f32 0.0, %v799
        %v801 = vpop.f32.mrb[0].mxu0
        %v802 = vadd.f32 0.0, %v801
        %v803 = vpop.f32.mrb[0].mxu0
        %v804 = vadd.f32 0.0, %v803
        %v805 = vpop.f32.mrb[0].mxu0
        %v806 = vadd.f32 0.0, %v805
        %807 = vdwg.mxu0
        %v808 = vld [vmem:[#allocation11] sm:$0xff]
        %v809 = vld [vmem:[#allocation11 + $0x8] sm:$0xff]
        %v810 = vld [vmem:[#allocation11 + $0x10] sm:$0xff]
        %v811 = vld [vmem:[#allocation11 + $0x18] sm:$0xff]
        %v812 = vld [vmem:[#allocation11 + $0x20] sm:$0xff]
        %v813 = vld [vmem:[#allocation11 + $0x28] sm:$0xff]
        %v814 = vld [vmem:[#allocation11 + $0x30] sm:$0xff]
        %v815 = vld [vmem:[#allocation11 + $0x38] sm:$0xff]
        %v816 = vld [vmem:[#allocation11 + $0x40] sm:$0xff]
        %v817 = vld [vmem:[#allocation11 + $0x48] sm:$0xff]
        %v818 = vld [vmem:[#allocation11 + $0x50] sm:$0xff]
        %v819 = vld [vmem:[#allocation11 + $0x58] sm:$0xff]
        %v820 = vld [vmem:[#allocation11 + $0x60] sm:$0xff]
        %v821 = vld [vmem:[#allocation11 + $0x68] sm:$0xff]
        %v822 = vld [vmem:[#allocation11 + $0x70] sm:$0xff]
        %v823 = vld [vmem:[#allocation11 + $0x78] sm:$0xff]
        %v824 = vld [vmem:[#allocation11 + $0x80] sm:$0xff]
        %v825 = vld [vmem:[#allocation11 + $0x88] sm:$0xff]
        %v826 = vld [vmem:[#allocation11 + $0x90] sm:$0xff]
        %v827 = vld [vmem:[#allocation11 + $0x98] sm:$0xff]
        %v828 = vld [vmem:[#allocation11 + $0xa0] sm:$0xff]
        %v829 = vld [vmem:[#allocation11 + $0xa8] sm:$0xff]
        %v830 = vld [vmem:[#allocation11 + $0xb0] sm:$0xff]
        %v831 = vld [vmem:[#allocation11 + $0xb8] sm:$0xff]
        %v832 = vld [vmem:[#allocation11 + $0xc0] sm:$0xff]
        %v833 = vld [vmem:[#allocation11 + $0xc8] sm:$0xff]
        %v834 = vld [vmem:[#allocation11 + $0xd0] sm:$0xff]
        %v835 = vld [vmem:[#allocation11 + $0xd8] sm:$0xff]
        %v836 = vld [vmem:[#allocation11 + $0xe0] sm:$0xff]
        %v837 = vld [vmem:[#allocation11 + $0xe8] sm:$0xff]
        %v838 = vld [vmem:[#allocation11 + $0xf0] sm:$0xff]
        %v839 = vld [vmem:[#allocation11 + $0xf8] sm:$0xff]
        %v872 = vunpack.c.l.b16 %v808
        %v873 = vunpack.c.h.b16 %v808
        %v874 = vunpack.c.l.b16 %v809
        %v875 = vunpack.c.h.b16 %v809
        %v876 = vunpack.c.l.b16 %v810
        %v877 = vunpack.c.h.b16 %v810
        %v878 = vunpack.c.l.b16 %v811
        %v879 = vunpack.c.h.b16 %v811
        %v880 = vunpack.c.l.b16 %v812
        %v881 = vunpack.c.h.b16 %v812
        %v882 = vunpack.c.l.b16 %v813
        %v883 = vunpack.c.h.b16 %v813
        %v884 = vunpack.c.l.b16 %v814
        %v885 = vunpack.c.h.b16 %v814
        %v886 = vunpack.c.l.b16 %v815
        %v887 = vunpack.c.h.b16 %v815
        %v888 = vunpack.c.l.b16 %v816
        %v889 = vunpack.c.h.b16 %v816
        %v890 = vunpack.c.l.b16 %v817
        %v891 = vunpack.c.h.b16 %v817
        %v892 = vunpack.c.l.b16 %v818
        %v893 = vunpack.c.h.b16 %v818
        %v894 = vunpack.c.l.b16 %v819
        %v895 = vunpack.c.h.b16 %v819
        %v896 = vunpack.c.l.b16 %v820
        %v897 = vunpack.c.h.b16 %v820
        %v898 = vunpack.c.l.b16 %v821
        %v899 = vunpack.c.h.b16 %v821
        %v900 = vunpack.c.l.b16 %v822
        %v901 = vunpack.c.h.b16 %v822
        %v902 = vunpack.c.l.b16 %v823
        %v903 = vunpack.c.h.b16 %v823
        %v904 = vunpack.c.l.b16 %v824
        %v905 = vunpack.c.h.b16 %v824
        %v906 = vunpack.c.l.b16 %v825
        %v907 = vunpack.c.h.b16 %v825
        %v908 = vunpack.c.l.b16 %v826
        %v909 = vunpack.c.h.b16 %v826
        %v910 = vunpack.c.l.b16 %v827
        %v911 = vunpack.c.h.b16 %v827
        %v912 = vunpack.c.l.b16 %v828
        %v913 = vunpack.c.h.b16 %v828
        %v914 = vunpack.c.l.b16 %v829
        %v915 = vunpack.c.h.b16 %v829
        %v916 = vunpack.c.l.b16 %v830
        %v917 = vunpack.c.h.b16 %v830
        %v918 = vunpack.c.l.b16 %v831
        %v919 = vunpack.c.h.b16 %v831
        %v920 = vunpack.c.l.b16 %v832
        %v921 = vunpack.c.h.b16 %v832
        %v922 = vunpack.c.l.b16 %v833
        %v923 = vunpack.c.h.b16 %v833
        %v924 = vunpack.c.l.b16 %v834
        %v925 = vunpack.c.h.b16 %v834
        %v926 = vunpack.c.l.b16 %v835
        %v927 = vunpack.c.h.b16 %v835
        %v928 = vunpack.c.l.b16 %v836
        %v929 = vunpack.c.h.b16 %v836
        %v930 = vunpack.c.l.b16 %v837
        %v931 = vunpack.c.h.b16 %v837
        %v932 = vunpack.c.l.b16 %v838
        %v933 = vunpack.c.h.b16 %v838
        %v934 = vunpack.c.l.b16 %v839
        %v935 = vunpack.c.h.b16 %v839
        %v936 = vpack.c.b16 %v876, %v872
        %v937 = vpack.c.b16 %v877, %v873
        %v938 = vpack.c.b16 %v878, %v874
        %v939 = vpack.c.b16 %v879, %v875
        %v940 = vpack.c.b16 %v884, %v880
        %v941 = vpack.c.b16 %v885, %v881
        %v942 = vpack.c.b16 %v886, %v882
        %v943 = vpack.c.b16 %v887, %v883
        %v944 = vpack.c.b16 %v892, %v888
        %v945 = vpack.c.b16 %v893, %v889
        %v946 = vpack.c.b16 %v894, %v890
        %v947 = vpack.c.b16 %v895, %v891
        %v948 = vpack.c.b16 %v900, %v896
        %v949 = vpack.c.b16 %v901, %v897
        %v950 = vpack.c.b16 %v902, %v898
        %v951 = vpack.c.b16 %v903, %v899
        %v952 = vpack.c.b16 %v908, %v904
        %v953 = vpack.c.b16 %v909, %v905
        %v954 = vpack.c.b16 %v910, %v906
        %v955 = vpack.c.b16 %v911, %v907
        %v956 = vpack.c.b16 %v916, %v912
        %v957 = vpack.c.b16 %v917, %v913
        %v958 = vpack.c.b16 %v918, %v914
        %v959 = vpack.c.b16 %v919, %v915
        %v960 = vpack.c.b16 %v924, %v920
        %v961 = vpack.c.b16 %v925, %v921
        %v962 = vpack.c.b16 %v926, %v922
        %v963 = vpack.c.b16 %v927, %v923
        %v964 = vpack.c.b16 %v932, %v928
        %v965 = vpack.c.b16 %v933, %v929
        %v966 = vpack.c.b16 %v934, %v930
        %v967 = vpack.c.b16 %v935, %v931
        %1000 = vmatprep.subr.bf16.mxu0 %v937
        %1001 = vmatpush1.bf16.msra.mxu0 %v936
        %1002 = vmatprep.subr.bf16.mxu0 %v941
        %1003 = vmatpush1.bf16.msra.mxu0 %v940
        %1004 = vmatprep.subr.bf16.mxu0 %v945
        %1005 = vmatpush1.bf16.msra.mxu0 %v944
        %1006 = vmatprep.subr.bf16.mxu0 %v949
        %1007 = vmatpush1.bf16.msra.mxu0 %v948
        %1008 = vmatprep.subr.bf16.mxu0 %v953
        %1009 = vmatpush1.bf16.msra.mxu0 %v952
        %1010 = vmatprep.subr.bf16.mxu0 %v957
        %1011 = vmatpush1.bf16.msra.mxu0 %v956
        %1012 = vmatprep.subr.bf16.mxu0 %v961
        %1013 = vmatpush1.bf16.msra.mxu0 %v960
        %1014 = vmatprep.subr.bf16.mxu0 %v965
        %1015 = vmatpush1.bf16.msra.mxu0 %v964
        %1016 = vmatprep.subr.bf16.mxu0 0
        %1017 = vmatpush1.bf16.msra.mxu0 0
        %1018 = vmatprep.subr.bf16.mxu0 0
        %1019 = vmatpush1.bf16.msra.mxu0 0
        %1020 = vmatprep.subr.bf16.mxu0 0
        %1021 = vmatpush1.bf16.msra.mxu0 0
        %1022 = vmatprep.subr.bf16.mxu0 0
        %1023 = vmatpush1.bf16.msra.mxu0 0
        %1024 = vmatprep.subr.bf16.mxu0 0
        %1025 = vmatpush1.bf16.msra.mxu0 0
        %1026 = vmatprep.subr.bf16.mxu0 0
        %1027 = vmatpush1.bf16.msra.mxu0 0
        %1028 = vmatprep.subr.bf16.mxu0 0
        %1029 = vmatpush1.bf16.msra.mxu0 0
        %1030 = vmatprep.subr.bf16.mxu0 0
        %1031 = vmatpush1.bf16.msra.mxu0 0
        %1032 = vmatprep.mubr.bf16.mxu0 0
        %1033 = vmatmul.mubr.bf16.gmra.mrb[0].mxu0 %v599
        %v1034 = vpop.f32.mrb[0].mxu0
        %v1035 = vadd.f32 0.0, %v1034
        %v1036 = vpop.f32.mrb[0].mxu0
        %v1037 = vadd.f32 0.0, %v1036
        %v1038 = vpop.f32.mrb[0].mxu0
        %v1039 = vadd.f32 0.0, %v1038
        %v1040 = vpop.f32.mrb[0].mxu0
        %v1041 = vadd.f32 0.0, %v1040
        %1042 = vmatprep.mubr.bf16.mxu0 0
        %1043 = vmatmul.mubr.bf16.gmra.mrb[0].mxu0 %v600
        %v1044 = vpop.f32.mrb[0].mxu0
        %v1045 = vadd.f32 0.0, %v1044
        %v1046 = vpop.f32.mrb[0].mxu0
        %v1047 = vadd.f32 0.0, %v1046
        %v1048 = vpop.f32.mrb[0].mxu0
        %v1049 = vadd.f32 0.0, %v1048
        %v1050 = vpop.f32.mrb[0].mxu0
        %v1051 = vadd.f32 0.0, %v1050
        %1052 = vmatprep.mubr.bf16.mxu0 0
        %1053 = vmatmul.mubr.bf16.gmra.mrb[0].mxu0 %v601
        %v1054 = vpop.f32.mrb[0].mxu0
        %v1055 = vadd.f32 0.0, %v1054
        %v1056 = vpop.f32.mrb[0].mxu0
        %v1057 = vadd.f32 0.0, %v1056
        %v1058 = vpop.f32.mrb[0].mxu0
        %v1059 = vadd.f32 0.0, %v1058
        %v1060 = vpop.f32.mrb[0].mxu0
        %v1061 = vadd.f32 0.0, %v1060
        %1062 = vmatprep.mubr.bf16.mxu0 0
        %1063 = vmatmul.mubr.bf16.gmra.mrb[0].mxu0 %v602
        %v1064 = vpop.f32.mrb[0].mxu0
        %v1065 = vadd.f32 0.0, %v1064
        %v1066 = vpop.f32.mrb[0].mxu0
        %v1067 = vadd.f32 0.0, %v1066
        %v1068 = vpop.f32.mrb[0].mxu0
        %v1069 = vadd.f32 0.0, %v1068
        %v1070 = vpop.f32.mrb[0].mxu0
        %v1071 = vadd.f32 0.0, %v1070
        %1072 = vmatprep.mubr.bf16.mxu0 0
        %1073 = vmatmul.mubr.bf16.gmra.mrb[0].mxu0 %v603
        %v1074 = vpop.f32.mrb[0].mxu0
        %v1075 = vadd.f32 0.0, %v1074
        %v1076 = vpop.f32.mrb[0].mxu0
        %v1077 = vadd.f32 0.0, %v1076
        %v1078 = vpop.f32.mrb[0].mxu0
        %v1079 = vadd.f32 0.0, %v1078
        %v1080 = vpop.f32.mrb[0].mxu0
        %v1081 = vadd.f32 0.0, %v1080
        %1082 = vmatprep.mubr.bf16.mxu0 0
        %1083 = vmatmul.mubr.bf16.gmra.mrb[0].mxu0 %v604
        %v1084 = vpop.f32.mrb[0].mxu0
        %v1085 = vadd.f32 0.0, %v1084
        %v1086 = vpop.f32.mrb[0].mxu0
        %v1087 = vadd.f32 0.0, %v1086
        %v1088 = vpop.f32.mrb[0].mxu0
        %v1089 = vadd.f32 0.0, %v1088
        %v1090 = vpop.f32.mrb[0].mxu0
        %v1091 = vadd.f32 0.0, %v1090
        %1092 = vmatprep.mubr.bf16.mxu0 0
        %1093 = vmatmul.mubr.bf16.gmra.mrb[0].mxu0 %v605
        %v1094 = vpop.f32.mrb[0].mxu0
        %v1095 = vadd.f32 0.0, %v1094
        %v1096 = vpop.f32.mrb[0].mxu0
        %v1097 = vadd.f32 0.0, %v1096
        %v1098 = vpop.f32.mrb[0].mxu0
        %v1099 = vadd.f32 0.0, %v1098
        %v1100 = vpop.f32.mrb[0].mxu0
        %v1101 = vadd.f32 0.0, %v1100
        %1102 = vmatprep.mubr.bf16.mxu0 0
        %1103 = vmatmul.mubr.bf16.gmra.mrb[0].mxu0 %v606
        %v1104 = vpop.f32.mrb[0].mxu0
        %v1105 = vadd.f32 0.0, %v1104
        %v1106 = vpop.f32.mrb[0].mxu0
        %v1107 = vadd.f32 0.0, %v1106
        %v1108 = vpop.f32.mrb[0].mxu0
        %v1109 = vadd.f32 0.0, %v1108
        %v1110 = vpop.f32.mrb[0].mxu0
        %v1111 = vadd.f32 0.0, %v1110
        %1112 = vdwg.mxu0
        %1113 = vmatprep.subr.bf16.mxu0 %v939
        %1114 = vmatpush1.bf16.msra.mxu0 %v938
        %1115 = vmatprep.subr.bf16.mxu0 %v943
        %1116 = vmatpush1.bf16.msra.mxu0 %v942
        %1117 = vmatprep.subr.bf16.mxu0 %v947
        %1118 = vmatpush1.bf16.msra.mxu0 %v946
        %1119 = vmatprep.subr.bf16.mxu0 %v951
        %1120 = vmatpush1.bf16.msra.mxu0 %v950
        %1121 = vmatprep.subr.bf16.mxu0 %v955
        %1122 = vmatpush1.bf16.msra.mxu0 %v954
        %1123 = vmatprep.subr.bf16.mxu0 %v959
        %1124 = vmatpush1.bf16.msra.mxu0 %v958
        %1125 = vmatprep.subr.bf16.mxu0 %v963
        %1126 = vmatpush1.bf16.msra.mxu0 %v962
        %1127 = vmatprep.subr.bf16.mxu0 %v967
        %1128 = vmatpush1.bf16.msra.mxu0 %v966
        %1129 = vmatprep.subr.bf16.mxu0 0
        %1130 = vmatpush1.bf16.msra.mxu0 0
        %1131 = vmatprep.subr.bf16.mxu0 0
        %1132 = vmatpush1.bf16.msra.mxu0 0
        %1133 = vmatprep.subr.bf16.mxu0 0
        %1134 = vmatpush1.bf16.msra.mxu0 0
        %1135 = vmatprep.subr.bf16.mxu0 0
        %1136 = vmatpush1.bf16.msra.mxu0 0
        %1137 = vmatprep.subr.bf16.mxu0 0
        %1138 = vmatpush1.bf16.msra.mxu0 0
        %1139 = vmatprep.subr.bf16.mxu0 0
        %1140 = vmatpush1.bf16.msra.mxu0 0
        %1141 = vmatprep.subr.bf16.mxu0 0
        %1142 = vmatpush1.bf16.msra.mxu0 0
        %1143 = vmatprep.subr.bf16.mxu0 0
        %1144 = vmatpush1.bf16.msra.mxu0 0
        %1145 = vmatprep.mubr.bf16.mxu0 0
        %1146 = vmatmul.mubr.bf16.gmra.mrb[0].mxu0 %v599
        %v1147 = vpop.f32.mrb[0].mxu0
        %v1148 = vadd.f32 0.0, %v1147
        %v1149 = vpop.f32.mrb[0].mxu0
        %v1150 = vadd.f32 0.0, %v1149
        %v1151 = vpop.f32.mrb[0].mxu0
        %v1152 = vadd.f32 0.0, %v1151
        %v1153 = vpop.f32.mrb[0].mxu0
        %v1154 = vadd.f32 0.0, %v1153
        %1155 = vmatprep.mubr.bf16.mxu0 0
        %1156 = vmatmul.mubr.bf16.gmra.mrb[0].mxu0 %v600
        %v1157 = vpop.f32.mrb[0].mxu0
        %v1158 = vadd.f32 0.0, %v1157
        %v1159 = vpop.f32.mrb[0].mxu0
        %v1160 = vadd.f32 0.0, %v1159
        %v1161 = vpop.f32.mrb[0].mxu0
        %v1162 = vadd.f32 0.0, %v1161
        %v1163 = vpop.f32.mrb[0].mxu0
        %v1164 = vadd.f32 0.0, %v1163
        %1165 = vmatprep.mubr.bf16.mxu0 0
        %1166 = vmatmul.mubr.bf16.gmra.mrb[0].mxu0 %v601
        %v1167 = vpop.f32.mrb[0].mxu0
        %v1168 = vadd.f32 0.0, %v1167
        %v1169 = vpop.f32.mrb[0].mxu0
        %v1170 = vadd.f32 0.0, %v1169
        %v1171 = vpop.f32.mrb[0].mxu0
        %v1172 = vadd.f32 0.0, %v1171
        %v1173 = vpop.f32.mrb[0].mxu0
        %v1174 = vadd.f32 0.0, %v1173
        %1175 = vmatprep.mubr.bf16.mxu0 0
        %1176 = vmatmul.mubr.bf16.gmra.mrb[0].mxu0 %v602
        %v1177 = vpop.f32.mrb[0].mxu0
        %v1178 = vadd.f32 0.0, %v1177
        %v1179 = vpop.f32.mrb[0].mxu0
        %v1180 = vadd.f32 0.0, %v1179
        %v1181 = vpop.f32.mrb[0].mxu0
        %v1182 = vadd.f32 0.0, %v1181
        %v1183 = vpop.f32.mrb[0].mxu0
        %v1184 = vadd.f32 0.0, %v1183
        %1185 = vmatprep.mubr.bf16.mxu0 0
        %1186 = vmatmul.mubr.bf16.gmra.mrb[0].mxu0 %v603
        %v1187 = vpop.f32.mrb[0].mxu0
        %v1188 = vadd.f32 0.0, %v1187
        %v1189 = vpop.f32.mrb[0].mxu0
        %v1190 = vadd.f32 0.0, %v1189
        %v1191 = vpop.f32.mrb[0].mxu0
        %v1192 = vadd.f32 0.0, %v1191
        %v1193 = vpop.f32.mrb[0].mxu0
        %v1194 = vadd.f32 0.0, %v1193
        %1195 = vmatprep.mubr.bf16.mxu0 0
        %1196 = vmatmul.mubr.bf16.gmra.mrb[0].mxu0 %v604
        %v1197 = vpop.f32.mrb[0].mxu0
        %v1198 = vadd.f32 0.0, %v1197
        %v1199 = vpop.f32.mrb[0].mxu0
        %v1200 = vadd.f32 0.0, %v1199
        %v1201 = vpop.f32.mrb[0].mxu0
        %v1202 = vadd.f32 0.0, %v1201
        %v1203 = vpop.f32.mrb[0].mxu0
        %v1204 = vadd.f32 0.0, %v1203
        %1205 = vmatprep.mubr.bf16.mxu0 0
        %1206 = vmatmul.mubr.bf16.gmra.mrb[0].mxu0 %v605
        %v1207 = vpop.f32.mrb[0].mxu0
        %v1208 = vadd.f32 0.0, %v1207
        %v1209 = vpop.f32.mrb[0].mxu0
        %v1210 = vadd.f32 0.0, %v1209
        %v1211 = vpop.f32.mrb[0].mxu0
        %v1212 = vadd.f32 0.0, %v1211
        %v1213 = vpop.f32.mrb[0].mxu0
        %v1214 = vadd.f32 0.0, %v1213
        %1215 = vmatprep.mubr.bf16.mxu0 0
        %1216 = vmatmul.mubr.bf16.gmra.mrb[0].mxu0 %v606
        %v1217 = vpop.f32.mrb[0].mxu0
        %v1218 = vadd.f32 0.0, %v1217
        %v1219 = vpop.f32.mrb[0].mxu0
        %v1220 = vadd.f32 0.0, %v1219
        %v1221 = vpop.f32.mrb[0].mxu0
        %v1222 = vadd.f32 0.0, %v1221
        %v1223 = vpop.f32.mrb[0].mxu0
        %v1224 = vadd.f32 0.0, %v1223
        %1225 = vdwg.mxu0
        %v1226 = vld [vmem:[%s3] sm:$0xff]
        %v1227 = vld [vmem:[%s3 + $0x8] sm:$0xff]
        %v1228 = vld [vmem:[%s3 + $0x10] sm:$0xff]
        %v1229 = vld [vmem:[%s3 + $0x18] sm:$0xff]
        %v1230 = vld [vmem:[%s3 + $0x20] sm:$0xff]
        %v1231 = vld [vmem:[%s3 + $0x28] sm:$0xff]
        %v1232 = vld [vmem:[%s3 + $0x30] sm:$0xff]
        %v1233 = vld [vmem:[%s3 + $0x38] sm:$0xff]
        %v1234 = vld [vmem:[%s3 + $0x40] sm:$0xff]
        %v1235 = vld [vmem:[%s3 + $0x48] sm:$0xff]
        %v1236 = vld [vmem:[%s3 + $0x50] sm:$0xff]
        %v1237 = vld [vmem:[%s3 + $0x58] sm:$0xff]
        %v1238 = vld [vmem:[%s3 + $0x60] sm:$0xff]
        %v1239 = vld [vmem:[%s3 + $0x68] sm:$0xff]
        %v1240 = vld [vmem:[%s3 + $0x70] sm:$0xff]
        %v1241 = vld [vmem:[%s3 + $0x78] sm:$0xff]
        %v1242 = vld [vmem:[#allocation2] sm:$0x7]
        %v1243 = vld [vmem:[#allocation2 + $0x8] sm:$0x7]
        %v1244 = vld [vmem:[#allocation2 + $0x10] sm:$0x7]
        %v1245 = vld [vmem:[#allocation2 + $0x18] sm:$0x7]
        %vm1310 = vcmask 1042432
        %v1311 = vrot.slane %v1035, 5
        %v1312 = vrot.slane %v1037, 5
        %v1313 = vrot.slane %v1148, 5
        %v1314 = vrot.slane %v1150, 5
        %v1315 = vrot.slane %v1039, 5
        %v1316 = vsel %vm1310, %v1311, %v1315
        %v1317 = vrot.slane %v1041, 5
        %v1318 = vsel %vm1310, %v1312, %v1317
        %v1319 = vrot.slane %v1152, 5
        %v1320 = vsel %vm1310, %v1313, %v1319
        %v1321 = vrot.slane %v1154, 5
        %v1322 = vsel %vm1310, %v1314, %v1321
        %v1323 = vrot.slane %v1045, 5
        %v1324 = vsel %vm1310, %v1315, %v1323
        %v1325 = vrot.slane %v1047, 5
        %v1326 = vsel %vm1310, %v1317, %v1325
        %v1327 = vrot.slane %v1158, 5
        %v1328 = vsel %vm1310, %v1319, %v1327
        %v1329 = vrot.slane %v1160, 5
        %v1330 = vsel %vm1310, %v1321, %v1329
        %v1331 = vrot.slane %v1049, 5
        %v1332 = vsel %vm1310, %v1323, %v1331
        %v1333 = vrot.slane %v1051, 5
        %v1334 = vsel %vm1310, %v1325, %v1333
        %v1335 = vrot.slane %v1162, 5
        %v1336 = vsel %vm1310, %v1327, %v1335
        %v1337 = vrot.slane %v1164, 5
        %v1338 = vsel %vm1310, %v1329, %v1337
        %v1339 = vrot.slane %v1055, 5
        %v1340 = vsel %vm1310, %v1331, %v1339
        %v1341 = vrot.slane %v1057, 5
        %v1342 = vsel %vm1310, %v1333, %v1341
        %v1343 = vrot.slane %v1168, 5
        %v1344 = vsel %vm1310, %v1335, %v1343
        %v1345 = vrot.slane %v1170, 5
        %v1346 = vsel %vm1310, %v1337, %v1345
        %v1347 = vrot.slane %v1059, 5
        %v1348 = vsel %vm1310, %v1339, %v1347
        %v1349 = vrot.slane %v1061, 5
        %v1350 = vsel %vm1310, %v1341, %v1349
        %v1351 = vrot.slane %v1172, 5
        %v1352 = vsel %vm1310, %v1343, %v1351
        %v1353 = vrot.slane %v1174, 5
        %v1354 = vsel %vm1310, %v1345, %v1353
        %v1355 = vrot.slane %v1065, 5
        %v1356 = vsel %vm1310, %v1347, %v1355
        %v1357 = vrot.slane %v1067, 5
        %v1358 = vsel %vm1310, %v1349, %v1357
        %v1359 = vrot.slane %v1178, 5
        %v1360 = vsel %vm1310, %v1351, %v1359
        %v1361 = vrot.slane %v1180, 5
        %v1362 = vsel %vm1310, %v1353, %v1361
        %v1363 = vrot.slane %v1069, 5
        %v1364 = vsel %vm1310, %v1355, %v1363
        %v1365 = vrot.slane %v1071, 5
        %v1366 = vsel %vm1310, %v1357, %v1365
        %v1367 = vrot.slane %v1182, 5
        %v1368 = vsel %vm1310, %v1359, %v1367
        %v1369 = vrot.slane %v1184, 5
        %v1370 = vsel %vm1310, %v1361, %v1369
        %v1371 = vrot.slane %v1075, 5
        %v1372 = vsel %vm1310, %v1363, %v1371
        %v1373 = vrot.slane %v1077, 5
        %v1374 = vsel %vm1310, %v1365, %v1373
        %v1375 = vrot.slane %v1188, 5
        %v1376 = vsel %vm1310, %v1367, %v1375
        %v1377 = vrot.slane %v1190, 5
        %v1378 = vsel %vm1310, %v1369, %v1377
        %v1379 = vrot.slane %v1079, 5
        %v1380 = vsel %vm1310, %v1371, %v1379
        %v1381 = vrot.slane %v1081, 5
        %v1382 = vsel %vm1310, %v1373, %v1381
        %v1383 = vrot.slane %v1192, 5
        %v1384 = vsel %vm1310, %v1375, %v1383
        %v1385 = vrot.slane %v1194, 5
        %v1386 = vsel %vm1310, %v1377, %v1385
        %v1387 = vrot.slane %v1085, 5
        %v1388 = vsel %vm1310, %v1379, %v1387
        %v1389 = vrot.slane %v1087, 5
        %v1390 = vsel %vm1310, %v1381, %v1389
        %v1391 = vrot.slane %v1198, 5
        %v1392 = vsel %vm1310, %v1383, %v1391
        %v1393 = vrot.slane %v1200, 5
        %v1394 = vsel %vm1310, %v1385, %v1393
        %v1395 = vrot.slane %v1089, 5
        %v1396 = vsel %vm1310, %v1387, %v1395
        %v1397 = vrot.slane %v1091, 5
        %v1398 = vsel %vm1310, %v1389, %v1397
        %v1399 = vrot.slane %v1202, 5
        %v1400 = vsel %vm1310, %v1391, %v1399
        %v1401 = vrot.slane %v1204, 5
        %v1402 = vsel %vm1310, %v1393, %v1401
        %v1403 = vrot.slane %v1095, 5
        %v1404 = vsel %vm1310, %v1395, %v1403
        %v1405 = vrot.slane %v1097, 5
        %v1406 = vsel %vm1310, %v1397, %v1405
        %v1407 = vrot.slane %v1208, 5
        %v1408 = vsel %vm1310, %v1399, %v1407
        %v1409 = vrot.slane %v1210, 5
        %v1410 = vsel %vm1310, %v1401, %v1409
        %v1411 = vrot.slane %v1099, 5
        %v1412 = vsel %vm1310, %v1403, %v1411
        %v1413 = vrot.slane %v1101, 5
        %v1414 = vsel %vm1310, %v1405, %v1413
        %v1415 = vrot.slane %v1212, 5
        %v1416 = vsel %vm1310, %v1407, %v1415
        %v1417 = vrot.slane %v1214, 5
        %v1418 = vsel %vm1310, %v1409, %v1417
        %v1419 = vrot.slane %v1105, 5
        %v1420 = vsel %vm1310, %v1411, %v1419
        %v1421 = vrot.slane %v1107, 5
        %v1422 = vsel %vm1310, %v1413, %v1421
        %v1423 = vrot.slane %v1218, 5
        %v1424 = vsel %vm1310, %v1415, %v1423
        %v1425 = vrot.slane %v1220, 5
        %v1426 = vsel %vm1310, %v1417, %v1425
        %v1427 = vrot.slane %v1109, 5
        %v1428 = vsel %vm1310, %v1419, %v1427
        %v1429 = vrot.slane %v1111, 5
        %v1430 = vsel %vm1310, %v1421, %v1429
        %v1431 = vrot.slane %v1222, 5
        %v1432 = vsel %vm1310, %v1423, %v1431
        %v1433 = vrot.slane %v1224, 5
        %v1434 = vsel %vm1310, %v1425, %v1433
        %v1503 = vsel %vm1310, %v1242, %v1311
        %v1504 = vsel %vm1310, %v1243, %v1312
        %v1505 = vsel %vm1310, %v1244, %v1313
        %v1506 = vsel %vm1310, %v1245, %v1314
        %v1507 = vld [vmem:[%s4] sm:$0xff]
        %v1508 = vld [vmem:[%s4 + $0x8] sm:$0xff]
        %v1509 = vld [vmem:[#allocation13] sm:$0xf]
        %v1511 = vlaneseq
        %v1512 = vshrl.u32 %v1511, 7
        %v1513 = vsub.s32 0, %v1512
        %v1514 = vrot.slane %v1509, %v1513
        %v1515 = vlaneseq
        %v1516 = vshrl.u32 %v1515, 7
        %v1517 = vsub.s32 1, %v1516
        %v1518 = vrot.slane %v1509, %v1517
        %v1519 = vlaneseq
        %v1520 = vshrl.u32 %v1519, 7
        %v1521 = vsub.s32 2, %v1520
        %v1522 = vrot.slane %v1509, %v1521
        %v1523 = vlaneseq
        %v1524 = vshrl.u32 %v1523, 7
        %v1525 = vsub.s32 3, %v1524
        %v1526 = vrot.slane %v1509, %v1525
        %v1533 = vlaneseq
        %v1534 = vshrl.u32 %v1533, 7
        %v1535 = vsub.s32 0, %v1534
        %v1536 = vrot.slane %v1507, %v1535
        %v1537 = vlaneseq
        %v1538 = vshrl.u32 %v1537, 7
        %v1539 = vsub.s32 4, %v1538
        %v1540 = vrot.slane %v1507, %v1539
        %v1541 = vlaneseq
        %v1542 = vshrl.u32 %v1541, 7
        %v1543 = vsub.s32 0, %v1542
        %v1544 = vrot.slane %v1508, %v1543
        %v1545 = vlaneseq
        %v1546 = vshrl.u32 %v1545, 7
        %v1547 = vsub.s32 4, %v1546
        %v1548 = vrot.slane %v1508, %v1547
        %v1553 = vlaneseq
        %v1554 = vshrl.u32 %v1553, 7
        %v1555 = vsub.s32 0, %v1554
        %v1556 = vrot.slane %v1536, %v1555
        %v1557 = vlaneseq
        %v1558 = vshrl.u32 %v1557, 7
        %v1559 = vsub.s32 0, %v1558
        %v1560 = vrot.slane %v1540, %v1559
        %v1561 = vlaneseq
        %v1562 = vshrl.u32 %v1561, 7
        %v1563 = vsub.s32 0, %v1562
        %v1564 = vrot.slane %v1544, %v1563
        %v1565 = vlaneseq
        %v1566 = vshrl.u32 %v1565, 7
        %v1567 = vsub.s32 0, %v1566
        %v1568 = vrot.slane %v1548, %v1567
        %v1569 = vmul.f32 %v1556, %v1503
        %v1570 = vmul.f32 %v1560, %v1504
        %v1571 = vmul.f32 %v1564, %v1505
        %v1572 = vmul.f32 %v1568, %v1506
        %v1573 = vmul.f32 %v1556, %v1316
        %v1574 = vmul.f32 %v1560, %v1318
        %v1575 = vmul.f32 %v1564, %v1320
        %v1576 = vmul.f32 %v1568, %v1322
        %v1577 = vmul.f32 %v1556, %v1324
        %v1578 = vmul.f32 %v1560, %v1326
        %v1579 = vmul.f32 %v1564, %v1328
        %v1580 = vmul.f32 %v1568, %v1330
        %v1581 = vmul.f32 %v1556, %v1332
        %v1582 = vmul.f32 %v1560, %v1334
        %v1583 = vmul.f32 %v1564, %v1336
        %v1584 = vmul.f32 %v1568, %v1338
        %v1585 = vmul.f32 %v1556, %v1340
        %v1586 = vmul.f32 %v1560, %v1342
        %v1587 = vmul.f32 %v1564, %v1344
        %v1588 = vmul.f32 %v1568, %v1346
        %v1589 = vmul.f32 %v1556, %v1348
        %v1590 = vmul.f32 %v1560, %v1350
        %v1591 = vmul.f32 %v1564, %v1352
        %v1592 = vmul.f32 %v1568, %v1354
        %v1593 = vmul.f32 %v1556, %v1356
        %v1594 = vmul.f32 %v1560, %v1358
        %v1595 = vmul.f32 %v1564, %v1360
        %v1596 = vmul.f32 %v1568, %v1362
        %v1597 = vmul.f32 %v1556, %v1364
        %v1598 = vmul.f32 %v1560, %v1366
        %v1599 = vmul.f32 %v1564, %v1368
        %v1600 = vmul.f32 %v1568, %v1370
        %v1601 = vmul.f32 %v1556, %v1372
        %v1602 = vmul.f32 %v1560, %v1374
        %v1603 = vmul.f32 %v1564, %v1376
        %v1604 = vmul.f32 %v1568, %v1378
        %v1605 = vmul.f32 %v1556, %v1380
        %v1606 = vmul.f32 %v1560, %v1382
        %v1607 = vmul.f32 %v1564, %v1384
        %v1608 = vmul.f32 %v1568, %v1386
        %v1609 = vmul.f32 %v1556, %v1388
        %v1610 = vmul.f32 %v1560, %v1390
        %v1611 = vmul.f32 %v1564, %v1392
        %v1612 = vmul.f32 %v1568, %v1394
        %v1613 = vmul.f32 %v1556, %v1396
        %v1614 = vmul.f32 %v1560, %v1398
        %v1615 = vmul.f32 %v1564, %v1400
        %v1616 = vmul.f32 %v1568, %v1402
        %v1617 = vmul.f32 %v1556, %v1404
        %v1618 = vmul.f32 %v1560, %v1406
        %v1619 = vmul.f32 %v1564, %v1408
        %v1620 = vmul.f32 %v1568, %v1410
        %v1621 = vmul.f32 %v1556, %v1412
        %v1622 = vmul.f32 %v1560, %v1414
        %v1623 = vmul.f32 %v1564, %v1416
        %v1624 = vmul.f32 %v1568, %v1418
        %v1625 = vmul.f32 %v1556, %v1420
        %v1626 = vmul.f32 %v1560, %v1422
        %v1627 = vmul.f32 %v1564, %v1424
        %v1628 = vmul.f32 %v1568, %v1426
        %v1629 = vmul.f32 %v1556, %v1428
        %v1630 = vmul.f32 %v1560, %v1430
        %v1631 = vmul.f32 %v1564, %v1432
        %v1632 = vmul.f32 %v1568, %v1434
        %v1633 = vadd.f32 %v1514, %v1569
        %v1634 = vadd.f32 %v1518, %v1570
        %v1635 = vadd.f32 %v1522, %v1571
        %v1636 = vadd.f32 %v1526, %v1572
        %v1637 = vadd.f32 %v1514, %v1573
        %v1638 = vadd.f32 %v1518, %v1574
        %v1639 = vadd.f32 %v1522, %v1575
        %v1640 = vadd.f32 %v1526, %v1576
        %v1641 = vadd.f32 %v1514, %v1577
        %v1642 = vadd.f32 %v1518, %v1578
        %v1643 = vadd.f32 %v1522, %v1579
        %v1644 = vadd.f32 %v1526, %v1580
        %v1645 = vadd.f32 %v1514, %v1581
        %v1646 = vadd.f32 %v1518, %v1582
        %v1647 = vadd.f32 %v1522, %v1583
        %v1648 = vadd.f32 %v1526, %v1584
        %v1649 = vadd.f32 %v1514, %v1585
        %v1650 = vadd.f32 %v1518, %v1586
        %v1651 = vadd.f32 %v1522, %v1587
        %v1652 = vadd.f32 %v1526, %v1588
        %v1653 = vadd.f32 %v1514, %v1589
        %v1654 = vadd.f32 %v1518, %v1590
        %v1655 = vadd.f32 %v1522, %v1591
        %v1656 = vadd.f32 %v1526, %v1592
        %v1657 = vadd.f32 %v1514, %v1593
        %v1658 = vadd.f32 %v1518, %v1594
        %v1659 = vadd.f32 %v1522, %v1595
        %v1660 = vadd.f32 %v1526, %v1596
        %v1661 = vadd.f32 %v1514, %v1597
        %v1662 = vadd.f32 %v1518, %v1598
        %v1663 = vadd.f32 %v1522, %v1599
        %v1664 = vadd.f32 %v1526, %v1600
        %v1665 = vadd.f32 %v1514, %v1601
        %v1666 = vadd.f32 %v1518, %v1602
        %v1667 = vadd.f32 %v1522, %v1603
        %v1668 = vadd.f32 %v1526, %v1604
        %v1669 = vadd.f32 %v1514, %v1605
        %v1670 = vadd.f32 %v1518, %v1606
        %v1671 = vadd.f32 %v1522, %v1607
        %v1672 = vadd.f32 %v1526, %v1608
        %v1673 = vadd.f32 %v1514, %v1609
        %v1674 = vadd.f32 %v1518, %v1610
        %v1675 = vadd.f32 %v1522, %v1611
        %v1676 = vadd.f32 %v1526, %v1612
        %v1677 = vadd.f32 %v1514, %v1613
        %v1678 = vadd.f32 %v1518, %v1614
        %v1679 = vadd.f32 %v1522, %v1615
        %v1680 = vadd.f32 %v1526, %v1616
        %v1681 = vadd.f32 %v1514, %v1617
        %v1682 = vadd.f32 %v1518, %v1618
        %v1683 = vadd.f32 %v1522, %v1619
        %v1684 = vadd.f32 %v1526, %v1620
        %v1685 = vadd.f32 %v1514, %v1621
        %v1686 = vadd.f32 %v1518, %v1622
        %v1687 = vadd.f32 %v1522, %v1623
        %v1688 = vadd.f32 %v1526, %v1624
        %v1689 = vadd.f32 %v1514, %v1625
        %v1690 = vadd.f32 %v1518, %v1626
        %v1691 = vadd.f32 %v1522, %v1627
        %v1692 = vadd.f32 %v1526, %v1628
        %v1693 = vadd.f32 %v1514, %v1629
        %v1694 = vadd.f32 %v1518, %v1630
        %v1695 = vadd.f32 %v1522, %v1631
        %v1696 = vadd.f32 %v1526, %v1632
        %v1697 = vlaneseq
        %v1698 = vshrl.u32 %v1697, 7
        %v1699 = vsub.s32 1, %v1698
        %v1700 = vrot.slane %v1507, %v1699
        %v1701 = vlaneseq
        %v1702 = vshrl.u32 %v1701, 7
        %v1703 = vsub.s32 5, %v1702
        %v1704 = vrot.slane %v1507, %v1703
        %v1705 = vlaneseq
        %v1706 = vshrl.u32 %v1705, 7
        %v1707 = vsub.s32 1, %v1706
        %v1708 = vrot.slane %v1508, %v1707
        %v1709 = vlaneseq
        %v1710 = vshrl.u32 %v1709, 7
        %v1711 = vsub.s32 5, %v1710
        %v1712 = vrot.slane %v1508, %v1711
        %v1717 = vlaneseq
        %v1718 = vshrl.u32 %v1717, 7
        %v1719 = vsub.s32 1, %v1718
        %v1720 = vrot.slane %v1700, %v1719
        %v1721 = vlaneseq
        %v1722 = vshrl.u32 %v1721, 7
        %v1723 = vsub.s32 1, %v1722
        %v1724 = vrot.slane %v1704, %v1723
        %v1725 = vlaneseq
        %v1726 = vshrl.u32 %v1725, 7
        %v1727 = vsub.s32 1, %v1726
        %v1728 = vrot.slane %v1708, %v1727
        %v1729 = vlaneseq
        %v1730 = vshrl.u32 %v1729, 7
        %v1731 = vsub.s32 1, %v1730
        %v1732 = vrot.slane %v1712, %v1731
        %v1733 = vmul.f32 %v1720, %v1503
        %v1734 = vmul.f32 %v1724, %v1504
        %v1735 = vmul.f32 %v1728, %v1505
        %v1736 = vmul.f32 %v1732, %v1506
        %v1737 = vmul.f32 %v1720, %v1316
        %v1738 = vmul.f32 %v1724, %v1318
        %v1739 = vmul.f32 %v1728, %v1320
        %v1740 = vmul.f32 %v1732, %v1322
        %v1741 = vmul.f32 %v1720, %v1324
        %v1742 = vmul.f32 %v1724, %v1326
        %v1743 = vmul.f32 %v1728, %v1328
        %v1744 = vmul.f32 %v1732, %v1330
        %v1745 = vmul.f32 %v1720, %v1332
        %v1746 = vmul.f32 %v1724, %v1334
        %v1747 = vmul.f32 %v1728, %v1336
        %v1748 = vmul.f32 %v1732, %v1338
        %v1749 = vmul.f32 %v1720, %v1340
        %v1750 = vmul.f32 %v1724, %v1342
        %v1751 = vmul.f32 %v1728, %v1344
        %v1752 = vmul.f32 %v1732, %v1346
        %v1753 = vmul.f32 %v1720, %v1348
        %v1754 = vmul.f32 %v1724, %v1350
        %v1755 = vmul.f32 %v1728, %v1352
        %v1756 = vmul.f32 %v1732, %v1354
        %v1757 = vmul.f32 %v1720, %v1356
        %v1758 = vmul.f32 %v1724, %v1358
        %v1759 = vmul.f32 %v1728, %v1360
        %v1760 = vmul.f32 %v1732, %v1362
        %v1761 = vmul.f32 %v1720, %v1364
        %v1762 = vmul.f32 %v1724, %v1366
        %v1763 = vmul.f32 %v1728, %v1368
        %v1764 = vmul.f32 %v1732, %v1370
        %v1765 = vmul.f32 %v1720, %v1372
        %v1766 = vmul.f32 %v1724, %v1374
        %v1767 = vmul.f32 %v1728, %v1376
        %v1768 = vmul.f32 %v1732, %v1378
        %v1769 = vmul.f32 %v1720, %v1380
        %v1770 = vmul.f32 %v1724, %v1382
        %v1771 = vmul.f32 %v1728, %v1384
        %v1772 = vmul.f32 %v1732, %v1386
        %v1773 = vmul.f32 %v1720, %v1388
        %v1774 = vmul.f32 %v1724, %v1390
        %v1775 = vmul.f32 %v1728, %v1392
        %v1776 = vmul.f32 %v1732, %v1394
        %v1777 = vmul.f32 %v1720, %v1396
        %v1778 = vmul.f32 %v1724, %v1398
        %v1779 = vmul.f32 %v1728, %v1400
        %v1780 = vmul.f32 %v1732, %v1402
        %v1781 = vmul.f32 %v1720, %v1404
        %v1782 = vmul.f32 %v1724, %v1406
        %v1783 = vmul.f32 %v1728, %v1408
        %v1784 = vmul.f32 %v1732, %v1410
        %v1785 = vmul.f32 %v1720, %v1412
        %v1786 = vmul.f32 %v1724, %v1414
        %v1787 = vmul.f32 %v1728, %v1416
        %v1788 = vmul.f32 %v1732, %v1418
        %v1789 = vmul.f32 %v1720, %v1420
        %v1790 = vmul.f32 %v1724, %v1422
        %v1791 = vmul.f32 %v1728, %v1424
        %v1792 = vmul.f32 %v1732, %v1426
        %v1793 = vmul.f32 %v1720, %v1428
        %v1794 = vmul.f32 %v1724, %v1430
        %v1795 = vmul.f32 %v1728, %v1432
        %v1796 = vmul.f32 %v1732, %v1434
        %v1797 = vmul.f32 %v1720, %v1427
        %v1798 = vmul.f32 %v1724, %v1429
        %v1799 = vmul.f32 %v1728, %v1431
        %v1800 = vmul.f32 %v1732, %v1433
        %vm1869 = vcmask 1046528
        %v1870 = vrot.slane %v1733, 1
        %v1871 = vrot.slane %v1737, 1
        %v1872 = vsel %vm1869, %v1870, %v1871
        %v1873 = vrot.slane %v1734, 1
        %v1874 = vrot.slane %v1738, 1
        %v1875 = vsel %vm1869, %v1873, %v1874
        %v1876 = vrot.slane %v1735, 1
        %v1877 = vrot.slane %v1739, 1
        %v1878 = vsel %vm1869, %v1876, %v1877
        %v1879 = vrot.slane %v1736, 1
        %v1880 = vrot.slane %v1740, 1
        %v1881 = vsel %vm1869, %v1879, %v1880
        %v1882 = vrot.slane %v1741, 1
        %v1883 = vsel %vm1869, %v1871, %v1882
        %v1884 = vrot.slane %v1742, 1
        %v1885 = vsel %vm1869, %v1874, %v1884
        %v1886 = vrot.slane %v1743, 1
        %v1887 = vsel %vm1869, %v1877, %v1886
        %v1888 = vrot.slane %v1744, 1
        %v1889 = vsel %vm1869, %v1880, %v1888
        %v1890 = vrot.slane %v1745, 1
        %v1891 = vsel %vm1869, %v1882, %v1890
        %v1892 = vrot.slane %v1746, 1
        %v1893 = vsel %vm1869, %v1884, %v1892
        %v1894 = vrot.slane %v1747, 1
        %v1895 = vsel %vm1869, %v1886, %v1894
        %v1896 = vrot.slane %v1748, 1
        %v1897 = vsel %vm1869, %v1888, %v1896
        %v1898 = vrot.slane %v1749, 1
        %v1899 = vsel %vm1869, %v1890, %v1898
        %v1900 = vrot.slane %v1750, 1
        %v1901 = vsel %vm1869, %v1892, %v1900
        %v1902 = vrot.slane %v1751, 1
        %v1903 = vsel %vm1869, %v1894, %v1902
        %v1904 = vrot.slane %v1752, 1
        %v1905 = vsel %vm1869, %v1896, %v1904
        %v1906 = vrot.slane %v1753, 1
        %v1907 = vsel %vm1869, %v1898, %v1906
        %v1908 = vrot.slane %v1754, 1
        %v1909 = vsel %vm1869, %v1900, %v1908
        %v1910 = vrot.slane %v1755, 1
        %v1911 = vsel %vm1869, %v1902, %v1910
        %v1912 = vrot.slane %v1756, 1
        %v1913 = vsel %vm1869, %v1904, %v1912
        %v1914 = vrot.slane %v1757, 1
        %v1915 = vsel %vm1869, %v1906, %v1914
        %v1916 = vrot.slane %v1758, 1
        %v1917 = vsel %vm1869, %v1908, %v1916
        %v1918 = vrot.slane %v1759, 1
        %v1919 = vsel %vm1869, %v1910, %v1918
        %v1920 = vrot.slane %v1760, 1
        %v1921 = vsel %vm1869, %v1912, %v1920
        %v1922 = vrot.slane %v1761, 1
        %v1923 = vsel %vm1869, %v1914, %v1922
        %v1924 = vrot.slane %v1762, 1
        %v1925 = vsel %vm1869, %v1916, %v1924
        %v1926 = vrot.slane %v1763, 1
        %v1927 = vsel %vm1869, %v1918, %v1926
        %v1928 = vrot.slane %v1764, 1
        %v1929 = vsel %vm1869, %v1920, %v1928
        %v1930 = vrot.slane %v1765, 1
        %v1931 = vsel %vm1869, %v1922, %v1930
        %v1932 = vrot.slane %v1766, 1
        %v1933 = vsel %vm1869, %v1924, %v1932
        %v1934 = vrot.slane %v1767, 1
        %v1935 = vsel %vm1869, %v1926, %v1934
        %v1936 = vrot.slane %v1768, 1
        %v1937 = vsel %vm1869, %v1928, %v1936
        %v1938 = vrot.slane %v1769, 1
        %v1939 = vsel %vm1869, %v1930, %v1938
        %v1940 = vrot.slane %v1770, 1
        %v1941 = vsel %vm1869, %v1932, %v1940
        %v1942 = vrot.slane %v1771, 1
        %v1943 = vsel %vm1869, %v1934, %v1942
        %v1944 = vrot.slane %v1772, 1
        %v1945 = vsel %vm1869, %v1936, %v1944
        %v1946 = vrot.slane %v1773, 1
        %v1947 = vsel %vm1869, %v1938, %v1946
        %v1948 = vrot.slane %v1774, 1
        %v1949 = vsel %vm1869, %v1940, %v1948
        %v1950 = vrot.slane %v1775, 1
        %v1951 = vsel %vm1869, %v1942, %v1950
        %v1952 = vrot.slane %v1776, 1
        %v1953 = vsel %vm1869, %v1944, %v1952
        %v1954 = vrot.slane %v1777, 1
        %v1955 = vsel %vm1869, %v1946, %v1954
        %v1956 = vrot.slane %v1778, 1
        %v1957 = vsel %vm1869, %v1948, %v1956
        %v1958 = vrot.slane %v1779, 1
        %v1959 = vsel %vm1869, %v1950, %v1958
        %v1960 = vrot.slane %v1780, 1
        %v1961 = vsel %vm1869, %v1952, %v1960
        %v1962 = vrot.slane %v1781, 1
        %v1963 = vsel %vm1869, %v1954, %v1962
        %v1964 = vrot.slane %v1782, 1
        %v1965 = vsel %vm1869, %v1956, %v1964
        %v1966 = vrot.slane %v1783, 1
        %v1967 = vsel %vm1869, %v1958, %v1966
        %v1968 = vrot.slane %v1784, 1
        %v1969 = vsel %vm1869, %v1960, %v1968
        %v1970 = vrot.slane %v1785, 1
        %v1971 = vsel %vm1869, %v1962, %v1970
        %v1972 = vrot.slane %v1786, 1
        %v1973 = vsel %vm1869, %v1964, %v1972
        %v1974 = vrot.slane %v1787, 1
        %v1975 = vsel %vm1869, %v1966, %v1974
        %v1976 = vrot.slane %v1788, 1
        %v1977 = vsel %vm1869, %v1968, %v1976
        %v1978 = vrot.slane %v1789, 1
        %v1979 = vsel %vm1869, %v1970, %v1978
        %v1980 = vrot.slane %v1790, 1
        %v1981 = vsel %vm1869, %v1972, %v1980
        %v1982 = vrot.slane %v1791, 1
        %v1983 = vsel %vm1869, %v1974, %v1982
        %v1984 = vrot.slane %v1792, 1
        %v1985 = vsel %vm1869, %v1976, %v1984
        %v1986 = vrot.slane %v1793, 1
        %v1987 = vsel %vm1869, %v1978, %v1986
        %v1988 = vrot.slane %v1794, 1
        %v1989 = vsel %vm1869, %v1980, %v1988
        %v1990 = vrot.slane %v1795, 1
        %v1991 = vsel %vm1869, %v1982, %v1990
        %v1992 = vrot.slane %v1796, 1
        %v1993 = vsel %vm1869, %v1984, %v1992
        %v1994 = vrot.slane %v1797, 1
        %v1995 = vsel %vm1869, %v1986, %v1994
        %v1996 = vrot.slane %v1798, 1
        %v1997 = vsel %vm1869, %v1988, %v1996
        %v1998 = vrot.slane %v1799, 1
        %v1999 = vsel %vm1869, %v1990, %v1998
        %v2000 = vrot.slane %v1800, 1
        %v2001 = vsel %vm1869, %v1992, %v2000
        %v2066 = vadd.f32 %v1633, %v1872
        %v2067 = vadd.f32 %v1634, %v1875
        %v2068 = vadd.f32 %v1635, %v1878
        %v2069 = vadd.f32 %v1636, %v1881
        %v2070 = vadd.f32 %v1637, %v1883
        %v2071 = vadd.f32 %v1638, %v1885
        %v2072 = vadd.f32 %v1639, %v1887
        %v2073 = vadd.f32 %v1640, %v1889
        %v2074 = vadd.f32 %v1641, %v1891
        %v2075 = vadd.f32 %v1642, %v1893
        %v2076 = vadd.f32 %v1643, %v1895
        %v2077 = vadd.f32 %v1644, %v1897
        %v2078 = vadd.f32 %v1645, %v1899
        %v2079 = vadd.f32 %v1646, %v1901
        %v2080 = vadd.f32 %v1647, %v1903
        %v2081 = vadd.f32 %v1648, %v1905
        %v2082 = vadd.f32 %v1649, %v1907
        %v2083 = vadd.f32 %v1650, %v1909
        %v2084 = vadd.f32 %v1651, %v1911
        %v2085 = vadd.f32 %v1652, %v1913
        %v2086 = vadd.f32 %v1653, %v1915
        %v2087 = vadd.f32 %v1654, %v1917
        %v2088 = vadd.f32 %v1655, %v1919
        %v2089 = vadd.f32 %v1656, %v1921
        %v2090 = vadd.f32 %v1657, %v1923
        %v2091 = vadd.f32 %v1658, %v1925
        %v2092 = vadd.f32 %v1659, %v1927
        %v2093 = vadd.f32 %v1660, %v1929
        %v2094 = vadd.f32 %v1661, %v1931
        %v2095 = vadd.f32 %v1662, %v1933
        %v2096 = vadd.f32 %v1663, %v1935
        %v2097 = vadd.f32 %v1664, %v1937
        %v2098 = vadd.f32 %v1665, %v1939
        %v2099 = vadd.f32 %v1666, %v1941
        %v2100 = vadd.f32 %v1667, %v1943
        %v2101 = vadd.f32 %v1668, %v1945
        %v2102 = vadd.f32 %v1669, %v1947
        %v2103 = vadd.f32 %v1670, %v1949
        %v2104 = vadd.f32 %v1671, %v1951
        %v2105 = vadd.f32 %v1672, %v1953
        %v2106 = vadd.f32 %v1673, %v1955
        %v2107 = vadd.f32 %v1674, %v1957
        %v2108 = vadd.f32 %v1675, %v1959
        %v2109 = vadd.f32 %v1676, %v1961
        %v2110 = vadd.f32 %v1677, %v1963
        %v2111 = vadd.f32 %v1678, %v1965
        %v2112 = vadd.f32 %v1679, %v1967
        %v2113 = vadd.f32 %v1680, %v1969
        %v2114 = vadd.f32 %v1681, %v1971
        %v2115 = vadd.f32 %v1682, %v1973
        %v2116 = vadd.f32 %v1683, %v1975
        %v2117 = vadd.f32 %v1684, %v1977
        %v2118 = vadd.f32 %v1685, %v1979
        %v2119 = vadd.f32 %v1686, %v1981
        %v2120 = vadd.f32 %v1687, %v1983
        %v2121 = vadd.f32 %v1688, %v1985
        %v2122 = vadd.f32 %v1689, %v1987
        %v2123 = vadd.f32 %v1690, %v1989
        %v2124 = vadd.f32 %v1691, %v1991
        %v2125 = vadd.f32 %v1692, %v1993
        %v2126 = vadd.f32 %v1693, %v1995
        %v2127 = vadd.f32 %v1694, %v1997
        %v2128 = vadd.f32 %v1695, %v1999
        %v2129 = vadd.f32 %v1696, %v2001
        %v2130 = vlaneseq
        %v2131 = vshrl.u32 %v2130, 7
        %v2132 = vsub.s32 2, %v2131
        %v2133 = vrot.slane %v1507, %v2132
        %v2134 = vlaneseq
        %v2135 = vshrl.u32 %v2134, 7
        %v2136 = vsub.s32 6, %v2135
        %v2137 = vrot.slane %v1507, %v2136
        %v2138 = vlaneseq
        %v2139 = vshrl.u32 %v2138, 7
        %v2140 = vsub.s32 2, %v2139
        %v2141 = vrot.slane %v1508, %v2140
        %v2142 = vlaneseq
        %v2143 = vshrl.u32 %v2142, 7
        %v2144 = vsub.s32 6, %v2143
        %v2145 = vrot.slane %v1508, %v2144
        %v2150 = vlaneseq
        %v2151 = vshrl.u32 %v2150, 7
        %v2152 = vsub.s32 2, %v2151
        %v2153 = vrot.slane %v2133, %v2152
        %v2154 = vlaneseq
        %v2155 = vshrl.u32 %v2154, 7
        %v2156 = vsub.s32 2, %v2155
        %v2157 = vrot.slane %v2137, %v2156
        %v2158 = vlaneseq
        %v2159 = vshrl.u32 %v2158, 7
        %v2160 = vsub.s32 2, %v2159
        %v2161 = vrot.slane %v2141, %v2160
        %v2162 = vlaneseq
        %v2163 = vshrl.u32 %v2162, 7
        %v2164 = vsub.s32 2, %v2163
        %v2165 = vrot.slane %v2145, %v2164
        %v2166 = vmul.f32 %v2153, %v1503
        %v2167 = vmul.f32 %v2157, %v1504
        %v2168 = vmul.f32 %v2161, %v1505
        %v2169 = vmul.f32 %v2165, %v1506
        %v2170 = vmul.f32 %v2153, %v1316
        %v2171 = vmul.f32 %v2157, %v1318
        %v2172 = vmul.f32 %v2161, %v1320
        %v2173 = vmul.f32 %v2165, %v1322
        %v2174 = vmul.f32 %v2153, %v1324
        %v2175 = vmul.f32 %v2157, %v1326
        %v2176 = vmul.f32 %v2161, %v1328
        %v2177 = vmul.f32 %v2165, %v1330
        %v2178 = vmul.f32 %v2153, %v1332
        %v2179 = vmul.f32 %v2157, %v1334
        %v2180 = vmul.f32 %v2161, %v1336
        %v2181 = vmul.f32 %v2165, %v1338
        %v2182 = vmul.f32 %v2153, %v1340
        %v2183 = vmul.f32 %v2157, %v1342
        %v2184 = vmul.f32 %v2161, %v1344
        %v2185 = vmul.f32 %v2165, %v1346
        %v2186 = vmul.f32 %v2153, %v1348
        %v2187 = vmul.f32 %v2157, %v1350
        %v2188 = vmul.f32 %v2161, %v1352
        %v2189 = vmul.f32 %v2165, %v1354
        %v2190 = vmul.f32 %v2153, %v1356
        %v2191 = vmul.f32 %v2157, %v1358
        %v2192 = vmul.f32 %v2161, %v1360
        %v2193 = vmul.f32 %v2165, %v1362
        %v2194 = vmul.f32 %v2153, %v1364
        %v2195 = vmul.f32 %v2157, %v1366
        %v2196 = vmul.f32 %v2161, %v1368
        %v2197 = vmul.f32 %v2165, %v1370
        %v2198 = vmul.f32 %v2153, %v1372
        %v2199 = vmul.f32 %v2157, %v1374
        %v2200 = vmul.f32 %v2161, %v1376
        %v2201 = vmul.f32 %v2165, %v1378
        %v2202 = vmul.f32 %v2153, %v1380
        %v2203 = vmul.f32 %v2157, %v1382
        %v2204 = vmul.f32 %v2161, %v1384
        %v2205 = vmul.f32 %v2165, %v1386
        %v2206 = vmul.f32 %v2153, %v1388
        %v2207 = vmul.f32 %v2157, %v1390
        %v2208 = vmul.f32 %v2161, %v1392
        %v2209 = vmul.f32 %v2165, %v1394
        %v2210 = vmul.f32 %v2153, %v1396
        %v2211 = vmul.f32 %v2157, %v1398
        %v2212 = vmul.f32 %v2161, %v1400
        %v2213 = vmul.f32 %v2165, %v1402
        %v2214 = vmul.f32 %v2153, %v1404
        %v2215 = vmul.f32 %v2157, %v1406
        %v2216 = vmul.f32 %v2161, %v1408
        %v2217 = vmul.f32 %v2165, %v1410
        %v2218 = vmul.f32 %v2153, %v1412
        %v2219 = vmul.f32 %v2157, %v1414
        %v2220 = vmul.f32 %v2161, %v1416
        %v2221 = vmul.f32 %v2165, %v1418
        %v2222 = vmul.f32 %v2153, %v1420
        %v2223 = vmul.f32 %v2157, %v1422
        %v2224 = vmul.f32 %v2161, %v1424
        %v2225 = vmul.f32 %v2165, %v1426
        %v2226 = vmul.f32 %v2153, %v1428
        %v2227 = vmul.f32 %v2157, %v1430
        %v2228 = vmul.f32 %v2161, %v1432
        %v2229 = vmul.f32 %v2165, %v1434
        %v2230 = vmul.f32 %v2153, %v1427
        %v2231 = vmul.f32 %v2157, %v1429
        %v2232 = vmul.f32 %v2161, %v1431
        %v2233 = vmul.f32 %v2165, %v1433
        %vm2302 = vcmask 1045504
        %v2303 = vrot.slane %v2166, 2
        %v2304 = vrot.slane %v2170, 2
        %v2305 = vsel %vm2302, %v2303, %v2304
        %v2306 = vrot.slane %v2167, 2
        %v2307 = vrot.slane %v2171, 2
        %v2308 = vsel %vm2302, %v2306, %v2307
        %v2309 = vrot.slane %v2168, 2
        %v2310 = vrot.slane %v2172, 2
        %v2311 = vsel %vm2302, %v2309, %v2310
        %v2312 = vrot.slane %v2169, 2
        %v2313 = vrot.slane %v2173, 2
        %v2314 = vsel %vm2302, %v2312, %v2313
        %v2315 = vrot.slane %v2174, 2
        %v2316 = vsel %vm2302, %v2304, %v2315
        %v2317 = vrot.slane %v2175, 2
        %v2318 = vsel %vm2302, %v2307, %v2317
        %v2319 = vrot.slane %v2176, 2
        %v2320 = vsel %vm2302, %v2310, %v2319
        %v2321 = vrot.slane %v2177, 2
        %v2322 = vsel %vm2302, %v2313, %v2321
        %v2323 = vrot.slane %v2178, 2
        %v2324 = vsel %vm2302, %v2315, %v2323
        %v2325 = vrot.slane %v2179, 2
        %v2326 = vsel %vm2302, %v2317, %v2325
        %v2327 = vrot.slane %v2180, 2
        %v2328 = vsel %vm2302, %v2319, %v2327
        %v2329 = vrot.slane %v2181, 2
        %v2330 = vsel %vm2302, %v2321, %v2329
        %v2331 = vrot.slane %v2182, 2
        %v2332 = vsel %vm2302, %v2323, %v2331
        %v2333 = vrot.slane %v2183, 2
        %v2334 = vsel %vm2302, %v2325, %v2333
        %v2335 = vrot.slane %v2184, 2
        %v2336 = vsel %vm2302, %v2327, %v2335
        %v2337 = vrot.slane %v2185, 2
        %v2338 = vsel %vm2302, %v2329, %v2337
        %v2339 = vrot.slane %v2186, 2
        %v2340 = vsel %vm2302, %v2331, %v2339
        %v2341 = vrot.slane %v2187, 2
        %v2342 = vsel %vm2302, %v2333, %v2341
        %v2343 = vrot.slane %v2188, 2
        %v2344 = vsel %vm2302, %v2335, %v2343
        %v2345 = vrot.slane %v2189, 2
        %v2346 = vsel %vm2302, %v2337, %v2345
        %v2347 = vrot.slane %v2190, 2
        %v2348 = vsel %vm2302, %v2339, %v2347
        %v2349 = vrot.slane %v2191, 2
        %v2350 = vsel %vm2302, %v2341, %v2349
        %v2351 = vrot.slane %v2192, 2
        %v2352 = vsel %vm2302, %v2343, %v2351
        %v2353 = vrot.slane %v2193, 2
        %v2354 = vsel %vm2302, %v2345, %v2353
        %v2355 = vrot.slane %v2194, 2
        %v2356 = vsel %vm2302, %v2347, %v2355
        %v2357 = vrot.slane %v2195, 2
        %v2358 = vsel %vm2302, %v2349, %v2357
        %v2359 = vrot.slane %v2196, 2
        %v2360 = vsel %vm2302, %v2351, %v2359
        %v2361 = vrot.slane %v2197, 2
        %v2362 = vsel %vm2302, %v2353, %v2361
        %v2363 = vrot.slane %v2198, 2
        %v2364 = vsel %vm2302, %v2355, %v2363
        %v2365 = vrot.slane %v2199, 2
        %v2366 = vsel %vm2302, %v2357, %v2365
        %v2367 = vrot.slane %v2200, 2
        %v2368 = vsel %vm2302, %v2359, %v2367
        %v2369 = vrot.slane %v2201, 2
        %v2370 = vsel %vm2302, %v2361, %v2369
        %v2371 = vrot.slane %v2202, 2
        %v2372 = vsel %vm2302, %v2363, %v2371
        %v2373 = vrot.slane %v2203, 2
        %v2374 = vsel %vm2302, %v2365, %v2373
        %v2375 = vrot.slane %v2204, 2
        %v2376 = vsel %vm2302, %v2367, %v2375
        %v2377 = vrot.slane %v2205, 2
        %v2378 = vsel %vm2302, %v2369, %v2377
        %v2379 = vrot.slane %v2206, 2
        %v2380 = vsel %vm2302, %v2371, %v2379
        %v2381 = vrot.slane %v2207, 2
        %v2382 = vsel %vm2302, %v2373, %v2381
        %v2383 = vrot.slane %v2208, 2
        %v2384 = vsel %vm2302, %v2375, %v2383
        %v2385 = vrot.slane %v2209, 2
        %v2386 = vsel %vm2302, %v2377, %v2385
        %v2387 = vrot.slane %v2210, 2
        %v2388 = vsel %vm2302, %v2379, %v2387
        %v2389 = vrot.slane %v2211, 2
        %v2390 = vsel %vm2302, %v2381, %v2389
        %v2391 = vrot.slane %v2212, 2
        %v2392 = vsel %vm2302, %v2383, %v2391
        %v2393 = vrot.slane %v2213, 2
        %v2394 = vsel %vm2302, %v2385, %v2393
        %v2395 = vrot.slane %v2214, 2
        %v2396 = vsel %vm2302, %v2387, %v2395
        %v2397 = vrot.slane %v2215, 2
        %v2398 = vsel %vm2302, %v2389, %v2397
        %v2399 = vrot.slane %v2216, 2
        %v2400 = vsel %vm2302, %v2391, %v2399
        %v2401 = vrot.slane %v2217, 2
        %v2402 = vsel %vm2302, %v2393, %v2401
        %v2403 = vrot.slane %v2218, 2
        %v2404 = vsel %vm2302, %v2395, %v2403
        %v2405 = vrot.slane %v2219, 2
        %v2406 = vsel %vm2302, %v2397, %v2405
        %v2407 = vrot.slane %v2220, 2
        %v2408 = vsel %vm2302, %v2399, %v2407
        %v2409 = vrot.slane %v2221, 2
        %v2410 = vsel %vm2302, %v2401, %v2409
        %v2411 = vrot.slane %v2222, 2
        %v2412 = vsel %vm2302, %v2403, %v2411
        %v2413 = vrot.slane %v2223, 2
        %v2414 = vsel %vm2302, %v2405, %v2413
        %v2415 = vrot.slane %v2224, 2
        %v2416 = vsel %vm2302, %v2407, %v2415
        %v2417 = vrot.slane %v2225, 2
        %v2418 = vsel %vm2302, %v2409, %v2417
        %v2419 = vrot.slane %v2226, 2
        %v2420 = vsel %vm2302, %v2411, %v2419
        %v2421 = vrot.slane %v2227, 2
        %v2422 = vsel %vm2302, %v2413, %v2421
        %v2423 = vrot.slane %v2228, 2
        %v2424 = vsel %vm2302, %v2415, %v2423
        %v2425 = vrot.slane %v2229, 2
        %v2426 = vsel %vm2302, %v2417, %v2425
        %v2427 = vrot.slane %v2230, 2
        %v2428 = vsel %vm2302, %v2419, %v2427
        %v2429 = vrot.slane %v2231, 2
        %v2430 = vsel %vm2302, %v2421, %v2429
        %v2431 = vrot.slane %v2232, 2
        %v2432 = vsel %vm2302, %v2423, %v2431
        %v2433 = vrot.slane %v2233, 2
        %v2434 = vsel %vm2302, %v2425, %v2433
        %v2499 = vadd.f32 %v2066, %v2305
        %v2500 = vadd.f32 %v2067, %v2308
        %v2501 = vadd.f32 %v2068, %v2311
        %v2502 = vadd.f32 %v2069, %v2314
        %v2503 = vadd.f32 %v2070, %v2316
        %v2504 = vadd.f32 %v2071, %v2318
        %v2505 = vadd.f32 %v2072, %v2320
        %v2506 = vadd.f32 %v2073, %v2322
        %v2507 = vadd.f32 %v2074, %v2324
        %v2508 = vadd.f32 %v2075, %v2326
        %v2509 = vadd.f32 %v2076, %v2328
        %v2510 = vadd.f32 %v2077, %v2330
        %v2511 = vadd.f32 %v2078, %v2332
        %v2512 = vadd.f32 %v2079, %v2334
        %v2513 = vadd.f32 %v2080, %v2336
        %v2514 = vadd.f32 %v2081, %v2338
        %v2515 = vadd.f32 %v2082, %v2340
        %v2516 = vadd.f32 %v2083, %v2342
        %v2517 = vadd.f32 %v2084, %v2344
        %v2518 = vadd.f32 %v2085, %v2346
        %v2519 = vadd.f32 %v2086, %v2348
        %v2520 = vadd.f32 %v2087, %v2350
        %v2521 = vadd.f32 %v2088, %v2352
        %v2522 = vadd.f32 %v2089, %v2354
        %v2523 = vadd.f32 %v2090, %v2356
        %v2524 = vadd.f32 %v2091, %v2358
        %v2525 = vadd.f32 %v2092, %v2360
        %v2526 = vadd.f32 %v2093, %v2362
        %v2527 = vadd.f32 %v2094, %v2364
        %v2528 = vadd.f32 %v2095, %v2366
        %v2529 = vadd.f32 %v2096, %v2368
        %v2530 = vadd.f32 %v2097, %v2370
        %v2531 = vadd.f32 %v2098, %v2372
        %v2532 = vadd.f32 %v2099, %v2374
        %v2533 = vadd.f32 %v2100, %v2376
        %v2534 = vadd.f32 %v2101, %v2378
        %v2535 = vadd.f32 %v2102, %v2380
        %v2536 = vadd.f32 %v2103, %v2382
        %v2537 = vadd.f32 %v2104, %v2384
        %v2538 = vadd.f32 %v2105, %v2386
        %v2539 = vadd.f32 %v2106, %v2388
        %v2540 = vadd.f32 %v2107, %v2390
        %v2541 = vadd.f32 %v2108, %v2392
        %v2542 = vadd.f32 %v2109, %v2394
        %v2543 = vadd.f32 %v2110, %v2396
        %v2544 = vadd.f32 %v2111, %v2398
        %v2545 = vadd.f32 %v2112, %v2400
        %v2546 = vadd.f32 %v2113, %v2402
        %v2547 = vadd.f32 %v2114, %v2404
        %v2548 = vadd.f32 %v2115, %v2406
        %v2549 = vadd.f32 %v2116, %v2408
        %v2550 = vadd.f32 %v2117, %v2410
        %v2551 = vadd.f32 %v2118, %v2412
        %v2552 = vadd.f32 %v2119, %v2414
        %v2553 = vadd.f32 %v2120, %v2416
        %v2554 = vadd.f32 %v2121, %v2418
        %v2555 = vadd.f32 %v2122, %v2420
        %v2556 = vadd.f32 %v2123, %v2422
        %v2557 = vadd.f32 %v2124, %v2424
        %v2558 = vadd.f32 %v2125, %v2426
        %v2559 = vadd.f32 %v2126, %v2428
        %v2560 = vadd.f32 %v2127, %v2430
        %v2561 = vadd.f32 %v2128, %v2432
        %v2562 = vadd.f32 %v2129, %v2434
        %v2563 = vlaneseq
        %v2564 = vshrl.u32 %v2563, 7
        %v2565 = vsub.s32 3, %v2564
        %v2566 = vrot.slane %v1507, %v2565
        %v2567 = vlaneseq
        %v2568 = vshrl.u32 %v2567, 7
        %v2569 = vsub.s32 7, %v2568
        %v2570 = vrot.slane %v1507, %v2569
        %v2571 = vlaneseq
        %v2572 = vshrl.u32 %v2571, 7
        %v2573 = vsub.s32 3, %v2572
        %v2574 = vrot.slane %v1508, %v2573
        %v2575 = vlaneseq
        %v2576 = vshrl.u32 %v2575, 7
        %v2577 = vsub.s32 7, %v2576
        %v2578 = vrot.slane %v1508, %v2577
        %v2583 = vlaneseq
        %v2584 = vshrl.u32 %v2583, 7
        %v2585 = vsub.s32 3, %v2584
        %v2586 = vrot.slane %v2566, %v2585
        %v2587 = vlaneseq
        %v2588 = vshrl.u32 %v2587, 7
        %v2589 = vsub.s32 3, %v2588
        %v2590 = vrot.slane %v2570, %v2589
        %v2591 = vlaneseq
        %v2592 = vshrl.u32 %v2591, 7
        %v2593 = vsub.s32 3, %v2592
        %v2594 = vrot.slane %v2574, %v2593
        %v2595 = vlaneseq
        %v2596 = vshrl.u32 %v2595, 7
        %v2597 = vsub.s32 3, %v2596
        %v2598 = vrot.slane %v2578, %v2597
        %v2599 = vmul.f32 %v2586, %v1503
        %v2600 = vmul.f32 %v2590, %v1504
        %v2601 = vmul.f32 %v2594, %v1505
        %v2602 = vmul.f32 %v2598, %v1506
        %v2603 = vmul.f32 %v2586, %v1316
        %v2604 = vmul.f32 %v2590, %v1318
        %v2605 = vmul.f32 %v2594, %v1320
        %v2606 = vmul.f32 %v2598, %v1322
        %v2607 = vmul.f32 %v2586, %v1324
        %v2608 = vmul.f32 %v2590, %v1326
        %v2609 = vmul.f32 %v2594, %v1328
        %v2610 = vmul.f32 %v2598, %v1330
        %v2611 = vmul.f32 %v2586, %v1332
        %v2612 = vmul.f32 %v2590, %v1334
        %v2613 = vmul.f32 %v2594, %v1336
        %v2614 = vmul.f32 %v2598, %v1338
        %v2615 = vmul.f32 %v2586, %v1340
        %v2616 = vmul.f32 %v2590, %v1342
        %v2617 = vmul.f32 %v2594, %v1344
        %v2618 = vmul.f32 %v2598, %v1346
        %v2619 = vmul.f32 %v2586, %v1348
        %v2620 = vmul.f32 %v2590, %v1350
        %v2621 = vmul.f32 %v2594, %v1352
        %v2622 = vmul.f32 %v2598, %v1354
        %v2623 = vmul.f32 %v2586, %v1356
        %v2624 = vmul.f32 %v2590, %v1358
        %v2625 = vmul.f32 %v2594, %v1360
        %v2626 = vmul.f32 %v2598, %v1362
        %v2627 = vmul.f32 %v2586, %v1364
        %v2628 = vmul.f32 %v2590, %v1366
        %v2629 = vmul.f32 %v2594, %v1368
        %v2630 = vmul.f32 %v2598, %v1370
        %v2631 = vmul.f32 %v2586, %v1372
        %v2632 = vmul.f32 %v2590, %v1374
        %v2633 = vmul.f32 %v2594, %v1376
        %v2634 = vmul.f32 %v2598, %v1378
        %v2635 = vmul.f32 %v2586, %v1380
        %v2636 = vmul.f32 %v2590, %v1382
        %v2637 = vmul.f32 %v2594, %v1384
        %v2638 = vmul.f32 %v2598, %v1386
        %v2639 = vmul.f32 %v2586, %v1388
        %v2640 = vmul.f32 %v2590, %v1390
        %v2641 = vmul.f32 %v2594, %v1392
        %v2642 = vmul.f32 %v2598, %v1394
        %v2643 = vmul.f32 %v2586, %v1396
        %v2644 = vmul.f32 %v2590, %v1398
        %v2645 = vmul.f32 %v2594, %v1400
        %v2646 = vmul.f32 %v2598, %v1402
        %v2647 = vmul.f32 %v2586, %v1404
        %v2648 = vmul.f32 %v2590, %v1406
        %v2649 = vmul.f32 %v2594, %v1408
        %v2650 = vmul.f32 %v2598, %v1410
        %v2651 = vmul.f32 %v2586, %v1412
        %v2652 = vmul.f32 %v2590, %v1414
        %v2653 = vmul.f32 %v2594, %v1416
        %v2654 = vmul.f32 %v2598, %v1418
        %v2655 = vmul.f32 %v2586, %v1420
        %v2656 = vmul.f32 %v2590, %v1422
        %v2657 = vmul.f32 %v2594, %v1424
        %v2658 = vmul.f32 %v2598, %v1426
        %v2659 = vmul.f32 %v2586, %v1428
        %v2660 = vmul.f32 %v2590, %v1430
        %v2661 = vmul.f32 %v2594, %v1432
        %v2662 = vmul.f32 %v2598, %v1434
        %v2663 = vmul.f32 %v2586, %v1427
        %v2664 = vmul.f32 %v2590, %v1429
        %v2665 = vmul.f32 %v2594, %v1431
        %v2666 = vmul.f32 %v2598, %v1433
        %vm2735 = vcmask 1044480
        %v2736 = vrot.slane %v2599, 3
        %v2737 = vrot.slane %v2603, 3
        %v2738 = vsel %vm2735, %v2736, %v2737
        %v2739 = vrot.slane %v2600, 3
        %v2740 = vrot.slane %v2604, 3
        %v2741 = vsel %vm2735, %v2739, %v2740
        %v2742 = vrot.slane %v2601, 3
        %v2743 = vrot.slane %v2605, 3
        %v2744 = vsel %vm2735, %v2742, %v2743
        %v2745 = vrot.slane %v2602, 3
        %v2746 = vrot.slane %v2606, 3
        %v2747 = vsel %vm2735, %v2745, %v2746
        %v2748 = vrot.slane %v2607, 3
        %v2749 = vsel %vm2735, %v2737, %v2748
        %v2750 = vrot.slane %v2608, 3
        %v2751 = vsel %vm2735, %v2740, %v2750
        %v2752 = vrot.slane %v2609, 3
        %v2753 = vsel %vm2735, %v2743, %v2752
        %v2754 = vrot.slane %v2610, 3
        %v2755 = vsel %vm2735, %v2746, %v2754
        %v2756 = vrot.slane %v2611, 3
        %v2757 = vsel %vm2735, %v2748, %v2756
        %v2758 = vrot.slane %v2612, 3
        %v2759 = vsel %vm2735, %v2750, %v2758
        %v2760 = vrot.slane %v2613, 3
        %v2761 = vsel %vm2735, %v2752, %v2760
        %v2762 = vrot.slane %v2614, 3
        %v2763 = vsel %vm2735, %v2754, %v2762
        %v2764 = vrot.slane %v2615, 3
        %v2765 = vsel %vm2735, %v2756, %v2764
        %v2766 = vrot.slane %v2616, 3
        %v2767 = vsel %vm2735, %v2758, %v2766
        %v2768 = vrot.slane %v2617, 3
        %v2769 = vsel %vm2735, %v2760, %v2768
        %v2770 = vrot.slane %v2618, 3
        %v2771 = vsel %vm2735, %v2762, %v2770
        %v2772 = vrot.slane %v2619, 3
        %v2773 = vsel %vm2735, %v2764, %v2772
        %v2774 = vrot.slane %v2620, 3
        %v2775 = vsel %vm2735, %v2766, %v2774
        %v2776 = vrot.slane %v2621, 3
        %v2777 = vsel %vm2735, %v2768, %v2776
        %v2778 = vrot.slane %v2622, 3
        %v2779 = vsel %vm2735, %v2770, %v2778
        %v2780 = vrot.slane %v2623, 3
        %v2781 = vsel %vm2735, %v2772, %v2780
        %v2782 = vrot.slane %v2624, 3
        %v2783 = vsel %vm2735, %v2774, %v2782
        %v2784 = vrot.slane %v2625, 3
        %v2785 = vsel %vm2735, %v2776, %v2784
        %v2786 = vrot.slane %v2626, 3
        %v2787 = vsel %vm2735, %v2778, %v2786
        %v2788 = vrot.slane %v2627, 3
        %v2789 = vsel %vm2735, %v2780, %v2788
        %v2790 = vrot.slane %v2628, 3
        %v2791 = vsel %vm2735, %v2782, %v2790
        %v2792 = vrot.slane %v2629, 3
        %v2793 = vsel %vm2735, %v2784, %v2792
        %v2794 = vrot.slane %v2630, 3
        %v2795 = vsel %vm2735, %v2786, %v2794
        %v2796 = vrot.slane %v2631, 3
        %v2797 = vsel %vm2735, %v2788, %v2796
        %v2798 = vrot.slane %v2632, 3
        %v2799 = vsel %vm2735, %v2790, %v2798
        %v2800 = vrot.slane %v2633, 3
        %v2801 = vsel %vm2735, %v2792, %v2800
        %v2802 = vrot.slane %v2634, 3
        %v2803 = vsel %vm2735, %v2794, %v2802
        %v2804 = vrot.slane %v2635, 3
        %v2805 = vsel %vm2735, %v2796, %v2804
        %v2806 = vrot.slane %v2636, 3
        %v2807 = vsel %vm2735, %v2798, %v2806
        %v2808 = vrot.slane %v2637, 3
        %v2809 = vsel %vm2735, %v2800, %v2808
        %v2810 = vrot.slane %v2638, 3
        %v2811 = vsel %vm2735, %v2802, %v2810
        %v2812 = vrot.slane %v2639, 3
        %v2813 = vsel %vm2735, %v2804, %v2812
        %v2814 = vrot.slane %v2640, 3
        %v2815 = vsel %vm2735, %v2806, %v2814
        %v2816 = vrot.slane %v2641, 3
        %v2817 = vsel %vm2735, %v2808, %v2816
        %v2818 = vrot.slane %v2642, 3
        %v2819 = vsel %vm2735, %v2810, %v2818
        %v2820 = vrot.slane %v2643, 3
        %v2821 = vsel %vm2735, %v2812, %v2820
        %v2822 = vrot.slane %v2644, 3
        %v2823 = vsel %vm2735, %v2814, %v2822
        %v2824 = vrot.slane %v2645, 3
        %v2825 = vsel %vm2735, %v2816, %v2824
        %v2826 = vrot.slane %v2646, 3
        %v2827 = vsel %vm2735, %v2818, %v2826
        %v2828 = vrot.slane %v2647, 3
        %v2829 = vsel %vm2735, %v2820, %v2828
        %v2830 = vrot.slane %v2648, 3
        %v2831 = vsel %vm2735, %v2822, %v2830
        %v2832 = vrot.slane %v2649, 3
        %v2833 = vsel %vm2735, %v2824, %v2832
        %v2834 = vrot.slane %v2650, 3
        %v2835 = vsel %vm2735, %v2826, %v2834
        %v2836 = vrot.slane %v2651, 3
        %v2837 = vsel %vm2735, %v2828, %v2836
        %v2838 = vrot.slane %v2652, 3
        %v2839 = vsel %vm2735, %v2830, %v2838
        %v2840 = vrot.slane %v2653, 3
        %v2841 = vsel %vm2735, %v2832, %v2840
        %v2842 = vrot.slane %v2654, 3
        %v2843 = vsel %vm2735, %v2834, %v2842
        %v2844 = vrot.slane %v2655, 3
        %v2845 = vsel %vm2735, %v2836, %v2844
        %v2846 = vrot.slane %v2656, 3
        %v2847 = vsel %vm2735, %v2838, %v2846
        %v2848 = vrot.slane %v2657, 3
        %v2849 = vsel %vm2735, %v2840, %v2848
        %v2850 = vrot.slane %v2658, 3
        %v2851 = vsel %vm2735, %v2842, %v2850
        %v2852 = vrot.slane %v2659, 3
        %v2853 = vsel %vm2735, %v2844, %v2852
        %v2854 = vrot.slane %v2660, 3
        %v2855 = vsel %vm2735, %v2846, %v2854
        %v2856 = vrot.slane %v2661, 3
        %v2857 = vsel %vm2735, %v2848, %v2856
        %v2858 = vrot.slane %v2662, 3
        %v2859 = vsel %vm2735, %v2850, %v2858
        %v2860 = vrot.slane %v2663, 3
        %v2861 = vsel %vm2735, %v2852, %v2860
        %v2862 = vrot.slane %v2664, 3
        %v2863 = vsel %vm2735, %v2854, %v2862
        %v2864 = vrot.slane %v2665, 3
        %v2865 = vsel %vm2735, %v2856, %v2864
        %v2866 = vrot.slane %v2666, 3
        %v2867 = vsel %vm2735, %v2858, %v2866
        %v2932 = vadd.f32 %v2499, %v2738
        %v2933 = vadd.f32 %v2500, %v2741
        %v2934 = vadd.f32 %v2501, %v2744
        %v2935 = vadd.f32 %v2502, %v2747
        %v2936 = vadd.f32 %v2503, %v2749
        %v2937 = vadd.f32 %v2504, %v2751
        %v2938 = vadd.f32 %v2505, %v2753
        %v2939 = vadd.f32 %v2506, %v2755
        %v2940 = vadd.f32 %v2507, %v2757
        %v2941 = vadd.f32 %v2508, %v2759
        %v2942 = vadd.f32 %v2509, %v2761
        %v2943 = vadd.f32 %v2510, %v2763
        %v2944 = vadd.f32 %v2511, %v2765
        %v2945 = vadd.f32 %v2512, %v2767
        %v2946 = vadd.f32 %v2513, %v2769
        %v2947 = vadd.f32 %v2514, %v2771
        %v2948 = vadd.f32 %v2515, %v2773
        %v2949 = vadd.f32 %v2516, %v2775
        %v2950 = vadd.f32 %v2517, %v2777
        %v2951 = vadd.f32 %v2518, %v2779
        %v2952 = vadd.f32 %v2519, %v2781
        %v2953 = vadd.f32 %v2520, %v2783
        %v2954 = vadd.f32 %v2521, %v2785
        %v2955 = vadd.f32 %v2522, %v2787
        %v2956 = vadd.f32 %v2523, %v2789
        %v2957 = vadd.f32 %v2524, %v2791
        %v2958 = vadd.f32 %v2525, %v2793
        %v2959 = vadd.f32 %v2526, %v2795
        %v2960 = vadd.f32 %v2527, %v2797
        %v2961 = vadd.f32 %v2528, %v2799
        %v2962 = vadd.f32 %v2529, %v2801
        %v2963 = vadd.f32 %v2530, %v2803
        %v2964 = vadd.f32 %v2531, %v2805
        %v2965 = vadd.f32 %v2532, %v2807
        %v2966 = vadd.f32 %v2533, %v2809
        %v2967 = vadd.f32 %v2534, %v2811
        %v2968 = vadd.f32 %v2535, %v2813
        %v2969 = vadd.f32 %v2536, %v2815
        %v2970 = vadd.f32 %v2537, %v2817
        %v2971 = vadd.f32 %v2538, %v2819
        %v2972 = vadd.f32 %v2539, %v2821
        %v2973 = vadd.f32 %v2540, %v2823
        %v2974 = vadd.f32 %v2541, %v2825
        %v2975 = vadd.f32 %v2542, %v2827
        %v2976 = vadd.f32 %v2543, %v2829
        %v2977 = vadd.f32 %v2544, %v2831
        %v2978 = vadd.f32 %v2545, %v2833
        %v2979 = vadd.f32 %v2546, %v2835
        %v2980 = vadd.f32 %v2547, %v2837
        %v2981 = vadd.f32 %v2548, %v2839
        %v2982 = vadd.f32 %v2549, %v2841
        %v2983 = vadd.f32 %v2550, %v2843
        %v2984 = vadd.f32 %v2551, %v2845
        %v2985 = vadd.f32 %v2552, %v2847
        %v2986 = vadd.f32 %v2553, %v2849
        %v2987 = vadd.f32 %v2554, %v2851
        %v2988 = vadd.f32 %v2555, %v2853
        %v2989 = vadd.f32 %v2556, %v2855
        %v2990 = vadd.f32 %v2557, %v2857
        %v2991 = vadd.f32 %v2558, %v2859
        %v2992 = vadd.f32 %v2559, %v2861
        %v2993 = vadd.f32 %v2560, %v2863
        %v2994 = vadd.f32 %v2561, %v2865
        %v2995 = vadd.f32 %v2562, %v2867
        %2996 = vst [vmem:[#allocation2] sm:$0x7] %v1427
        %2997 = vst [vmem:[#allocation2 + $0x8] sm:$0x7] %v1429
        %2998 = vst [vmem:[#allocation2 + $0x10] sm:$0x7] %v1431
        %2999 = vst [vmem:[#allocation2 + $0x18] sm:$0x7] %v1433
        %v3000 = vsub.f32 0.0, %v2932
        %v3001 = vsub.f32 0.0, %v2933
        %v3002 = vsub.f32 0.0, %v2934
        %v3003 = vsub.f32 0.0, %v2935
        %v3004 = vsub.f32 0.0, %v2936
        %v3005 = vsub.f32 0.0, %v2937
        %v3006 = vsub.f32 0.0, %v2938
        %v3007 = vsub.f32 0.0, %v2939
        %v3008 = vsub.f32 0.0, %v2940
        %v3009 = vsub.f32 0.0, %v2941
        %v3010 = vsub.f32 0.0, %v2942
        %v3011 = vsub.f32 0.0, %v2943
        %v3012 = vsub.f32 0.0, %v2944
        %v3013 = vsub.f32 0.0, %v2945
        %v3014 = vsub.f32 0.0, %v2946
        %v3015 = vsub.f32 0.0, %v2947
        %v3016 = vsub.f32 0.0, %v2948
        %v3017 = vsub.f32 0.0, %v2949
        %v3018 = vsub.f32 0.0, %v2950
        %v3019 = vsub.f32 0.0, %v2951
        %v3020 = vsub.f32 0.0, %v2952
        %v3021 = vsub.f32 0.0, %v2953
        %v3022 = vsub.f32 0.0, %v2954
        %v3023 = vsub.f32 0.0, %v2955
        %v3024 = vsub.f32 0.0, %v2956
        %v3025 = vsub.f32 0.0, %v2957
        %v3026 = vsub.f32 0.0, %v2958
        %v3027 = vsub.f32 0.0, %v2959
        %v3028 = vsub.f32 0.0, %v2960
        %v3029 = vsub.f32 0.0, %v2961
        %v3030 = vsub.f32 0.0, %v2962
        %v3031 = vsub.f32 0.0, %v2963
        %v3032 = vsub.f32 0.0, %v2964
        %v3033 = vsub.f32 0.0, %v2965
        %v3034 = vsub.f32 0.0, %v2966
        %v3035 = vsub.f32 0.0, %v2967
        %v3036 = vsub.f32 0.0, %v2968
        %v3037 = vsub.f32 0.0, %v2969
        %v3038 = vsub.f32 0.0, %v2970
        %v3039 = vsub.f32 0.0, %v2971
        %v3040 = vsub.f32 0.0, %v2972
        %v3041 = vsub.f32 0.0, %v2973
        %v3042 = vsub.f32 0.0, %v2974
        %v3043 = vsub.f32 0.0, %v2975
        %v3044 = vsub.f32 0.0, %v2976
        %v3045 = vsub.f32 0.0, %v2977
        %v3046 = vsub.f32 0.0, %v2978
        %v3047 = vsub.f32 0.0, %v2979
        %v3048 = vsub.f32 0.0, %v2980
        %v3049 = vsub.f32 0.0, %v2981
        %v3050 = vsub.f32 0.0, %v2982
        %v3051 = vsub.f32 0.0, %v2983
        %v3052 = vsub.f32 0.0, %v2984
        %v3053 = vsub.f32 0.0, %v2985
        %v3054 = vsub.f32 0.0, %v2986
        %v3055 = vsub.f32 0.0, %v2987
        %v3056 = vsub.f32 0.0, %v2988
        %v3057 = vsub.f32 0.0, %v2989
        %v3058 = vsub.f32 0.0, %v2990
        %v3059 = vsub.f32 0.0, %v2991
        %v3060 = vsub.f32 0.0, %v2992
        %v3061 = vsub.f32 0.0, %v2993
        %v3062 = vsub.f32 0.0, %v2994
        %v3063 = vsub.f32 0.0, %v2995
        %v3064 = vmul.f32 %v3000, 1.442695
        %v3065 = vpow.pop %v3064
        %v3066 = vmul.f32 %v3001, 1.442695
        %v3067 = vpow.pop %v3066
        %v3068 = vmul.f32 %v3002, 1.442695
        %v3069 = vpow.pop %v3068
        %v3070 = vmul.f32 %v3003, 1.442695
        %v3071 = vpow.pop %v3070
        %v3072 = vmul.f32 %v3004, 1.442695
        %v3073 = vpow.pop %v3072
        %v3074 = vmul.f32 %v3005, 1.442695
        %v3075 = vpow.pop %v3074
        %v3076 = vmul.f32 %v3006, 1.442695
        %v3077 = vpow.pop %v3076
        %v3078 = vmul.f32 %v3007, 1.442695
        %v3079 = vpow.pop %v3078
        %v3080 = vmul.f32 %v3008, 1.442695
        %v3081 = vpow.pop %v3080
        %v3082 = vmul.f32 %v3009, 1.442695
        %v3083 = vpow.pop %v3082
        %v3084 = vmul.f32 %v3010, 1.442695
        %v3085 = vpow.pop %v3084
        %v3086 = vmul.f32 %v3011, 1.442695
        %v3087 = vpow.pop %v3086
        %v3088 = vmul.f32 %v3012, 1.442695
        %v3089 = vpow.pop %v3088
        %v3090 = vmul.f32 %v3013, 1.442695
        %v3091 = vpow.pop %v3090
        %v3092 = vmul.f32 %v3014, 1.442695
        %v3093 = vpow.pop %v3092
        %v3094 = vmul.f32 %v3015, 1.442695
        %v3095 = vpow.pop %v3094
        %v3096 = vmul.f32 %v3016, 1.442695
        %v3097 = vpow.pop %v3096
        %v3098 = vmul.f32 %v3017, 1.442695
        %v3099 = vpow.pop %v3098
        %v3100 = vmul.f32 %v3018, 1.442695
        %v3101 = vpow.pop %v3100
        %v3102 = vmul.f32 %v3019, 1.442695
        %v3103 = vpow.pop %v3102
        %v3104 = vmul.f32 %v3020, 1.442695
        %v3105 = vpow.pop %v3104
        %v3106 = vmul.f32 %v3021, 1.442695
        %v3107 = vpow.pop %v3106
        %v3108 = vmul.f32 %v3022, 1.442695
        %v3109 = vpow.pop %v3108
        %v3110 = vmul.f32 %v3023, 1.442695
        %v3111 = vpow.pop %v3110
        %v3112 = vmul.f32 %v3024, 1.442695
        %v3113 = vpow.pop %v3112
        %v3114 = vmul.f32 %v3025, 1.442695
        %v3115 = vpow.pop %v3114
        %v3116 = vmul.f32 %v3026, 1.442695
        %v3117 = vpow.pop %v3116
        %v3118 = vmul.f32 %v3027, 1.442695
        %v3119 = vpow.pop %v3118
        %v3120 = vmul.f32 %v3028, 1.442695
        %v3121 = vpow.pop %v3120
        %v3122 = vmul.f32 %v3029, 1.442695
        %v3123 = vpow.pop %v3122
        %v3124 = vmul.f32 %v3030, 1.442695
        %v3125 = vpow.pop %v3124
        %v3126 = vmul.f32 %v3031, 1.442695
        %v3127 = vpow.pop %v3126
        %v3128 = vmul.f32 %v3032, 1.442695
        %v3129 = vpow.pop %v3128
        %v3130 = vmul.f32 %v3033, 1.442695
        %v3131 = vpow.pop %v3130
        %v3132 = vmul.f32 %v3034, 1.442695
        %v3133 = vpow.pop %v3132
        %v3134 = vmul.f32 %v3035, 1.442695
        %v3135 = vpow.pop %v3134
        %v3136 = vmul.f32 %v3036, 1.442695
        %v3137 = vpow.pop %v3136
        %v3138 = vmul.f32 %v3037, 1.442695
        %v3139 = vpow.pop %v3138
        %v3140 = vmul.f32 %v3038, 1.442695
        %v3141 = vpow.pop %v3140
        %v3142 = vmul.f32 %v3039, 1.442695
        %v3143 = vpow.pop %v3142
        %v3144 = vmul.f32 %v3040, 1.442695
        %v3145 = vpow.pop %v3144
        %v3146 = vmul.f32 %v3041, 1.442695
        %v3147 = vpow.pop %v3146
        %v3148 = vmul.f32 %v3042, 1.442695
        %v3149 = vpow.pop %v3148
        %v3150 = vmul.f32 %v3043, 1.442695
        %v3151 = vpow.pop %v3150
        %v3152 = vmul.f32 %v3044, 1.442695
        %v3153 = vpow.pop %v3152
        %v3154 = vmul.f32 %v3045, 1.442695
        %v3155 = vpow.pop %v3154
        %v3156 = vmul.f32 %v3046, 1.442695
        %v3157 = vpow.pop %v3156
        %v3158 = vmul.f32 %v3047, 1.442695
        %v3159 = vpow.pop %v3158
        %v3160 = vmul.f32 %v3048, 1.442695
        %v3161 = vpow.pop %v3160
        %v3162 = vmul.f32 %v3049, 1.442695
        %v3163 = vpow.pop %v3162
        %v3164 = vmul.f32 %v3050, 1.442695
        %v3165 = vpow.pop %v3164
        %v3166 = vmul.f32 %v3051, 1.442695
        %v3167 = vpow.pop %v3166
        %v3168 = vmul.f32 %v3052, 1.442695
        %v3169 = vpow.pop %v3168
        %v3170 = vmul.f32 %v3053, 1.442695
        %v3171 = vpow.pop %v3170
        %v3172 = vmul.f32 %v3054, 1.442695
        %v3173 = vpow.pop %v3172
        %v3174 = vmul.f32 %v3055, 1.442695
        %v3175 = vpow.pop %v3174
        %v3176 = vmul.f32 %v3056, 1.442695
        %v3177 = vpow.pop %v3176
        %v3178 = vmul.f32 %v3057, 1.442695
        %v3179 = vpow.pop %v3178
        %v3180 = vmul.f32 %v3058, 1.442695
        %v3181 = vpow.pop %v3180
        %v3182 = vmul.f32 %v3059, 1.442695
        %v3183 = vpow.pop %v3182
        %v3184 = vmul.f32 %v3060, 1.442695
        %v3185 = vpow.pop %v3184
        %v3186 = vmul.f32 %v3061, 1.442695
        %v3187 = vpow.pop %v3186
        %v3188 = vmul.f32 %v3062, 1.442695
        %v3189 = vpow.pop %v3188
        %v3190 = vmul.f32 %v3063, 1.442695
        %v3191 = vpow.pop %v3190
        %v3192 = vadd.f32 %v3065, 1.0
        %v3193 = vadd.f32 %v3067, 1.0
        %v3194 = vadd.f32 %v3069, 1.0
        %v3195 = vadd.f32 %v3071, 1.0
        %v3196 = vadd.f32 %v3073, 1.0
        %v3197 = vadd.f32 %v3075, 1.0
        %v3198 = vadd.f32 %v3077, 1.0
        %v3199 = vadd.f32 %v3079, 1.0
        %v3200 = vadd.f32 %v3081, 1.0
        %v3201 = vadd.f32 %v3083, 1.0
        %v3202 = vadd.f32 %v3085, 1.0
        %v3203 = vadd.f32 %v3087, 1.0
        %v3204 = vadd.f32 %v3089, 1.0
        %v3205 = vadd.f32 %v3091, 1.0
        %v3206 = vadd.f32 %v3093, 1.0
        %v3207 = vadd.f32 %v3095, 1.0
        %v3208 = vadd.f32 %v3097, 1.0
        %v3209 = vadd.f32 %v3099, 1.0
        %v3210 = vadd.f32 %v3101, 1.0
        %v3211 = vadd.f32 %v3103, 1.0
        %v3212 = vadd.f32 %v3105, 1.0
        %v3213 = vadd.f32 %v3107, 1.0
        %v3214 = vadd.f32 %v3109, 1.0
        %v3215 = vadd.f32 %v3111, 1.0
        %v3216 = vadd.f32 %v3113, 1.0
        %v3217 = vadd.f32 %v3115, 1.0
        %v3218 = vadd.f32 %v3117, 1.0
        %v3219 = vadd.f32 %v3119, 1.0
        %v3220 = vadd.f32 %v3121, 1.0
        %v3221 = vadd.f32 %v3123, 1.0
        %v3222 = vadd.f32 %v3125, 1.0
        %v3223 = vadd.f32 %v3127, 1.0
        %v3224 = vadd.f32 %v3129, 1.0
        %v3225 = vadd.f32 %v3131, 1.0
        %v3226 = vadd.f32 %v3133, 1.0
        %v3227 = vadd.f32 %v3135, 1.0
        %v3228 = vadd.f32 %v3137, 1.0
        %v3229 = vadd.f32 %v3139, 1.0
        %v3230 = vadd.f32 %v3141, 1.0
        %v3231 = vadd.f32 %v3143, 1.0
        %v3232 = vadd.f32 %v3145, 1.0
        %v3233 = vadd.f32 %v3147, 1.0
        %v3234 = vadd.f32 %v3149, 1.0
        %v3235 = vadd.f32 %v3151, 1.0
        %v3236 = vadd.f32 %v3153, 1.0
        %v3237 = vadd.f32 %v3155, 1.0
        %v3238 = vadd.f32 %v3157, 1.0
        %v3239 = vadd.f32 %v3159, 1.0
        %v3240 = vadd.f32 %v3161, 1.0
        %v3241 = vadd.f32 %v3163, 1.0
        %v3242 = vadd.f32 %v3165, 1.0
        %v3243 = vadd.f32 %v3167, 1.0
        %v3244 = vadd.f32 %v3169, 1.0
        %v3245 = vadd.f32 %v3171, 1.0
        %v3246 = vadd.f32 %v3173, 1.0
        %v3247 = vadd.f32 %v3175, 1.0
        %v3248 = vadd.f32 %v3177, 1.0
        %v3249 = vadd.f32 %v3179, 1.0
        %v3250 = vadd.f32 %v3181, 1.0
        %v3251 = vadd.f32 %v3183, 1.0
        %v3252 = vadd.f32 %v3185, 1.0
        %v3253 = vadd.f32 %v3187, 1.0
        %v3254 = vadd.f32 %v3189, 1.0
        %v3255 = vadd.f32 %v3191, 1.0
        %v3256 = vrcp.pop %v3192
        %v3257 = vmul.f32 1.0, %v3256
        %v3258 = vrcp.pop %v3193
        %v3259 = vmul.f32 1.0, %v3258
        %v3260 = vrcp.pop %v3194
        %v3261 = vmul.f32 1.0, %v3260
        %v3262 = vrcp.pop %v3195
        %v3263 = vmul.f32 1.0, %v3262
        %v3264 = vrcp.pop %v3196
        %v3265 = vmul.f32 1.0, %v3264
        %v3266 = vrcp.pop %v3197
        %v3267 = vmul.f32 1.0, %v3266
        %v3268 = vrcp.pop %v3198
        %v3269 = vmul.f32 1.0, %v3268
        %v3270 = vrcp.pop %v3199
        %v3271 = vmul.f32 1.0, %v3270
        %v3272 = vrcp.pop %v3200
        %v3273 = vmul.f32 1.0, %v3272
        %v3274 = vrcp.pop %v3201
        %v3275 = vmul.f32 1.0, %v3274
        %v3276 = vrcp.pop %v3202
        %v3277 = vmul.f32 1.0, %v3276
        %v3278 = vrcp.pop %v3203
        %v3279 = vmul.f32 1.0, %v3278
        %v3280 = vrcp.pop %v3204
        %v3281 = vmul.f32 1.0, %v3280
        %v3282 = vrcp.pop %v3205
        %v3283 = vmul.f32 1.0, %v3282
        %v3284 = vrcp.pop %v3206
        %v3285 = vmul.f32 1.0, %v3284
        %v3286 = vrcp.pop %v3207
        %v3287 = vmul.f32 1.0, %v3286
        %v3288 = vrcp.pop %v3208
        %v3289 = vmul.f32 1.0, %v3288
        %v3290 = vrcp.pop %v3209
        %v3291 = vmul.f32 1.0, %v3290
        %v3292 = vrcp.pop %v3210
        %v3293 = vmul.f32 1.0, %v3292
        %v3294 = vrcp.pop %v3211
        %v3295 = vmul.f32 1.0, %v3294
        %v3296 = vrcp.pop %v3212
        %v3297 = vmul.f32 1.0, %v3296
        %v3298 = vrcp.pop %v3213
        %v3299 = vmul.f32 1.0, %v3298
        %v3300 = vrcp.pop %v3214
        %v3301 = vmul.f32 1.0, %v3300
        %v3302 = vrcp.pop %v3215
        %v3303 = vmul.f32 1.0, %v3302
        %v3304 = vrcp.pop %v3216
        %v3305 = vmul.f32 1.0, %v3304
        %v3306 = vrcp.pop %v3217
        %v3307 = vmul.f32 1.0, %v3306
        %v3308 = vrcp.pop %v3218
        %v3309 = vmul.f32 1.0, %v3308
        %v3310 = vrcp.pop %v3219
        %v3311 = vmul.f32 1.0, %v3310
        %v3312 = vrcp.pop %v3220
        %v3313 = vmul.f32 1.0, %v3312
        %v3314 = vrcp.pop %v3221
        %v3315 = vmul.f32 1.0, %v3314
        %v3316 = vrcp.pop %v3222
        %v3317 = vmul.f32 1.0, %v3316
        %v3318 = vrcp.pop %v3223
        %v3319 = vmul.f32 1.0, %v3318
        %v3320 = vrcp.pop %v3224
        %v3321 = vmul.f32 1.0, %v3320
        %v3322 = vrcp.pop %v3225
        %v3323 = vmul.f32 1.0, %v3322
        %v3324 = vrcp.pop %v3226
        %v3325 = vmul.f32 1.0, %v3324
        %v3326 = vrcp.pop %v3227
        %v3327 = vmul.f32 1.0, %v3326
        %v3328 = vrcp.pop %v3228
        %v3329 = vmul.f32 1.0, %v3328
        %v3330 = vrcp.pop %v3229
        %v3331 = vmul.f32 1.0, %v3330
        %v3332 = vrcp.pop %v3230
        %v3333 = vmul.f32 1.0, %v3332
        %v3334 = vrcp.pop %v3231
        %v3335 = vmul.f32 1.0, %v3334
        %v3336 = vrcp.pop %v3232
        %v3337 = vmul.f32 1.0, %v3336
        %v3338 = vrcp.pop %v3233
        %v3339 = vmul.f32 1.0, %v3338
        %v3340 = vrcp.pop %v3234
        %v3341 = vmul.f32 1.0, %v3340
        %v3342 = vrcp.pop %v3235
        %v3343 = vmul.f32 1.0, %v3342
        %v3344 = vrcp.pop %v3236
        %v3345 = vmul.f32 1.0, %v3344
        %v3346 = vrcp.pop %v3237
        %v3347 = vmul.f32 1.0, %v3346
        %v3348 = vrcp.pop %v3238
        %v3349 = vmul.f32 1.0, %v3348
        %v3350 = vrcp.pop %v3239
        %v3351 = vmul.f32 1.0, %v3350
        %v3352 = vrcp.pop %v3240
        %v3353 = vmul.f32 1.0, %v3352
        %v3354 = vrcp.pop %v3241
        %v3355 = vmul.f32 1.0, %v3354
        %v3356 = vrcp.pop %v3242
        %v3357 = vmul.f32 1.0, %v3356
        %v3358 = vrcp.pop %v3243
        %v3359 = vmul.f32 1.0, %v3358
        %v3360 = vrcp.pop %v3244
        %v3361 = vmul.f32 1.0, %v3360
        %v3362 = vrcp.pop %v3245
        %v3363 = vmul.f32 1.0, %v3362
        %v3364 = vrcp.pop %v3246
        %v3365 = vmul.f32 1.0, %v3364
        %v3366 = vrcp.pop %v3247
        %v3367 = vmul.f32 1.0, %v3366
        %v3368 = vrcp.pop %v3248
        %v3369 = vmul.f32 1.0, %v3368
        %v3370 = vrcp.pop %v3249
        %v3371 = vmul.f32 1.0, %v3370
        %v3372 = vrcp.pop %v3250
        %v3373 = vmul.f32 1.0, %v3372
        %v3374 = vrcp.pop %v3251
        %v3375 = vmul.f32 1.0, %v3374
        %v3376 = vrcp.pop %v3252
        %v3377 = vmul.f32 1.0, %v3376
        %v3378 = vrcp.pop %v3253
        %v3379 = vmul.f32 1.0, %v3378
        %v3380 = vrcp.pop %v3254
        %v3381 = vmul.f32 1.0, %v3380
        %v3382 = vrcp.pop %v3255
        %v3383 = vmul.f32 1.0, %v3382
        %v3384 = vmul.f32 %v2932, %v3257
        %v3385 = vmul.f32 %v2933, %v3259
        %v3386 = vmul.f32 %v2934, %v3261
        %v3387 = vmul.f32 %v2935, %v3263
        %v3388 = vmul.f32 %v2936, %v3265
        %v3389 = vmul.f32 %v2937, %v3267
        %v3390 = vmul.f32 %v2938, %v3269
        %v3391 = vmul.f32 %v2939, %v3271
        %v3392 = vmul.f32 %v2940, %v3273
        %v3393 = vmul.f32 %v2941, %v3275
        %v3394 = vmul.f32 %v2942, %v3277
        %v3395 = vmul.f32 %v2943, %v3279
        %v3396 = vmul.f32 %v2944, %v3281
        %v3397 = vmul.f32 %v2945, %v3283
        %v3398 = vmul.f32 %v2946, %v3285
        %v3399 = vmul.f32 %v2947, %v3287
        %v3400 = vmul.f32 %v2948, %v3289
        %v3401 = vmul.f32 %v2949, %v3291
        %v3402 = vmul.f32 %v2950, %v3293
        %v3403 = vmul.f32 %v2951, %v3295
        %v3404 = vmul.f32 %v2952, %v3297
        %v3405 = vmul.f32 %v2953, %v3299
        %v3406 = vmul.f32 %v2954, %v3301
        %v3407 = vmul.f32 %v2955, %v3303
        %v3408 = vmul.f32 %v2956, %v3305
        %v3409 = vmul.f32 %v2957, %v3307
        %v3410 = vmul.f32 %v2958, %v3309
        %v3411 = vmul.f32 %v2959, %v3311
        %v3412 = vmul.f32 %v2960, %v3313
        %v3413 = vmul.f32 %v2961, %v3315
        %v3414 = vmul.f32 %v2962, %v3317
        %v3415 = vmul.f32 %v2963, %v3319
        %v3416 = vmul.f32 %v2964, %v3321
        %v3417 = vmul.f32 %v2965, %v3323
        %v3418 = vmul.f32 %v2966, %v3325
        %v3419 = vmul.f32 %v2967, %v3327
        %v3420 = vmul.f32 %v2968, %v3329
        %v3421 = vmul.f32 %v2969, %v3331
        %v3422 = vmul.f32 %v2970, %v3333
        %v3423 = vmul.f32 %v2971, %v3335
        %v3424 = vmul.f32 %v2972, %v3337
        %v3425 = vmul.f32 %v2973, %v3339
        %v3426 = vmul.f32 %v2974, %v3341
        %v3427 = vmul.f32 %v2975, %v3343
        %v3428 = vmul.f32 %v2976, %v3345
        %v3429 = vmul.f32 %v2977, %v3347
        %v3430 = vmul.f32 %v2978, %v3349
        %v3431 = vmul.f32 %v2979, %v3351
        %v3432 = vmul.f32 %v2980, %v3353
        %v3433 = vmul.f32 %v2981, %v3355
        %v3434 = vmul.f32 %v2982, %v3357
        %v3435 = vmul.f32 %v2983, %v3359
        %v3436 = vmul.f32 %v2984, %v3361
        %v3437 = vmul.f32 %v2985, %v3363
        %v3438 = vmul.f32 %v2986, %v3365
        %v3439 = vmul.f32 %v2987, %v3367
        %v3440 = vmul.f32 %v2988, %v3369
        %v3441 = vmul.f32 %v2989, %v3371
        %v3442 = vmul.f32 %v2990, %v3373
        %v3443 = vmul.f32 %v2991, %v3375
        %v3444 = vmul.f32 %v2992, %v3377
        %v3445 = vmul.f32 %v2993, %v3379
        %v3446 = vmul.f32 %v2994, %v3381
        %v3447 = vmul.f32 %v2995, %v3383
        %v3448 = vld [vmem:[#allocation14] sm:$0x1]
        %v3450 = vlaneseq
        %v3451 = vshrl.u32 %v3450, 7
        %v3452 = vsub.s32 0, %v3451
        %v3453 = vrot.slane %v3448, %v3452
        %3455 = vmatprep.subr.mxu0 0.0
        %3456 = vmatpush1.msra.mxu0 %v1226
        %3457 = vmatprep.subr.mxu0 0.0
        %3458 = vmatpush1.msra.mxu0 %v1227
        %3459 = vmatprep.subr.mxu0 0.0
        %3460 = vmatpush1.msra.mxu0 %v1228
        %3461 = vmatprep.subr.mxu0 0.0
        %3462 = vmatpush1.msra.mxu0 %v1229
        %3463 = vmatprep.subr.mxu0 0.0
        %3464 = vmatpush1.msra.mxu0 %v1230
        %3465 = vmatprep.subr.mxu0 0.0
        %3466 = vmatpush1.msra.mxu0 %v1231
        %3467 = vmatprep.subr.mxu0 0.0
        %3468 = vmatpush1.msra.mxu0 %v1232
        %3469 = vmatprep.subr.mxu0 0.0
        %3470 = vmatpush1.msra.mxu0 %v1233
        %3471 = vmatprep.subr.mxu0 0.0
        %3472 = vmatpush1.msra.mxu0 %v1234
        %3473 = vmatprep.subr.mxu0 0.0
        %3474 = vmatpush1.msra.mxu0 %v1235
        %3475 = vmatprep.subr.mxu0 0.0
        %3476 = vmatpush1.msra.mxu0 %v1236
        %3477 = vmatprep.subr.mxu0 0.0
        %3478 = vmatpush1.msra.mxu0 %v1237
        %3479 = vmatprep.subr.mxu0 0.0
        %3480 = vmatpush1.msra.mxu0 %v1238
        %3481 = vmatprep.subr.mxu0 0.0
        %3482 = vmatpush1.msra.mxu0 %v1239
        %3483 = vmatprep.subr.mxu0 0.0
        %3484 = vmatpush1.msra.mxu0 %v1240
        %3485 = vmatprep.subr.mxu0 0.0
        %3486 = vmatpush1.msra.mxu0 %v1241
        %3487 = vmatprep.subr.mxu0 0.0
        %3488 = vmatpush1.msra.mxu0 0.0
        %3489 = vmatprep.subr.mxu0 0.0
        %3490 = vmatpush1.msra.mxu0 0.0
        %3491 = vmatprep.subr.mxu0 0.0
        %3492 = vmatpush1.msra.mxu0 0.0
        %3493 = vmatprep.subr.mxu0 0.0
        %3494 = vmatpush1.msra.mxu0 0.0
        %3495 = vmatprep.subr.mxu0 0.0
        %3496 = vmatpush1.msra.mxu0 0.0
        %3497 = vmatprep.subr.mxu0 0.0
        %3498 = vmatpush1.msra.mxu0 0.0
        %3499 = vmatprep.subr.mxu0 0.0
        %3500 = vmatpush1.msra.mxu0 0.0
        %3501 = vmatprep.subr.mxu0 0.0
        %3502 = vmatpush1.msra.mxu0 0.0
        %3503 = vmatprep.subr.mxu0 0.0
        %3504 = vmatpush1.msra.mxu0 0.0
        %3505 = vmatprep.subr.mxu0 0.0
        %3506 = vmatpush1.msra.mxu0 0.0
        %3507 = vmatprep.subr.mxu0 0.0
        %3508 = vmatpush1.msra.mxu0 0.0
        %3509 = vmatprep.subr.mxu0 0.0
        %3510 = vmatpush1.msra.mxu0 0.0
        %3511 = vmatprep.subr.mxu0 0.0
        %3512 = vmatpush1.msra.mxu0 0.0
        %3513 = vmatprep.subr.mxu0 0.0
        %3514 = vmatpush1.msra.mxu0 0.0
        %3515 = vmatprep.subr.mxu0 0.0
        %3516 = vmatpush1.msra.mxu0 0.0
        %3517 = vmatprep.subr.mxu0 0.0
        %3518 = vmatpush1.msra.mxu0 0.0
        %3519 = vmatprep.mubr.f32.mxu0 0.0
        %3520 = vmatmul.mubr.f32.gmra.mrb[0].mxu0 %v535
        %v3521 = vpop.f32.mrb[0].mxu0
        %v3522 = vadd.f32 %v3453, %v3521
        %v3523 = vpop.f32.mrb[0].mxu0
        %3524 = vmatprep.mubr.f32.mxu0 0.0
        %3525 = vmatmul.mubr.f32.gmra.mrb[0].mxu0 %v536
        %v3526 = vpop.f32.mrb[0].mxu0
        %v3527 = vadd.f32 %v3453, %v3526
        %v3528 = vpop.f32.mrb[0].mxu0
        %3529 = vmatprep.mubr.f32.mxu0 0.0
        %3530 = vmatmul.mubr.f32.gmra.mrb[0].mxu0 %v537
        %v3531 = vpop.f32.mrb[0].mxu0
        %v3532 = vadd.f32 %v3453, %v3531
        %v3533 = vpop.f32.mrb[0].mxu0
        %3534 = vmatprep.mubr.f32.mxu0 0.0
        %3535 = vmatmul.mubr.f32.gmra.mrb[0].mxu0 %v538
        %v3536 = vpop.f32.mrb[0].mxu0
        %v3537 = vadd.f32 %v3453, %v3536
        %v3538 = vpop.f32.mrb[0].mxu0
        %3539 = vmatprep.mubr.f32.mxu0 0.0
        %3540 = vmatmul.mubr.f32.gmra.mrb[0].mxu0 %v539
        %v3541 = vpop.f32.mrb[0].mxu0
        %v3542 = vadd.f32 %v3453, %v3541
        %v3543 = vpop.f32.mrb[0].mxu0
        %3544 = vmatprep.mubr.f32.mxu0 0.0
        %3545 = vmatmul.mubr.f32.gmra.mrb[0].mxu0 %v540
        %v3546 = vpop.f32.mrb[0].mxu0
        %v3547 = vadd.f32 %v3453, %v3546
        %v3548 = vpop.f32.mrb[0].mxu0
        %3549 = vmatprep.mubr.f32.mxu0 0.0
        %3550 = vmatmul.mubr.f32.gmra.mrb[0].mxu0 %v541
        %v3551 = vpop.f32.mrb[0].mxu0
        %v3552 = vadd.f32 %v3453, %v3551
        %v3553 = vpop.f32.mrb[0].mxu0
        %3554 = vmatprep.mubr.f32.mxu0 0.0
        %3555 = vmatmul.mubr.f32.gmra.mrb[0].mxu0 %v542
        %v3556 = vpop.f32.mrb[0].mxu0
        %v3557 = vadd.f32 %v3453, %v3556
        %v3558 = vpop.f32.mrb[0].mxu0
        %3559 = vmatprep.mubr.f32.mxu0 0.0
        %3560 = vmatmul.mubr.f32.gmra.mrb[0].mxu0 %v543
        %v3561 = vpop.f32.mrb[0].mxu0
        %v3562 = vadd.f32 %v3453, %v3561
        %v3563 = vpop.f32.mrb[0].mxu0
        %3564 = vmatprep.mubr.f32.mxu0 0.0
        %3565 = vmatmul.mubr.f32.gmra.mrb[0].mxu0 %v544
        %v3566 = vpop.f32.mrb[0].mxu0
        %v3567 = vadd.f32 %v3453, %v3566
        %v3568 = vpop.f32.mrb[0].mxu0
        %3569 = vmatprep.mubr.f32.mxu0 0.0
        %3570 = vmatmul.mubr.f32.gmra.mrb[0].mxu0 %v545
        %v3571 = vpop.f32.mrb[0].mxu0
        %v3572 = vadd.f32 %v3453, %v3571
        %v3573 = vpop.f32.mrb[0].mxu0
        %3574 = vmatprep.mubr.f32.mxu0 0.0
        %3575 = vmatmul.mubr.f32.gmra.mrb[0].mxu0 %v546
        %v3576 = vpop.f32.mrb[0].mxu0
        %v3577 = vadd.f32 %v3453, %v3576
        %v3578 = vpop.f32.mrb[0].mxu0
        %3579 = vmatprep.mubr.f32.mxu0 0.0
        %3580 = vmatmul.mubr.f32.gmra.mrb[0].mxu0 %v547
        %v3581 = vpop.f32.mrb[0].mxu0
        %v3582 = vadd.f32 %v3453, %v3581
        %v3583 = vpop.f32.mrb[0].mxu0
        %3584 = vmatprep.mubr.f32.mxu0 0.0
        %3585 = vmatmul.mubr.f32.gmra.mrb[0].mxu0 %v548
        %v3586 = vpop.f32.mrb[0].mxu0
        %v3587 = vadd.f32 %v3453, %v3586
        %v3588 = vpop.f32.mrb[0].mxu0
        %3589 = vmatprep.mubr.f32.mxu0 0.0
        %3590 = vmatmul.mubr.f32.gmra.mrb[0].mxu0 %v549
        %v3591 = vpop.f32.mrb[0].mxu0
        %v3592 = vadd.f32 %v3453, %v3591
        %v3593 = vpop.f32.mrb[0].mxu0
        %3594 = vmatprep.mubr.f32.mxu0 0.0
        %3595 = vmatmul.mubr.f32.gmra.mrb[0].mxu0 %v550
        %v3596 = vpop.f32.mrb[0].mxu0
        %v3597 = vadd.f32 %v3453, %v3596
        %v3598 = vpop.f32.mrb[0].mxu0
        %3599 = vdwg.mxu0
        %vm3600 = vcmp.gt.f32.partialorder %v3522, 20.0
        %vm3601 = vcmp.gt.f32.partialorder %v3527, 20.0
        %vm3602 = vcmp.gt.f32.partialorder %v3532, 20.0
        %vm3603 = vcmp.gt.f32.partialorder %v3537, 20.0
        %vm3604 = vcmp.gt.f32.partialorder %v3542, 20.0
        %vm3605 = vcmp.gt.f32.partialorder %v3547, 20.0
        %vm3606 = vcmp.gt.f32.partialorder %v3552, 20.0
        %vm3607 = vcmp.gt.f32.partialorder %v3557, 20.0
        %vm3608 = vcmp.gt.f32.partialorder %v3562, 20.0
        %vm3609 = vcmp.gt.f32.partialorder %v3567, 20.0
        %vm3610 = vcmp.gt.f32.partialorder %v3572, 20.0
        %vm3611 = vcmp.gt.f32.partialorder %v3577, 20.0
        %vm3612 = vcmp.gt.f32.partialorder %v3582, 20.0
        %vm3613 = vcmp.gt.f32.partialorder %v3587, 20.0
        %vm3614 = vcmp.gt.f32.partialorder %v3592, 20.0
        %vm3615 = vcmp.gt.f32.partialorder %v3597, 20.0
        %v3616 = vmin.f32 %v3522, 20.0
        %v3617 = vmin.f32 %v3527, 20.0
        %v3618 = vmin.f32 %v3532, 20.0
        %v3619 = vmin.f32 %v3537, 20.0
        %v3620 = vmin.f32 %v3542, 20.0
        %v3621 = vmin.f32 %v3547, 20.0
        %v3622 = vmin.f32 %v3552, 20.0
        %v3623 = vmin.f32 %v3557, 20.0
        %v3624 = vmin.f32 %v3562, 20.0
        %v3625 = vmin.f32 %v3567, 20.0
        %v3626 = vmin.f32 %v3572, 20.0
        %v3627 = vmin.f32 %v3577, 20.0
        %v3628 = vmin.f32 %v3582, 20.0
        %v3629 = vmin.f32 %v3587, 20.0
        %v3630 = vmin.f32 %v3592, 20.0
        %v3631 = vmin.f32 %v3597, 20.0
        %v3632 = vmul.f32 %v3616, 1.442695
        %v3633 = vpow.pop %v3632
        %v3634 = vmul.f32 %v3617, 1.442695
        %v3635 = vpow.pop %v3634
        %v3636 = vmul.f32 %v3618, 1.442695
        %v3637 = vpow.pop %v3636
        %v3638 = vmul.f32 %v3619, 1.442695
        %v3639 = vpow.pop %v3638
        %v3640 = vmul.f32 %v3620, 1.442695
        %v3641 = vpow.pop %v3640
        %v3642 = vmul.f32 %v3621, 1.442695
        %v3643 = vpow.pop %v3642
        %v3644 = vmul.f32 %v3622, 1.442695
        %v3645 = vpow.pop %v3644
        %v3646 = vmul.f32 %v3623, 1.442695
        %v3647 = vpow.pop %v3646
        %v3648 = vmul.f32 %v3624, 1.442695
        %v3649 = vpow.pop %v3648
        %v3650 = vmul.f32 %v3625, 1.442695
        %v3651 = vpow.pop %v3650
        %v3652 = vmul.f32 %v3626, 1.442695
        %v3653 = vpow.pop %v3652
        %v3654 = vmul.f32 %v3627, 1.442695
        %v3655 = vpow.pop %v3654
        %v3656 = vmul.f32 %v3628, 1.442695
        %v3657 = vpow.pop %v3656
        %v3658 = vmul.f32 %v3629, 1.442695
        %v3659 = vpow.pop %v3658
        %v3660 = vmul.f32 %v3630, 1.442695
        %v3661 = vpow.pop %v3660
        %v3662 = vmul.f32 %v3631, 1.442695
        %v3663 = vpow.pop %v3662
        %v3664 = vadd.f32 %v3633, 1.0
        %v3665 = vadd.f32 %v3635, 1.0
        %v3666 = vadd.f32 %v3637, 1.0
        %v3667 = vadd.f32 %v3639, 1.0
        %v3668 = vadd.f32 %v3641, 1.0
        %v3669 = vadd.f32 %v3643, 1.0
        %v3670 = vadd.f32 %v3645, 1.0
        %v3671 = vadd.f32 %v3647, 1.0
        %v3672 = vadd.f32 %v3649, 1.0
        %v3673 = vadd.f32 %v3651, 1.0
        %v3674 = vadd.f32 %v3653, 1.0
        %v3675 = vadd.f32 %v3655, 1.0
        %v3676 = vadd.f32 %v3657, 1.0
        %v3677 = vadd.f32 %v3659, 1.0
        %v3678 = vadd.f32 %v3661, 1.0
        %v3679 = vadd.f32 %v3663, 1.0
        %v3680 = vlog2.pop %v3664
        %v3681 = vmul.f32 %v3680, 0.6931472
        %v3682 = vlog2.pop %v3665
        %v3683 = vmul.f32 %v3682, 0.6931472
        %v3684 = vlog2.pop %v3666
        %v3685 = vmul.f32 %v3684, 0.6931472
        %v3686 = vlog2.pop %v3667
        %v3687 = vmul.f32 %v3686, 0.6931472
        %v3688 = vlog2.pop %v3668
        %v3689 = vmul.f32 %v3688, 0.6931472
        %v3690 = vlog2.pop %v3669
        %v3691 = vmul.f32 %v3690, 0.6931472
        %v3692 = vlog2.pop %v3670
        %v3693 = vmul.f32 %v3692, 0.6931472
        %v3694 = vlog2.pop %v3671
        %v3695 = vmul.f32 %v3694, 0.6931472
        %v3696 = vlog2.pop %v3672
        %v3697 = vmul.f32 %v3696, 0.6931472
        %v3698 = vlog2.pop %v3673
        %v3699 = vmul.f32 %v3698, 0.6931472
        %v3700 = vlog2.pop %v3674
        %v3701 = vmul.f32 %v3700, 0.6931472
        %v3702 = vlog2.pop %v3675
        %v3703 = vmul.f32 %v3702, 0.6931472
        %v3704 = vlog2.pop %v3676
        %v3705 = vmul.f32 %v3704, 0.6931472
        %v3706 = vlog2.pop %v3677
        %v3707 = vmul.f32 %v3706, 0.6931472
        %v3708 = vlog2.pop %v3678
        %v3709 = vmul.f32 %v3708, 0.6931472
        %v3710 = vlog2.pop %v3679
        %v3711 = vmul.f32 %v3710, 0.6931472
        %v3712 = vsel %vm3600, %v3522, %v3681
        %v3713 = vsel %vm3601, %v3527, %v3683
        %v3714 = vsel %vm3602, %v3532, %v3685
        %v3715 = vsel %vm3603, %v3537, %v3687
        %v3716 = vsel %vm3604, %v3542, %v3689
        %v3717 = vsel %vm3605, %v3547, %v3691
        %v3718 = vsel %vm3606, %v3552, %v3693
        %v3719 = vsel %vm3607, %v3557, %v3695
        %v3720 = vsel %vm3608, %v3562, %v3697
        %v3721 = vsel %vm3609, %v3567, %v3699
        %v3722 = vsel %vm3610, %v3572, %v3701
        %v3723 = vsel %vm3611, %v3577, %v3703
        %v3724 = vsel %vm3612, %v3582, %v3705
        %v3725 = vsel %vm3613, %v3587, %v3707
        %v3726 = vsel %vm3614, %v3592, %v3709
        %v3727 = vsel %vm3615, %v3597, %v3711
        %v3728 = vld [vmem:[%s7] sm:$0x1]
        %v3730 = vlaneseq
        %v3731 = vshrl.u32 %v3730, 7
        %v3732 = vsub.s32 0, %v3731
        %v3733 = vrot.slane %v3728, %v3732
        %v3735 = vmul.f32 %v3712, %v3733
        %v3736 = vmul.f32 %v3713, %v3733
        %v3737 = vmul.f32 %v3714, %v3733
        %v3738 = vmul.f32 %v3715, %v3733
        %v3739 = vmul.f32 %v3716, %v3733
        %v3740 = vmul.f32 %v3717, %v3733
        %v3741 = vmul.f32 %v3718, %v3733
        %v3742 = vmul.f32 %v3719, %v3733
        %v3743 = vmul.f32 %v3720, %v3733
        %v3744 = vmul.f32 %v3721, %v3733
        %v3745 = vmul.f32 %v3722, %v3733
        %v3746 = vmul.f32 %v3723, %v3733
        %v3747 = vmul.f32 %v3724, %v3733
        %v3748 = vmul.f32 %v3725, %v3733
        %v3749 = vmul.f32 %v3726, %v3733
        %v3750 = vmul.f32 %v3727, %v3733
        %v3751 = vlaneseq
        %v3752 = vshrl.u32 %v3751, 7
        %v3753 = vadd.s32 %v3752, 8
        %v3754 = vadd.s32 %v3752, 16
        %v3755 = vadd.s32 %v3752, 24
        %v3756 = vadd.s32 %v3752, 32
        %v3757 = vadd.s32 %v3752, 40
        %v3758 = vadd.s32 %v3752, 48
        %v3759 = vadd.s32 %v3752, 56
        %v3760 = vadd.s32 %v3752, 64
        %v3761 = vadd.s32 %v3752, 72
        %v3762 = vadd.s32 %v3752, 80
        %v3763 = vadd.s32 %v3752, 88
        %v3764 = vadd.s32 %v3752, 96
        %v3765 = vadd.s32 %v3752, 104
        %v3766 = vadd.s32 %v3752, 112
        %v3767 = vadd.s32 %v3752, 120
        %v3768 = vlaneseq
        %v3769 = vand.u32 %v3768, 127
        %vm3770 = vcmp.le.s32.totalorder %v3769, %v3752
        %vm3771 = vcmp.le.s32.totalorder %v3769, %v3753
        %vm3772 = vcmp.le.s32.totalorder %v3769, %v3754
        %vm3773 = vcmp.le.s32.totalorder %v3769, %v3755
        %vm3774 = vcmp.le.s32.totalorder %v3769, %v3756
        %vm3775 = vcmp.le.s32.totalorder %v3769, %v3757
        %vm3776 = vcmp.le.s32.totalorder %v3769, %v3758
        %vm3777 = vcmp.le.s32.totalorder %v3769, %v3759
        %vm3778 = vcmp.le.s32.totalorder %v3769, %v3760
        %vm3779 = vcmp.le.s32.totalorder %v3769, %v3761
        %vm3780 = vcmp.le.s32.totalorder %v3769, %v3762
        %vm3781 = vcmp.le.s32.totalorder %v3769, %v3763
        %vm3782 = vcmp.le.s32.totalorder %v3769, %v3764
        %vm3783 = vcmp.le.s32.totalorder %v3769, %v3765
        %vm3784 = vcmp.le.s32.totalorder %v3769, %v3766
        %vm3785 = vcmp.le.s32.totalorder %v3769, %v3767
        %v3786 = vsel %vm3770, 1, 0
        %v3787 = vsel %vm3771, 1, 0
        %v3788 = vsel %vm3772, 1, 0
        %v3789 = vsel %vm3773, 1, 0
        %v3790 = vsel %vm3774, 1, 0
        %v3791 = vsel %vm3775, 1, 0
        %v3792 = vsel %vm3776, 1, 0
        %v3793 = vsel %vm3777, 1, 0
        %v3794 = vsel %vm3778, 1, 0
        %v3795 = vsel %vm3779, 1, 0
        %v3796 = vsel %vm3780, 1, 0
        %v3797 = vsel %vm3781, 1, 0
        %v3798 = vsel %vm3782, 1, 0
        %v3799 = vsel %vm3783, 1, 0
        %v3800 = vsel %vm3784, 1, 0
        %v3801 = vsel %vm3785, 1, 0
        %v3802 = vcvt.s32.f32 %v3786
        %v3803 = vcvt.s32.f32 %v3787
        %v3804 = vcvt.s32.f32 %v3788
        %v3805 = vcvt.s32.f32 %v3789
        %v3806 = vcvt.s32.f32 %v3790
        %v3807 = vcvt.s32.f32 %v3791
        %v3808 = vcvt.s32.f32 %v3792
        %v3809 = vcvt.s32.f32 %v3793
        %v3810 = vcvt.s32.f32 %v3794
        %v3811 = vcvt.s32.f32 %v3795
        %v3812 = vcvt.s32.f32 %v3796
        %v3813 = vcvt.s32.f32 %v3797
        %v3814 = vcvt.s32.f32 %v3798
        %v3815 = vcvt.s32.f32 %v3799
        %v3816 = vcvt.s32.f32 %v3800
        %v3817 = vcvt.s32.f32 %v3801
        %vm3818 = vcmp.le.s32.totalorder %v3752, %v3769
        %vm3819 = vcmp.le.s32.totalorder %v3753, %v3769
        %vm3820 = vcmp.le.s32.totalorder %v3754, %v3769
        %vm3821 = vcmp.le.s32.totalorder %v3755, %v3769
        %vm3822 = vcmp.le.s32.totalorder %v3756, %v3769
        %vm3823 = vcmp.le.s32.totalorder %v3757, %v3769
        %vm3824 = vcmp.le.s32.totalorder %v3758, %v3769
        %vm3825 = vcmp.le.s32.totalorder %v3759, %v3769
        %vm3826 = vcmp.le.s32.totalorder %v3760, %v3769
        %vm3827 = vcmp.le.s32.totalorder %v3761, %v3769
        %vm3828 = vcmp.le.s32.totalorder %v3762, %v3769
        %vm3829 = vcmp.le.s32.totalorder %v3763, %v3769
        %vm3830 = vcmp.le.s32.totalorder %v3764, %v3769
        %vm3831 = vcmp.le.s32.totalorder %v3765, %v3769
        %vm3832 = vcmp.le.s32.totalorder %v3766, %v3769
        %vm3833 = vcmp.le.s32.totalorder %v3767, %v3769
        %v3834 = vsel %vm3818, 1, 0
        %v3835 = vsel %vm3819, 1, 0
        %v3836 = vsel %vm3820, 1, 0
        %v3837 = vsel %vm3821, 1, 0
        %v3838 = vsel %vm3822, 1, 0
        %v3839 = vsel %vm3823, 1, 0
        %v3840 = vsel %vm3824, 1, 0
        %v3841 = vsel %vm3825, 1, 0
        %v3842 = vsel %vm3826, 1, 0
        %v3843 = vsel %vm3827, 1, 0
        %v3844 = vsel %vm3828, 1, 0
        %v3845 = vsel %vm3829, 1, 0
        %v3846 = vsel %vm3830, 1, 0
        %v3847 = vsel %vm3831, 1, 0
        %v3848 = vsel %vm3832, 1, 0
        %v3849 = vsel %vm3833, 1, 0
        %v3850 = vcvt.s32.f32 %v3834
        %v3851 = vcvt.s32.f32 %v3835
        %v3852 = vcvt.s32.f32 %v3836
        %v3853 = vcvt.s32.f32 %v3837
        %v3854 = vcvt.s32.f32 %v3838
        %v3855 = vcvt.s32.f32 %v3839
        %v3856 = vcvt.s32.f32 %v3840
        %v3857 = vcvt.s32.f32 %v3841
        %v3858 = vcvt.s32.f32 %v3842
        %v3859 = vcvt.s32.f32 %v3843
        %v3860 = vcvt.s32.f32 %v3844
        %v3861 = vcvt.s32.f32 %v3845
        %v3862 = vcvt.s32.f32 %v3846
        %v3863 = vcvt.s32.f32 %v3847
        %v3864 = vcvt.s32.f32 %v3848
        %v3865 = vcvt.s32.f32 %v3849
        %3866 = vmatprep.subr.mxu0 0.0
        %3867 = vmatpush1.msra.mxu0 %v3735
        %3868 = vmatprep.subr.mxu0 0.0
        %3869 = vmatpush1.msra.mxu0 %v3736
        %3870 = vmatprep.subr.mxu0 0.0
        %3871 = vmatpush1.msra.mxu0 %v3737
        %3872 = vmatprep.subr.mxu0 0.0
        %3873 = vmatpush1.msra.mxu0 %v3738
        %3874 = vmatprep.subr.mxu0 0.0
        %3875 = vmatpush1.msra.mxu0 %v3739
        %3876 = vmatprep.subr.mxu0 0.0
        %3877 = vmatpush1.msra.mxu0 %v3740
        %3878 = vmatprep.subr.mxu0 0.0
        %3879 = vmatpush1.msra.mxu0 %v3741
        %3880 = vmatprep.subr.mxu0 0.0
        %3881 = vmatpush1.msra.mxu0 %v3742
        %3882 = vmatprep.subr.mxu0 0.0
        %3883 = vmatpush1.msra.mxu0 %v3743
        %3884 = vmatprep.subr.mxu0 0.0
        %3885 = vmatpush1.msra.mxu0 %v3744
        %3886 = vmatprep.subr.mxu0 0.0
        %3887 = vmatpush1.msra.mxu0 %v3745
        %3888 = vmatprep.subr.mxu0 0.0
        %3889 = vmatpush1.msra.mxu0 %v3746
        %3890 = vmatprep.subr.mxu0 0.0
        %3891 = vmatpush1.msra.mxu0 %v3747
        %3892 = vmatprep.subr.mxu0 0.0
        %3893 = vmatpush1.msra.mxu0 %v3748
        %3894 = vmatprep.subr.mxu0 0.0
        %3895 = vmatpush1.msra.mxu0 %v3749
        %3896 = vmatprep.subr.mxu0 0.0
        %3897 = vmatpush1.msra.mxu0 %v3750
        %3898 = vmatprep.subr.mxu0 0.0
        %3899 = vmatpush1.msra.mxu0 0.0
        %3900 = vmatprep.subr.mxu0 0.0
        %3901 = vmatpush1.msra.mxu0 0.0
        %3902 = vmatprep.subr.mxu0 0.0
        %3903 = vmatpush1.msra.mxu0 0.0
        %3904 = vmatprep.subr.mxu0 0.0
        %3905 = vmatpush1.msra.mxu0 0.0
        %3906 = vmatprep.subr.mxu0 0.0
        %3907 = vmatpush1.msra.mxu0 0.0
        %3908 = vmatprep.subr.mxu0 0.0
        %3909 = vmatpush1.msra.mxu0 0.0
        %3910 = vmatprep.subr.mxu0 0.0
        %3911 = vmatpush1.msra.mxu0 0.0
        %3912 = vmatprep.subr.mxu0 0.0
        %3913 = vmatpush1.msra.mxu0 0.0
        %3914 = vmatprep.subr.mxu0 0.0
        %3915 = vmatpush1.msra.mxu0 0.0
        %3916 = vmatprep.subr.mxu0 0.0
        %3917 = vmatpush1.msra.mxu0 0.0
        %3918 = vmatprep.subr.mxu0 0.0
        %3919 = vmatpush1.msra.mxu0 0.0
        %3920 = vmatprep.subr.mxu0 0.0
        %3921 = vmatpush1.msra.mxu0 0.0
        %3922 = vmatprep.subr.mxu0 0.0
        %3923 = vmatpush1.msra.mxu0 0.0
        %3924 = vmatprep.subr.mxu0 0.0
        %3925 = vmatpush1.msra.mxu0 0.0
        %3926 = vmatprep.subr.mxu0 0.0
        %3927 = vmatpush1.msra.mxu0 0.0
        %3928 = vmatprep.subr.mxu0 0.0
        %3929 = vmatpush1.msra.mxu0 0.0
        %3930 = vmatprep.mubr.f32.mxu0 0.0
        %3931 = vmatmul.mubr.f32.gmra.mrb[0].mxu0 %v3802
        %v3932 = vpop.f32.mrb[0].mxu0
        %v3933 = vadd.f32 0.0, %v3932
        %v3934 = vpop.f32.mrb[0].mxu0
        %3935 = vmatprep.mubr.f32.mxu0 0.0
        %3936 = vmatmul.mubr.f32.gmra.mrb[0].mxu0 %v3803
        %v3937 = vpop.f32.mrb[0].mxu0
        %v3938 = vadd.f32 0.0, %v3937
        %v3939 = vpop.f32.mrb[0].mxu0
        %3940 = vmatprep.mubr.f32.mxu0 0.0
        %3941 = vmatmul.mubr.f32.gmra.mrb[0].mxu0 %v3804
        %v3942 = vpop.f32.mrb[0].mxu0
        %v3943 = vadd.f32 0.0, %v3942
        %v3944 = vpop.f32.mrb[0].mxu0
        %3945 = vmatprep.mubr.f32.mxu0 0.0
        %3946 = vmatmul.mubr.f32.gmra.mrb[0].mxu0 %v3805
        %v3947 = vpop.f32.mrb[0].mxu0
        %v3948 = vadd.f32 0.0, %v3947
        %v3949 = vpop.f32.mrb[0].mxu0
        %3950 = vmatprep.mubr.f32.mxu0 0.0
        %3951 = vmatmul.mubr.f32.gmra.mrb[0].mxu0 %v3806
        %v3952 = vpop.f32.mrb[0].mxu0
        %v3953 = vadd.f32 0.0, %v3952
        %v3954 = vpop.f32.mrb[0].mxu0
        %3955 = vmatprep.mubr.f32.mxu0 0.0
        %3956 = vmatmul.mubr.f32.gmra.mrb[0].mxu0 %v3807
        %v3957 = vpop.f32.mrb[0].mxu0
        %v3958 = vadd.f32 0.0, %v3957
        %v3959 = vpop.f32.mrb[0].mxu0
        %3960 = vmatprep.mubr.f32.mxu0 0.0
        %3961 = vmatmul.mubr.f32.gmra.mrb[0].mxu0 %v3808
        %v3962 = vpop.f32.mrb[0].mxu0
        %v3963 = vadd.f32 0.0, %v3962
        %v3964 = vpop.f32.mrb[0].mxu0
        %3965 = vmatprep.mubr.f32.mxu0 0.0
        %3966 = vmatmul.mubr.f32.gmra.mrb[0].mxu0 %v3809
        %v3967 = vpop.f32.mrb[0].mxu0
        %v3968 = vadd.f32 0.0, %v3967
        %v3969 = vpop.f32.mrb[0].mxu0
        %3970 = vmatprep.mubr.f32.mxu0 0.0
        %3971 = vmatmul.mubr.f32.gmra.mrb[0].mxu0 %v3810
        %v3972 = vpop.f32.mrb[0].mxu0
        %v3973 = vadd.f32 0.0, %v3972
        %v3974 = vpop.f32.mrb[0].mxu0
        %3975 = vmatprep.mubr.f32.mxu0 0.0
        %3976 = vmatmul.mubr.f32.gmra.mrb[0].mxu0 %v3811
        %v3977 = vpop.f32.mrb[0].mxu0
        %v3978 = vadd.f32 0.0, %v3977
        %v3979 = vpop.f32.mrb[0].mxu0
        %3980 = vmatprep.mubr.f32.mxu0 0.0
        %3981 = vmatmul.mubr.f32.gmra.mrb[0].mxu0 %v3812
        %v3982 = vpop.f32.mrb[0].mxu0
        %v3983 = vadd.f32 0.0, %v3982
        %v3984 = vpop.f32.mrb[0].mxu0
        %3985 = vmatprep.mubr.f32.mxu0 0.0
        %3986 = vmatmul.mubr.f32.gmra.mrb[0].mxu0 %v3813
        %v3987 = vpop.f32.mrb[0].mxu0
        %v3988 = vadd.f32 0.0, %v3987
        %v3989 = vpop.f32.mrb[0].mxu0
        %3990 = vmatprep.mubr.f32.mxu0 0.0
        %3991 = vmatmul.mubr.f32.gmra.mrb[0].mxu0 %v3814
        %v3992 = vpop.f32.mrb[0].mxu0
        %v3993 = vadd.f32 0.0, %v3992
        %v3994 = vpop.f32.mrb[0].mxu0
        %3995 = vmatprep.mubr.f32.mxu0 0.0
        %3996 = vmatmul.mubr.f32.gmra.mrb[0].mxu0 %v3815
        %v3997 = vpop.f32.mrb[0].mxu0
        %v3998 = vadd.f32 0.0, %v3997
        %v3999 = vpop.f32.mrb[0].mxu0
        %4000 = vmatprep.mubr.f32.mxu0 0.0
        %4001 = vmatmul.mubr.f32.gmra.mrb[0].mxu0 %v3816
        %v4002 = vpop.f32.mrb[0].mxu0
        %v4003 = vadd.f32 0.0, %v4002
        %v4004 = vpop.f32.mrb[0].mxu0
        %4005 = vmatprep.mubr.f32.mxu0 0.0
        %4006 = vmatmul.mubr.f32.gmra.mrb[0].mxu0 %v3817
        %v4007 = vpop.f32.mrb[0].mxu0
        %v4008 = vadd.f32 0.0, %v4007
        %v4009 = vpop.f32.mrb[0].mxu0
        %4010 = vdwg.mxu0
        %4011 = vxpose.xlu0.b32.start [1/16] %v3735, 128
        %4012 = vxpose.xlu0.b32.cont [2/16] %v3736, 128
        %4013 = vxpose.xlu0.b32.cont [3/16] %v3737, 128
        %4014 = vxpose.xlu0.b32.cont [4/16] %v3738, 128
        %4015 = vxpose.xlu0.b32.cont [5/16] %v3739, 128
        %4016 = vxpose.xlu0.b32.cont [6/16] %v3740, 128
        %4017 = vxpose.xlu0.b32.cont [7/16] %v3741, 128
        %4018 = vxpose.xlu0.b32.cont [8/16] %v3742, 128
        %4019 = vxpose.xlu0.b32.cont [9/16] %v3743, 128
        %4020 = vxpose.xlu0.b32.cont [10/16] %v3744, 128
        %4021 = vxpose.xlu0.b32.cont [11/16] %v3745, 128
        %4022 = vxpose.xlu0.b32.cont [12/16] %v3746, 128
        %4023 = vxpose.xlu0.b32.cont [13/16] %v3747, 128
        %4024 = vxpose.xlu0.b32.cont [14/16] %v3748, 128
        %4025 = vxpose.xlu0.b32.cont [15/16] %v3749, 128
        %4026 = vxpose.xlu0.b32.end [16/16] %v3750, 128
        %v4027 = vpop.trf.xlu0
        %v4028 = vpop.trf.xlu0
        %v4029 = vpop.trf.xlu0
        %v4030 = vpop.trf.xlu0
        %v4031 = vpop.trf.xlu0
        %v4032 = vpop.trf.xlu0
        %v4033 = vpop.trf.xlu0
        %v4034 = vpop.trf.xlu0
        %v4035 = vpop.trf.xlu0
        %v4036 = vpop.trf.xlu0
        %v4037 = vpop.trf.xlu0
        %v4038 = vpop.trf.xlu0
        %v4039 = vpop.trf.xlu0
        %v4040 = vpop.trf.xlu0
        %v4041 = vpop.trf.xlu0
        %v4042 = vpop.trf.xlu0
        %4043 = vmatprep.subr.mxu0 0.0
        %4044 = vmatpush1.msra.mxu0 %v3850
        %4045 = vmatprep.subr.mxu0 0.0
        %4046 = vmatpush1.msra.mxu0 %v3851
        %4047 = vmatprep.subr.mxu0 0.0
        %4048 = vmatpush1.msra.mxu0 %v3852
        %4049 = vmatprep.subr.mxu0 0.0
        %4050 = vmatpush1.msra.mxu0 %v3853
        %4051 = vmatprep.subr.mxu0 0.0
        %4052 = vmatpush1.msra.mxu0 %v3854
        %4053 = vmatprep.subr.mxu0 0.0
        %4054 = vmatpush1.msra.mxu0 %v3855
        %4055 = vmatprep.subr.mxu0 0.0
        %4056 = vmatpush1.msra.mxu0 %v3856
        %4057 = vmatprep.subr.mxu0 0.0
        %4058 = vmatpush1.msra.mxu0 %v3857
        %4059 = vmatprep.subr.mxu0 0.0
        %4060 = vmatpush1.msra.mxu0 %v3858
        %4061 = vmatprep.subr.mxu0 0.0
        %4062 = vmatpush1.msra.mxu0 %v3859
        %4063 = vmatprep.subr.mxu0 0.0
        %4064 = vmatpush1.msra.mxu0 %v3860
        %4065 = vmatprep.subr.mxu0 0.0
        %4066 = vmatpush1.msra.mxu0 %v3861
        %4067 = vmatprep.subr.mxu0 0.0
        %4068 = vmatpush1.msra.mxu0 %v3862
        %4069 = vmatprep.subr.mxu0 0.0
        %4070 = vmatpush1.msra.mxu0 %v3863
        %4071 = vmatprep.subr.mxu0 0.0
        %4072 = vmatpush1.msra.mxu0 %v3864
        %4073 = vmatprep.subr.mxu0 0.0
        %4074 = vmatpush1.msra.mxu0 %v3865
        %4075 = vmatprep.subr.mxu0 0.0
        %4076 = vmatpush1.msra.mxu0 0.0
        %4077 = vmatprep.subr.mxu0 0.0
        %4078 = vmatpush1.msra.mxu0 0.0
        %4079 = vmatprep.subr.mxu0 0.0
        %4080 = vmatpush1.msra.mxu0 0.0
        %4081 = vmatprep.subr.mxu0 0.0
        %4082 = vmatpush1.msra.mxu0 0.0
        %4083 = vmatprep.subr.mxu0 0.0
        %4084 = vmatpush1.msra.mxu0 0.0
        %4085 = vmatprep.subr.mxu0 0.0
        %4086 = vmatpush1.msra.mxu0 0.0
        %4087 = vmatprep.subr.mxu0 0.0
        %4088 = vmatpush1.msra.mxu0 0.0
        %4089 = vmatprep.subr.mxu0 0.0
        %4090 = vmatpush1.msra.mxu0 0.0
        %4091 = vmatprep.subr.mxu0 0.0
        %4092 = vmatpush1.msra.mxu0 0.0
        %4093 = vmatprep.subr.mxu0 0.0
        %4094 = vmatpush1.msra.mxu0 0.0
        %4095 = vmatprep.subr.mxu0 0.0
        %4096 = vmatpush1.msra.mxu0 0.0
        %4097 = vmatprep.subr.mxu0 0.0
        %4098 = vmatpush1.msra.mxu0 0.0
        %4099 = vmatprep.subr.mxu0 0.0
        %4100 = vmatpush1.msra.mxu0 0.0
        %4101 = vmatprep.subr.mxu0 0.0
        %4102 = vmatpush1.msra.mxu0 0.0
        %4103 = vmatprep.subr.mxu0 0.0
        %4104 = vmatpush1.msra.mxu0 0.0
        %4105 = vmatprep.subr.mxu0 0.0
        %4106 = vmatpush1.msra.mxu0 0.0
        %4107 = vmatprep.mubr.f32.mxu0 0.0
        %4108 = vmatmul.mubr.f32.gmra.mrb[0].mxu0 %v4027
        %v4109 = vpop.f32.mrb[0].mxu0
        %v4110 = vadd.f32 0.0, %v4109
        %v4111 = vpop.f32.mrb[0].mxu0
        %4112 = vdwg.mxu0
        %v4113 = vld [vmem:[%s10] sm:$0xff]
        %v4115 = vcombine.high %v4113, %v4113
        %vm4116 = vcmask 31744
        %v4118 = vsel %vm4116, %v3712, 0
        %v4121 = vsel %vm4116, %v3713, 0
        %v4124 = vsel %vm4116, %v3714, 0
        %v4127 = vsel %vm4116, %v3715, 0
        %v4130 = vsel %vm4116, %v3716, 0
        %v4133 = vsel %vm4116, %v3717, 0
        %v4136 = vsel %vm4116, %v3718, 0
        %v4139 = vsel %vm4116, %v3719, 0
        %v4142 = vsel %vm4116, %v3720, 0
        %v4145 = vsel %vm4116, %v3721, 0
        %v4148 = vsel %vm4116, %v3722, 0
        %v4151 = vsel %vm4116, %v3723, 0
        %v4154 = vsel %vm4116, %v3724, 0
        %v4157 = vsel %vm4116, %v3725, 0
        %v4160 = vsel %vm4116, %v3726, 0
        %v4163 = vsel %vm4116, %v3727, 0
        %vm4165 = vcmask 1043456
        %v4166 = vsel %vm4165, %v4113, 0
        %v4168 = vsel %vm4165, %v4115, 0
        %4170 = vmatprep.subr.mxu0 %v4168
        %4171 = vmatpush1.msra.mxu0 %v4166
        %4172 = vmatprep.subr.mxu0 0.0
        %4173 = vmatpush1.msra.mxu0 0.0
        %4174 = vmatprep.subr.mxu0 0.0
        %4175 = vmatpush1.msra.mxu0 0.0
        %4176 = vmatprep.subr.mxu0 0.0
        %4177 = vmatpush1.msra.mxu0 0.0
        %4178 = vmatprep.subr.mxu0 0.0
        %4179 = vmatpush1.msra.mxu0 0.0
        %4180 = vmatprep.subr.mxu0 0.0
        %4181 = vmatpush1.msra.mxu0 0.0
        %4182 = vmatprep.subr.mxu0 0.0
        %4183 = vmatpush1.msra.mxu0 0.0
        %4184 = vmatprep.subr.mxu0 0.0
        %4185 = vmatpush1.msra.mxu0 0.0
        %4186 = vmatprep.subr.mxu0 0.0
        %4187 = vmatpush1.msra.mxu0 0.0
        %4188 = vmatprep.subr.mxu0 0.0
        %4189 = vmatpush1.msra.mxu0 0.0
        %4190 = vmatprep.subr.mxu0 0.0
        %4191 = vmatpush1.msra.mxu0 0.0
        %4192 = vmatprep.subr.mxu0 0.0
        %4193 = vmatpush1.msra.mxu0 0.0
        %4194 = vmatprep.subr.mxu0 0.0
        %4195 = vmatpush1.msra.mxu0 0.0
        %4196 = vmatprep.subr.mxu0 0.0
        %4197 = vmatpush1.msra.mxu0 0.0
        %4198 = vmatprep.subr.mxu0 0.0
        %4199 = vmatpush1.msra.mxu0 0.0
        %4200 = vmatprep.subr.mxu0 0.0
        %4201 = vmatpush1.msra.mxu0 0.0
        %4202 = vmatprep.subr.mxu0 0.0
        %4203 = vmatpush1.msra.mxu0 0.0
        %4204 = vmatprep.subr.mxu0 0.0
        %4205 = vmatpush1.msra.mxu0 0.0
        %4206 = vmatprep.subr.mxu0 0.0
        %4207 = vmatpush1.msra.mxu0 0.0
        %4208 = vmatprep.subr.mxu0 0.0
        %4209 = vmatpush1.msra.mxu0 0.0
        %4210 = vmatprep.subr.mxu0 0.0
        %4211 = vmatpush1.msra.mxu0 0.0
        %4212 = vmatprep.subr.mxu0 0.0
        %4213 = vmatpush1.msra.mxu0 0.0
        %4214 = vmatprep.subr.mxu0 0.0
        %4215 = vmatpush1.msra.mxu0 0.0
        %4216 = vmatprep.subr.mxu0 0.0
        %4217 = vmatpush1.msra.mxu0 0.0
        %4218 = vmatprep.subr.mxu0 0.0
        %4219 = vmatpush1.msra.mxu0 0.0
        %4220 = vmatprep.subr.mxu0 0.0
        %4221 = vmatpush1.msra.mxu0 0.0
        %4222 = vmatprep.subr.mxu0 0.0
        %4223 = vmatpush1.msra.mxu0 0.0
        %4224 = vmatprep.subr.mxu0 0.0
        %4225 = vmatpush1.msra.mxu0 0.0
        %4226 = vmatprep.subr.mxu0 0.0
        %4227 = vmatpush1.msra.mxu0 0.0
        %4228 = vmatprep.subr.mxu0 0.0
        %4229 = vmatpush1.msra.mxu0 0.0
        %4230 = vmatprep.subr.mxu0 0.0
        %4231 = vmatpush1.msra.mxu0 0.0
        %4232 = vmatprep.subr.mxu0 0.0
        %4233 = vmatpush1.msra.mxu0 0.0
        %4234 = vmatprep.mubr.f32.mxu0 0.0
        %4235 = vmatmul.mubr.f32.gmra.mrb[0].mxu0 %v4118
        %v4236 = vpop.f32.mrb[0].mxu0
        %v4237 = vadd.f32 0.0, %v4236
        %v4238 = vpop.f32.mrb[0].mxu0
        %v4239 = vadd.f32 0.0, %v4238
        %4240 = vmatprep.mubr.f32.mxu0 0.0
        %4241 = vmatmul.mubr.f32.gmra.mrb[0].mxu0 %v4121
        %v4242 = vpop.f32.mrb[0].mxu0
        %v4243 = vadd.f32 0.0, %v4242
        %v4244 = vpop.f32.mrb[0].mxu0
        %v4245 = vadd.f32 0.0, %v4244
        %4246 = vmatprep.mubr.f32.mxu0 0.0
        %4247 = vmatmul.mubr.f32.gmra.mrb[0].mxu0 %v4124
        %v4248 = vpop.f32.mrb[0].mxu0
        %v4249 = vadd.f32 0.0, %v4248
        %v4250 = vpop.f32.mrb[0].mxu0
        %v4251 = vadd.f32 0.0, %v4250
        %4252 = vmatprep.mubr.f32.mxu0 0.0
        %4253 = vmatmul.mubr.f32.gmra.mrb[0].mxu0 %v4127
        %v4254 = vpop.f32.mrb[0].mxu0
        %v4255 = vadd.f32 0.0, %v4254
        %v4256 = vpop.f32.mrb[0].mxu0
        %v4257 = vadd.f32 0.0, %v4256
        %4258 = vmatprep.mubr.f32.mxu0 0.0
        %4259 = vmatmul.mubr.f32.gmra.mrb[0].mxu0 %v4130
        %v4260 = vpop.f32.mrb[0].mxu0
        %v4261 = vadd.f32 0.0, %v4260
        %v4262 = vpop.f32.mrb[0].mxu0
        %v4263 = vadd.f32 0.0, %v4262
        %4264 = vmatprep.mubr.f32.mxu0 0.0
        %4265 = vmatmul.mubr.f32.gmra.mrb[0].mxu0 %v4133
        %v4266 = vpop.f32.mrb[0].mxu0
        %v4267 = vadd.f32 0.0, %v4266
        %v4268 = vpop.f32.mrb[0].mxu0
        %v4269 = vadd.f32 0.0, %v4268
        %4270 = vmatprep.mubr.f32.mxu0 0.0
        %4271 = vmatmul.mubr.f32.gmra.mrb[0].mxu0 %v4136
        %v4272 = vpop.f32.mrb[0].mxu0
        %v4273 = vadd.f32 0.0, %v4272
        %v4274 = vpop.f32.mrb[0].mxu0
        %v4275 = vadd.f32 0.0, %v4274
        %4276 = vmatprep.mubr.f32.mxu0 0.0
        %4277 = vmatmul.mubr.f32.gmra.mrb[0].mxu0 %v4139
        %v4278 = vpop.f32.mrb[0].mxu0
        %v4279 = vadd.f32 0.0, %v4278
        %v4280 = vpop.f32.mrb[0].mxu0
        %v4281 = vadd.f32 0.0, %v4280
        %4282 = vmatprep.mubr.f32.mxu0 0.0
        %4283 = vmatmul.mubr.f32.gmra.mrb[0].mxu0 %v4142
        %v4284 = vpop.f32.mrb[0].mxu0
        %v4285 = vadd.f32 0.0, %v4284
        %v4286 = vpop.f32.mrb[0].mxu0
        %v4287 = vadd.f32 0.0, %v4286
        %4288 = vmatprep.mubr.f32.mxu0 0.0
        %4289 = vmatmul.mubr.f32.gmra.mrb[0].mxu0 %v4145
        %v4290 = vpop.f32.mrb[0].mxu0
        %v4291 = vadd.f32 0.0, %v4290
        %v4292 = vpop.f32.mrb[0].mxu0
        %v4293 = vadd.f32 0.0, %v4292
        %4294 = vmatprep.mubr.f32.mxu0 0.0
        %4295 = vmatmul.mubr.f32.gmra.mrb[0].mxu0 %v4148
        %v4296 = vpop.f32.mrb[0].mxu0
        %v4297 = vadd.f32 0.0, %v4296
        %v4298 = vpop.f32.mrb[0].mxu0
        %v4299 = vadd.f32 0.0, %v4298
        %4300 = vmatprep.mubr.f32.mxu0 0.0
        %4301 = vmatmul.mubr.f32.gmra.mrb[0].mxu0 %v4151
        %v4302 = vpop.f32.mrb[0].mxu0
        %v4303 = vadd.f32 0.0, %v4302
        %v4304 = vpop.f32.mrb[0].mxu0
        %v4305 = vadd.f32 0.0, %v4304
        %4306 = vmatprep.mubr.f32.mxu0 0.0
        %4307 = vmatmul.mubr.f32.gmra.mrb[0].mxu0 %v4154
        %v4308 = vpop.f32.mrb[0].mxu0
        %v4309 = vadd.f32 0.0, %v4308
        %v4310 = vpop.f32.mrb[0].mxu0
        %v4311 = vadd.f32 0.0, %v4310
        %4312 = vmatprep.mubr.f32.mxu0 0.0
        %4313 = vmatmul.mubr.f32.gmra.mrb[0].mxu0 %v4157
        %v4314 = vpop.f32.mrb[0].mxu0
        %v4315 = vadd.f32 0.0, %v4314
        %v4316 = vpop.f32.mrb[0].mxu0
        %v4317 = vadd.f32 0.0, %v4316
        %4318 = vmatprep.mubr.f32.mxu0 0.0
        %4319 = vmatmul.mubr.f32.gmra.mrb[0].mxu0 %v4160
        %v4320 = vpop.f32.mrb[0].mxu0
        %v4321 = vadd.f32 0.0, %v4320
        %v4322 = vpop.f32.mrb[0].mxu0
        %v4323 = vadd.f32 0.0, %v4322
        %4324 = vmatprep.mubr.f32.mxu0 0.0
        %4325 = vmatmul.mubr.f32.gmra.mrb[0].mxu0 %v4163
        %v4326 = vpop.f32.mrb[0].mxu0
        %v4327 = vadd.f32 0.0, %v4326
        %v4328 = vpop.f32.mrb[0].mxu0
        %v4329 = vadd.f32 0.0, %v4328
        %4330 = vdwg.mxu0
        %v4332 = vsel %vm4116, %v3933, 0
        %v4335 = vsel %vm4116, %v3938, 0
        %v4338 = vsel %vm4116, %v3943, 0
        %v4341 = vsel %vm4116, %v3948, 0
        %v4344 = vsel %vm4116, %v3953, 0
        %v4347 = vsel %vm4116, %v3958, 0
        %v4350 = vsel %vm4116, %v3963, 0
        %v4353 = vsel %vm4116, %v3968, 0
        %v4356 = vsel %vm4116, %v3973, 0
        %v4359 = vsel %vm4116, %v3978, 0
        %v4362 = vsel %vm4116, %v3983, 0
        %v4365 = vsel %vm4116, %v3988, 0
        %v4368 = vsel %vm4116, %v3993, 0
        %v4371 = vsel %vm4116, %v3998, 0
        %v4374 = vsel %vm4116, %v4003, 0
        %v4377 = vsel %vm4116, %v4008, 0
        %4379 = vmatprep.subr.mxu0 %v4168
        %4380 = vmatpush1.msra.mxu0 %v4166
        %4381 = vmatprep.subr.mxu0 0.0
        %4382 = vmatpush1.msra.mxu0 0.0
        %4383 = vmatprep.subr.mxu0 0.0
        %4384 = vmatpush1.msra.mxu0 0.0
        %4385 = vmatprep.subr.mxu0 0.0
        %4386 = vmatpush1.msra.mxu0 0.0
        %4387 = vmatprep.subr.mxu0 0.0
        %4388 = vmatpush1.msra.mxu0 0.0
        %4389 = vmatprep.subr.mxu0 0.0
        %4390 = vmatpush1.msra.mxu0 0.0
        %4391 = vmatprep.subr.mxu0 0.0
        %4392 = vmatpush1.msra.mxu0 0.0
        %4393 = vmatprep.subr.mxu0 0.0
        %4394 = vmatpush1.msra.mxu0 0.0
        %4395 = vmatprep.subr.mxu0 0.0
        %4396 = vmatpush1.msra.mxu0 0.0
        %4397 = vmatprep.subr.mxu0 0.0
        %4398 = vmatpush1.msra.mxu0 0.0
        %4399 = vmatprep.subr.mxu0 0.0
        %4400 = vmatpush1.msra.mxu0 0.0
        %4401 = vmatprep.subr.mxu0 0.0
        %4402 = vmatpush1.msra.mxu0 0.0
        %4403 = vmatprep.subr.mxu0 0.0
        %4404 = vmatpush1.msra.mxu0 0.0
        %4405 = vmatprep.subr.mxu0 0.0
        %4406 = vmatpush1.msra.mxu0 0.0
        %4407 = vmatprep.subr.mxu0 0.0
        %4408 = vmatpush1.msra.mxu0 0.0
        %4409 = vmatprep.subr.mxu0 0.0
        %4410 = vmatpush1.msra.mxu0 0.0
        %4411 = vmatprep.subr.mxu0 0.0
        %4412 = vmatpush1.msra.mxu0 0.0
        %4413 = vmatprep.subr.mxu0 0.0
        %4414 = vmatpush1.msra.mxu0 0.0
        %4415 = vmatprep.subr.mxu0 0.0
        %4416 = vmatpush1.msra.mxu0 0.0
        %4417 = vmatprep.subr.mxu0 0.0
        %4418 = vmatpush1.msra.mxu0 0.0
        %4419 = vmatprep.subr.mxu0 0.0
        %4420 = vmatpush1.msra.mxu0 0.0
        %4421 = vmatprep.subr.mxu0 0.0
        %4422 = vmatpush1.msra.mxu0 0.0
        %4423 = vmatprep.subr.mxu0 0.0
        %4424 = vmatpush1.msra.mxu0 0.0
        %4425 = vmatprep.subr.mxu0 0.0
        %4426 = vmatpush1.msra.mxu0 0.0
        %4427 = vmatprep.subr.mxu0 0.0
        %4428 = vmatpush1.msra.mxu0 0.0
        %4429 = vmatprep.subr.mxu0 0.0
        %4430 = vmatpush1.msra.mxu0 0.0
        %4431 = vmatprep.subr.mxu0 0.0
        %4432 = vmatpush1.msra.mxu0 0.0
        %4433 = vmatprep.subr.mxu0 0.0
        %4434 = vmatpush1.msra.mxu0 0.0
        %4435 = vmatprep.subr.mxu0 0.0
        %4436 = vmatpush1.msra.mxu0 0.0
        %4437 = vmatprep.subr.mxu0 0.0
        %4438 = vmatpush1.msra.mxu0 0.0
        %4439 = vmatprep.subr.mxu0 0.0
        %4440 = vmatpush1.msra.mxu0 0.0
        %4441 = vmatprep.subr.mxu0 0.0
        %4442 = vmatpush1.msra.mxu0 0.0
        %4443 = vmatprep.mubr.f32.mxu0 0.0
        %4444 = vmatmul.mubr.f32.gmra.mrb[0].mxu0 %v4332
        %v4445 = vpop.f32.mrb[0].mxu0
        %v4446 = vadd.f32 0.0, %v4445
        %v4447 = vpop.f32.mrb[0].mxu0
        %v4448 = vadd.f32 0.0, %v4447
        %4449 = vmatprep.mubr.f32.mxu0 0.0
        %4450 = vmatmul.mubr.f32.gmra.mrb[0].mxu0 %v4335
        %v4451 = vpop.f32.mrb[0].mxu0
        %v4452 = vadd.f32 0.0, %v4451
        %v4453 = vpop.f32.mrb[0].mxu0
        %v4454 = vadd.f32 0.0, %v4453
        %4455 = vmatprep.mubr.f32.mxu0 0.0
        %4456 = vmatmul.mubr.f32.gmra.mrb[0].mxu0 %v4338
        %v4457 = vpop.f32.mrb[0].mxu0
        %v4458 = vadd.f32 0.0, %v4457
        %v4459 = vpop.f32.mrb[0].mxu0
        %v4460 = vadd.f32 0.0, %v4459
        %4461 = vmatprep.mubr.f32.mxu0 0.0
        %4462 = vmatmul.mubr.f32.gmra.mrb[0].mxu0 %v4341
        %v4463 = vpop.f32.mrb[0].mxu0
        %v4464 = vadd.f32 0.0, %v4463
        %v4465 = vpop.f32.mrb[0].mxu0
        %v4466 = vadd.f32 0.0, %v4465
        %4467 = vmatprep.mubr.f32.mxu0 0.0
        %4468 = vmatmul.mubr.f32.gmra.mrb[0].mxu0 %v4344
        %v4469 = vpop.f32.mrb[0].mxu0
        %v4470 = vadd.f32 0.0, %v4469
        %v4471 = vpop.f32.mrb[0].mxu0
        %v4472 = vadd.f32 0.0, %v4471
        %4473 = vmatprep.mubr.f32.mxu0 0.0
        %4474 = vmatmul.mubr.f32.gmra.mrb[0].mxu0 %v4347
        %v4475 = vpop.f32.mrb[0].mxu0
        %v4476 = vadd.f32 0.0, %v4475
        %v4477 = vpop.f32.mrb[0].mxu0
        %v4478 = vadd.f32 0.0, %v4477
        %4479 = vmatprep.mubr.f32.mxu0 0.0
        %4480 = vmatmul.mubr.f32.gmra.mrb[0].mxu0 %v4350
        %v4481 = vpop.f32.mrb[0].mxu0
        %v4482 = vadd.f32 0.0, %v4481
        %v4483 = vpop.f32.mrb[0].mxu0
        %v4484 = vadd.f32 0.0, %v4483
        %4485 = vmatprep.mubr.f32.mxu0 0.0
        %4486 = vmatmul.mubr.f32.gmra.mrb[0].mxu0 %v4353
        %v4487 = vpop.f32.mrb[0].mxu0
        %v4488 = vadd.f32 0.0, %v4487
        %v4489 = vpop.f32.mrb[0].mxu0
        %v4490 = vadd.f32 0.0, %v4489
        %4491 = vmatprep.mubr.f32.mxu0 0.0
        %4492 = vmatmul.mubr.f32.gmra.mrb[0].mxu0 %v4356
        %v4493 = vpop.f32.mrb[0].mxu0
        %v4494 = vadd.f32 0.0, %v4493
        %v4495 = vpop.f32.mrb[0].mxu0
        %v4496 = vadd.f32 0.0, %v4495
        %4497 = vmatprep.mubr.f32.mxu0 0.0
        %4498 = vmatmul.mubr.f32.gmra.mrb[0].mxu0 %v4359
        %v4499 = vpop.f32.mrb[0].mxu0
        %v4500 = vadd.f32 0.0, %v4499
        %v4501 = vpop.f32.mrb[0].mxu0
        %v4502 = vadd.f32 0.0, %v4501
        %4503 = vmatprep.mubr.f32.mxu0 0.0
        %4504 = vmatmul.mubr.f32.gmra.mrb[0].mxu0 %v4362
        %v4505 = vpop.f32.mrb[0].mxu0
        %v4506 = vadd.f32 0.0, %v4505
        %v4507 = vpop.f32.mrb[0].mxu0
        %v4508 = vadd.f32 0.0, %v4507
        %4509 = vmatprep.mubr.f32.mxu0 0.0
        %4510 = vmatmul.mubr.f32.gmra.mrb[0].mxu0 %v4365
        %v4511 = vpop.f32.mrb[0].mxu0
        %v4512 = vadd.f32 0.0, %v4511
        %v4513 = vpop.f32.mrb[0].mxu0
        %v4514 = vadd.f32 0.0, %v4513
        %4515 = vmatprep.mubr.f32.mxu0 0.0
        %4516 = vmatmul.mubr.f32.gmra.mrb[0].mxu0 %v4368
        %v4517 = vpop.f32.mrb[0].mxu0
        %v4518 = vadd.f32 0.0, %v4517
        %v4519 = vpop.f32.mrb[0].mxu0
        %v4520 = vadd.f32 0.0, %v4519
        %4521 = vmatprep.mubr.f32.mxu0 0.0
        %4522 = vmatmul.mubr.f32.gmra.mrb[0].mxu0 %v4371
        %v4523 = vpop.f32.mrb[0].mxu0
        %v4524 = vadd.f32 0.0, %v4523
        %v4525 = vpop.f32.mrb[0].mxu0
        %v4526 = vadd.f32 0.0, %v4525
        %4527 = vmatprep.mubr.f32.mxu0 0.0
        %4528 = vmatmul.mubr.f32.gmra.mrb[0].mxu0 %v4374
        %v4529 = vpop.f32.mrb[0].mxu0
        %v4530 = vadd.f32 0.0, %v4529
        %v4531 = vpop.f32.mrb[0].mxu0
        %v4532 = vadd.f32 0.0, %v4531
        %4533 = vmatprep.mubr.f32.mxu0 0.0
        %4534 = vmatmul.mubr.f32.gmra.mrb[0].mxu0 %v4377
        %v4535 = vpop.f32.mrb[0].mxu0
        %v4536 = vadd.f32 0.0, %v4535
        %v4537 = vpop.f32.mrb[0].mxu0
        %v4538 = vadd.f32 0.0, %v4537
        %4539 = vdwg.mxu0
        %v4540 = vmul.f32 %v3933, 1.442695
        %v4541 = vpow.pop %v4540
        %v4542 = vmul.f32 %v3938, 1.442695
        %v4543 = vpow.pop %v4542
        %v4544 = vmul.f32 %v3943, 1.442695
        %v4545 = vpow.pop %v4544
        %v4546 = vmul.f32 %v3948, 1.442695
        %v4547 = vpow.pop %v4546
        %v4548 = vmul.f32 %v3953, 1.442695
        %v4549 = vpow.pop %v4548
        %v4550 = vmul.f32 %v3958, 1.442695
        %v4551 = vpow.pop %v4550
        %v4552 = vmul.f32 %v3963, 1.442695
        %v4553 = vpow.pop %v4552
        %v4554 = vmul.f32 %v3968, 1.442695
        %v4555 = vpow.pop %v4554
        %v4556 = vmul.f32 %v3973, 1.442695
        %v4557 = vpow.pop %v4556
        %v4558 = vmul.f32 %v3978, 1.442695
        %v4559 = vpow.pop %v4558
        %v4560 = vmul.f32 %v3983, 1.442695
        %v4561 = vpow.pop %v4560
        %v4562 = vmul.f32 %v3988, 1.442695
        %v4563 = vpow.pop %v4562
        %v4564 = vmul.f32 %v3993, 1.442695
        %v4565 = vpow.pop %v4564
        %v4566 = vmul.f32 %v3998, 1.442695
        %v4567 = vpow.pop %v4566
        %v4568 = vmul.f32 %v4003, 1.442695
        %v4569 = vpow.pop %v4568
        %v4570 = vmul.f32 %v4008, 1.442695
        %v4571 = vpow.pop %v4570
        %v4573 = vsel %vm4116, %v4541, 0
        %v4576 = vsel %vm4116, %v4543, 0
        %v4579 = vsel %vm4116, %v4545, 0
        %v4582 = vsel %vm4116, %v4547, 0
        %v4585 = vsel %vm4116, %v4549, 0
        %v4588 = vsel %vm4116, %v4551, 0
        %v4591 = vsel %vm4116, %v4553, 0
        %v4594 = vsel %vm4116, %v4555, 0
        %v4597 = vsel %vm4116, %v4557, 0
        %v4600 = vsel %vm4116, %v4559, 0
        %v4603 = vsel %vm4116, %v4561, 0
        %v4606 = vsel %vm4116, %v4563, 0
        %v4609 = vsel %vm4116, %v4565, 0
        %v4612 = vsel %vm4116, %v4567, 0
        %v4615 = vsel %vm4116, %v4569, 0
        %v4618 = vsel %vm4116, %v4571, 0
        %4620 = vmatprep.subr.mxu0 %v4168
        %4621 = vmatpush1.msra.mxu0 %v4166
        %4622 = vmatprep.subr.mxu0 0.0
        %4623 = vmatpush1.msra.mxu0 0.0
        %4624 = vmatprep.subr.mxu0 0.0
        %4625 = vmatpush1.msra.mxu0 0.0
        %4626 = vmatprep.subr.mxu0 0.0
        %4627 = vmatpush1.msra.mxu0 0.0
        %4628 = vmatprep.subr.mxu0 0.0
        %4629 = vmatpush1.msra.mxu0 0.0
        %4630 = vmatprep.subr.mxu0 0.0
        %4631 = vmatpush1.msra.mxu0 0.0
        %4632 = vmatprep.subr.mxu0 0.0
        %4633 = vmatpush1.msra.mxu0 0.0
        %4634 = vmatprep.subr.mxu0 0.0
        %4635 = vmatpush1.msra.mxu0 0.0
        %4636 = vmatprep.subr.mxu0 0.0
        %4637 = vmatpush1.msra.mxu0 0.0
        %4638 = vmatprep.subr.mxu0 0.0
        %4639 = vmatpush1.msra.mxu0 0.0
        %4640 = vmatprep.subr.mxu0 0.0
        %4641 = vmatpush1.msra.mxu0 0.0
        %4642 = vmatprep.subr.mxu0 0.0
        %4643 = vmatpush1.msra.mxu0 0.0
        %4644 = vmatprep.subr.mxu0 0.0
        %4645 = vmatpush1.msra.mxu0 0.0
        %4646 = vmatprep.subr.mxu0 0.0
        %4647 = vmatpush1.msra.mxu0 0.0
        %4648 = vmatprep.subr.mxu0 0.0
        %4649 = vmatpush1.msra.mxu0 0.0
        %4650 = vmatprep.subr.mxu0 0.0
        %4651 = vmatpush1.msra.mxu0 0.0
        %4652 = vmatprep.subr.mxu0 0.0
        %4653 = vmatpush1.msra.mxu0 0.0
        %4654 = vmatprep.subr.mxu0 0.0
        %4655 = vmatpush1.msra.mxu0 0.0
        %4656 = vmatprep.subr.mxu0 0.0
        %4657 = vmatpush1.msra.mxu0 0.0
        %4658 = vmatprep.subr.mxu0 0.0
        %4659 = vmatpush1.msra.mxu0 0.0
        %4660 = vmatprep.subr.mxu0 0.0
        %4661 = vmatpush1.msra.mxu0 0.0
        %4662 = vmatprep.subr.mxu0 0.0
        %4663 = vmatpush1.msra.mxu0 0.0
        %4664 = vmatprep.subr.mxu0 0.0
        %4665 = vmatpush1.msra.mxu0 0.0
        %4666 = vmatprep.subr.mxu0 0.0
        %4667 = vmatpush1.msra.mxu0 0.0
        %4668 = vmatprep.subr.mxu0 0.0
        %4669 = vmatpush1.msra.mxu0 0.0
        %4670 = vmatprep.subr.mxu0 0.0
        %4671 = vmatpush1.msra.mxu0 0.0
        %4672 = vmatprep.subr.mxu0 0.0
        %4673 = vmatpush1.msra.mxu0 0.0
        %4674 = vmatprep.subr.mxu0 0.0
        %4675 = vmatpush1.msra.mxu0 0.0
        %4676 = vmatprep.subr.mxu0 0.0
        %4677 = vmatpush1.msra.mxu0 0.0
        %4678 = vmatprep.subr.mxu0 0.0
        %4679 = vmatpush1.msra.mxu0 0.0
        %4680 = vmatprep.subr.mxu0 0.0
        %4681 = vmatpush1.msra.mxu0 0.0
        %4682 = vmatprep.subr.mxu0 0.0
        %4683 = vmatpush1.msra.mxu0 0.0
        %4684 = vmatprep.mubr.f32.mxu0 0.0
        %4685 = vmatmul.mubr.f32.gmra.mrb[0].mxu0 %v4573
        %v4686 = vpop.f32.mrb[0].mxu0
        %v4687 = vadd.f32 0.0, %v4686
        %v4688 = vpop.f32.mrb[0].mxu0
        %v4689 = vadd.f32 0.0, %v4688
        %4690 = vmatprep.mubr.f32.mxu0 0.0
        %4691 = vmatmul.mubr.f32.gmra.mrb[0].mxu0 %v4576
        %v4692 = vpop.f32.mrb[0].mxu0
        %v4693 = vadd.f32 0.0, %v4692
        %v4694 = vpop.f32.mrb[0].mxu0
        %v4695 = vadd.f32 0.0, %v4694
        %4696 = vmatprep.mubr.f32.mxu0 0.0
        %4697 = vmatmul.mubr.f32.gmra.mrb[0].mxu0 %v4579
        %v4698 = vpop.f32.mrb[0].mxu0
        %v4699 = vadd.f32 0.0, %v4698
        %v4700 = vpop.f32.mrb[0].mxu0
        %v4701 = vadd.f32 0.0, %v4700
        %4702 = vmatprep.mubr.f32.mxu0 0.0
        %4703 = vmatmul.mubr.f32.gmra.mrb[0].mxu0 %v4582
        %v4704 = vpop.f32.mrb[0].mxu0
        %v4705 = vadd.f32 0.0, %v4704
        %v4706 = vpop.f32.mrb[0].mxu0
        %v4707 = vadd.f32 0.0, %v4706
        %4708 = vmatprep.mubr.f32.mxu0 0.0
        %4709 = vmatmul.mubr.f32.gmra.mrb[0].mxu0 %v4585
        %v4710 = vpop.f32.mrb[0].mxu0
        %v4711 = vadd.f32 0.0, %v4710
        %v4712 = vpop.f32.mrb[0].mxu0
        %v4713 = vadd.f32 0.0, %v4712
        %4714 = vmatprep.mubr.f32.mxu0 0.0
        %4715 = vmatmul.mubr.f32.gmra.mrb[0].mxu0 %v4588
        %v4716 = vpop.f32.mrb[0].mxu0
        %v4717 = vadd.f32 0.0, %v4716
        %v4718 = vpop.f32.mrb[0].mxu0
        %v4719 = vadd.f32 0.0, %v4718
        %4720 = vmatprep.mubr.f32.mxu0 0.0
        %4721 = vmatmul.mubr.f32.gmra.mrb[0].mxu0 %v4591
        %v4722 = vpop.f32.mrb[0].mxu0
        %v4723 = vadd.f32 0.0, %v4722
        %v4724 = vpop.f32.mrb[0].mxu0
        %v4725 = vadd.f32 0.0, %v4724
        %4726 = vmatprep.mubr.f32.mxu0 0.0
        %4727 = vmatmul.mubr.f32.gmra.mrb[0].mxu0 %v4594
        %v4728 = vpop.f32.mrb[0].mxu0
        %v4729 = vadd.f32 0.0, %v4728
        %v4730 = vpop.f32.mrb[0].mxu0
        %v4731 = vadd.f32 0.0, %v4730
        %4732 = vmatprep.mubr.f32.mxu0 0.0
        %4733 = vmatmul.mubr.f32.gmra.mrb[0].mxu0 %v4597
        %v4734 = vpop.f32.mrb[0].mxu0
        %v4735 = vadd.f32 0.0, %v4734
        %v4736 = vpop.f32.mrb[0].mxu0
        %v4737 = vadd.f32 0.0, %v4736
        %4738 = vmatprep.mubr.f32.mxu0 0.0
        %4739 = vmatmul.mubr.f32.gmra.mrb[0].mxu0 %v4600
        %v4740 = vpop.f32.mrb[0].mxu0
        %v4741 = vadd.f32 0.0, %v4740
        %v4742 = vpop.f32.mrb[0].mxu0
        %v4743 = vadd.f32 0.0, %v4742
        %4744 = vmatprep.mubr.f32.mxu0 0.0
        %4745 = vmatmul.mubr.f32.gmra.mrb[0].mxu0 %v4603
        %v4746 = vpop.f32.mrb[0].mxu0
        %v4747 = vadd.f32 0.0, %v4746
        %v4748 = vpop.f32.mrb[0].mxu0
        %v4749 = vadd.f32 0.0, %v4748
        %4750 = vmatprep.mubr.f32.mxu0 0.0
        %4751 = vmatmul.mubr.f32.gmra.mrb[0].mxu0 %v4606
        %v4752 = vpop.f32.mrb[0].mxu0
        %v4753 = vadd.f32 0.0, %v4752
        %v4754 = vpop.f32.mrb[0].mxu0
        %v4755 = vadd.f32 0.0, %v4754
        %4756 = vmatprep.mubr.f32.mxu0 0.0
        %4757 = vmatmul.mubr.f32.gmra.mrb[0].mxu0 %v4609
        %v4758 = vpop.f32.mrb[0].mxu0
        %v4759 = vadd.f32 0.0, %v4758
        %v4760 = vpop.f32.mrb[0].mxu0
        %v4761 = vadd.f32 0.0, %v4760
        %4762 = vmatprep.mubr.f32.mxu0 0.0
        %4763 = vmatmul.mubr.f32.gmra.mrb[0].mxu0 %v4612
        %v4764 = vpop.f32.mrb[0].mxu0
        %v4765 = vadd.f32 0.0, %v4764
        %v4766 = vpop.f32.mrb[0].mxu0
        %v4767 = vadd.f32 0.0, %v4766
        %4768 = vmatprep.mubr.f32.mxu0 0.0
        %4769 = vmatmul.mubr.f32.gmra.mrb[0].mxu0 %v4615
        %v4770 = vpop.f32.mrb[0].mxu0
        %v4771 = vadd.f32 0.0, %v4770
        %v4772 = vpop.f32.mrb[0].mxu0
        %v4773 = vadd.f32 0.0, %v4772
        %4774 = vmatprep.mubr.f32.mxu0 0.0
        %4775 = vmatmul.mubr.f32.gmra.mrb[0].mxu0 %v4618
        %v4776 = vpop.f32.mrb[0].mxu0
        %v4777 = vadd.f32 0.0, %v4776
        %v4778 = vpop.f32.mrb[0].mxu0
        %v4779 = vadd.f32 0.0, %v4778
        %4780 = vdwg.mxu0
        %v4781 = vlaneseq
        %v4782 = vshrl.u32 %v4781, 7
        %v4783 = vsub.s32 7, %v4782
        %v4784 = vrot.slane %v4008, %v4783
        %v4785 = vsub.f32 %v4784, %v3933
        %v4786 = vsub.f32 %v4784, %v3938
        %v4787 = vsub.f32 %v4784, %v3943
        %v4788 = vsub.f32 %v4784, %v3948
        %v4789 = vsub.f32 %v4784, %v3953
        %v4790 = vsub.f32 %v4784, %v3958
        %v4791 = vsub.f32 %v4784, %v3963
        %v4792 = vsub.f32 %v4784, %v3968
        %v4793 = vsub.f32 %v4784, %v3973
        %v4794 = vsub.f32 %v4784, %v3978
        %v4795 = vsub.f32 %v4784, %v3983
        %v4796 = vsub.f32 %v4784, %v3988
        %v4797 = vsub.f32 %v4784, %v3993
        %v4798 = vsub.f32 %v4784, %v3998
        %v4799 = vsub.f32 %v4784, %v4003
        %v4800 = vsub.f32 %v4784, %v4008
        %v4801 = vmul.f32 %v4785, 1.442695
        %v4802 = vpow.pop %v4801
        %v4803 = vmul.f32 %v4786, 1.442695
        %v4804 = vpow.pop %v4803
        %v4805 = vmul.f32 %v4787, 1.442695
        %v4806 = vpow.pop %v4805
        %v4807 = vmul.f32 %v4788, 1.442695
        %v4808 = vpow.pop %v4807
        %v4809 = vmul.f32 %v4789, 1.442695
        %v4810 = vpow.pop %v4809
        %v4811 = vmul.f32 %v4790, 1.442695
        %v4812 = vpow.pop %v4811
        %v4813 = vmul.f32 %v4791, 1.442695
        %v4814 = vpow.pop %v4813
        %v4815 = vmul.f32 %v4792, 1.442695
        %v4816 = vpow.pop %v4815
        %v4817 = vmul.f32 %v4793, 1.442695
        %v4818 = vpow.pop %v4817
        %v4819 = vmul.f32 %v4794, 1.442695
        %v4820 = vpow.pop %v4819
        %v4821 = vmul.f32 %v4795, 1.442695
        %v4822 = vpow.pop %v4821
        %v4823 = vmul.f32 %v4796, 1.442695
        %v4824 = vpow.pop %v4823
        %v4825 = vmul.f32 %v4797, 1.442695
        %v4826 = vpow.pop %v4825
        %v4827 = vmul.f32 %v4798, 1.442695
        %v4828 = vpow.pop %v4827
        %v4829 = vmul.f32 %v4799, 1.442695
        %v4830 = vpow.pop %v4829
        %v4831 = vmul.f32 %v4800, 1.442695
        %v4832 = vpow.pop %v4831
        %v4833 = vmul.f32 %v4802, %v3712
        %v4834 = vmul.f32 %v4804, %v3713
        %v4835 = vmul.f32 %v4806, %v3714
        %v4836 = vmul.f32 %v4808, %v3715
        %v4837 = vmul.f32 %v4810, %v3716
        %v4838 = vmul.f32 %v4812, %v3717
        %v4839 = vmul.f32 %v4814, %v3718
        %v4840 = vmul.f32 %v4816, %v3719
        %v4841 = vmul.f32 %v4818, %v3720
        %v4842 = vmul.f32 %v4820, %v3721
        %v4843 = vmul.f32 %v4822, %v3722
        %v4844 = vmul.f32 %v4824, %v3723
        %v4845 = vmul.f32 %v4826, %v3724
        %v4846 = vmul.f32 %v4828, %v3725
        %v4847 = vmul.f32 %v4830, %v3726
        %v4848 = vmul.f32 %v4832, %v3727
        %v4850 = vsel %vm4116, %v4833, 0
        %v4853 = vsel %vm4116, %v4834, 0
        %v4856 = vsel %vm4116, %v4835, 0
        %v4859 = vsel %vm4116, %v4836, 0
        %v4862 = vsel %vm4116, %v4837, 0
        %v4865 = vsel %vm4116, %v4838, 0
        %v4868 = vsel %vm4116, %v4839, 0
        %v4871 = vsel %vm4116, %v4840, 0
        %v4874 = vsel %vm4116, %v4841, 0
        %v4877 = vsel %vm4116, %v4842, 0
        %v4880 = vsel %vm4116, %v4843, 0
        %v4883 = vsel %vm4116, %v4844, 0
        %v4886 = vsel %vm4116, %v4845, 0
        %v4889 = vsel %vm4116, %v4846, 0
        %v4892 = vsel %vm4116, %v4847, 0
        %v4895 = vsel %vm4116, %v4848, 0
        %4897 = vmatprep.subr.mxu0 %v4168
        %4898 = vmatpush1.msra.mxu0 %v4166
        %4899 = vmatprep.subr.mxu0 0.0
        %4900 = vmatpush1.msra.mxu0 0.0
        %4901 = vmatprep.subr.mxu0 0.0
        %4902 = vmatpush1.msra.mxu0 0.0
        %4903 = vmatprep.subr.mxu0 0.0
        %4904 = vmatpush1.msra.mxu0 0.0
        %4905 = vmatprep.subr.mxu0 0.0
        %4906 = vmatpush1.msra.mxu0 0.0
        %4907 = vmatprep.subr.mxu0 0.0
        %4908 = vmatpush1.msra.mxu0 0.0
        %4909 = vmatprep.subr.mxu0 0.0
        %4910 = vmatpush1.msra.mxu0 0.0
        %4911 = vmatprep.subr.mxu0 0.0
        %4912 = vmatpush1.msra.mxu0 0.0
        %4913 = vmatprep.subr.mxu0 0.0
        %4914 = vmatpush1.msra.mxu0 0.0
        %4915 = vmatprep.subr.mxu0 0.0
        %4916 = vmatpush1.msra.mxu0 0.0
        %4917 = vmatprep.subr.mxu0 0.0
        %4918 = vmatpush1.msra.mxu0 0.0
        %4919 = vmatprep.subr.mxu0 0.0
        %4920 = vmatpush1.msra.mxu0 0.0
        %4921 = vmatprep.subr.mxu0 0.0
        %4922 = vmatpush1.msra.mxu0 0.0
        %4923 = vmatprep.subr.mxu0 0.0
        %4924 = vmatpush1.msra.mxu0 0.0
        %4925 = vmatprep.subr.mxu0 0.0
        %4926 = vmatpush1.msra.mxu0 0.0
        %4927 = vmatprep.subr.mxu0 0.0
        %4928 = vmatpush1.msra.mxu0 0.0
        %4929 = vmatprep.subr.mxu0 0.0
        %4930 = vmatpush1.msra.mxu0 0.0
        %4931 = vmatprep.subr.mxu0 0.0
        %4932 = vmatpush1.msra.mxu0 0.0
        %4933 = vmatprep.subr.mxu0 0.0
        %4934 = vmatpush1.msra.mxu0 0.0
        %4935 = vmatprep.subr.mxu0 0.0
        %4936 = vmatpush1.msra.mxu0 0.0
        %4937 = vmatprep.subr.mxu0 0.0
        %4938 = vmatpush1.msra.mxu0 0.0
        %4939 = vmatprep.subr.mxu0 0.0
        %4940 = vmatpush1.msra.mxu0 0.0
        %4941 = vmatprep.subr.mxu0 0.0
        %4942 = vmatpush1.msra.mxu0 0.0
        %4943 = vmatprep.subr.mxu0 0.0
        %4944 = vmatpush1.msra.mxu0 0.0
        %4945 = vmatprep.subr.mxu0 0.0
        %4946 = vmatpush1.msra.mxu0 0.0
        %4947 = vmatprep.subr.mxu0 0.0
        %4948 = vmatpush1.msra.mxu0 0.0
        %4949 = vmatprep.subr.mxu0 0.0
        %4950 = vmatpush1.msra.mxu0 0.0
        %4951 = vmatprep.subr.mxu0 0.0
        %4952 = vmatpush1.msra.mxu0 0.0
        %4953 = vmatprep.subr.mxu0 0.0
        %4954 = vmatpush1.msra.mxu0 0.0
        %4955 = vmatprep.subr.mxu0 0.0
        %4956 = vmatpush1.msra.mxu0 0.0
        %4957 = vmatprep.subr.mxu0 0.0
        %4958 = vmatpush1.msra.mxu0 0.0
        %4959 = vmatprep.subr.mxu0 0.0
        %4960 = vmatpush1.msra.mxu0 0.0
        %4961 = vmatprep.mubr.f32.mxu0 0.0
        %4962 = vmatmul.mubr.f32.gmra.mrb[0].mxu0 %v4850
        %v4963 = vpop.f32.mrb[0].mxu0
        %v4964 = vadd.f32 0.0, %v4963
        %v4965 = vpop.f32.mrb[0].mxu0
        %v4966 = vadd.f32 0.0, %v4965
        %4967 = vmatprep.mubr.f32.mxu0 0.0
        %4968 = vmatmul.mubr.f32.gmra.mrb[0].mxu0 %v4853
        %v4969 = vpop.f32.mrb[0].mxu0
        %v4970 = vadd.f32 0.0, %v4969
        %v4971 = vpop.f32.mrb[0].mxu0
        %v4972 = vadd.f32 0.0, %v4971
        %4973 = vmatprep.mubr.f32.mxu0 0.0
        %4974 = vmatmul.mubr.f32.gmra.mrb[0].mxu0 %v4856
        %v4975 = vpop.f32.mrb[0].mxu0
        %v4976 = vadd.f32 0.0, %v4975
        %v4977 = vpop.f32.mrb[0].mxu0
        %v4978 = vadd.f32 0.0, %v4977
        %4979 = vmatprep.mubr.f32.mxu0 0.0
        %4980 = vmatmul.mubr.f32.gmra.mrb[0].mxu0 %v4859
        %v4981 = vpop.f32.mrb[0].mxu0
        %v4982 = vadd.f32 0.0, %v4981
        %v4983 = vpop.f32.mrb[0].mxu0
        %v4984 = vadd.f32 0.0, %v4983
        %4985 = vmatprep.mubr.f32.mxu0 0.0
        %4986 = vmatmul.mubr.f32.gmra.mrb[0].mxu0 %v4862
        %v4987 = vpop.f32.mrb[0].mxu0
        %v4988 = vadd.f32 0.0, %v4987
        %v4989 = vpop.f32.mrb[0].mxu0
        %v4990 = vadd.f32 0.0, %v4989
        %4991 = vmatprep.mubr.f32.mxu0 0.0
        %4992 = vmatmul.mubr.f32.gmra.mrb[0].mxu0 %v4865
        %v4993 = vpop.f32.mrb[0].mxu0
        %v4994 = vadd.f32 0.0, %v4993
        %v4995 = vpop.f32.mrb[0].mxu0
        %v4996 = vadd.f32 0.0, %v4995
        %4997 = vmatprep.mubr.f32.mxu0 0.0
        %4998 = vmatmul.mubr.f32.gmra.mrb[0].mxu0 %v4868
        %v4999 = vpop.f32.mrb[0].mxu0
        %v5000 = vadd.f32 0.0, %v4999
        %v5001 = vpop.f32.mrb[0].mxu0
        %v5002 = vadd.f32 0.0, %v5001
        %5003 = vmatprep.mubr.f32.mxu0 0.0
        %5004 = vmatmul.mubr.f32.gmra.mrb[0].mxu0 %v4871
        %v5005 = vpop.f32.mrb[0].mxu0
        %v5006 = vadd.f32 0.0, %v5005
        %v5007 = vpop.f32.mrb[0].mxu0
        %v5008 = vadd.f32 0.0, %v5007
        %5009 = vmatprep.mubr.f32.mxu0 0.0
        %5010 = vmatmul.mubr.f32.gmra.mrb[0].mxu0 %v4874
        %v5011 = vpop.f32.mrb[0].mxu0
        %v5012 = vadd.f32 0.0, %v5011
        %v5013 = vpop.f32.mrb[0].mxu0
        %v5014 = vadd.f32 0.0, %v5013
        %5015 = vmatprep.mubr.f32.mxu0 0.0
        %5016 = vmatmul.mubr.f32.gmra.mrb[0].mxu0 %v4877
        %v5017 = vpop.f32.mrb[0].mxu0
        %v5018 = vadd.f32 0.0, %v5017
        %v5019 = vpop.f32.mrb[0].mxu0
        %v5020 = vadd.f32 0.0, %v5019
        %5021 = vmatprep.mubr.f32.mxu0 0.0
        %5022 = vmatmul.mubr.f32.gmra.mrb[0].mxu0 %v4880
        %v5023 = vpop.f32.mrb[0].mxu0
        %v5024 = vadd.f32 0.0, %v5023
        %v5025 = vpop.f32.mrb[0].mxu0
        %v5026 = vadd.f32 0.0, %v5025
        %5027 = vmatprep.mubr.f32.mxu0 0.0
        %5028 = vmatmul.mubr.f32.gmra.mrb[0].mxu0 %v4883
        %v5029 = vpop.f32.mrb[0].mxu0
        %v5030 = vadd.f32 0.0, %v5029
        %v5031 = vpop.f32.mrb[0].mxu0
        %v5032 = vadd.f32 0.0, %v5031
        %5033 = vmatprep.mubr.f32.mxu0 0.0
        %5034 = vmatmul.mubr.f32.gmra.mrb[0].mxu0 %v4886
        %v5035 = vpop.f32.mrb[0].mxu0
        %v5036 = vadd.f32 0.0, %v5035
        %v5037 = vpop.f32.mrb[0].mxu0
        %v5038 = vadd.f32 0.0, %v5037
        %5039 = vmatprep.mubr.f32.mxu0 0.0
        %5040 = vmatmul.mubr.f32.gmra.mrb[0].mxu0 %v4889
        %v5041 = vpop.f32.mrb[0].mxu0
        %v5042 = vadd.f32 0.0, %v5041
        %v5043 = vpop.f32.mrb[0].mxu0
        %v5044 = vadd.f32 0.0, %v5043
        %5045 = vmatprep.mubr.f32.mxu0 0.0
        %5046 = vmatmul.mubr.f32.gmra.mrb[0].mxu0 %v4892
        %v5047 = vpop.f32.mrb[0].mxu0
        %v5048 = vadd.f32 0.0, %v5047
        %v5049 = vpop.f32.mrb[0].mxu0
        %v5050 = vadd.f32 0.0, %v5049
        %5051 = vmatprep.mubr.f32.mxu0 0.0
        %5052 = vmatmul.mubr.f32.gmra.mrb[0].mxu0 %v4895
        %v5053 = vpop.f32.mrb[0].mxu0
        %v5054 = vadd.f32 0.0, %v5053
        %v5055 = vpop.f32.mrb[0].mxu0
        %v5056 = vadd.f32 0.0, %v5055
        %5057 = vdwg.mxu0
        %v5058 = vmul.f32 %v3384, %v4237
        %v5059 = vmul.f32 %v3385, %v4239
        %v5060 = vmul.f32 %v3388, %v4243
        %v5061 = vmul.f32 %v3389, %v4245
        %v5062 = vmul.f32 %v3392, %v4249
        %v5063 = vmul.f32 %v3393, %v4251
        %v5064 = vmul.f32 %v3396, %v4255
        %v5065 = vmul.f32 %v3397, %v4257
        %v5066 = vmul.f32 %v3400, %v4261
        %v5067 = vmul.f32 %v3401, %v4263
        %v5068 = vmul.f32 %v3404, %v4267
        %v5069 = vmul.f32 %v3405, %v4269
        %v5070 = vmul.f32 %v3408, %v4273
        %v5071 = vmul.f32 %v3409, %v4275
        %v5072 = vmul.f32 %v3412, %v4279
        %v5073 = vmul.f32 %v3413, %v4281
        %v5074 = vmul.f32 %v3416, %v4285
        %v5075 = vmul.f32 %v3417, %v4287
        %v5076 = vmul.f32 %v3420, %v4291
        %v5077 = vmul.f32 %v3421, %v4293
        %v5078 = vmul.f32 %v3424, %v4297
        %v5079 = vmul.f32 %v3425, %v4299
        %v5080 = vmul.f32 %v3428, %v4303
        %v5081 = vmul.f32 %v3429, %v4305
        %v5082 = vmul.f32 %v3432, %v4309
        %v5083 = vmul.f32 %v3433, %v4311
        %v5084 = vmul.f32 %v3436, %v4315
        %v5085 = vmul.f32 %v3437, %v4317
        %v5086 = vmul.f32 %v3440, %v4321
        %v5087 = vmul.f32 %v3441, %v4323
        %v5088 = vmul.f32 %v3444, %v4327
        %v5089 = vmul.f32 %v3445, %v4329
        %v5090 = vpack.c.bf16 %v5060, %v5058
        %v5091 = vpack.c.bf16 %v5061, %v5059
        %v5092 = vpack.c.bf16 %v5064, %v5062
        %v5093 = vpack.c.bf16 %v5065, %v5063
        %v5094 = vpack.c.bf16 %v5068, %v5066
        %v5095 = vpack.c.bf16 %v5069, %v5067
        %v5096 = vpack.c.bf16 %v5072, %v5070
        %v5097 = vpack.c.bf16 %v5073, %v5071
        %v5098 = vpack.c.bf16 %v5076, %v5074
        %v5099 = vpack.c.bf16 %v5077, %v5075
        %v5100 = vpack.c.bf16 %v5080, %v5078
        %v5101 = vpack.c.bf16 %v5081, %v5079
        %v5102 = vpack.c.bf16 %v5084, %v5082
        %v5103 = vpack.c.bf16 %v5085, %v5083
        %v5104 = vpack.c.bf16 %v5088, %v5086
        %v5105 = vpack.c.bf16 %v5089, %v5087
        %5106 = vst [vmem:[#allocation5] sm:$0xff] %v5090
        %5107 = vst [vmem:[#allocation5 + $0x8] sm:$0xff] %v5091
        %5108 = vst [vmem:[#allocation5 + $0x10] sm:$0xff] %v5092
        %5109 = vst [vmem:[#allocation5 + $0x18] sm:$0xff] %v5093
        %5110 = vst [vmem:[#allocation5 + $0x20] sm:$0xff] %v5094
        %5111 = vst [vmem:[#allocation5 + $0x28] sm:$0xff] %v5095
        %5112 = vst [vmem:[#allocation5 + $0x30] sm:$0xff] %v5096
        %5113 = vst [vmem:[#allocation5 + $0x38] sm:$0xff] %v5097
        %5114 = vst [vmem:[#allocation5 + $0x40] sm:$0xff] %v5098
        %5115 = vst [vmem:[#allocation5 + $0x48] sm:$0xff] %v5099
        %5116 = vst [vmem:[#allocation5 + $0x50] sm:$0xff] %v5100
        %5117 = vst [vmem:[#allocation5 + $0x58] sm:$0xff] %v5101
        %5118 = vst [vmem:[#allocation5 + $0x60] sm:$0xff] %v5102
        %5119 = vst [vmem:[#allocation5 + $0x68] sm:$0xff] %v5103
        %5120 = vst [vmem:[#allocation5 + $0x70] sm:$0xff] %v5104
        %5121 = vst [vmem:[#allocation5 + $0x78] sm:$0xff] %v5105
        %5122 = vst [vmem:[#allocation6] sm:$0xff] %v4446
        %5123 = vst [vmem:[#allocation6 + $0x8] sm:$0xff] %v4448
        %5124 = vst [vmem:[#allocation6 + $0x10] sm:$0xff] %v4452
        %5125 = vst [vmem:[#allocation6 + $0x18] sm:$0xff] %v4454
        %5126 = vst [vmem:[#allocation6 + $0x20] sm:$0xff] %v4458
        %5127 = vst [vmem:[#allocation6 + $0x28] sm:$0xff] %v4460
        %5128 = vst [vmem:[#allocation6 + $0x30] sm:$0xff] %v4464
        %5129 = vst [vmem:[#allocation6 + $0x38] sm:$0xff] %v4466
        %5130 = vst [vmem:[#allocation6 + $0x40] sm:$0xff] %v4470
        %5131 = vst [vmem:[#allocation6 + $0x48] sm:$0xff] %v4472
        %5132 = vst [vmem:[#allocation6 + $0x50] sm:$0xff] %v4476
        %5133 = vst [vmem:[#allocation6 + $0x58] sm:$0xff] %v4478
        %5134 = vst [vmem:[#allocation6 + $0x60] sm:$0xff] %v4482
        %5135 = vst [vmem:[#allocation6 + $0x68] sm:$0xff] %v4484
        %5136 = vst [vmem:[#allocation6 + $0x70] sm:$0xff] %v4488
        %5137 = vst [vmem:[#allocation6 + $0x78] sm:$0xff] %v4490
        %5138 = vst [vmem:[#allocation6 + $0x80] sm:$0xff] %v4494
        %5139 = vst [vmem:[#allocation6 + $0x88] sm:$0xff] %v4496
        %5140 = vst [vmem:[#allocation6 + $0x90] sm:$0xff] %v4500
        %5141 = vst [vmem:[#allocation6 + $0x98] sm:$0xff] %v4502
        %5142 = vst [vmem:[#allocation6 + $0xa0] sm:$0xff] %v4506
        %5143 = vst [vmem:[#allocation6 + $0xa8] sm:$0xff] %v4508
        %5144 = vst [vmem:[#allocation6 + $0xb0] sm:$0xff] %v4512
        %5145 = vst [vmem:[#allocation6 + $0xb8] sm:$0xff] %v4514
        %5146 = vst [vmem:[#allocation6 + $0xc0] sm:$0xff] %v4518
        %5147 = vst [vmem:[#allocation6 + $0xc8] sm:$0xff] %v4520
        %5148 = vst [vmem:[#allocation6 + $0xd0] sm:$0xff] %v4524
        %5149 = vst [vmem:[#allocation6 + $0xd8] sm:$0xff] %v4526
        %5150 = vst [vmem:[#allocation6 + $0xe0] sm:$0xff] %v4530
        %5151 = vst [vmem:[#allocation6 + $0xe8] sm:$0xff] %v4532
        %5152 = vst [vmem:[#allocation6 + $0xf0] sm:$0xff] %v4536
        %5153 = vst [vmem:[#allocation6 + $0xf8] sm:$0xff] %v4538
        %5154 = vst [vmem:[#allocation7] sm:$0xf] %v4110
        %vm5155 = vcmask 130048
        %v5157 = vsel %vm5155, %v3387, 0
        %v5160 = vsel %vm5155, %v3391, 0
        %v5163 = vsel %vm5155, %v3395, 0
        %v5166 = vsel %vm5155, %v3399, 0
        %v5169 = vsel %vm5155, %v3403, 0
        %v5172 = vsel %vm5155, %v3407, 0
        %v5175 = vsel %vm5155, %v3411, 0
        %v5178 = vsel %vm5155, %v3415, 0
        %v5181 = vsel %vm5155, %v3419, 0
        %v5184 = vsel %vm5155, %v3423, 0
        %v5187 = vsel %vm5155, %v3427, 0
        %v5190 = vsel %vm5155, %v3431, 0
        %v5193 = vsel %vm5155, %v3435, 0
        %v5196 = vsel %vm5155, %v3439, 0
        %v5199 = vsel %vm5155, %v3443, 0
        %v5202 = vsel %vm5155, %v3447, 0
        %v5205 = vsel %vm5155, %v3386, 0
        %v5208 = vsel %vm5155, %v3390, 0
        %v5211 = vsel %vm5155, %v3394, 0
        %v5214 = vsel %vm5155, %v3398, 0
        %v5217 = vsel %vm5155, %v3402, 0
        %v5220 = vsel %vm5155, %v3406, 0
        %v5223 = vsel %vm5155, %v3410, 0
        %v5226 = vsel %vm5155, %v3414, 0
        %v5229 = vsel %vm5155, %v3418, 0
        %v5232 = vsel %vm5155, %v3422, 0
        %v5235 = vsel %vm5155, %v3426, 0
        %v5238 = vsel %vm5155, %v3430, 0
        %v5241 = vsel %vm5155, %v3434, 0
        %v5244 = vsel %vm5155, %v3438, 0
        %v5247 = vsel %vm5155, %v3442, 0
        %v5250 = vsel %vm5155, %v3446, 0
        %5252 = vmatprep.subr.mxu0 0.0
        %5253 = vmatpush1.xpose.msra.mxu0 %v5205
        %5254 = vmatprep.subr.mxu0 0.0
        %5255 = vmatpush1.xpose.msra.mxu0 %v5208
        %5256 = vmatprep.subr.mxu0 0.0
        %5257 = vmatpush1.xpose.msra.mxu0 %v5211
        %5258 = vmatprep.subr.mxu0 0.0
        %5259 = vmatpush1.xpose.msra.mxu0 %v5214
        %5260 = vmatprep.subr.mxu0 0.0
        %5261 = vmatpush1.xpose.msra.mxu0 %v5217
        %5262 = vmatprep.subr.mxu0 0.0
        %5263 = vmatpush1.xpose.msra.mxu0 %v5220
        %5264 = vmatprep.subr.mxu0 0.0
        %5265 = vmatpush1.xpose.msra.mxu0 %v5223
        %5266 = vmatprep.subr.mxu0 0.0
        %5267 = vmatpush1.xpose.msra.mxu0 %v5226
        %5268 = vmatprep.subr.mxu0 0.0
        %5269 = vmatpush1.xpose.msra.mxu0 %v5229
        %5270 = vmatprep.subr.mxu0 0.0
        %5271 = vmatpush1.xpose.msra.mxu0 %v5232
        %5272 = vmatprep.subr.mxu0 0.0
        %5273 = vmatpush1.xpose.msra.mxu0 %v5235
        %5274 = vmatprep.subr.mxu0 0.0
        %5275 = vmatpush1.xpose.msra.mxu0 %v5238
        %5276 = vmatprep.subr.mxu0 0.0
        %5277 = vmatpush1.xpose.msra.mxu0 %v5241
        %5278 = vmatprep.subr.mxu0 0.0
        %5279 = vmatpush1.xpose.msra.mxu0 %v5244
        %5280 = vmatprep.subr.mxu0 0.0
        %5281 = vmatpush1.xpose.msra.mxu0 %v5247
        %5282 = vmatprep.subr.mxu0 0.0
        %5283 = vmatpush1.xpose.msra.mxu0 %v5250
        %5284 = vmatprep.subr.mxu0 0.0
        %5285 = vmatpush1.xpose.msra.mxu0 0.0
        %5286 = vmatprep.subr.mxu0 0.0
        %5287 = vmatpush1.xpose.msra.mxu0 0.0
        %5288 = vmatprep.subr.mxu0 0.0
        %5289 = vmatpush1.xpose.msra.mxu0 0.0
        %5290 = vmatprep.subr.mxu0 0.0
        %5291 = vmatpush1.xpose.msra.mxu0 0.0
        %5292 = vmatprep.subr.mxu0 0.0
        %5293 = vmatpush1.xpose.msra.mxu0 0.0
        %5294 = vmatprep.subr.mxu0 0.0
        %5295 = vmatpush1.xpose.msra.mxu0 0.0
        %5296 = vmatprep.subr.mxu0 0.0
        %5297 = vmatpush1.xpose.msra.mxu0 0.0
        %5298 = vmatprep.subr.mxu0 0.0
        %5299 = vmatpush1.xpose.msra.mxu0 0.0
        %5300 = vmatprep.subr.mxu0 0.0
        %5301 = vmatpush1.xpose.msra.mxu0 0.0
        %5302 = vmatprep.subr.mxu0 0.0
        %5303 = vmatpush1.xpose.msra.mxu0 0.0
        %5304 = vmatprep.subr.mxu0 0.0
        %5305 = vmatpush1.xpose.msra.mxu0 0.0
        %5306 = vmatprep.subr.mxu0 0.0
        %5307 = vmatpush1.xpose.msra.mxu0 0.0
        %5308 = vmatprep.subr.mxu0 0.0
        %5309 = vmatpush1.xpose.msra.mxu0 0.0
        %5310 = vmatprep.subr.mxu0 0.0
        %5311 = vmatpush1.xpose.msra.mxu0 0.0
        %5312 = vmatprep.subr.mxu0 0.0
        %5313 = vmatpush1.xpose.msra.mxu0 0.0
        %5314 = vmatprep.subr.mxu0 0.0
        %5315 = vmatpush1.xpose.msra.mxu0 0.0
        %5316 = vmatprep.mubr.f32.mxu0 0.0
        %5317 = vmatmul.mubr.f32.gmra.mrb[0].mxu0 %v5157
        %v5318 = vpop.f32.mrb[0].mxu0
        %v5319 = vadd.f32 0.0, %v5318
        %v5320 = vpop.f32.mrb[0].mxu0
        %5321 = vmatprep.mubr.f32.mxu0 0.0
        %5322 = vmatmul.mubr.f32.gmra.mrb[0].mxu0 %v5160
        %v5323 = vpop.f32.mrb[0].mxu0
        %v5324 = vadd.f32 0.0, %v5323
        %v5325 = vpop.f32.mrb[0].mxu0
        %5326 = vmatprep.mubr.f32.mxu0 0.0
        %5327 = vmatmul.mubr.f32.gmra.mrb[0].mxu0 %v5163
        %v5328 = vpop.f32.mrb[0].mxu0
        %v5329 = vadd.f32 0.0, %v5328
        %v5330 = vpop.f32.mrb[0].mxu0
        %5331 = vmatprep.mubr.f32.mxu0 0.0
        %5332 = vmatmul.mubr.f32.gmra.mrb[0].mxu0 %v5166
        %v5333 = vpop.f32.mrb[0].mxu0
        %v5334 = vadd.f32 0.0, %v5333
        %v5335 = vpop.f32.mrb[0].mxu0
        %5336 = vmatprep.mubr.f32.mxu0 0.0
        %5337 = vmatmul.mubr.f32.gmra.mrb[0].mxu0 %v5169
        %v5338 = vpop.f32.mrb[0].mxu0
        %v5339 = vadd.f32 0.0, %v5338
        %v5340 = vpop.f32.mrb[0].mxu0
        %5341 = vmatprep.mubr.f32.mxu0 0.0
        %5342 = vmatmul.mubr.f32.gmra.mrb[0].mxu0 %v5172
        %v5343 = vpop.f32.mrb[0].mxu0
        %v5344 = vadd.f32 0.0, %v5343
        %v5345 = vpop.f32.mrb[0].mxu0
        %5346 = vmatprep.mubr.f32.mxu0 0.0
        %5347 = vmatmul.mubr.f32.gmra.mrb[0].mxu0 %v5175
        %v5348 = vpop.f32.mrb[0].mxu0
        %v5349 = vadd.f32 0.0, %v5348
        %v5350 = vpop.f32.mrb[0].mxu0
        %5351 = vmatprep.mubr.f32.mxu0 0.0
        %5352 = vmatmul.mubr.f32.gmra.mrb[0].mxu0 %v5178
        %v5353 = vpop.f32.mrb[0].mxu0
        %v5354 = vadd.f32 0.0, %v5353
        %v5355 = vpop.f32.mrb[0].mxu0
        %5356 = vmatprep.mubr.f32.mxu0 0.0
        %5357 = vmatmul.mubr.f32.gmra.mrb[0].mxu0 %v5181
        %v5358 = vpop.f32.mrb[0].mxu0
        %v5359 = vadd.f32 0.0, %v5358
        %v5360 = vpop.f32.mrb[0].mxu0
        %5361 = vmatprep.mubr.f32.mxu0 0.0
        %5362 = vmatmul.mubr.f32.gmra.mrb[0].mxu0 %v5184
        %v5363 = vpop.f32.mrb[0].mxu0
        %v5364 = vadd.f32 0.0, %v5363
        %v5365 = vpop.f32.mrb[0].mxu0
        %5366 = vmatprep.mubr.f32.mxu0 0.0
        %5367 = vmatmul.mubr.f32.gmra.mrb[0].mxu0 %v5187
        %v5368 = vpop.f32.mrb[0].mxu0
        %v5369 = vadd.f32 0.0, %v5368
        %v5370 = vpop.f32.mrb[0].mxu0
        %5371 = vmatprep.mubr.f32.mxu0 0.0
        %5372 = vmatmul.mubr.f32.gmra.mrb[0].mxu0 %v5190
        %v5373 = vpop.f32.mrb[0].mxu0
        %v5374 = vadd.f32 0.0, %v5373
        %v5375 = vpop.f32.mrb[0].mxu0
        %5376 = vmatprep.mubr.f32.mxu0 0.0
        %5377 = vmatmul.mubr.f32.gmra.mrb[0].mxu0 %v5193
        %v5378 = vpop.f32.mrb[0].mxu0
        %v5379 = vadd.f32 0.0, %v5378
        %v5380 = vpop.f32.mrb[0].mxu0
        %5381 = vmatprep.mubr.f32.mxu0 0.0
        %5382 = vmatmul.mubr.f32.gmra.mrb[0].mxu0 %v5196
        %v5383 = vpop.f32.mrb[0].mxu0
        %v5384 = vadd.f32 0.0, %v5383
        %v5385 = vpop.f32.mrb[0].mxu0
        %5386 = vmatprep.mubr.f32.mxu0 0.0
        %5387 = vmatmul.mubr.f32.gmra.mrb[0].mxu0 %v5199
        %v5388 = vpop.f32.mrb[0].mxu0
        %v5389 = vadd.f32 0.0, %v5388
        %v5390 = vpop.f32.mrb[0].mxu0
        %5391 = vmatprep.mubr.f32.mxu0 0.0
        %5392 = vmatmul.mubr.f32.gmra.mrb[0].mxu0 %v5202
        %v5393 = vpop.f32.mrb[0].mxu0
        %v5394 = vadd.f32 0.0, %v5393
        %v5395 = vpop.f32.mrb[0].mxu0
        %5396 = vdwg.mxu0
        %v5397 = vsel %vm3770, %v5319, 0.0
        %v5398 = vsel %vm3771, %v5324, 0.0
        %v5399 = vsel %vm3772, %v5329, 0.0
        %v5400 = vsel %vm3773, %v5334, 0.0
        %v5401 = vsel %vm3774, %v5339, 0.0
        %v5402 = vsel %vm3775, %v5344, 0.0
        %v5403 = vsel %vm3776, %v5349, 0.0
        %v5404 = vsel %vm3777, %v5354, 0.0
        %v5405 = vsel %vm3778, %v5359, 0.0
        %v5406 = vsel %vm3779, %v5364, 0.0
        %v5407 = vsel %vm3780, %v5369, 0.0
        %v5408 = vsel %vm3781, %v5374, 0.0
        %v5409 = vsel %vm3782, %v5379, 0.0
        %v5410 = vsel %vm3783, %v5384, 0.0
        %v5411 = vsel %vm3784, %v5389, 0.0
        %v5412 = vsel %vm3785, %v5394, 0.0
        %v5413 = vld [vmem:[#allocation7] sm:$0x3]
        %v5414 = vld [vmem:[#allocation6] sm:$0xff]
        %v5415 = vld [vmem:[#allocation6 + $0x10] sm:$0xff]
        %v5416 = vld [vmem:[#allocation6 + $0x20] sm:$0xff]
        %v5417 = vld [vmem:[#allocation6 + $0x30] sm:$0xff]
        %v5418 = vld [vmem:[#allocation6 + $0x40] sm:$0xff]
        %v5419 = vld [vmem:[#allocation6 + $0x50] sm:$0xff]
        %v5420 = vld [vmem:[#allocation6 + $0x60] sm:$0xff]
        %v5421 = vld [vmem:[#allocation6 + $0x70] sm:$0xff]
        %v5422 = vld [vmem:[#allocation6 + $0x80] sm:$0xff]
        %v5423 = vld [vmem:[#allocation6 + $0x90] sm:$0xff]
        %v5424 = vld [vmem:[#allocation6 + $0xa0] sm:$0xff]
        %v5425 = vld [vmem:[#allocation6 + $0xb0] sm:$0xff]
        %v5426 = vld [vmem:[#allocation6 + $0xc0] sm:$0xff]
        %v5427 = vld [vmem:[#allocation6 + $0xd0] sm:$0xff]
        %v5428 = vld [vmem:[#allocation6 + $0xe0] sm:$0xff]
        %v5429 = vld [vmem:[#allocation6 + $0xf0] sm:$0xff]
        %v5430 = vld [vmem:[#allocation5] sm:$0xff]
        %v5431 = vld [vmem:[#allocation5 + $0x10] sm:$0xff]
        %v5432 = vld [vmem:[#allocation5 + $0x20] sm:$0xff]
        %v5433 = vld [vmem:[#allocation5 + $0x30] sm:$0xff]
        %v5434 = vld [vmem:[#allocation5 + $0x40] sm:$0xff]
        %v5435 = vld [vmem:[#allocation5 + $0x50] sm:$0xff]
        %v5436 = vld [vmem:[#allocation5 + $0x60] sm:$0xff]
        %v5437 = vld [vmem:[#allocation5 + $0x70] sm:$0xff]
        %5439 = vset.pattern.permute.xlu0 0
        %5440 = vperm.xlu0 %5439, %v5414
        %v5441 = vpop.permute.xlu0 %5440
        %5444 = vset.pattern.permute.xlu0 0
        %5445 = vperm.xlu0 %5444, %v5415
        %v5446 = vpop.permute.xlu0 %5445
        %5449 = vset.pattern.permute.xlu0 0
        %5450 = vperm.xlu0 %5449, %v5416
        %v5451 = vpop.permute.xlu0 %5450
        %5454 = vset.pattern.permute.xlu0 0
        %5455 = vperm.xlu0 %5454, %v5417
        %v5456 = vpop.permute.xlu0 %5455
        %5459 = vset.pattern.permute.xlu0 0
        %5460 = vperm.xlu0 %5459, %v5418
        %v5461 = vpop.permute.xlu0 %5460
        %5464 = vset.pattern.permute.xlu0 0
        %5465 = vperm.xlu0 %5464, %v5419
        %v5466 = vpop.permute.xlu0 %5465
        %5469 = vset.pattern.permute.xlu0 0
        %5470 = vperm.xlu0 %5469, %v5420
        %v5471 = vpop.permute.xlu0 %5470
        %5474 = vset.pattern.permute.xlu0 0
        %5475 = vperm.xlu0 %5474, %v5421
        %v5476 = vpop.permute.xlu0 %5475
        %5479 = vset.pattern.permute.xlu0 0
        %5480 = vperm.xlu0 %5479, %v5422
        %v5481 = vpop.permute.xlu0 %5480
        %5484 = vset.pattern.permute.xlu0 0
        %5485 = vperm.xlu0 %5484, %v5423
        %v5486 = vpop.permute.xlu0 %5485
        %5489 = vset.pattern.permute.xlu0 0
        %5490 = vperm.xlu0 %5489, %v5424
        %v5491 = vpop.permute.xlu0 %5490
        %5494 = vset.pattern.permute.xlu0 0
        %5495 = vperm.xlu0 %5494, %v5425
        %v5496 = vpop.permute.xlu0 %5495
        %5499 = vset.pattern.permute.xlu0 0
        %5500 = vperm.xlu0 %5499, %v5426
        %v5501 = vpop.permute.xlu0 %5500
        %5504 = vset.pattern.permute.xlu0 0
        %5505 = vperm.xlu0 %5504, %v5427
        %v5506 = vpop.permute.xlu0 %5505
        %5509 = vset.pattern.permute.xlu0 0
        %5510 = vperm.xlu0 %5509, %v5428
        %v5511 = vpop.permute.xlu0 %5510
        %5514 = vset.pattern.permute.xlu0 0
        %5515 = vperm.xlu0 %5514, %v5429
        %v5516 = vpop.permute.xlu0 %5515
        %v5518 = vlaneseq
        %v5519 = vshrl.u32 %v5518, 7
        %v5520 = vsub.s32 0, %v5519
        %v5521 = vrot.slane %v5413, %v5520
        %v5522 = vsub.f32 %v5441, %v5521
        %v5523 = vsub.f32 %v5446, %v5521
        %v5524 = vsub.f32 %v5451, %v5521
        %v5525 = vsub.f32 %v5456, %v5521
        %v5526 = vsub.f32 %v5461, %v5521
        %v5527 = vsub.f32 %v5466, %v5521
        %v5528 = vsub.f32 %v5471, %v5521
        %v5529 = vsub.f32 %v5476, %v5521
        %v5530 = vsub.f32 %v5481, %v5521
        %v5531 = vsub.f32 %v5486, %v5521
        %v5532 = vsub.f32 %v5491, %v5521
        %v5533 = vsub.f32 %v5496, %v5521
        %v5534 = vsub.f32 %v5501, %v5521
        %v5535 = vsub.f32 %v5506, %v5521
        %v5536 = vsub.f32 %v5511, %v5521
        %v5537 = vsub.f32 %v5516, %v5521
        %v5538 = vmin.f32 %v5522, 0.0
        %v5539 = vmin.f32 %v5523, 0.0
        %v5540 = vmin.f32 %v5524, 0.0
        %v5541 = vmin.f32 %v5525, 0.0
        %v5542 = vmin.f32 %v5526, 0.0
        %v5543 = vmin.f32 %v5527, 0.0
        %v5544 = vmin.f32 %v5528, 0.0
        %v5545 = vmin.f32 %v5529, 0.0
        %v5546 = vmin.f32 %v5530, 0.0
        %v5547 = vmin.f32 %v5531, 0.0
        %v5548 = vmin.f32 %v5532, 0.0
        %v5549 = vmin.f32 %v5533, 0.0
        %v5550 = vmin.f32 %v5534, 0.0
        %v5551 = vmin.f32 %v5535, 0.0
        %v5552 = vmin.f32 %v5536, 0.0
        %v5553 = vmin.f32 %v5537, 0.0
        %v5554 = vmul.f32 %v5538, 1.442695
        %v5555 = vpow.pop %v5554
        %v5556 = vmul.f32 %v5539, 1.442695
        %v5557 = vpow.pop %v5556
        %v5558 = vmul.f32 %v5540, 1.442695
        %v5559 = vpow.pop %v5558
        %v5560 = vmul.f32 %v5541, 1.442695
        %v5561 = vpow.pop %v5560
        %v5562 = vmul.f32 %v5542, 1.442695
        %v5563 = vpow.pop %v5562
        %v5564 = vmul.f32 %v5543, 1.442695
        %v5565 = vpow.pop %v5564
        %v5566 = vmul.f32 %v5544, 1.442695
        %v5567 = vpow.pop %v5566
        %v5568 = vmul.f32 %v5545, 1.442695
        %v5569 = vpow.pop %v5568
        %v5570 = vmul.f32 %v5546, 1.442695
        %v5571 = vpow.pop %v5570
        %v5572 = vmul.f32 %v5547, 1.442695
        %v5573 = vpow.pop %v5572
        %v5574 = vmul.f32 %v5548, 1.442695
        %v5575 = vpow.pop %v5574
        %v5576 = vmul.f32 %v5549, 1.442695
        %v5577 = vpow.pop %v5576
        %v5578 = vmul.f32 %v5550, 1.442695
        %v5579 = vpow.pop %v5578
        %v5580 = vmul.f32 %v5551, 1.442695
        %v5581 = vpow.pop %v5580
        %v5582 = vmul.f32 %v5552, 1.442695
        %v5583 = vpow.pop %v5582
        %v5584 = vmul.f32 %v5553, 1.442695
        %v5585 = vpow.pop %v5584
        %v5586 = vmul.f32 %v5397, %v5555
        %v5587 = vmul.f32 %v5398, %v5557
        %v5588 = vmul.f32 %v5399, %v5559
        %v5589 = vmul.f32 %v5400, %v5561
        %v5590 = vmul.f32 %v5401, %v5563
        %v5591 = vmul.f32 %v5402, %v5565
        %v5592 = vmul.f32 %v5403, %v5567
        %v5593 = vmul.f32 %v5404, %v5569
        %v5594 = vmul.f32 %v5405, %v5571
        %v5595 = vmul.f32 %v5406, %v5573
        %v5596 = vmul.f32 %v5407, %v5575
        %v5597 = vmul.f32 %v5408, %v5577
        %v5598 = vmul.f32 %v5409, %v5579
        %v5599 = vmul.f32 %v5410, %v5581
        %v5600 = vmul.f32 %v5411, %v5583
        %v5601 = vmul.f32 %v5412, %v5585
        %v5602 = vpack.c.bf16 %v5587, %v5586
        %v5603 = vpack.c.bf16 %v5589, %v5588
        %v5604 = vpack.c.bf16 %v5591, %v5590
        %v5605 = vpack.c.bf16 %v5593, %v5592
        %v5606 = vpack.c.bf16 %v5595, %v5594
        %v5607 = vpack.c.bf16 %v5597, %v5596
        %v5608 = vpack.c.bf16 %v5599, %v5598
        %v5609 = vpack.c.bf16 %v5601, %v5600
        %5610 = vmatprep.subr.bf16.mxu0 0
        %5611 = vmatpush1.bf16.msra.mxu0 %v5430
        %5612 = vmatprep.subr.bf16.mxu0 0
        %5613 = vmatpush1.bf16.msra.mxu0 %v5431
        %5614 = vmatprep.subr.bf16.mxu0 0
        %5615 = vmatpush1.bf16.msra.mxu0 %v5432
        %5616 = vmatprep.subr.bf16.mxu0 0
        %5617 = vmatpush1.bf16.msra.mxu0 %v5433
        %5618 = vmatprep.subr.bf16.mxu0 0
        %5619 = vmatpush1.bf16.msra.mxu0 %v5434
        %5620 = vmatprep.subr.bf16.mxu0 0
        %5621 = vmatpush1.bf16.msra.mxu0 %v5435
        %5622 = vmatprep.subr.bf16.mxu0 0
        %5623 = vmatpush1.bf16.msra.mxu0 %v5436
        %5624 = vmatprep.subr.bf16.mxu0 0
        %5625 = vmatpush1.bf16.msra.mxu0 %v5437
        %5626 = vmatprep.subr.bf16.mxu0 0
        %5627 = vmatpush1.bf16.msra.mxu0 0
        %5628 = vmatprep.subr.bf16.mxu0 0
        %5629 = vmatpush1.bf16.msra.mxu0 0
        %5630 = vmatprep.subr.bf16.mxu0 0
        %5631 = vmatpush1.bf16.msra.mxu0 0
        %5632 = vmatprep.subr.bf16.mxu0 0
        %5633 = vmatpush1.bf16.msra.mxu0 0
        %5634 = vmatprep.subr.bf16.mxu0 0
        %5635 = vmatpush1.bf16.msra.mxu0 0
        %5636 = vmatprep.subr.bf16.mxu0 0
        %5637 = vmatpush1.bf16.msra.mxu0 0
        %5638 = vmatprep.subr.bf16.mxu0 0
        %5639 = vmatpush1.bf16.msra.mxu0 0
        %5640 = vmatprep.subr.bf16.mxu0 0
        %5641 = vmatpush1.bf16.msra.mxu0 0
        %5642 = vmatprep.mubr.bf16.mxu0 0
        %5643 = vmatmul.mubr.bf16.gmra.mrb[0].mxu0 %v5602
        %v5644 = vpop.f32.mrb[0].mxu0
        %v5645 = vadd.f32 0.0, %v5644
        %v5646 = vpop.f32.mrb[0].mxu0
        %v5647 = vpop.f32.mrb[0].mxu0
        %v5648 = vadd.f32 0.0, %v5647
        %v5649 = vpop.f32.mrb[0].mxu0
        %5650 = vmatprep.mubr.bf16.mxu0 0
        %5651 = vmatmul.mubr.bf16.gmra.mrb[0].mxu0 %v5603
        %v5652 = vpop.f32.mrb[0].mxu0
        %v5653 = vadd.f32 0.0, %v5652
        %v5654 = vpop.f32.mrb[0].mxu0
        %v5655 = vpop.f32.mrb[0].mxu0
        %v5656 = vadd.f32 0.0, %v5655
        %v5657 = vpop.f32.mrb[0].mxu0
        %5658 = vmatprep.mubr.bf16.mxu0 0
        %5659 = vmatmul.mubr.bf16.gmra.mrb[0].mxu0 %v5604
        %v5660 = vpop.f32.mrb[0].mxu0
        %v5661 = vadd.f32 0.0, %v5660
        %v5662 = vpop.f32.mrb[0].mxu0
        %v5663 = vpop.f32.mrb[0].mxu0
        %v5664 = vadd.f32 0.0, %v5663
        %v5665 = vpop.f32.mrb[0].mxu0
        %5666 = vmatprep.mubr.bf16.mxu0 0
        %5667 = vmatmul.mubr.bf16.gmra.mrb[0].mxu0 %v5605
        %v5668 = vpop.f32.mrb[0].mxu0
        %v5669 = vadd.f32 0.0, %v5668
        %v5670 = vpop.f32.mrb[0].mxu0
        %v5671 = vpop.f32.mrb[0].mxu0
        %v5672 = vadd.f32 0.0, %v5671
        %v5673 = vpop.f32.mrb[0].mxu0
        %5674 = vmatprep.mubr.bf16.mxu0 0
        %5675 = vmatmul.mubr.bf16.gmra.mrb[0].mxu0 %v5606
        %v5676 = vpop.f32.mrb[0].mxu0
        %v5677 = vadd.f32 0.0, %v5676
        %v5678 = vpop.f32.mrb[0].mxu0
        %v5679 = vpop.f32.mrb[0].mxu0
        %v5680 = vadd.f32 0.0, %v5679
        %v5681 = vpop.f32.mrb[0].mxu0
        %5682 = vmatprep.mubr.bf16.mxu0 0
        %5683 = vmatmul.mubr.bf16.gmra.mrb[0].mxu0 %v5607
        %v5684 = vpop.f32.mrb[0].mxu0
        %v5685 = vadd.f32 0.0, %v5684
        %v5686 = vpop.f32.mrb[0].mxu0
        %v5687 = vpop.f32.mrb[0].mxu0
        %v5688 = vadd.f32 0.0, %v5687
        %v5689 = vpop.f32.mrb[0].mxu0
        %5690 = vmatprep.mubr.bf16.mxu0 0
        %5691 = vmatmul.mubr.bf16.gmra.mrb[0].mxu0 %v5608
        %v5692 = vpop.f32.mrb[0].mxu0
        %v5693 = vadd.f32 0.0, %v5692
        %v5694 = vpop.f32.mrb[0].mxu0
        %v5695 = vpop.f32.mrb[0].mxu0
        %v5696 = vadd.f32 0.0, %v5695
        %v5697 = vpop.f32.mrb[0].mxu0
        %5698 = vmatprep.mubr.bf16.mxu0 0
        %5699 = vmatmul.mubr.bf16.gmra.mrb[0].mxu0 %v5609
        %v5700 = vpop.f32.mrb[0].mxu0
        %v5701 = vadd.f32 0.0, %v5700
        %v5702 = vpop.f32.mrb[0].mxu0
        %v5703 = vpop.f32.mrb[0].mxu0
        %v5704 = vadd.f32 0.0, %v5703
        %v5705 = vpop.f32.mrb[0].mxu0
        %5706 = vdwg.mxu0
        %5707 = vset.pattern.permute.xlu0 64
        %5708 = vperm.xlu0 %5707, %v5414
        %v5709 = vpop.permute.xlu0 %5708
        %5711 = vset.pattern.permute.xlu0 64
        %5712 = vperm.xlu0 %5711, %v5415
        %v5713 = vpop.permute.xlu0 %5712
        %5715 = vset.pattern.permute.xlu0 64
        %5716 = vperm.xlu0 %5715, %v5416
        %v5717 = vpop.permute.xlu0 %5716
        %5719 = vset.pattern.permute.xlu0 64
        %5720 = vperm.xlu0 %5719, %v5417
        %v5721 = vpop.permute.xlu0 %5720
        %5723 = vset.pattern.permute.xlu0 64
        %5724 = vperm.xlu0 %5723, %v5418
        %v5725 = vpop.permute.xlu0 %5724
        %5727 = vset.pattern.permute.xlu0 64
        %5728 = vperm.xlu0 %5727, %v5419
        %v5729 = vpop.permute.xlu0 %5728
        %5731 = vset.pattern.permute.xlu0 64
        %5732 = vperm.xlu0 %5731, %v5420
        %v5733 = vpop.permute.xlu0 %5732
        %5735 = vset.pattern.permute.xlu0 64
        %5736 = vperm.xlu0 %5735, %v5421
        %v5737 = vpop.permute.xlu0 %5736
        %5739 = vset.pattern.permute.xlu0 64
        %5740 = vperm.xlu0 %5739, %v5422
        %v5741 = vpop.permute.xlu0 %5740
        %5743 = vset.pattern.permute.xlu0 64
        %5744 = vperm.xlu0 %5743, %v5423
        %v5745 = vpop.permute.xlu0 %5744
        %5747 = vset.pattern.permute.xlu0 64
        %5748 = vperm.xlu0 %5747, %v5424
        %v5749 = vpop.permute.xlu0 %5748
        %5751 = vset.pattern.permute.xlu0 64
        %5752 = vperm.xlu0 %5751, %v5425
        %v5753 = vpop.permute.xlu0 %5752
        %5755 = vset.pattern.permute.xlu0 64
        %5756 = vperm.xlu0 %5755, %v5426
        %v5757 = vpop.permute.xlu0 %5756
        %5759 = vset.pattern.permute.xlu0 64
        %5760 = vperm.xlu0 %5759, %v5427
        %v5761 = vpop.permute.xlu0 %5760
        %5763 = vset.pattern.permute.xlu0 64
        %5764 = vperm.xlu0 %5763, %v5428
        %v5765 = vpop.permute.xlu0 %5764
        %5767 = vset.pattern.permute.xlu0 64
        %5768 = vperm.xlu0 %5767, %v5429
        %v5769 = vpop.permute.xlu0 %5768
        %v5771 = vlaneseq
        %v5772 = vshrl.u32 %v5771, 7
        %v5773 = vsub.s32 1, %v5772
        %v5774 = vrot.slane %v5413, %v5773
        %v5775 = vsub.f32 %v5709, %v5774
        %v5776 = vsub.f32 %v5713, %v5774
        %v5777 = vsub.f32 %v5717, %v5774
        %v5778 = vsub.f32 %v5721, %v5774
        %v5779 = vsub.f32 %v5725, %v5774
        %v5780 = vsub.f32 %v5729, %v5774
        %v5781 = vsub.f32 %v5733, %v5774
        %v5782 = vsub.f32 %v5737, %v5774
        %v5783 = vsub.f32 %v5741, %v5774
        %v5784 = vsub.f32 %v5745, %v5774
        %v5785 = vsub.f32 %v5749, %v5774
        %v5786 = vsub.f32 %v5753, %v5774
        %v5787 = vsub.f32 %v5757, %v5774
        %v5788 = vsub.f32 %v5761, %v5774
        %v5789 = vsub.f32 %v5765, %v5774
        %v5790 = vsub.f32 %v5769, %v5774
        %v5791 = vmin.f32 %v5775, 0.0
        %v5792 = vmin.f32 %v5776, 0.0
        %v5793 = vmin.f32 %v5777, 0.0
        %v5794 = vmin.f32 %v5778, 0.0
        %v5795 = vmin.f32 %v5779, 0.0
        %v5796 = vmin.f32 %v5780, 0.0
        %v5797 = vmin.f32 %v5781, 0.0
        %v5798 = vmin.f32 %v5782, 0.0
        %v5799 = vmin.f32 %v5783, 0.0
        %v5800 = vmin.f32 %v5784, 0.0
        %v5801 = vmin.f32 %v5785, 0.0
        %v5802 = vmin.f32 %v5786, 0.0
        %v5803 = vmin.f32 %v5787, 0.0
        %v5804 = vmin.f32 %v5788, 0.0
        %v5805 = vmin.f32 %v5789, 0.0
        %v5806 = vmin.f32 %v5790, 0.0
        %v5807 = vmul.f32 %v5791, 1.442695
        %v5808 = vpow.pop %v5807
        %v5809 = vmul.f32 %v5792, 1.442695
        %v5810 = vpow.pop %v5809
        %v5811 = vmul.f32 %v5793, 1.442695
        %v5812 = vpow.pop %v5811
        %v5813 = vmul.f32 %v5794, 1.442695
        %v5814 = vpow.pop %v5813
        %v5815 = vmul.f32 %v5795, 1.442695
        %v5816 = vpow.pop %v5815
        %v5817 = vmul.f32 %v5796, 1.442695
        %v5818 = vpow.pop %v5817
        %v5819 = vmul.f32 %v5797, 1.442695
        %v5820 = vpow.pop %v5819
        %v5821 = vmul.f32 %v5798, 1.442695
        %v5822 = vpow.pop %v5821
        %v5823 = vmul.f32 %v5799, 1.442695
        %v5824 = vpow.pop %v5823
        %v5825 = vmul.f32 %v5800, 1.442695
        %v5826 = vpow.pop %v5825
        %v5827 = vmul.f32 %v5801, 1.442695
        %v5828 = vpow.pop %v5827
        %v5829 = vmul.f32 %v5802, 1.442695
        %v5830 = vpow.pop %v5829
        %v5831 = vmul.f32 %v5803, 1.442695
        %v5832 = vpow.pop %v5831
        %v5833 = vmul.f32 %v5804, 1.442695
        %v5834 = vpow.pop %v5833
        %v5835 = vmul.f32 %v5805, 1.442695
        %v5836 = vpow.pop %v5835
        %v5837 = vmul.f32 %v5806, 1.442695
        %v5838 = vpow.pop %v5837
        %v5839 = vmul.f32 %v5397, %v5808
        %v5840 = vmul.f32 %v5398, %v5810
        %v5841 = vmul.f32 %v5399, %v5812
        %v5842 = vmul.f32 %v5400, %v5814
        %v5843 = vmul.f32 %v5401, %v5816
        %v5844 = vmul.f32 %v5402, %v5818
        %v5845 = vmul.f32 %v5403, %v5820
        %v5846 = vmul.f32 %v5404, %v5822
        %v5847 = vmul.f32 %v5405, %v5824
        %v5848 = vmul.f32 %v5406, %v5826
        %v5849 = vmul.f32 %v5407, %v5828
        %v5850 = vmul.f32 %v5408, %v5830
        %v5851 = vmul.f32 %v5409, %v5832
        %v5852 = vmul.f32 %v5410, %v5834
        %v5853 = vmul.f32 %v5411, %v5836
        %v5854 = vmul.f32 %v5412, %v5838
        %v5855 = vpack.c.bf16 %v5840, %v5839
        %v5856 = vpack.c.bf16 %v5842, %v5841
        %v5857 = vpack.c.bf16 %v5844, %v5843
        %v5858 = vpack.c.bf16 %v5846, %v5845
        %v5859 = vpack.c.bf16 %v5848, %v5847
        %v5860 = vpack.c.bf16 %v5850, %v5849
        %v5861 = vpack.c.bf16 %v5852, %v5851
        %v5862 = vpack.c.bf16 %v5854, %v5853
        %5871 = vrot.lane.b32.xlu0 %v5430, 64
        %v5872 = vpop.permute.xlu0 %5871
        %5873 = vrot.lane.b32.xlu0 %v5431, 64
        %v5874 = vpop.permute.xlu0 %5873
        %5875 = vrot.lane.b32.xlu0 %v5432, 64
        %v5876 = vpop.permute.xlu0 %5875
        %5877 = vrot.lane.b32.xlu0 %v5433, 64
        %v5878 = vpop.permute.xlu0 %5877
        %5879 = vrot.lane.b32.xlu0 %v5434, 64
        %v5880 = vpop.permute.xlu0 %5879
        %5881 = vrot.lane.b32.xlu0 %v5435, 64
        %v5882 = vpop.permute.xlu0 %5881
        %5883 = vrot.lane.b32.xlu0 %v5436, 64
        %v5884 = vpop.permute.xlu0 %5883
        %5885 = vrot.lane.b32.xlu0 %v5437, 64
        %v5886 = vpop.permute.xlu0 %5885
        %5895 = vmatprep.subr.bf16.mxu0 0
        %5896 = vmatpush1.bf16.msra.mxu0 %v5872
        %5897 = vmatprep.subr.bf16.mxu0 0
        %5898 = vmatpush1.bf16.msra.mxu0 %v5874
        %5899 = vmatprep.subr.bf16.mxu0 0
        %5900 = vmatpush1.bf16.msra.mxu0 %v5876
        %5901 = vmatprep.subr.bf16.mxu0 0
        %5902 = vmatpush1.bf16.msra.mxu0 %v5878
        %5903 = vmatprep.subr.bf16.mxu0 0
        %5904 = vmatpush1.bf16.msra.mxu0 %v5880
        %5905 = vmatprep.subr.bf16.mxu0 0
        %5906 = vmatpush1.bf16.msra.mxu0 %v5882
        %5907 = vmatprep.subr.bf16.mxu0 0
        %5908 = vmatpush1.bf16.msra.mxu0 %v5884
        %5909 = vmatprep.subr.bf16.mxu0 0
        %5910 = vmatpush1.bf16.msra.mxu0 %v5886
        %5911 = vmatprep.subr.bf16.mxu0 0
        %5912 = vmatpush1.bf16.msra.mxu0 0
        %5913 = vmatprep.subr.bf16.mxu0 0
        %5914 = vmatpush1.bf16.msra.mxu0 0
        %5915 = vmatprep.subr.bf16.mxu0 0
        %5916 = vmatpush1.bf16.msra.mxu0 0
        %5917 = vmatprep.subr.bf16.mxu0 0
        %5918 = vmatpush1.bf16.msra.mxu0 0
        %5919 = vmatprep.subr.bf16.mxu0 0
        %5920 = vmatpush1.bf16.msra.mxu0 0
        %5921 = vmatprep.subr.bf16.mxu0 0
        %5922 = vmatpush1.bf16.msra.mxu0 0
        %5923 = vmatprep.subr.bf16.mxu0 0
        %5924 = vmatpush1.bf16.msra.mxu0 0
        %5925 = vmatprep.subr.bf16.mxu0 0
        %5926 = vmatpush1.bf16.msra.mxu0 0
        %5927 = vmatprep.mubr.bf16.mxu0 0
        %5928 = vmatmul.mubr.bf16.gmra.mrb[0].mxu0 %v5855
        %v5929 = vpop.f32.mrb[0].mxu0
        %v5930 = vadd.f32 0.0, %v5929
        %v5931 = vpop.f32.mrb[0].mxu0
        %v5932 = vpop.f32.mrb[0].mxu0
        %v5933 = vadd.f32 0.0, %v5932
        %v5934 = vpop.f32.mrb[0].mxu0
        %5935 = vmatprep.mubr.bf16.mxu0 0
        %5936 = vmatmul.mubr.bf16.gmra.mrb[0].mxu0 %v5856
        %v5937 = vpop.f32.mrb[0].mxu0
        %v5938 = vadd.f32 0.0, %v5937
        %v5939 = vpop.f32.mrb[0].mxu0
        %v5940 = vpop.f32.mrb[0].mxu0
        %v5941 = vadd.f32 0.0, %v5940
        %v5942 = vpop.f32.mrb[0].mxu0
        %5943 = vmatprep.mubr.bf16.mxu0 0
        %5944 = vmatmul.mubr.bf16.gmra.mrb[0].mxu0 %v5857
        %v5945 = vpop.f32.mrb[0].mxu0
        %v5946 = vadd.f32 0.0, %v5945
        %v5947 = vpop.f32.mrb[0].mxu0
        %v5948 = vpop.f32.mrb[0].mxu0
        %v5949 = vadd.f32 0.0, %v5948
        %v5950 = vpop.f32.mrb[0].mxu0
        %5951 = vmatprep.mubr.bf16.mxu0 0
        %5952 = vmatmul.mubr.bf16.gmra.mrb[0].mxu0 %v5858
        %v5953 = vpop.f32.mrb[0].mxu0
        %v5954 = vadd.f32 0.0, %v5953
        %v5955 = vpop.f32.mrb[0].mxu0
        %v5956 = vpop.f32.mrb[0].mxu0
        %v5957 = vadd.f32 0.0, %v5956
        %v5958 = vpop.f32.mrb[0].mxu0
        %5959 = vmatprep.mubr.bf16.mxu0 0
        %5960 = vmatmul.mubr.bf16.gmra.mrb[0].mxu0 %v5859
        %v5961 = vpop.f32.mrb[0].mxu0
        %v5962 = vadd.f32 0.0, %v5961
        %v5963 = vpop.f32.mrb[0].mxu0
        %v5964 = vpop.f32.mrb[0].mxu0
        %v5965 = vadd.f32 0.0, %v5964
        %v5966 = vpop.f32.mrb[0].mxu0
        %5967 = vmatprep.mubr.bf16.mxu0 0
        %5968 = vmatmul.mubr.bf16.gmra.mrb[0].mxu0 %v5860
        %v5969 = vpop.f32.mrb[0].mxu0
        %v5970 = vadd.f32 0.0, %v5969
        %v5971 = vpop.f32.mrb[0].mxu0
        %v5972 = vpop.f32.mrb[0].mxu0
        %v5973 = vadd.f32 0.0, %v5972
        %v5974 = vpop.f32.mrb[0].mxu0
        %5975 = vmatprep.mubr.bf16.mxu0 0
        %5976 = vmatmul.mubr.bf16.gmra.mrb[0].mxu0 %v5861
        %v5977 = vpop.f32.mrb[0].mxu0
        %v5978 = vadd.f32 0.0, %v5977
        %v5979 = vpop.f32.mrb[0].mxu0
        %v5980 = vpop.f32.mrb[0].mxu0
        %v5981 = vadd.f32 0.0, %v5980
        %v5982 = vpop.f32.mrb[0].mxu0
        %5983 = vmatprep.mubr.bf16.mxu0 0
        %5984 = vmatmul.mubr.bf16.gmra.mrb[0].mxu0 %v5862
        %v5985 = vpop.f32.mrb[0].mxu0
        %v5986 = vadd.f32 0.0, %v5985
        %v5987 = vpop.f32.mrb[0].mxu0
        %v5988 = vpop.f32.mrb[0].mxu0
        %v5989 = vadd.f32 0.0, %v5988
        %v5990 = vpop.f32.mrb[0].mxu0
        %5991 = vdwg.mxu0
        %6008 = vrot.lane.b32.xlu0 %v5930, 64
        %v6009 = vpop.permute.xlu0 %6008
        %6010 = vrot.lane.b32.xlu0 %v5933, 64
        %v6011 = vpop.permute.xlu0 %6010
        %6012 = vrot.lane.b32.xlu0 %v5938, 64
        %v6013 = vpop.permute.xlu0 %6012
        %6014 = vrot.lane.b32.xlu0 %v5941, 64
        %v6015 = vpop.permute.xlu0 %6014
        %6016 = vrot.lane.b32.xlu0 %v5946, 64
        %v6017 = vpop.permute.xlu0 %6016
        %6018 = vrot.lane.b32.xlu0 %v5949, 64
        %v6019 = vpop.permute.xlu0 %6018
        %6020 = vrot.lane.b32.xlu0 %v5954, 64
        %v6021 = vpop.permute.xlu0 %6020
        %6022 = vrot.lane.b32.xlu0 %v5957, 64
        %v6023 = vpop.permute.xlu0 %6022
        %6024 = vrot.lane.b32.xlu0 %v5962, 64
        %v6025 = vpop.permute.xlu0 %6024
        %6026 = vrot.lane.b32.xlu0 %v5965, 64
        %v6027 = vpop.permute.xlu0 %6026
        %6028 = vrot.lane.b32.xlu0 %v5970, 64
        %v6029 = vpop.permute.xlu0 %6028
        %6030 = vrot.lane.b32.xlu0 %v5973, 64
        %v6031 = vpop.permute.xlu0 %6030
        %6032 = vrot.lane.b32.xlu0 %v5978, 64
        %v6033 = vpop.permute.xlu0 %6032
        %6034 = vrot.lane.b32.xlu0 %v5981, 64
        %v6035 = vpop.permute.xlu0 %6034
        %6036 = vrot.lane.b32.xlu0 %v5986, 64
        %v6037 = vpop.permute.xlu0 %6036
        %6038 = vrot.lane.b32.xlu0 %v5989, 64
        %v6039 = vpop.permute.xlu0 %6038
        %vm6056 = vcmask 523264
        %v6057 = vsel %vm6056, %v5645, %v6009
        %v6058 = vsel %vm6056, %v5648, %v6011
        %v6059 = vsel %vm6056, %v5653, %v6013
        %v6060 = vsel %vm6056, %v5656, %v6015
        %v6061 = vsel %vm6056, %v5661, %v6017
        %v6062 = vsel %vm6056, %v5664, %v6019
        %v6063 = vsel %vm6056, %v5669, %v6021
        %v6064 = vsel %vm6056, %v5672, %v6023
        %v6065 = vsel %vm6056, %v5677, %v6025
        %v6066 = vsel %vm6056, %v5680, %v6027
        %v6067 = vsel %vm6056, %v5685, %v6029
        %v6068 = vsel %vm6056, %v5688, %v6031
        %v6069 = vsel %vm6056, %v5693, %v6033
        %v6070 = vsel %vm6056, %v5696, %v6035
        %v6071 = vsel %vm6056, %v5701, %v6037
        %v6072 = vsel %vm6056, %v5704, %v6039
        %6073 = vst [vmem:[#allocation4] sm:$0xff] %v6057
        %6074 = vst [vmem:[#allocation4 + $0x10] sm:$0xff] %v6058
        %6075 = vst [vmem:[#allocation4 + $0x20] sm:$0xff] %v6059
        %6076 = vst [vmem:[#allocation4 + $0x30] sm:$0xff] %v6060
        %6077 = vst [vmem:[#allocation4 + $0x40] sm:$0xff] %v6061
        %6078 = vst [vmem:[#allocation4 + $0x50] sm:$0xff] %v6062
        %6079 = vst [vmem:[#allocation4 + $0x60] sm:$0xff] %v6063
        %6080 = vst [vmem:[#allocation4 + $0x70] sm:$0xff] %v6064
        %6081 = vst [vmem:[#allocation4 + $0x80] sm:$0xff] %v6065
        %6082 = vst [vmem:[#allocation4 + $0x90] sm:$0xff] %v6066
        %6083 = vst [vmem:[#allocation4 + $0xa0] sm:$0xff] %v6067
        %6084 = vst [vmem:[#allocation4 + $0xb0] sm:$0xff] %v6068
        %6085 = vst [vmem:[#allocation4 + $0xc0] sm:$0xff] %v6069
        %6086 = vst [vmem:[#allocation4 + $0xd0] sm:$0xff] %v6070
        %6087 = vst [vmem:[#allocation4 + $0xe0] sm:$0xff] %v6071
        %6088 = vst [vmem:[#allocation4 + $0xf0] sm:$0xff] %v6072
        %s6089 = scalar_lea.vmem [#allocation7], 2
        %v6090 = vld [vmem:[%s6089] sm:$0x3]
        %s6091 = scalar_lea.vmem [#allocation6], 8
        %v6092 = vld [vmem:[%s6091] sm:$0xff]
        %v6093 = vld [vmem:[%s6091 + $0x10] sm:$0xff]
        %v6094 = vld [vmem:[%s6091 + $0x20] sm:$0xff]
        %v6095 = vld [vmem:[%s6091 + $0x30] sm:$0xff]
        %v6096 = vld [vmem:[%s6091 + $0x40] sm:$0xff]
        %v6097 = vld [vmem:[%s6091 + $0x50] sm:$0xff]
        %v6098 = vld [vmem:[%s6091 + $0x60] sm:$0xff]
        %v6099 = vld [vmem:[%s6091 + $0x70] sm:$0xff]
        %v6100 = vld [vmem:[%s6091 + $0x80] sm:$0xff]
        %v6101 = vld [vmem:[%s6091 + $0x90] sm:$0xff]
        %v6102 = vld [vmem:[%s6091 + $0xa0] sm:$0xff]
        %v6103 = vld [vmem:[%s6091 + $0xb0] sm:$0xff]
        %v6104 = vld [vmem:[%s6091 + $0xc0] sm:$0xff]
        %v6105 = vld [vmem:[%s6091 + $0xd0] sm:$0xff]
        %v6106 = vld [vmem:[%s6091 + $0xe0] sm:$0xff]
        %v6107 = vld [vmem:[%s6091 + $0xf0] sm:$0xff]
        %s6108 = scalar_lea.vmem [#allocation5], 8
        %v6109 = vld [vmem:[%s6108] sm:$0xff]
        %v6110 = vld [vmem:[%s6108 + $0x10] sm:$0xff]
        %v6111 = vld [vmem:[%s6108 + $0x20] sm:$0xff]
        %v6112 = vld [vmem:[%s6108 + $0x30] sm:$0xff]
        %v6113 = vld [vmem:[%s6108 + $0x40] sm:$0xff]
        %v6114 = vld [vmem:[%s6108 + $0x50] sm:$0xff]
        %v6115 = vld [vmem:[%s6108 + $0x60] sm:$0xff]
        %v6116 = vld [vmem:[%s6108 + $0x70] sm:$0xff]
        %6118 = vset.pattern.permute.xlu0 0
        %6119 = vperm.xlu0 %6118, %v6092
        %v6120 = vpop.permute.xlu0 %6119
        %6123 = vset.pattern.permute.xlu0 0
        %6124 = vperm.xlu0 %6123, %v6093
        %v6125 = vpop.permute.xlu0 %6124
        %6128 = vset.pattern.permute.xlu0 0
        %6129 = vperm.xlu0 %6128, %v6094
        %v6130 = vpop.permute.xlu0 %6129
        %6133 = vset.pattern.permute.xlu0 0
        %6134 = vperm.xlu0 %6133, %v6095
        %v6135 = vpop.permute.xlu0 %6134
        %6138 = vset.pattern.permute.xlu0 0
        %6139 = vperm.xlu0 %6138, %v6096
        %v6140 = vpop.permute.xlu0 %6139
        %6143 = vset.pattern.permute.xlu0 0
        %6144 = vperm.xlu0 %6143, %v6097
        %v6145 = vpop.permute.xlu0 %6144
        %6148 = vset.pattern.permute.xlu0 0
        %6149 = vperm.xlu0 %6148, %v6098
        %v6150 = vpop.permute.xlu0 %6149
        %6153 = vset.pattern.permute.xlu0 0
        %6154 = vperm.xlu0 %6153, %v6099
        %v6155 = vpop.permute.xlu0 %6154
        %6158 = vset.pattern.permute.xlu0 0
        %6159 = vperm.xlu0 %6158, %v6100
        %v6160 = vpop.permute.xlu0 %6159
        %6163 = vset.pattern.permute.xlu0 0
        %6164 = vperm.xlu0 %6163, %v6101
        %v6165 = vpop.permute.xlu0 %6164
        %6168 = vset.pattern.permute.xlu0 0
        %6169 = vperm.xlu0 %6168, %v6102
        %v6170 = vpop.permute.xlu0 %6169
        %6173 = vset.pattern.permute.xlu0 0
        %6174 = vperm.xlu0 %6173, %v6103
        %v6175 = vpop.permute.xlu0 %6174
        %6178 = vset.pattern.permute.xlu0 0
        %6179 = vperm.xlu0 %6178, %v6104
        %v6180 = vpop.permute.xlu0 %6179
        %6183 = vset.pattern.permute.xlu0 0
        %6184 = vperm.xlu0 %6183, %v6105
        %v6185 = vpop.permute.xlu0 %6184
        %6188 = vset.pattern.permute.xlu0 0
        %6189 = vperm.xlu0 %6188, %v6106
        %v6190 = vpop.permute.xlu0 %6189
        %6193 = vset.pattern.permute.xlu0 0
        %6194 = vperm.xlu0 %6193, %v6107
        %v6195 = vpop.permute.xlu0 %6194
        %v6197 = vlaneseq
        %v6198 = vshrl.u32 %v6197, 7
        %v6199 = vsub.s32 0, %v6198
        %v6200 = vrot.slane %v6090, %v6199
        %v6201 = vsub.f32 %v6120, %v6200
        %v6202 = vsub.f32 %v6125, %v6200
        %v6203 = vsub.f32 %v6130, %v6200
        %v6204 = vsub.f32 %v6135, %v6200
        %v6205 = vsub.f32 %v6140, %v6200
        %v6206 = vsub.f32 %v6145, %v6200
        %v6207 = vsub.f32 %v6150, %v6200
        %v6208 = vsub.f32 %v6155, %v6200
        %v6209 = vsub.f32 %v6160, %v6200
        %v6210 = vsub.f32 %v6165, %v6200
        %v6211 = vsub.f32 %v6170, %v6200
        %v6212 = vsub.f32 %v6175, %v6200
        %v6213 = vsub.f32 %v6180, %v6200
        %v6214 = vsub.f32 %v6185, %v6200
        %v6215 = vsub.f32 %v6190, %v6200
        %v6216 = vsub.f32 %v6195, %v6200
        %v6217 = vmin.f32 %v6201, 0.0
        %v6218 = vmin.f32 %v6202, 0.0
        %v6219 = vmin.f32 %v6203, 0.0
        %v6220 = vmin.f32 %v6204, 0.0
        %v6221 = vmin.f32 %v6205, 0.0
        %v6222 = vmin.f32 %v6206, 0.0
        %v6223 = vmin.f32 %v6207, 0.0
        %v6224 = vmin.f32 %v6208, 0.0
        %v6225 = vmin.f32 %v6209, 0.0
        %v6226 = vmin.f32 %v6210, 0.0
        %v6227 = vmin.f32 %v6211, 0.0
        %v6228 = vmin.f32 %v6212, 0.0
        %v6229 = vmin.f32 %v6213, 0.0
        %v6230 = vmin.f32 %v6214, 0.0
        %v6231 = vmin.f32 %v6215, 0.0
        %v6232 = vmin.f32 %v6216, 0.0
        %v6233 = vmul.f32 %v6217, 1.442695
        %v6234 = vpow.pop %v6233
        %v6235 = vmul.f32 %v6218, 1.442695
        %v6236 = vpow.pop %v6235
        %v6237 = vmul.f32 %v6219, 1.442695
        %v6238 = vpow.pop %v6237
        %v6239 = vmul.f32 %v6220, 1.442695
        %v6240 = vpow.pop %v6239
        %v6241 = vmul.f32 %v6221, 1.442695
        %v6242 = vpow.pop %v6241
        %v6243 = vmul.f32 %v6222, 1.442695
        %v6244 = vpow.pop %v6243
        %v6245 = vmul.f32 %v6223, 1.442695
        %v6246 = vpow.pop %v6245
        %v6247 = vmul.f32 %v6224, 1.442695
        %v6248 = vpow.pop %v6247
        %v6249 = vmul.f32 %v6225, 1.442695
        %v6250 = vpow.pop %v6249
        %v6251 = vmul.f32 %v6226, 1.442695
        %v6252 = vpow.pop %v6251
        %v6253 = vmul.f32 %v6227, 1.442695
        %v6254 = vpow.pop %v6253
        %v6255 = vmul.f32 %v6228, 1.442695
        %v6256 = vpow.pop %v6255
        %v6257 = vmul.f32 %v6229, 1.442695
        %v6258 = vpow.pop %v6257
        %v6259 = vmul.f32 %v6230, 1.442695
        %v6260 = vpow.pop %v6259
        %v6261 = vmul.f32 %v6231, 1.442695
        %v6262 = vpow.pop %v6261
        %v6263 = vmul.f32 %v6232, 1.442695
        %v6264 = vpow.pop %v6263
        %v6265 = vmul.f32 %v5397, %v6234
        %v6266 = vmul.f32 %v5398, %v6236
        %v6267 = vmul.f32 %v5399, %v6238
        %v6268 = vmul.f32 %v5400, %v6240
        %v6269 = vmul.f32 %v5401, %v6242
        %v6270 = vmul.f32 %v5402, %v6244
        %v6271 = vmul.f32 %v5403, %v6246
        %v6272 = vmul.f32 %v5404, %v6248
        %v6273 = vmul.f32 %v5405, %v6250
        %v6274 = vmul.f32 %v5406, %v6252
        %v6275 = vmul.f32 %v5407, %v6254
        %v6276 = vmul.f32 %v5408, %v6256
        %v6277 = vmul.f32 %v5409, %v6258
        %v6278 = vmul.f32 %v5410, %v6260
        %v6279 = vmul.f32 %v5411, %v6262
        %v6280 = vmul.f32 %v5412, %v6264
        %v6281 = vpack.c.bf16 %v6266, %v6265
        %v6282 = vpack.c.bf16 %v6268, %v6267
        %v6283 = vpack.c.bf16 %v6270, %v6269
        %v6284 = vpack.c.bf16 %v6272, %v6271
        %v6285 = vpack.c.bf16 %v6274, %v6273
        %v6286 = vpack.c.bf16 %v6276, %v6275
        %v6287 = vpack.c.bf16 %v6278, %v6277
        %v6288 = vpack.c.bf16 %v6280, %v6279
        %6289 = vmatprep.subr.bf16.mxu0 0
        %6290 = vmatpush1.bf16.msra.mxu0 %v6109
        %6291 = vmatprep.subr.bf16.mxu0 0
        %6292 = vmatpush1.bf16.msra.mxu0 %v6110
        %6293 = vmatprep.subr.bf16.mxu0 0
        %6294 = vmatpush1.bf16.msra.mxu0 %v6111
        %6295 = vmatprep.subr.bf16.mxu0 0
        %6296 = vmatpush1.bf16.msra.mxu0 %v6112
        %6297 = vmatprep.subr.bf16.mxu0 0
        %6298 = vmatpush1.bf16.msra.mxu0 %v6113
        %6299 = vmatprep.subr.bf16.mxu0 0
        %6300 = vmatpush1.bf16.msra.mxu0 %v6114
        %6301 = vmatprep.subr.bf16.mxu0 0
        %6302 = vmatpush1.bf16.msra.mxu0 %v6115
        %6303 = vmatprep.subr.bf16.mxu0 0
        %6304 = vmatpush1.bf16.msra.mxu0 %v6116
        %6305 = vmatprep.subr.bf16.mxu0 0
        %6306 = vmatpush1.bf16.msra.mxu0 0
        %6307 = vmatprep.subr.bf16.mxu0 0
        %6308 = vmatpush1.bf16.msra.mxu0 0
        %6309 = vmatprep.subr.bf16.mxu0 0
        %6310 = vmatpush1.bf16.msra.mxu0 0
        %6311 = vmatprep.subr.bf16.mxu0 0
        %6312 = vmatpush1.bf16.msra.mxu0 0
        %6313 = vmatprep.subr.bf16.mxu0 0
        %6314 = vmatpush1.bf16.msra.mxu0 0
        %6315 = vmatprep.subr.bf16.mxu0 0
        %6316 = vmatpush1.bf16.msra.mxu0 0
        %6317 = vmatprep.subr.bf16.mxu0 0
        %6318 = vmatpush1.bf16.msra.mxu0 0
        %6319 = vmatprep.subr.bf16.mxu0 0
        %6320 = vmatpush1.bf16.msra.mxu0 0
        %6321 = vmatprep.mubr.bf16.mxu0 0
        %6322 = vmatmul.mubr.bf16.gmra.mrb[0].mxu0 %v6281
        %v6323 = vpop.f32.mrb[0].mxu0
        %v6324 = vadd.f32 0.0, %v6323
        %v6325 = vpop.f32.mrb[0].mxu0
        %v6326 = vpop.f32.mrb[0].mxu0
        %v6327 = vadd.f32 0.0, %v6326
        %v6328 = vpop.f32.mrb[0].mxu0
        %6329 = vmatprep.mubr.bf16.mxu0 0
        %6330 = vmatmul.mubr.bf16.gmra.mrb[0].mxu0 %v6282
        %v6331 = vpop.f32.mrb[0].mxu0
        %v6332 = vadd.f32 0.0, %v6331
        %v6333 = vpop.f32.mrb[0].mxu0
        %v6334 = vpop.f32.mrb[0].mxu0
        %v6335 = vadd.f32 0.0, %v6334
        %v6336 = vpop.f32.mrb[0].mxu0
        %6337 = vmatprep.mubr.bf16.mxu0 0
        %6338 = vmatmul.mubr.bf16.gmra.mrb[0].mxu0 %v6283
        %v6339 = vpop.f32.mrb[0].mxu0
        %v6340 = vadd.f32 0.0, %v6339
        %v6341 = vpop.f32.mrb[0].mxu0
        %v6342 = vpop.f32.mrb[0].mxu0
        %v6343 = vadd.f32 0.0, %v6342
        %v6344 = vpop.f32.mrb[0].mxu0
        %6345 = vmatprep.mubr.bf16.mxu0 0
        %6346 = vmatmul.mubr.bf16.gmra.mrb[0].mxu0 %v6284
        %v6347 = vpop.f32.mrb[0].mxu0
        %v6348 = vadd.f32 0.0, %v6347
        %v6349 = vpop.f32.mrb[0].mxu0
        %v6350 = vpop.f32.mrb[0].mxu0
        %v6351 = vadd.f32 0.0, %v6350
        %v6352 = vpop.f32.mrb[0].mxu0
        %6353 = vmatprep.mubr.bf16.mxu0 0
        %6354 = vmatmul.mubr.bf16.gmra.mrb[0].mxu0 %v6285
        %v6355 = vpop.f32.mrb[0].mxu0
        %v6356 = vadd.f32 0.0, %v6355
        %v6357 = vpop.f32.mrb[0].mxu0
        %v6358 = vpop.f32.mrb[0].mxu0
        %v6359 = vadd.f32 0.0, %v6358
        %v6360 = vpop.f32.mrb[0].mxu0
        %6361 = vmatprep.mubr.bf16.mxu0 0
        %6362 = vmatmul.mubr.bf16.gmra.mrb[0].mxu0 %v6286
        %v6363 = vpop.f32.mrb[0].mxu0
        %v6364 = vadd.f32 0.0, %v6363
        %v6365 = vpop.f32.mrb[0].mxu0
        %v6366 = vpop.f32.mrb[0].mxu0
        %v6367 = vadd.f32 0.0, %v6366
        %v6368 = vpop.f32.mrb[0].mxu0
        %6369 = vmatprep.mubr.bf16.mxu0 0
        %6370 = vmatmul.mubr.bf16.gmra.mrb[0].mxu0 %v6287
        %v6371 = vpop.f32.mrb[0].mxu0
        %v6372 = vadd.f32 0.0, %v6371
        %v6373 = vpop.f32.mrb[0].mxu0
        %v6374 = vpop.f32.mrb[0].mxu0
        %v6375 = vadd.f32 0.0, %v6374
        %v6376 = vpop.f32.mrb[0].mxu0
        %6377 = vmatprep.mubr.bf16.mxu0 0
        %6378 = vmatmul.mubr.bf16.gmra.mrb[0].mxu0 %v6288
        %v6379 = vpop.f32.mrb[0].mxu0
        %v6380 = vadd.f32 0.0, %v6379
        %v6381 = vpop.f32.mrb[0].mxu0
        %v6382 = vpop.f32.mrb[0].mxu0
        %v6383 = vadd.f32 0.0, %v6382
        %v6384 = vpop.f32.mrb[0].mxu0
        %6385 = vdwg.mxu0
        %6386 = vset.pattern.permute.xlu0 64
        %6387 = vperm.xlu0 %6386, %v6092
        %v6388 = vpop.permute.xlu0 %6387
        %6390 = vset.pattern.permute.xlu0 64
        %6391 = vperm.xlu0 %6390, %v6093
        %v6392 = vpop.permute.xlu0 %6391
        %6394 = vset.pattern.permute.xlu0 64
        %6395 = vperm.xlu0 %6394, %v6094
        %v6396 = vpop.permute.xlu0 %6395
        %6398 = vset.pattern.permute.xlu0 64
        %6399 = vperm.xlu0 %6398, %v6095
        %v6400 = vpop.permute.xlu0 %6399
        %6402 = vset.pattern.permute.xlu0 64
        %6403 = vperm.xlu0 %6402, %v6096
        %v6404 = vpop.permute.xlu0 %6403
        %6406 = vset.pattern.permute.xlu0 64
        %6407 = vperm.xlu0 %6406, %v6097
        %v6408 = vpop.permute.xlu0 %6407
        %6410 = vset.pattern.permute.xlu0 64
        %6411 = vperm.xlu0 %6410, %v6098
        %v6412 = vpop.permute.xlu0 %6411
        %6414 = vset.pattern.permute.xlu0 64
        %6415 = vperm.xlu0 %6414, %v6099
        %v6416 = vpop.permute.xlu0 %6415
        %6418 = vset.pattern.permute.xlu0 64
        %6419 = vperm.xlu0 %6418, %v6100
        %v6420 = vpop.permute.xlu0 %6419
        %6422 = vset.pattern.permute.xlu0 64
        %6423 = vperm.xlu0 %6422, %v6101
        %v6424 = vpop.permute.xlu0 %6423
        %6426 = vset.pattern.permute.xlu0 64
        %6427 = vperm.xlu0 %6426, %v6102
        %v6428 = vpop.permute.xlu0 %6427
        %6430 = vset.pattern.permute.xlu0 64
        %6431 = vperm.xlu0 %6430, %v6103
        %v6432 = vpop.permute.xlu0 %6431
        %6434 = vset.pattern.permute.xlu0 64
        %6435 = vperm.xlu0 %6434, %v6104
        %v6436 = vpop.permute.xlu0 %6435
        %6438 = vset.pattern.permute.xlu0 64
        %6439 = vperm.xlu0 %6438, %v6105
        %v6440 = vpop.permute.xlu0 %6439
        %6442 = vset.pattern.permute.xlu0 64
        %6443 = vperm.xlu0 %6442, %v6106
        %v6444 = vpop.permute.xlu0 %6443
        %6446 = vset.pattern.permute.xlu0 64
        %6447 = vperm.xlu0 %6446, %v6107
        %v6448 = vpop.permute.xlu0 %6447
        %v6450 = vlaneseq
        %v6451 = vshrl.u32 %v6450, 7
        %v6452 = vsub.s32 1, %v6451
        %v6453 = vrot.slane %v6090, %v6452
        %v6454 = vsub.f32 %v6388, %v6453
        %v6455 = vsub.f32 %v6392, %v6453
        %v6456 = vsub.f32 %v6396, %v6453
        %v6457 = vsub.f32 %v6400, %v6453
        %v6458 = vsub.f32 %v6404, %v6453
        %v6459 = vsub.f32 %v6408, %v6453
        %v6460 = vsub.f32 %v6412, %v6453
        %v6461 = vsub.f32 %v6416, %v6453
        %v6462 = vsub.f32 %v6420, %v6453
        %v6463 = vsub.f32 %v6424, %v6453
        %v6464 = vsub.f32 %v6428, %v6453
        %v6465 = vsub.f32 %v6432, %v6453
        %v6466 = vsub.f32 %v6436, %v6453
        %v6467 = vsub.f32 %v6440, %v6453
        %v6468 = vsub.f32 %v6444, %v6453
        %v6469 = vsub.f32 %v6448, %v6453
        %v6470 = vmin.f32 %v6454, 0.0
        %v6471 = vmin.f32 %v6455, 0.0
        %v6472 = vmin.f32 %v6456, 0.0
        %v6473 = vmin.f32 %v6457, 0.0
        %v6474 = vmin.f32 %v6458, 0.0
        %v6475 = vmin.f32 %v6459, 0.0
        %v6476 = vmin.f32 %v6460, 0.0
        %v6477 = vmin.f32 %v6461, 0.0
        %v6478 = vmin.f32 %v6462, 0.0
        %v6479 = vmin.f32 %v6463, 0.0
        %v6480 = vmin.f32 %v6464, 0.0
        %v6481 = vmin.f32 %v6465, 0.0
        %v6482 = vmin.f32 %v6466, 0.0
        %v6483 = vmin.f32 %v6467, 0.0
        %v6484 = vmin.f32 %v6468, 0.0
        %v6485 = vmin.f32 %v6469, 0.0
        %v6486 = vmul.f32 %v6470, 1.442695
        %v6487 = vpow.pop %v6486
        %v6488 = vmul.f32 %v6471, 1.442695
        %v6489 = vpow.pop %v6488
        %v6490 = vmul.f32 %v6472, 1.442695
        %v6491 = vpow.pop %v6490
        %v6492 = vmul.f32 %v6473, 1.442695
        %v6493 = vpow.pop %v6492
        %v6494 = vmul.f32 %v6474, 1.442695
        %v6495 = vpow.pop %v6494
        %v6496 = vmul.f32 %v6475, 1.442695
        %v6497 = vpow.pop %v6496
        %v6498 = vmul.f32 %v6476, 1.442695
        %v6499 = vpow.pop %v6498
        %v6500 = vmul.f32 %v6477, 1.442695
        %v6501 = vpow.pop %v6500
        %v6502 = vmul.f32 %v6478, 1.442695
        %v6503 = vpow.pop %v6502
        %v6504 = vmul.f32 %v6479, 1.442695
        %v6505 = vpow.pop %v6504
        %v6506 = vmul.f32 %v6480, 1.442695
        %v6507 = vpow.pop %v6506
        %v6508 = vmul.f32 %v6481, 1.442695
        %v6509 = vpow.pop %v6508
        %v6510 = vmul.f32 %v6482, 1.442695
        %v6511 = vpow.pop %v6510
        %v6512 = vmul.f32 %v6483, 1.442695
        %v6513 = vpow.pop %v6512
        %v6514 = vmul.f32 %v6484, 1.442695
        %v6515 = vpow.pop %v6514
        %v6516 = vmul.f32 %v6485, 1.442695
        %v6517 = vpow.pop %v6516
        %v6518 = vmul.f32 %v5397, %v6487
        %v6519 = vmul.f32 %v5398, %v6489
        %v6520 = vmul.f32 %v5399, %v6491
        %v6521 = vmul.f32 %v5400, %v6493
        %v6522 = vmul.f32 %v5401, %v6495
        %v6523 = vmul.f32 %v5402, %v6497
        %v6524 = vmul.f32 %v5403, %v6499
        %v6525 = vmul.f32 %v5404, %v6501
        %v6526 = vmul.f32 %v5405, %v6503
        %v6527 = vmul.f32 %v5406, %v6505
        %v6528 = vmul.f32 %v5407, %v6507
        %v6529 = vmul.f32 %v5408, %v6509
        %v6530 = vmul.f32 %v5409, %v6511
        %v6531 = vmul.f32 %v5410, %v6513
        %v6532 = vmul.f32 %v5411, %v6515
        %v6533 = vmul.f32 %v5412, %v6517
        %v6534 = vpack.c.bf16 %v6519, %v6518
        %v6535 = vpack.c.bf16 %v6521, %v6520
        %v6536 = vpack.c.bf16 %v6523, %v6522
        %v6537 = vpack.c.bf16 %v6525, %v6524
        %v6538 = vpack.c.bf16 %v6527, %v6526
        %v6539 = vpack.c.bf16 %v6529, %v6528
        %v6540 = vpack.c.bf16 %v6531, %v6530
        %v6541 = vpack.c.bf16 %v6533, %v6532
        %6550 = vrot.lane.b32.xlu0 %v6109, 64
        %v6551 = vpop.permute.xlu0 %6550
        %6552 = vrot.lane.b32.xlu0 %v6110, 64
        %v6553 = vpop.permute.xlu0 %6552
        %6554 = vrot.lane.b32.xlu0 %v6111, 64
        %v6555 = vpop.permute.xlu0 %6554
        %6556 = vrot.lane.b32.xlu0 %v6112, 64
        %v6557 = vpop.permute.xlu0 %6556
        %6558 = vrot.lane.b32.xlu0 %v6113, 64
        %v6559 = vpop.permute.xlu0 %6558
        %6560 = vrot.lane.b32.xlu0 %v6114, 64
        %v6561 = vpop.permute.xlu0 %6560
        %6562 = vrot.lane.b32.xlu0 %v6115, 64
        %v6563 = vpop.permute.xlu0 %6562
        %6564 = vrot.lane.b32.xlu0 %v6116, 64
        %v6565 = vpop.permute.xlu0 %6564
        %6574 = vmatprep.subr.bf16.mxu0 0
        %6575 = vmatpush1.bf16.msra.mxu0 %v6551
        %6576 = vmatprep.subr.bf16.mxu0 0
        %6577 = vmatpush1.bf16.msra.mxu0 %v6553
        %6578 = vmatprep.subr.bf16.mxu0 0
        %6579 = vmatpush1.bf16.msra.mxu0 %v6555
        %6580 = vmatprep.subr.bf16.mxu0 0
        %6581 = vmatpush1.bf16.msra.mxu0 %v6557
        %6582 = vmatprep.subr.bf16.mxu0 0
        %6583 = vmatpush1.bf16.msra.mxu0 %v6559
        %6584 = vmatprep.subr.bf16.mxu0 0
        %6585 = vmatpush1.bf16.msra.mxu0 %v6561
        %6586 = vmatprep.subr.bf16.mxu0 0
        %6587 = vmatpush1.bf16.msra.mxu0 %v6563
        %6588 = vmatprep.subr.bf16.mxu0 0
        %6589 = vmatpush1.bf16.msra.mxu0 %v6565
        %6590 = vmatprep.subr.bf16.mxu0 0
        %6591 = vmatpush1.bf16.msra.mxu0 0
        %6592 = vmatprep.subr.bf16.mxu0 0
        %6593 = vmatpush1.bf16.msra.mxu0 0
        %6594 = vmatprep.subr.bf16.mxu0 0
        %6595 = vmatpush1.bf16.msra.mxu0 0
        %6596 = vmatprep.subr.bf16.mxu0 0
        %6597 = vmatpush1.bf16.msra.mxu0 0
        %6598 = vmatprep.subr.bf16.mxu0 0
        %6599 = vmatpush1.bf16.msra.mxu0 0
        %6600 = vmatprep.subr.bf16.mxu0 0
        %6601 = vmatpush1.bf16.msra.mxu0 0
        %6602 = vmatprep.subr.bf16.mxu0 0
        %6603 = vmatpush1.bf16.msra.mxu0 0
        %6604 = vmatprep.subr.bf16.mxu0 0
        %6605 = vmatpush1.bf16.msra.mxu0 0
        %6606 = vmatprep.mubr.bf16.mxu0 0
        %6607 = vmatmul.mubr.bf16.gmra.mrb[0].mxu0 %v6534
        %v6608 = vpop.f32.mrb[0].mxu0
        %v6609 = vadd.f32 0.0, %v6608
        %v6610 = vpop.f32.mrb[0].mxu0
        %v6611 = vpop.f32.mrb[0].mxu0
        %v6612 = vadd.f32 0.0, %v6611
        %v6613 = vpop.f32.mrb[0].mxu0
        %6614 = vmatprep.mubr.bf16.mxu0 0
        %6615 = vmatmul.mubr.bf16.gmra.mrb[0].mxu0 %v6535
        %v6616 = vpop.f32.mrb[0].mxu0
        %v6617 = vadd.f32 0.0, %v6616
        %v6618 = vpop.f32.mrb[0].mxu0
        %v6619 = vpop.f32.mrb[0].mxu0
        %v6620 = vadd.f32 0.0, %v6619
        %v6621 = vpop.f32.mrb[0].mxu0
        %6622 = vmatprep.mubr.bf16.mxu0 0
        %6623 = vmatmul.mubr.bf16.gmra.mrb[0].mxu0 %v6536
        %v6624 = vpop.f32.mrb[0].mxu0
        %v6625 = vadd.f32 0.0, %v6624
        %v6626 = vpop.f32.mrb[0].mxu0
        %v6627 = vpop.f32.mrb[0].mxu0
        %v6628 = vadd.f32 0.0, %v6627
        %v6629 = vpop.f32.mrb[0].mxu0
        %6630 = vmatprep.mubr.bf16.mxu0 0
        %6631 = vmatmul.mubr.bf16.gmra.mrb[0].mxu0 %v6537
        %v6632 = vpop.f32.mrb[0].mxu0
        %v6633 = vadd.f32 0.0, %v6632
        %v6634 = vpop.f32.mrb[0].mxu0
        %v6635 = vpop.f32.mrb[0].mxu0
        %v6636 = vadd.f32 0.0, %v6635
        %v6637 = vpop.f32.mrb[0].mxu0
        %6638 = vmatprep.mubr.bf16.mxu0 0
        %6639 = vmatmul.mubr.bf16.gmra.mrb[0].mxu0 %v6538
        %v6640 = vpop.f32.mrb[0].mxu0
        %v6641 = vadd.f32 0.0, %v6640
        %v6642 = vpop.f32.mrb[0].mxu0
        %v6643 = vpop.f32.mrb[0].mxu0
        %v6644 = vadd.f32 0.0, %v6643
        %v6645 = vpop.f32.mrb[0].mxu0
        %6646 = vmatprep.mubr.bf16.mxu0 0
        %6647 = vmatmul.mubr.bf16.gmra.mrb[0].mxu0 %v6539
        %v6648 = vpop.f32.mrb[0].mxu0
        %v6649 = vadd.f32 0.0, %v6648
        %v6650 = vpop.f32.mrb[0].mxu0
        %v6651 = vpop.f32.mrb[0].mxu0
        %v6652 = vadd.f32 0.0, %v6651
        %v6653 = vpop.f32.mrb[0].mxu0
        %6654 = vmatprep.mubr.bf16.mxu0 0
        %6655 = vmatmul.mubr.bf16.gmra.mrb[0].mxu0 %v6540
        %v6656 = vpop.f32.mrb[0].mxu0
        %v6657 = vadd.f32 0.0, %v6656
        %v6658 = vpop.f32.mrb[0].mxu0
        %v6659 = vpop.f32.mrb[0].mxu0
        %v6660 = vadd.f32 0.0, %v6659
        %v6661 = vpop.f32.mrb[0].mxu0
        %6662 = vmatprep.mubr.bf16.mxu0 0
        %6663 = vmatmul.mubr.bf16.gmra.mrb[0].mxu0 %v6541
        %v6664 = vpop.f32.mrb[0].mxu0
        %v6665 = vadd.f32 0.0, %v6664
        %v6666 = vpop.f32.mrb[0].mxu0
        %v6667 = vpop.f32.mrb[0].mxu0
        %v6668 = vadd.f32 0.0, %v6667
        %v6669 = vpop.f32.mrb[0].mxu0
        %6670 = vdwg.mxu0
        %6687 = vrot.lane.b32.xlu0 %v6609, 64
        %v6688 = vpop.permute.xlu0 %6687
        %6689 = vrot.lane.b32.xlu0 %v6612, 64
        %v6690 = vpop.permute.xlu0 %6689
        %6691 = vrot.lane.b32.xlu0 %v6617, 64
        %v6692 = vpop.permute.xlu0 %6691
        %6693 = vrot.lane.b32.xlu0 %v6620, 64
        %v6694 = vpop.permute.xlu0 %6693
        %6695 = vrot.lane.b32.xlu0 %v6625, 64
        %v6696 = vpop.permute.xlu0 %6695
        %6697 = vrot.lane.b32.xlu0 %v6628, 64
        %v6698 = vpop.permute.xlu0 %6697
        %6699 = vrot.lane.b32.xlu0 %v6633, 64
        %v6700 = vpop.permute.xlu0 %6699
        %6701 = vrot.lane.b32.xlu0 %v6636, 64
        %v6702 = vpop.permute.xlu0 %6701
        %6703 = vrot.lane.b32.xlu0 %v6641, 64
        %v6704 = vpop.permute.xlu0 %6703
        %6705 = vrot.lane.b32.xlu0 %v6644, 64
        %v6706 = vpop.permute.xlu0 %6705
        %6707 = vrot.lane.b32.xlu0 %v6649, 64
        %v6708 = vpop.permute.xlu0 %6707
        %6709 = vrot.lane.b32.xlu0 %v6652, 64
        %v6710 = vpop.permute.xlu0 %6709
        %6711 = vrot.lane.b32.xlu0 %v6657, 64
        %v6712 = vpop.permute.xlu0 %6711
        %6713 = vrot.lane.b32.xlu0 %v6660, 64
        %v6714 = vpop.permute.xlu0 %6713
        %6715 = vrot.lane.b32.xlu0 %v6665, 64
        %v6716 = vpop.permute.xlu0 %6715
        %6717 = vrot.lane.b32.xlu0 %v6668, 64
        %v6718 = vpop.permute.xlu0 %6717
        %v6735 = vsel %vm6056, %v6324, %v6688
        %v6736 = vsel %vm6056, %v6327, %v6690
        %v6737 = vsel %vm6056, %v6332, %v6692
        %v6738 = vsel %vm6056, %v6335, %v6694
        %v6739 = vsel %vm6056, %v6340, %v6696
        %v6740 = vsel %vm6056, %v6343, %v6698
        %v6741 = vsel %vm6056, %v6348, %v6700
        %v6742 = vsel %vm6056, %v6351, %v6702
        %v6743 = vsel %vm6056, %v6356, %v6704
        %v6744 = vsel %vm6056, %v6359, %v6706
        %v6745 = vsel %vm6056, %v6364, %v6708
        %v6746 = vsel %vm6056, %v6367, %v6710
        %v6747 = vsel %vm6056, %v6372, %v6712
        %v6748 = vsel %vm6056, %v6375, %v6714
        %v6749 = vsel %vm6056, %v6380, %v6716
        %v6750 = vsel %vm6056, %v6383, %v6718
        %s6751 = scalar_lea.vmem [#allocation4], 8
        %6752 = vst [vmem:[%s6751] sm:$0xff] %v6735
        %6753 = vst [vmem:[%s6751 + $0x10] sm:$0xff] %v6736
        %6754 = vst [vmem:[%s6751 + $0x20] sm:$0xff] %v6737
        %6755 = vst [vmem:[%s6751 + $0x30] sm:$0xff] %v6738
        %6756 = vst [vmem:[%s6751 + $0x40] sm:$0xff] %v6739
        %6757 = vst [vmem:[%s6751 + $0x50] sm:$0xff] %v6740
        %6758 = vst [vmem:[%s6751 + $0x60] sm:$0xff] %v6741
        %6759 = vst [vmem:[%s6751 + $0x70] sm:$0xff] %v6742
        %6760 = vst [vmem:[%s6751 + $0x80] sm:$0xff] %v6743
        %6761 = vst [vmem:[%s6751 + $0x90] sm:$0xff] %v6744
        %6762 = vst [vmem:[%s6751 + $0xa0] sm:$0xff] %v6745
        %6763 = vst [vmem:[%s6751 + $0xb0] sm:$0xff] %v6746
        %6764 = vst [vmem:[%s6751 + $0xc0] sm:$0xff] %v6747
        %6765 = vst [vmem:[%s6751 + $0xd0] sm:$0xff] %v6748
        %6766 = vst [vmem:[%s6751 + $0xe0] sm:$0xff] %v6749
        %6767 = vst [vmem:[%s6751 + $0xf0] sm:$0xff] %v6750
        %v6768 = vld [vmem:[#allocation3] sm:$0xff]
        %v6769 = vld [vmem:[#allocation3 + $0x8] sm:$0xff]
        %v6770 = vld [vmem:[#allocation3 + $0x10] sm:$0xff]
        %v6771 = vld [vmem:[#allocation3 + $0x18] sm:$0xff]
        %v6772 = vld [vmem:[#allocation4] sm:$0xff]
        %v6773 = vld [vmem:[#allocation4 + $0x8] sm:$0xff]
        %v6774 = vld [vmem:[#allocation4 + $0x10] sm:$0xff]
        %v6775 = vld [vmem:[#allocation4 + $0x18] sm:$0xff]
        %v6776 = vld [vmem:[#allocation4 + $0x20] sm:$0xff]
        %v6777 = vld [vmem:[#allocation4 + $0x28] sm:$0xff]
        %v6778 = vld [vmem:[#allocation4 + $0x30] sm:$0xff]
        %v6779 = vld [vmem:[#allocation4 + $0x38] sm:$0xff]
        %v6780 = vld [vmem:[#allocation4 + $0x40] sm:$0xff]
        %v6781 = vld [vmem:[#allocation4 + $0x48] sm:$0xff]
        %v6782 = vld [vmem:[#allocation4 + $0x50] sm:$0xff]
        %v6783 = vld [vmem:[#allocation4 + $0x58] sm:$0xff]
        %v6784 = vld [vmem:[#allocation4 + $0x60] sm:$0xff]
        %v6785 = vld [vmem:[#allocation4 + $0x68] sm:$0xff]
        %v6786 = vld [vmem:[#allocation4 + $0x70] sm:$0xff]
        %v6787 = vld [vmem:[#allocation4 + $0x78] sm:$0xff]
        %v6788 = vld [vmem:[#allocation4 + $0x80] sm:$0xff]
        %v6789 = vld [vmem:[#allocation4 + $0x88] sm:$0xff]
        %v6790 = vld [vmem:[#allocation4 + $0x90] sm:$0xff]
        %v6791 = vld [vmem:[#allocation4 + $0x98] sm:$0xff]
        %v6792 = vld [vmem:[#allocation4 + $0xa0] sm:$0xff]
        %v6793 = vld [vmem:[#allocation4 + $0xa8] sm:$0xff]
        %v6794 = vld [vmem:[#allocation4 + $0xb0] sm:$0xff]
        %v6795 = vld [vmem:[#allocation4 + $0xb8] sm:$0xff]
        %v6796 = vld [vmem:[#allocation4 + $0xc0] sm:$0xff]
        %v6797 = vld [vmem:[#allocation4 + $0xc8] sm:$0xff]
        %v6798 = vld [vmem:[#allocation4 + $0xd0] sm:$0xff]
        %v6799 = vld [vmem:[#allocation4 + $0xd8] sm:$0xff]
        %v6800 = vld [vmem:[#allocation4 + $0xe0] sm:$0xff]
        %v6801 = vld [vmem:[#allocation4 + $0xe8] sm:$0xff]
        %v6802 = vld [vmem:[#allocation4 + $0xf0] sm:$0xff]
        %v6803 = vld [vmem:[#allocation4 + $0xf8] sm:$0xff]
        %6804 = vmatprep.subr.mxu0 %v6769
        %6805 = vmatpush1.msra.mxu0 %v6768
        %6806 = vmatprep.subr.mxu0 %v6771
        %6807 = vmatpush1.msra.mxu0 %v6770
        %6808 = vmatprep.subr.mxu0 0.0
        %6809 = vmatpush1.msra.mxu0 0.0
        %6810 = vmatprep.subr.mxu0 0.0
        %6811 = vmatpush1.msra.mxu0 0.0
        %6812 = vmatprep.subr.mxu0 0.0
        %6813 = vmatpush1.msra.mxu0 0.0
        %6814 = vmatprep.subr.mxu0 0.0
        %6815 = vmatpush1.msra.mxu0 0.0
        %6816 = vmatprep.subr.mxu0 0.0
        %6817 = vmatpush1.msra.mxu0 0.0
        %6818 = vmatprep.subr.mxu0 0.0
        %6819 = vmatpush1.msra.mxu0 0.0
        %6820 = vmatprep.subr.mxu0 0.0
        %6821 = vmatpush1.msra.mxu0 0.0
        %6822 = vmatprep.subr.mxu0 0.0
        %6823 = vmatpush1.msra.mxu0 0.0
        %6824 = vmatprep.subr.mxu0 0.0
        %6825 = vmatpush1.msra.mxu0 0.0
        %6826 = vmatprep.subr.mxu0 0.0
        %6827 = vmatpush1.msra.mxu0 0.0
        %6828 = vmatprep.subr.mxu0 0.0
        %6829 = vmatpush1.msra.mxu0 0.0
        %6830 = vmatprep.subr.mxu0 0.0
        %6831 = vmatpush1.msra.mxu0 0.0
        %6832 = vmatprep.subr.mxu0 0.0
        %6833 = vmatpush1.msra.mxu0 0.0
        %6834 = vmatprep.subr.mxu0 0.0
        %6835 = vmatpush1.msra.mxu0 0.0
        %6836 = vmatprep.subr.mxu0 0.0
        %6837 = vmatpush1.msra.mxu0 0.0
        %6838 = vmatprep.subr.mxu0 0.0
        %6839 = vmatpush1.msra.mxu0 0.0
        %6840 = vmatprep.subr.mxu0 0.0
        %6841 = vmatpush1.msra.mxu0 0.0
        %6842 = vmatprep.subr.mxu0 0.0
        %6843 = vmatpush1.msra.mxu0 0.0
        %6844 = vmatprep.subr.mxu0 0.0
        %6845 = vmatpush1.msra.mxu0 0.0
        %6846 = vmatprep.subr.mxu0 0.0
        %6847 = vmatpush1.msra.mxu0 0.0
        %6848 = vmatprep.subr.mxu0 0.0
        %6849 = vmatpush1.msra.mxu0 0.0
        %6850 = vmatprep.subr.mxu0 0.0
        %6851 = vmatpush1.msra.mxu0 0.0
        %6852 = vmatprep.subr.mxu0 0.0
        %6853 = vmatpush1.msra.mxu0 0.0
        %6854 = vmatprep.subr.mxu0 0.0
        %6855 = vmatpush1.msra.mxu0 0.0
        %6856 = vmatprep.subr.mxu0 0.0
        %6857 = vmatpush1.msra.mxu0 0.0
        %6858 = vmatprep.subr.mxu0 0.0
        %6859 = vmatpush1.msra.mxu0 0.0
        %6860 = vmatprep.subr.mxu0 0.0
        %6861 = vmatpush1.msra.mxu0 0.0
        %6862 = vmatprep.subr.mxu0 0.0
        %6863 = vmatpush1.msra.mxu0 0.0
        %6864 = vmatprep.subr.mxu0 0.0
        %6865 = vmatpush1.msra.mxu0 0.0
        %6866 = vmatprep.subr.mxu0 0.0
        %6867 = vmatpush1.msra.mxu0 0.0
        %6868 = vmatprep.mubr.f32.mxu0 0.0
        %6869 = vmatmul.mubr.f32.gmra.mrb[0].mxu0 %v5157
        %v6870 = vpop.f32.mrb[0].mxu0
        %v6871 = vadd.f32 0.0, %v6870
        %v6872 = vpop.f32.mrb[0].mxu0
        %v6873 = vadd.f32 0.0, %v6872
        %6874 = vmatprep.mubr.f32.mxu0 0.0
        %6875 = vmatmul.mubr.f32.gmra.mrb[0].mxu0 %v5160
        %v6876 = vpop.f32.mrb[0].mxu0
        %v6877 = vadd.f32 0.0, %v6876
        %v6878 = vpop.f32.mrb[0].mxu0
        %v6879 = vadd.f32 0.0, %v6878
        %6880 = vmatprep.mubr.f32.mxu0 0.0
        %6881 = vmatmul.mubr.f32.gmra.mrb[0].mxu0 %v5163
        %v6882 = vpop.f32.mrb[0].mxu0
        %v6883 = vadd.f32 0.0, %v6882
        %v6884 = vpop.f32.mrb[0].mxu0
        %v6885 = vadd.f32 0.0, %v6884
        %6886 = vmatprep.mubr.f32.mxu0 0.0
        %6887 = vmatmul.mubr.f32.gmra.mrb[0].mxu0 %v5166
        %v6888 = vpop.f32.mrb[0].mxu0
        %v6889 = vadd.f32 0.0, %v6888
        %v6890 = vpop.f32.mrb[0].mxu0
        %v6891 = vadd.f32 0.0, %v6890
        %6892 = vmatprep.mubr.f32.mxu0 0.0
        %6893 = vmatmul.mubr.f32.gmra.mrb[0].mxu0 %v5169
        %v6894 = vpop.f32.mrb[0].mxu0
        %v6895 = vadd.f32 0.0, %v6894
        %v6896 = vpop.f32.mrb[0].mxu0
        %v6897 = vadd.f32 0.0, %v6896
        %6898 = vmatprep.mubr.f32.mxu0 0.0
        %6899 = vmatmul.mubr.f32.gmra.mrb[0].mxu0 %v5172
        %v6900 = vpop.f32.mrb[0].mxu0
        %v6901 = vadd.f32 0.0, %v6900
        %v6902 = vpop.f32.mrb[0].mxu0
        %v6903 = vadd.f32 0.0, %v6902
        %6904 = vmatprep.mubr.f32.mxu0 0.0
        %6905 = vmatmul.mubr.f32.gmra.mrb[0].mxu0 %v5175
        %v6906 = vpop.f32.mrb[0].mxu0
        %v6907 = vadd.f32 0.0, %v6906
        %v6908 = vpop.f32.mrb[0].mxu0
        %v6909 = vadd.f32 0.0, %v6908
        %6910 = vmatprep.mubr.f32.mxu0 0.0
        %6911 = vmatmul.mubr.f32.gmra.mrb[0].mxu0 %v5178
        %v6912 = vpop.f32.mrb[0].mxu0
        %v6913 = vadd.f32 0.0, %v6912
        %v6914 = vpop.f32.mrb[0].mxu0
        %v6915 = vadd.f32 0.0, %v6914
        %6916 = vmatprep.mubr.f32.mxu0 0.0
        %6917 = vmatmul.mubr.f32.gmra.mrb[0].mxu0 %v5181
        %v6918 = vpop.f32.mrb[0].mxu0
        %v6919 = vadd.f32 0.0, %v6918
        %v6920 = vpop.f32.mrb[0].mxu0
        %v6921 = vadd.f32 0.0, %v6920
        %6922 = vmatprep.mubr.f32.mxu0 0.0
        %6923 = vmatmul.mubr.f32.gmra.mrb[0].mxu0 %v5184
        %v6924 = vpop.f32.mrb[0].mxu0
        %v6925 = vadd.f32 0.0, %v6924
        %v6926 = vpop.f32.mrb[0].mxu0
        %v6927 = vadd.f32 0.0, %v6926
        %6928 = vmatprep.mubr.f32.mxu0 0.0
        %6929 = vmatmul.mubr.f32.gmra.mrb[0].mxu0 %v5187
        %v6930 = vpop.f32.mrb[0].mxu0
        %v6931 = vadd.f32 0.0, %v6930
        %v6932 = vpop.f32.mrb[0].mxu0
        %v6933 = vadd.f32 0.0, %v6932
        %6934 = vmatprep.mubr.f32.mxu0 0.0
        %6935 = vmatmul.mubr.f32.gmra.mrb[0].mxu0 %v5190
        %v6936 = vpop.f32.mrb[0].mxu0
        %v6937 = vadd.f32 0.0, %v6936
        %v6938 = vpop.f32.mrb[0].mxu0
        %v6939 = vadd.f32 0.0, %v6938
        %6940 = vmatprep.mubr.f32.mxu0 0.0
        %6941 = vmatmul.mubr.f32.gmra.mrb[0].mxu0 %v5193
        %v6942 = vpop.f32.mrb[0].mxu0
        %v6943 = vadd.f32 0.0, %v6942
        %v6944 = vpop.f32.mrb[0].mxu0
        %v6945 = vadd.f32 0.0, %v6944
        %6946 = vmatprep.mubr.f32.mxu0 0.0
        %6947 = vmatmul.mubr.f32.gmra.mrb[0].mxu0 %v5196
        %v6948 = vpop.f32.mrb[0].mxu0
        %v6949 = vadd.f32 0.0, %v6948
        %v6950 = vpop.f32.mrb[0].mxu0
        %v6951 = vadd.f32 0.0, %v6950
        %6952 = vmatprep.mubr.f32.mxu0 0.0
        %6953 = vmatmul.mubr.f32.gmra.mrb[0].mxu0 %v5199
        %v6954 = vpop.f32.mrb[0].mxu0
        %v6955 = vadd.f32 0.0, %v6954
        %v6956 = vpop.f32.mrb[0].mxu0
        %v6957 = vadd.f32 0.0, %v6956
        %6958 = vmatprep.mubr.f32.mxu0 0.0
        %6959 = vmatmul.mubr.f32.gmra.mrb[0].mxu0 %v5202
        %v6960 = vpop.f32.mrb[0].mxu0
        %v6961 = vadd.f32 0.0, %v6960
        %v6962 = vpop.f32.mrb[0].mxu0
        %v6963 = vadd.f32 0.0, %v6962
        %6964 = vdwg.mxu0
        %v6965 = vmul.f32 %v4687, %v6871
        %v6966 = vmul.f32 %v4689, %v6873
        %v6967 = vmul.f32 %v4693, %v6877
        %v6968 = vmul.f32 %v4695, %v6879
        %v6969 = vmul.f32 %v4699, %v6883
        %v6970 = vmul.f32 %v4701, %v6885
        %v6971 = vmul.f32 %v4705, %v6889
        %v6972 = vmul.f32 %v4707, %v6891
        %v6973 = vmul.f32 %v4711, %v6895
        %v6974 = vmul.f32 %v4713, %v6897
        %v6975 = vmul.f32 %v4717, %v6901
        %v6976 = vmul.f32 %v4719, %v6903
        %v6977 = vmul.f32 %v4723, %v6907
        %v6978 = vmul.f32 %v4725, %v6909
        %v6979 = vmul.f32 %v4729, %v6913
        %v6980 = vmul.f32 %v4731, %v6915
        %v6981 = vmul.f32 %v4735, %v6919
        %v6982 = vmul.f32 %v4737, %v6921
        %v6983 = vmul.f32 %v4741, %v6925
        %v6984 = vmul.f32 %v4743, %v6927
        %v6985 = vmul.f32 %v4747, %v6931
        %v6986 = vmul.f32 %v4749, %v6933
        %v6987 = vmul.f32 %v4753, %v6937
        %v6988 = vmul.f32 %v4755, %v6939
        %v6989 = vmul.f32 %v4759, %v6943
        %v6990 = vmul.f32 %v4761, %v6945
        %v6991 = vmul.f32 %v4765, %v6949
        %v6992 = vmul.f32 %v4767, %v6951
        %v6993 = vmul.f32 %v4771, %v6955
        %v6994 = vmul.f32 %v4773, %v6957
        %v6995 = vmul.f32 %v4777, %v6961
        %v6996 = vmul.f32 %v4779, %v6963
        %v6997 = vadd.f32 %v6772, %v6965
        %v6998 = vadd.f32 %v6773, %v6966
        %v6999 = vadd.f32 %v6774, %v6967
        %v7000 = vadd.f32 %v6775, %v6968
        %v7001 = vadd.f32 %v6776, %v6969
        %v7002 = vadd.f32 %v6777, %v6970
        %v7003 = vadd.f32 %v6778, %v6971
        %v7004 = vadd.f32 %v6779, %v6972
        %v7005 = vadd.f32 %v6780, %v6973
        %v7006 = vadd.f32 %v6781, %v6974
        %v7007 = vadd.f32 %v6782, %v6975
        %v7008 = vadd.f32 %v6783, %v6976
        %v7009 = vadd.f32 %v6784, %v6977
        %v7010 = vadd.f32 %v6785, %v6978
        %v7011 = vadd.f32 %v6786, %v6979
        %v7012 = vadd.f32 %v6787, %v6980
        %v7013 = vadd.f32 %v6788, %v6981
        %v7014 = vadd.f32 %v6789, %v6982
        %v7015 = vadd.f32 %v6790, %v6983
        %v7016 = vadd.f32 %v6791, %v6984
        %v7017 = vadd.f32 %v6792, %v6985
        %v7018 = vadd.f32 %v6793, %v6986
        %v7019 = vadd.f32 %v6794, %v6987
        %v7020 = vadd.f32 %v6795, %v6988
        %v7021 = vadd.f32 %v6796, %v6989
        %v7022 = vadd.f32 %v6797, %v6990
        %v7023 = vadd.f32 %v6798, %v6991
        %v7024 = vadd.f32 %v6799, %v6992
        %v7025 = vadd.f32 %v6800, %v6993
        %v7026 = vadd.f32 %v6801, %v6994
        %v7027 = vadd.f32 %v6802, %v6995
        %v7028 = vadd.f32 %v6803, %v6996
        %v7029 = vld [vmem:[%s8] sm:$0x3]
        %v7031 = vlaneseq
        %v7032 = vshrl.u32 %v7031, 7
        %v7033 = vsub.s32 0, %v7032
        %v7034 = vrot.slane %v7029, %v7033
        %v7035 = vlaneseq
        %v7036 = vshrl.u32 %v7035, 7
        %v7037 = vsub.s32 1, %v7036
        %v7038 = vrot.slane %v7029, %v7037
        %v7041 = vmul.f32 %v3384, %v7034
        %v7042 = vmul.f32 %v3385, %v7038
        %v7043 = vmul.f32 %v3388, %v7034
        %v7044 = vmul.f32 %v3389, %v7038
        %v7045 = vmul.f32 %v3392, %v7034
        %v7046 = vmul.f32 %v3393, %v7038
        %v7047 = vmul.f32 %v3396, %v7034
        %v7048 = vmul.f32 %v3397, %v7038
        %v7049 = vmul.f32 %v3400, %v7034
        %v7050 = vmul.f32 %v3401, %v7038
        %v7051 = vmul.f32 %v3404, %v7034
        %v7052 = vmul.f32 %v3405, %v7038
        %v7053 = vmul.f32 %v3408, %v7034
        %v7054 = vmul.f32 %v3409, %v7038
        %v7055 = vmul.f32 %v3412, %v7034
        %v7056 = vmul.f32 %v3413, %v7038
        %v7057 = vmul.f32 %v3416, %v7034
        %v7058 = vmul.f32 %v3417, %v7038
        %v7059 = vmul.f32 %v3420, %v7034
        %v7060 = vmul.f32 %v3421, %v7038
        %v7061 = vmul.f32 %v3424, %v7034
        %v7062 = vmul.f32 %v3425, %v7038
        %v7063 = vmul.f32 %v3428, %v7034
        %v7064 = vmul.f32 %v3429, %v7038
        %v7065 = vmul.f32 %v3432, %v7034
        %v7066 = vmul.f32 %v3433, %v7038
        %v7067 = vmul.f32 %v3436, %v7034
        %v7068 = vmul.f32 %v3437, %v7038
        %v7069 = vmul.f32 %v3440, %v7034
        %v7070 = vmul.f32 %v3441, %v7038
        %v7071 = vmul.f32 %v3444, %v7034
        %v7072 = vmul.f32 %v3445, %v7038
        %v7073 = vadd.f32 %v6997, %v7041
        %v7074 = vadd.f32 %v6998, %v7042
        %v7075 = vadd.f32 %v6999, %v7043
        %v7076 = vadd.f32 %v7000, %v7044
        %v7077 = vadd.f32 %v7001, %v7045
        %v7078 = vadd.f32 %v7002, %v7046
        %v7079 = vadd.f32 %v7003, %v7047
        %v7080 = vadd.f32 %v7004, %v7048
        %v7081 = vadd.f32 %v7005, %v7049
        %v7082 = vadd.f32 %v7006, %v7050
        %v7083 = vadd.f32 %v7007, %v7051
        %v7084 = vadd.f32 %v7008, %v7052
        %v7085 = vadd.f32 %v7009, %v7053
        %v7086 = vadd.f32 %v7010, %v7054
        %v7087 = vadd.f32 %v7011, %v7055
        %v7088 = vadd.f32 %v7012, %v7056
        %v7089 = vadd.f32 %v7013, %v7057
        %v7090 = vadd.f32 %v7014, %v7058
        %v7091 = vadd.f32 %v7015, %v7059
        %v7092 = vadd.f32 %v7016, %v7060
        %v7093 = vadd.f32 %v7017, %v7061
        %v7094 = vadd.f32 %v7018, %v7062
        %v7095 = vadd.f32 %v7019, %v7063
        %v7096 = vadd.f32 %v7020, %v7064
        %v7097 = vadd.f32 %v7021, %v7065
        %v7098 = vadd.f32 %v7022, %v7066
        %v7099 = vadd.f32 %v7023, %v7067
        %v7100 = vadd.f32 %v7024, %v7068
        %v7101 = vadd.f32 %v7025, %v7069
        %v7102 = vadd.f32 %v7026, %v7070
        %v7103 = vadd.f32 %v7027, %v7071
        %v7104 = vadd.f32 %v7028, %v7072
        %v7105 = vlaneseq
        %v7106 = vshrl.u32 %v7105, 7
        %v7107 = vsub.s32 7, %v7106
        %v7108 = vrot.slane %v4777, %v7107
        %v7109 = vlaneseq
        %v7110 = vshrl.u32 %v7109, 7
        %v7111 = vsub.s32 7, %v7110
        %v7112 = vrot.slane %v4779, %v7111
        %v7113 = vmul.f32 %v7108, %v6768
        %v7114 = vmul.f32 %v7112, %v6769
        %v7115 = vmul.f32 %v7108, %v6770
        %v7116 = vmul.f32 %v7112, %v6771
        %v7117 = vmul.f32 %v3384, %v4964
        %v7118 = vmul.f32 %v3385, %v4966
        %v7119 = vmul.f32 %v3388, %v4970
        %v7120 = vmul.f32 %v3389, %v4972
        %v7121 = vmul.f32 %v3392, %v4976
        %v7122 = vmul.f32 %v3393, %v4978
        %v7123 = vmul.f32 %v3396, %v4982
        %v7124 = vmul.f32 %v3397, %v4984
        %v7125 = vmul.f32 %v3400, %v4988
        %v7126 = vmul.f32 %v3401, %v4990
        %v7127 = vmul.f32 %v3404, %v4994
        %v7128 = vmul.f32 %v3405, %v4996
        %v7129 = vmul.f32 %v3408, %v5000
        %v7130 = vmul.f32 %v3409, %v5002
        %v7131 = vmul.f32 %v3412, %v5006
        %v7132 = vmul.f32 %v3413, %v5008
        %v7133 = vmul.f32 %v3416, %v5012
        %v7134 = vmul.f32 %v3417, %v5014
        %v7135 = vmul.f32 %v3420, %v5018
        %v7136 = vmul.f32 %v3421, %v5020
        %v7137 = vmul.f32 %v3424, %v5024
        %v7138 = vmul.f32 %v3425, %v5026
        %v7139 = vmul.f32 %v3428, %v5030
        %v7140 = vmul.f32 %v3429, %v5032
        %v7141 = vmul.f32 %v3432, %v5036
        %v7142 = vmul.f32 %v3433, %v5038
        %v7143 = vmul.f32 %v3436, %v5042
        %v7144 = vmul.f32 %v3437, %v5044
        %v7145 = vmul.f32 %v3440, %v5048
        %v7146 = vmul.f32 %v3441, %v5050
        %v7147 = vmul.f32 %v3444, %v5054
        %v7148 = vmul.f32 %v3445, %v5056
        %7149 = vxpose.xlu0.b32.start [1/16] %v3386, 128
        %7150 = vxpose.xlu0.b32.cont [2/16] %v3390, 128
        %7151 = vxpose.xlu0.b32.cont [3/16] %v3394, 128
        %7152 = vxpose.xlu0.b32.cont [4/16] %v3398, 128
        %7153 = vxpose.xlu0.b32.cont [5/16] %v3402, 128
        %7154 = vxpose.xlu0.b32.cont [6/16] %v3406, 128
        %7155 = vxpose.xlu0.b32.cont [7/16] %v3410, 128
        %7156 = vxpose.xlu0.b32.cont [8/16] %v3414, 128
        %7157 = vxpose.xlu0.b32.cont [9/16] %v3418, 128
        %7158 = vxpose.xlu0.b32.cont [10/16] %v3422, 128
        %7159 = vxpose.xlu0.b32.cont [11/16] %v3426, 128
        %7160 = vxpose.xlu0.b32.cont [12/16] %v3430, 128
        %7161 = vxpose.xlu0.b32.cont [13/16] %v3434, 128
        %7162 = vxpose.xlu0.b32.cont [14/16] %v3438, 128
        %7163 = vxpose.xlu0.b32.cont [15/16] %v3442, 128
        %7164 = vxpose.xlu0.b32.end [16/16] %v3446, 128
        %v7165 = vpop.trf.xlu0
        %v7166 = vpop.trf.xlu0
        %v7167 = vpop.trf.xlu0
        %v7168 = vpop.trf.xlu0
        %v7169 = vpop.trf.xlu0
        %v7170 = vpop.trf.xlu0
        %v7171 = vpop.trf.xlu0
        %v7172 = vpop.trf.xlu0
        %v7173 = vpop.trf.xlu0
        %v7174 = vpop.trf.xlu0
        %v7175 = vpop.trf.xlu0
        %v7176 = vpop.trf.xlu0
        %v7177 = vpop.trf.xlu0
        %v7178 = vpop.trf.xlu0
        %v7179 = vpop.trf.xlu0
        %v7180 = vpop.trf.xlu0
        %7181 = vmatprep.subr.mxu0 %v7118
        %7182 = vmatpush1.msra.mxu0 %v7117
        %7183 = vmatprep.subr.mxu0 %v7120
        %7184 = vmatpush1.msra.mxu0 %v7119
        %7185 = vmatprep.subr.mxu0 %v7122
        %7186 = vmatpush1.msra.mxu0 %v7121
        %7187 = vmatprep.subr.mxu0 %v7124
        %7188 = vmatpush1.msra.mxu0 %v7123
        %7189 = vmatprep.subr.mxu0 %v7126
        %7190 = vmatpush1.msra.mxu0 %v7125
        %7191 = vmatprep.subr.mxu0 %v7128
        %7192 = vmatpush1.msra.mxu0 %v7127
        %7193 = vmatprep.subr.mxu0 %v7130
        %7194 = vmatpush1.msra.mxu0 %v7129
        %7195 = vmatprep.subr.mxu0 %v7132
        %7196 = vmatpush1.msra.mxu0 %v7131
        %7197 = vmatprep.subr.mxu0 %v7134
        %7198 = vmatpush1.msra.mxu0 %v7133
        %7199 = vmatprep.subr.mxu0 %v7136
        %7200 = vmatpush1.msra.mxu0 %v7135
        %7201 = vmatprep.subr.mxu0 %v7138
        %7202 = vmatpush1.msra.mxu0 %v7137
        %7203 = vmatprep.subr.mxu0 %v7140
        %7204 = vmatpush1.msra.mxu0 %v7139
        %7205 = vmatprep.subr.mxu0 %v7142
        %7206 = vmatpush1.msra.mxu0 %v7141
        %7207 = vmatprep.subr.mxu0 %v7144
        %7208 = vmatpush1.msra.mxu0 %v7143
        %7209 = vmatprep.subr.mxu0 %v7146
        %7210 = vmatpush1.msra.mxu0 %v7145
        %7211 = vmatprep.subr.mxu0 %v7148
        %7212 = vmatpush1.msra.mxu0 %v7147
        %7213 = vmatprep.subr.mxu0 0.0
        %7214 = vmatpush1.msra.mxu0 0.0
        %7215 = vmatprep.subr.mxu0 0.0
        %7216 = vmatpush1.msra.mxu0 0.0
        %7217 = vmatprep.subr.mxu0 0.0
        %7218 = vmatpush1.msra.mxu0 0.0
        %7219 = vmatprep.subr.mxu0 0.0
        %7220 = vmatpush1.msra.mxu0 0.0
        %7221 = vmatprep.subr.mxu0 0.0
        %7222 = vmatpush1.msra.mxu0 0.0
        %7223 = vmatprep.subr.mxu0 0.0
        %7224 = vmatpush1.msra.mxu0 0.0
        %7225 = vmatprep.subr.mxu0 0.0
        %7226 = vmatpush1.msra.mxu0 0.0
        %7227 = vmatprep.subr.mxu0 0.0
        %7228 = vmatpush1.msra.mxu0 0.0
        %7229 = vmatprep.subr.mxu0 0.0
        %7230 = vmatpush1.msra.mxu0 0.0
        %7231 = vmatprep.subr.mxu0 0.0
        %7232 = vmatpush1.msra.mxu0 0.0
        %7233 = vmatprep.subr.mxu0 0.0
        %7234 = vmatpush1.msra.mxu0 0.0
        %7235 = vmatprep.subr.mxu0 0.0
        %7236 = vmatpush1.msra.mxu0 0.0
        %7237 = vmatprep.subr.mxu0 0.0
        %7238 = vmatpush1.msra.mxu0 0.0
        %7239 = vmatprep.subr.mxu0 0.0
        %7240 = vmatpush1.msra.mxu0 0.0
        %7241 = vmatprep.subr.mxu0 0.0
        %7242 = vmatpush1.msra.mxu0 0.0
        %7243 = vmatprep.subr.mxu0 0.0
        %7244 = vmatpush1.msra.mxu0 0.0
        %7245 = vmatprep.mubr.f32.mxu0 0.0
        %7246 = vmatmul.mubr.f32.gmra.mrb[0].mxu0 %v7165
        %v7247 = vpop.f32.mrb[0].mxu0
        %v7248 = vadd.f32 0.0, %v7247
        %v7249 = vpop.f32.mrb[0].mxu0
        %v7250 = vadd.f32 0.0, %v7249
        %7251 = vmatprep.mubr.f32.mxu0 0.0
        %7252 = vmatmul.mubr.f32.gmra.mrb[0].mxu0 %v7166
        %v7253 = vpop.f32.mrb[0].mxu0
        %v7254 = vadd.f32 0.0, %v7253
        %v7255 = vpop.f32.mrb[0].mxu0
        %v7256 = vadd.f32 0.0, %v7255
        %7257 = vdwg.mxu0
        %v7258 = vadd.f32 %v7113, %v7248
        %v7259 = vadd.f32 %v7114, %v7250
        %v7260 = vadd.f32 %v7115, %v7254
        %v7261 = vadd.f32 %v7116, %v7256
        %7262 = vst [vmem:[#allocation3] sm:$0xff] %v7258
        %7263 = vst [vmem:[#allocation3 + $0x8] sm:$0xff] %v7259
        %7264 = vst [vmem:[#allocation3 + $0x10] sm:$0xff] %v7260
        %7265 = vst [vmem:[#allocation3 + $0x18] sm:$0xff] %v7261
        %v7266 = vsub.f32 0.0, %v730
        %v7267 = vsub.f32 0.0, %v732
        %v7268 = vsub.f32 0.0, %v734
        %v7269 = vsub.f32 0.0, %v736
        %v7270 = vsub.f32 0.0, %v740
        %v7271 = vsub.f32 0.0, %v742
        %v7272 = vsub.f32 0.0, %v744
        %v7273 = vsub.f32 0.0, %v746
        %v7274 = vsub.f32 0.0, %v750
        %v7275 = vsub.f32 0.0, %v752
        %v7276 = vsub.f32 0.0, %v754
        %v7277 = vsub.f32 0.0, %v756
        %v7278 = vsub.f32 0.0, %v760
        %v7279 = vsub.f32 0.0, %v762
        %v7280 = vsub.f32 0.0, %v764
        %v7281 = vsub.f32 0.0, %v766
        %v7282 = vsub.f32 0.0, %v770
        %v7283 = vsub.f32 0.0, %v772
        %v7284 = vsub.f32 0.0, %v774
        %v7285 = vsub.f32 0.0, %v776
        %v7286 = vsub.f32 0.0, %v780
        %v7287 = vsub.f32 0.0, %v782
        %v7288 = vsub.f32 0.0, %v784
        %v7289 = vsub.f32 0.0, %v786
        %v7290 = vsub.f32 0.0, %v790
        %v7291 = vsub.f32 0.0, %v792
        %v7292 = vsub.f32 0.0, %v794
        %v7293 = vsub.f32 0.0, %v796
        %v7294 = vsub.f32 0.0, %v800
        %v7295 = vsub.f32 0.0, %v802
        %v7296 = vsub.f32 0.0, %v804
        %v7297 = vsub.f32 0.0, %v806
        %v7298 = vmul.f32 %v7266, 1.442695
        %v7299 = vpow.pop %v7298
        %v7300 = vmul.f32 %v7267, 1.442695
        %v7301 = vpow.pop %v7300
        %v7302 = vmul.f32 %v7268, 1.442695
        %v7303 = vpow.pop %v7302
        %v7304 = vmul.f32 %v7269, 1.442695
        %v7305 = vpow.pop %v7304
        %v7306 = vmul.f32 %v7270, 1.442695
        %v7307 = vpow.pop %v7306
        %v7308 = vmul.f32 %v7271, 1.442695
        %v7309 = vpow.pop %v7308
        %v7310 = vmul.f32 %v7272, 1.442695
        %v7311 = vpow.pop %v7310
        %v7312 = vmul.f32 %v7273, 1.442695
        %v7313 = vpow.pop %v7312
        %v7314 = vmul.f32 %v7274, 1.442695
        %v7315 = vpow.pop %v7314
        %v7316 = vmul.f32 %v7275, 1.442695
        %v7317 = vpow.pop %v7316
        %v7318 = vmul.f32 %v7276, 1.442695
        %v7319 = vpow.pop %v7318
        %v7320 = vmul.f32 %v7277, 1.442695
        %v7321 = vpow.pop %v7320
        %v7322 = vmul.f32 %v7278, 1.442695
        %v7323 = vpow.pop %v7322
        %v7324 = vmul.f32 %v7279, 1.442695
        %v7325 = vpow.pop %v7324
        %v7326 = vmul.f32 %v7280, 1.442695
        %v7327 = vpow.pop %v7326
        %v7328 = vmul.f32 %v7281, 1.442695
        %v7329 = vpow.pop %v7328
        %v7330 = vmul.f32 %v7282, 1.442695
        %v7331 = vpow.pop %v7330
        %v7332 = vmul.f32 %v7283, 1.442695
        %v7333 = vpow.pop %v7332
        %v7334 = vmul.f32 %v7284, 1.442695
        %v7335 = vpow.pop %v7334
        %v7336 = vmul.f32 %v7285, 1.442695
        %v7337 = vpow.pop %v7336
        %v7338 = vmul.f32 %v7286, 1.442695
        %v7339 = vpow.pop %v7338
        %v7340 = vmul.f32 %v7287, 1.442695
        %v7341 = vpow.pop %v7340
        %v7342 = vmul.f32 %v7288, 1.442695
        %v7343 = vpow.pop %v7342
        %v7344 = vmul.f32 %v7289, 1.442695
        %v7345 = vpow.pop %v7344
        %v7346 = vmul.f32 %v7290, 1.442695
        %v7347 = vpow.pop %v7346
        %v7348 = vmul.f32 %v7291, 1.442695
        %v7349 = vpow.pop %v7348
        %v7350 = vmul.f32 %v7292, 1.442695
        %v7351 = vpow.pop %v7350
        %v7352 = vmul.f32 %v7293, 1.442695
        %v7353 = vpow.pop %v7352
        %v7354 = vmul.f32 %v7294, 1.442695
        %v7355 = vpow.pop %v7354
        %v7356 = vmul.f32 %v7295, 1.442695
        %v7357 = vpow.pop %v7356
        %v7358 = vmul.f32 %v7296, 1.442695
        %v7359 = vpow.pop %v7358
        %v7360 = vmul.f32 %v7297, 1.442695
        %v7361 = vpow.pop %v7360
        %v7362 = vadd.f32 %v7299, 1.0
        %v7363 = vadd.f32 %v7301, 1.0
        %v7364 = vadd.f32 %v7303, 1.0
        %v7365 = vadd.f32 %v7305, 1.0
        %v7366 = vadd.f32 %v7307, 1.0
        %v7367 = vadd.f32 %v7309, 1.0
        %v7368 = vadd.f32 %v7311, 1.0
        %v7369 = vadd.f32 %v7313, 1.0
        %v7370 = vadd.f32 %v7315, 1.0
        %v7371 = vadd.f32 %v7317, 1.0
        %v7372 = vadd.f32 %v7319, 1.0
        %v7373 = vadd.f32 %v7321, 1.0
        %v7374 = vadd.f32 %v7323, 1.0
        %v7375 = vadd.f32 %v7325, 1.0
        %v7376 = vadd.f32 %v7327, 1.0
        %v7377 = vadd.f32 %v7329, 1.0
        %v7378 = vadd.f32 %v7331, 1.0
        %v7379 = vadd.f32 %v7333, 1.0
        %v7380 = vadd.f32 %v7335, 1.0
        %v7381 = vadd.f32 %v7337, 1.0
        %v7382 = vadd.f32 %v7339, 1.0
        %v7383 = vadd.f32 %v7341, 1.0
        %v7384 = vadd.f32 %v7343, 1.0
        %v7385 = vadd.f32 %v7345, 1.0
        %v7386 = vadd.f32 %v7347, 1.0
        %v7387 = vadd.f32 %v7349, 1.0
        %v7388 = vadd.f32 %v7351, 1.0
        %v7389 = vadd.f32 %v7353, 1.0
        %v7390 = vadd.f32 %v7355, 1.0
        %v7391 = vadd.f32 %v7357, 1.0
        %v7392 = vadd.f32 %v7359, 1.0
        %v7393 = vadd.f32 %v7361, 1.0
        %v7394 = vrcp.pop %v7362
        %v7395 = vmul.f32 1.0, %v7394
        %v7396 = vrcp.pop %v7363
        %v7397 = vmul.f32 1.0, %v7396
        %v7398 = vrcp.pop %v7364
        %v7399 = vmul.f32 1.0, %v7398
        %v7400 = vrcp.pop %v7365
        %v7401 = vmul.f32 1.0, %v7400
        %v7402 = vrcp.pop %v7366
        %v7403 = vmul.f32 1.0, %v7402
        %v7404 = vrcp.pop %v7367
        %v7405 = vmul.f32 1.0, %v7404
        %v7406 = vrcp.pop %v7368
        %v7407 = vmul.f32 1.0, %v7406
        %v7408 = vrcp.pop %v7369
        %v7409 = vmul.f32 1.0, %v7408
        %v7410 = vrcp.pop %v7370
        %v7411 = vmul.f32 1.0, %v7410
        %v7412 = vrcp.pop %v7371
        %v7413 = vmul.f32 1.0, %v7412
        %v7414 = vrcp.pop %v7372
        %v7415 = vmul.f32 1.0, %v7414
        %v7416 = vrcp.pop %v7373
        %v7417 = vmul.f32 1.0, %v7416
        %v7418 = vrcp.pop %v7374
        %v7419 = vmul.f32 1.0, %v7418
        %v7420 = vrcp.pop %v7375
        %v7421 = vmul.f32 1.0, %v7420
        %v7422 = vrcp.pop %v7376
        %v7423 = vmul.f32 1.0, %v7422
        %v7424 = vrcp.pop %v7377
        %v7425 = vmul.f32 1.0, %v7424
        %v7426 = vrcp.pop %v7378
        %v7427 = vmul.f32 1.0, %v7426
        %v7428 = vrcp.pop %v7379
        %v7429 = vmul.f32 1.0, %v7428
        %v7430 = vrcp.pop %v7380
        %v7431 = vmul.f32 1.0, %v7430
        %v7432 = vrcp.pop %v7381
        %v7433 = vmul.f32 1.0, %v7432
        %v7434 = vrcp.pop %v7382
        %v7435 = vmul.f32 1.0, %v7434
        %v7436 = vrcp.pop %v7383
        %v7437 = vmul.f32 1.0, %v7436
        %v7438 = vrcp.pop %v7384
        %v7439 = vmul.f32 1.0, %v7438
        %v7440 = vrcp.pop %v7385
        %v7441 = vmul.f32 1.0, %v7440
        %v7442 = vrcp.pop %v7386
        %v7443 = vmul.f32 1.0, %v7442
        %v7444 = vrcp.pop %v7387
        %v7445 = vmul.f32 1.0, %v7444
        %v7446 = vrcp.pop %v7388
        %v7447 = vmul.f32 1.0, %v7446
        %v7448 = vrcp.pop %v7389
        %v7449 = vmul.f32 1.0, %v7448
        %v7450 = vrcp.pop %v7390
        %v7451 = vmul.f32 1.0, %v7450
        %v7452 = vrcp.pop %v7391
        %v7453 = vmul.f32 1.0, %v7452
        %v7454 = vrcp.pop %v7392
        %v7455 = vmul.f32 1.0, %v7454
        %v7456 = vrcp.pop %v7393
        %v7457 = vmul.f32 1.0, %v7456
        %v7458 = vmul.f32 %v730, %v7395
        %v7459 = vmul.f32 %v732, %v7397
        %v7460 = vmul.f32 %v734, %v7399
        %v7461 = vmul.f32 %v736, %v7401
        %v7462 = vmul.f32 %v740, %v7403
        %v7463 = vmul.f32 %v742, %v7405
        %v7464 = vmul.f32 %v744, %v7407
        %v7465 = vmul.f32 %v746, %v7409
        %v7466 = vmul.f32 %v750, %v7411
        %v7467 = vmul.f32 %v752, %v7413
        %v7468 = vmul.f32 %v754, %v7415
        %v7469 = vmul.f32 %v756, %v7417
        %v7470 = vmul.f32 %v760, %v7419
        %v7471 = vmul.f32 %v762, %v7421
        %v7472 = vmul.f32 %v764, %v7423
        %v7473 = vmul.f32 %v766, %v7425
        %v7474 = vmul.f32 %v770, %v7427
        %v7475 = vmul.f32 %v772, %v7429
        %v7476 = vmul.f32 %v774, %v7431
        %v7477 = vmul.f32 %v776, %v7433
        %v7478 = vmul.f32 %v780, %v7435
        %v7479 = vmul.f32 %v782, %v7437
        %v7480 = vmul.f32 %v784, %v7439
        %v7481 = vmul.f32 %v786, %v7441
        %v7482 = vmul.f32 %v790, %v7443
        %v7483 = vmul.f32 %v792, %v7445
        %v7484 = vmul.f32 %v794, %v7447
        %v7485 = vmul.f32 %v796, %v7449
        %v7486 = vmul.f32 %v800, %v7451
        %v7487 = vmul.f32 %v802, %v7453
        %v7488 = vmul.f32 %v804, %v7455
        %v7489 = vmul.f32 %v806, %v7457
        %v7490 = vmul.f32 %v7073, %v7458
        %v7491 = vmul.f32 %v7074, %v7459
        %v7492 = vmul.f32 %v7075, %v7460
        %v7493 = vmul.f32 %v7076, %v7461
        %v7494 = vmul.f32 %v7077, %v7462
        %v7495 = vmul.f32 %v7078, %v7463
        %v7496 = vmul.f32 %v7079, %v7464
        %v7497 = vmul.f32 %v7080, %v7465
        %v7498 = vmul.f32 %v7081, %v7466
        %v7499 = vmul.f32 %v7082, %v7467
        %v7500 = vmul.f32 %v7083, %v7468
        %v7501 = vmul.f32 %v7084, %v7469
        %v7502 = vmul.f32 %v7085, %v7470
        %v7503 = vmul.f32 %v7086, %v7471
        %v7504 = vmul.f32 %v7087, %v7472
        %v7505 = vmul.f32 %v7088, %v7473
        %v7506 = vmul.f32 %v7089, %v7474
        %v7507 = vmul.f32 %v7090, %v7475
        %v7508 = vmul.f32 %v7091, %v7476
        %v7509 = vmul.f32 %v7092, %v7477
        %v7510 = vmul.f32 %v7093, %v7478
        %v7511 = vmul.f32 %v7094, %v7479
        %v7512 = vmul.f32 %v7095, %v7480
        %v7513 = vmul.f32 %v7096, %v7481
        %v7514 = vmul.f32 %v7097, %v7482
        %v7515 = vmul.f32 %v7098, %v7483
        %v7516 = vmul.f32 %v7099, %v7484
        %v7517 = vmul.f32 %v7100, %v7485
        %v7518 = vmul.f32 %v7101, %v7486
        %v7519 = vmul.f32 %v7102, %v7487
        %v7520 = vmul.f32 %v7103, %v7488
        %v7521 = vmul.f32 %v7104, %v7489
        %v7522 = vmul.f32 %v7490, %v7490
        %v7523 = vmul.f32 %v7491, %v7491
        %v7524 = vmul.f32 %v7492, %v7492
        %v7525 = vmul.f32 %v7493, %v7493
        %v7526 = vmul.f32 %v7494, %v7494
        %v7527 = vmul.f32 %v7495, %v7495
        %v7528 = vmul.f32 %v7496, %v7496
        %v7529 = vmul.f32 %v7497, %v7497
        %v7530 = vmul.f32 %v7498, %v7498
        %v7531 = vmul.f32 %v7499, %v7499
        %v7532 = vmul.f32 %v7500, %v7500
        %v7533 = vmul.f32 %v7501, %v7501
        %v7534 = vmul.f32 %v7502, %v7502
        %v7535 = vmul.f32 %v7503, %v7503
        %v7536 = vmul.f32 %v7504, %v7504
        %v7537 = vmul.f32 %v7505, %v7505
        %v7538 = vmul.f32 %v7506, %v7506
        %v7539 = vmul.f32 %v7507, %v7507
        %v7540 = vmul.f32 %v7508, %v7508
        %v7541 = vmul.f32 %v7509, %v7509
        %v7542 = vmul.f32 %v7510, %v7510
        %v7543 = vmul.f32 %v7511, %v7511
        %v7544 = vmul.f32 %v7512, %v7512
        %v7545 = vmul.f32 %v7513, %v7513
        %v7546 = vmul.f32 %v7514, %v7514
        %v7547 = vmul.f32 %v7515, %v7515
        %v7548 = vmul.f32 %v7516, %v7516
        %v7549 = vmul.f32 %v7517, %v7517
        %v7550 = vmul.f32 %v7518, %v7518
        %v7551 = vmul.f32 %v7519, %v7519
        %v7552 = vmul.f32 %v7520, %v7520
        %v7553 = vmul.f32 %v7521, %v7521
        %v7554 = vadd.f32 %v7522, %v7523
        %7555 = vadd.xlane.f32.xlu0 %v7554
        %v7556 = vpop.xlane.xlu0 %7555
        %v7557 = vadd.f32 %v7524, %v7525
        %7558 = vadd.xlane.f32.xlu0 %v7557
        %v7559 = vpop.xlane.xlu0 %7558
        %v7560 = vadd.f32 %v7526, %v7527
        %7561 = vadd.xlane.f32.xlu0 %v7560
        %v7562 = vpop.xlane.xlu0 %7561
        %v7563 = vadd.f32 %v7528, %v7529
        %7564 = vadd.xlane.f32.xlu0 %v7563
        %v7565 = vpop.xlane.xlu0 %7564
        %v7566 = vadd.f32 %v7530, %v7531
        %7567 = vadd.xlane.f32.xlu0 %v7566
        %v7568 = vpop.xlane.xlu0 %7567
        %v7569 = vadd.f32 %v7532, %v7533
        %7570 = vadd.xlane.f32.xlu0 %v7569
        %v7571 = vpop.xlane.xlu0 %7570
        %v7572 = vadd.f32 %v7534, %v7535
        %7573 = vadd.xlane.f32.xlu0 %v7572
        %v7574 = vpop.xlane.xlu0 %7573
        %v7575 = vadd.f32 %v7536, %v7537
        %7576 = vadd.xlane.f32.xlu0 %v7575
        %v7577 = vpop.xlane.xlu0 %7576
        %v7578 = vadd.f32 %v7538, %v7539
        %7579 = vadd.xlane.f32.xlu0 %v7578
        %v7580 = vpop.xlane.xlu0 %7579
        %v7581 = vadd.f32 %v7540, %v7541
        %7582 = vadd.xlane.f32.xlu0 %v7581
        %v7583 = vpop.xlane.xlu0 %7582
        %v7584 = vadd.f32 %v7542, %v7543
        %7585 = vadd.xlane.f32.xlu0 %v7584
        %v7586 = vpop.xlane.xlu0 %7585
        %v7587 = vadd.f32 %v7544, %v7545
        %7588 = vadd.xlane.f32.xlu0 %v7587
        %v7589 = vpop.xlane.xlu0 %7588
        %v7590 = vadd.f32 %v7546, %v7547
        %7591 = vadd.xlane.f32.xlu0 %v7590
        %v7592 = vpop.xlane.xlu0 %7591
        %v7593 = vadd.f32 %v7548, %v7549
        %7594 = vadd.xlane.f32.xlu0 %v7593
        %v7595 = vpop.xlane.xlu0 %7594
        %v7596 = vadd.f32 %v7550, %v7551
        %7597 = vadd.xlane.f32.xlu0 %v7596
        %v7598 = vpop.xlane.xlu0 %7597
        %v7599 = vadd.f32 %v7552, %v7553
        %7600 = vadd.xlane.f32.xlu0 %v7599
        %v7601 = vpop.xlane.xlu0 %7600
        %v7602 = vrcp.pop 256.0
        %v7603 = vmul.f32 %v7556, %v7602
        %v7604 = vmul.f32 %v7559, %v7602
        %v7605 = vmul.f32 %v7562, %v7602
        %v7606 = vmul.f32 %v7565, %v7602
        %v7607 = vmul.f32 %v7568, %v7602
        %v7608 = vmul.f32 %v7571, %v7602
        %v7609 = vmul.f32 %v7574, %v7602
        %v7610 = vmul.f32 %v7577, %v7602
        %v7611 = vmul.f32 %v7580, %v7602
        %v7612 = vmul.f32 %v7583, %v7602
        %v7613 = vmul.f32 %v7586, %v7602
        %v7614 = vmul.f32 %v7589, %v7602
        %v7615 = vmul.f32 %v7592, %v7602
        %v7616 = vmul.f32 %v7595, %v7602
        %v7617 = vmul.f32 %v7598, %v7602
        %v7618 = vmul.f32 %v7601, %v7602
        %v7619 = vadd.f32 %v7603, 1e-05
        %v7620 = vadd.f32 %v7604, 1e-05
        %v7621 = vadd.f32 %v7605, 1e-05
        %v7622 = vadd.f32 %v7606, 1e-05
        %v7623 = vadd.f32 %v7607, 1e-05
        %v7624 = vadd.f32 %v7608, 1e-05
        %v7625 = vadd.f32 %v7609, 1e-05
        %v7626 = vadd.f32 %v7610, 1e-05
        %v7627 = vadd.f32 %v7611, 1e-05
        %v7628 = vadd.f32 %v7612, 1e-05
        %v7629 = vadd.f32 %v7613, 1e-05
        %v7630 = vadd.f32 %v7614, 1e-05
        %v7631 = vadd.f32 %v7615, 1e-05
        %v7632 = vadd.f32 %v7616, 1e-05
        %v7633 = vadd.f32 %v7617, 1e-05
        %v7634 = vadd.f32 %v7618, 1e-05
        %v7635 = vrsqrt.pop %v7619
        %v7636 = vrsqrt.pop %v7620
        %v7637 = vrsqrt.pop %v7621
        %v7638 = vrsqrt.pop %v7622
        %v7639 = vrsqrt.pop %v7623
        %v7640 = vrsqrt.pop %v7624
        %v7641 = vrsqrt.pop %v7625
        %v7642 = vrsqrt.pop %v7626
        %v7643 = vrsqrt.pop %v7627
        %v7644 = vrsqrt.pop %v7628
        %v7645 = vrsqrt.pop %v7629
        %v7646 = vrsqrt.pop %v7630
        %v7647 = vrsqrt.pop %v7631
        %v7648 = vrsqrt.pop %v7632
        %v7649 = vrsqrt.pop %v7633
        %v7650 = vrsqrt.pop %v7634
        %v7651 = vmul.f32 %v7490, %v7635
        %v7652 = vmul.f32 %v7491, %v7635
        %v7653 = vmul.f32 %v7492, %v7636
        %v7654 = vmul.f32 %v7493, %v7636
        %v7655 = vmul.f32 %v7494, %v7637
        %v7656 = vmul.f32 %v7495, %v7637
        %v7657 = vmul.f32 %v7496, %v7638
        %v7658 = vmul.f32 %v7497, %v7638
        %v7659 = vmul.f32 %v7498, %v7639
        %v7660 = vmul.f32 %v7499, %v7639
        %v7661 = vmul.f32 %v7500, %v7640
        %v7662 = vmul.f32 %v7501, %v7640
        %v7663 = vmul.f32 %v7502, %v7641
        %v7664 = vmul.f32 %v7503, %v7641
        %v7665 = vmul.f32 %v7504, %v7642
        %v7666 = vmul.f32 %v7505, %v7642
        %v7667 = vmul.f32 %v7506, %v7643
        %v7668 = vmul.f32 %v7507, %v7643
        %v7669 = vmul.f32 %v7508, %v7644
        %v7670 = vmul.f32 %v7509, %v7644
        %v7671 = vmul.f32 %v7510, %v7645
        %v7672 = vmul.f32 %v7511, %v7645
        %v7673 = vmul.f32 %v7512, %v7646
        %v7674 = vmul.f32 %v7513, %v7646
        %v7675 = vmul.f32 %v7514, %v7647
        %v7676 = vmul.f32 %v7515, %v7647
        %v7677 = vmul.f32 %v7516, %v7648
        %v7678 = vmul.f32 %v7517, %v7648
        %v7679 = vmul.f32 %v7518, %v7649
        %v7680 = vmul.f32 %v7519, %v7649
        %v7681 = vmul.f32 %v7520, %v7650
        %v7682 = vmul.f32 %v7521, %v7650
        %v7683 = vld [vmem:[%s9] sm:$0x3]
        %v7685 = vlaneseq
        %v7686 = vshrl.u32 %v7685, 7
        %v7687 = vsub.s32 0, %v7686
        %v7688 = vrot.slane %v7683, %v7687
        %v7689 = vlaneseq
        %v7690 = vshrl.u32 %v7689, 7
        %v7691 = vsub.s32 1, %v7690
        %v7692 = vrot.slane %v7683, %v7691
        %v7695 = vmul.f32 %v7651, %v7688
        %v7696 = vmul.f32 %v7652, %v7692
        %v7697 = vmul.f32 %v7653, %v7688
        %v7698 = vmul.f32 %v7654, %v7692
        %v7699 = vmul.f32 %v7655, %v7688
        %v7700 = vmul.f32 %v7656, %v7692
        %v7701 = vmul.f32 %v7657, %v7688
        %v7702 = vmul.f32 %v7658, %v7692
        %v7703 = vmul.f32 %v7659, %v7688
        %v7704 = vmul.f32 %v7660, %v7692
        %v7705 = vmul.f32 %v7661, %v7688
        %v7706 = vmul.f32 %v7662, %v7692
        %v7707 = vmul.f32 %v7663, %v7688
        %v7708 = vmul.f32 %v7664, %v7692
        %v7709 = vmul.f32 %v7665, %v7688
        %v7710 = vmul.f32 %v7666, %v7692
        %v7711 = vmul.f32 %v7667, %v7688
        %v7712 = vmul.f32 %v7668, %v7692
        %v7713 = vmul.f32 %v7669, %v7688
        %v7714 = vmul.f32 %v7670, %v7692
        %v7715 = vmul.f32 %v7671, %v7688
        %v7716 = vmul.f32 %v7672, %v7692
        %v7717 = vmul.f32 %v7673, %v7688
        %v7718 = vmul.f32 %v7674, %v7692
        %v7719 = vmul.f32 %v7675, %v7688
        %v7720 = vmul.f32 %v7676, %v7692
        %v7721 = vmul.f32 %v7677, %v7688
        %v7722 = vmul.f32 %v7678, %v7692
        %v7723 = vmul.f32 %v7679, %v7688
        %v7724 = vmul.f32 %v7680, %v7692
        %v7725 = vmul.f32 %v7681, %v7688
        %v7726 = vmul.f32 %v7682, %v7692
        %v7727 = vpack.c.bf16 %v7697, %v7695
        %v7728 = vpack.c.bf16 %v7698, %v7696
        %v7729 = vpack.c.bf16 %v7701, %v7699
        %v7730 = vpack.c.bf16 %v7702, %v7700
        %v7731 = vpack.c.bf16 %v7705, %v7703
        %v7732 = vpack.c.bf16 %v7706, %v7704
        %v7733 = vpack.c.bf16 %v7709, %v7707
        %v7734 = vpack.c.bf16 %v7710, %v7708
        %v7735 = vpack.c.bf16 %v7713, %v7711
        %v7736 = vpack.c.bf16 %v7714, %v7712
        %v7737 = vpack.c.bf16 %v7717, %v7715
        %v7738 = vpack.c.bf16 %v7718, %v7716
        %v7739 = vpack.c.bf16 %v7721, %v7719
        %v7740 = vpack.c.bf16 %v7722, %v7720
        %v7741 = vpack.c.bf16 %v7725, %v7723
        %v7742 = vpack.c.bf16 %v7726, %v7724
        %v7743 = vld [vmem:[#allocation16] sm:$0xf]
        %v7744 = vld [vmem:[#allocation16 + $0x4] sm:$0xf]
        %v7745 = vld [vmem:[#allocation16 + $0x8] sm:$0xf]
        %v7746 = vld [vmem:[#allocation16 + $0xc] sm:$0xf]
        %v7747 = vld [vmem:[#allocation16 + $0x10] sm:$0xf]
        %v7748 = vld [vmem:[#allocation16 + $0x14] sm:$0xf]
        %v7749 = vld [vmem:[#allocation16 + $0x18] sm:$0xf]
        %v7750 = vld [vmem:[#allocation16 + $0x1c] sm:$0xf]
        %v7751 = vld [vmem:[#allocation16 + $0x20] sm:$0xf]
        %v7752 = vld [vmem:[#allocation16 + $0x24] sm:$0xf]
        %v7753 = vld [vmem:[#allocation16 + $0x28] sm:$0xf]
        %v7754 = vld [vmem:[#allocation16 + $0x2c] sm:$0xf]
        %v7755 = vld [vmem:[#allocation16 + $0x30] sm:$0xf]
        %v7756 = vld [vmem:[#allocation16 + $0x34] sm:$0xf]
        %v7757 = vld [vmem:[#allocation16 + $0x38] sm:$0xf]
        %v7758 = vld [vmem:[#allocation16 + $0x3c] sm:$0xf]
        %v7759 = vld [vmem:[#allocation16 + $0x40] sm:$0xf]
        %v7760 = vld [vmem:[#allocation16 + $0x44] sm:$0xf]
        %v7761 = vld [vmem:[#allocation16 + $0x48] sm:$0xf]
        %v7762 = vld [vmem:[#allocation16 + $0x4c] sm:$0xf]
        %v7763 = vld [vmem:[#allocation16 + $0x50] sm:$0xf]
        %v7764 = vld [vmem:[#allocation16 + $0x54] sm:$0xf]
        %v7765 = vld [vmem:[#allocation16 + $0x58] sm:$0xf]
        %v7766 = vld [vmem:[#allocation16 + $0x5c] sm:$0xf]
        %v7767 = vld [vmem:[#allocation16 + $0x60] sm:$0xf]
        %v7768 = vld [vmem:[#allocation16 + $0x64] sm:$0xf]
        %v7769 = vld [vmem:[#allocation16 + $0x68] sm:$0xf]
        %v7770 = vld [vmem:[#allocation16 + $0x6c] sm:$0xf]
        %v7771 = vld [vmem:[#allocation16 + $0x70] sm:$0xf]
        %v7772 = vld [vmem:[#allocation16 + $0x74] sm:$0xf]
        %v7773 = vld [vmem:[#allocation16 + $0x78] sm:$0xf]
        %v7774 = vld [vmem:[#allocation16 + $0x7c] sm:$0xf]
        %v7807 = vunpack.c.l.b16 %v7743
        %v7808 = vunpack.c.l.b16 %v7744
        %v7809 = vunpack.c.l.b16 %v7745
        %v7810 = vunpack.c.l.b16 %v7746
        %v7811 = vunpack.c.l.b16 %v7747
        %v7812 = vunpack.c.l.b16 %v7748
        %v7813 = vunpack.c.l.b16 %v7749
        %v7814 = vunpack.c.l.b16 %v7750
        %v7815 = vunpack.c.l.b16 %v7751
        %v7816 = vunpack.c.l.b16 %v7752
        %v7817 = vunpack.c.l.b16 %v7753
        %v7818 = vunpack.c.l.b16 %v7754
        %v7819 = vunpack.c.l.b16 %v7755
        %v7820 = vunpack.c.l.b16 %v7756
        %v7821 = vunpack.c.l.b16 %v7757
        %v7822 = vunpack.c.l.b16 %v7758
        %v7823 = vunpack.c.l.b16 %v7759
        %v7824 = vunpack.c.l.b16 %v7760
        %v7825 = vunpack.c.l.b16 %v7761
        %v7826 = vunpack.c.l.b16 %v7762
        %v7827 = vunpack.c.l.b16 %v7763
        %v7828 = vunpack.c.l.b16 %v7764
        %v7829 = vunpack.c.l.b16 %v7765
        %v7830 = vunpack.c.l.b16 %v7766
        %v7831 = vunpack.c.l.b16 %v7767
        %v7832 = vunpack.c.l.b16 %v7768
        %v7833 = vunpack.c.l.b16 %v7769
        %v7834 = vunpack.c.l.b16 %v7770
        %v7835 = vunpack.c.l.b16 %v7771
        %v7836 = vunpack.c.l.b16 %v7772
        %v7837 = vunpack.c.l.b16 %v7773
        %v7838 = vunpack.c.l.b16 %v7774
        %v7839 = vpack.c.b16 %v7808, %v7807
        %v7840 = vpack.c.b16 %v7810, %v7809
        %v7841 = vpack.c.b16 %v7812, %v7811
        %v7842 = vpack.c.b16 %v7814, %v7813
        %v7843 = vpack.c.b16 %v7816, %v7815
        %v7844 = vpack.c.b16 %v7818, %v7817
        %v7845 = vpack.c.b16 %v7820, %v7819
        %v7846 = vpack.c.b16 %v7822, %v7821
        %v7847 = vpack.c.b16 %v7824, %v7823
        %v7848 = vpack.c.b16 %v7826, %v7825
        %v7849 = vpack.c.b16 %v7828, %v7827
        %v7850 = vpack.c.b16 %v7830, %v7829
        %v7851 = vpack.c.b16 %v7832, %v7831
        %v7852 = vpack.c.b16 %v7834, %v7833
        %v7853 = vpack.c.b16 %v7836, %v7835
        %v7854 = vpack.c.b16 %v7838, %v7837
        %7871 = vmatprep.subr.bf16.mxu0 0
        %7872 = vmatpush1.bf16.msra.mxu0 %v7839
        %7873 = vmatprep.subr.bf16.mxu0 0
        %7874 = vmatpush1.bf16.msra.mxu0 %v7840
        %7875 = vmatprep.subr.bf16.mxu0 0
        %7876 = vmatpush1.bf16.msra.mxu0 %v7841
        %7877 = vmatprep.subr.bf16.mxu0 0
        %7878 = vmatpush1.bf16.msra.mxu0 %v7842
        %7879 = vmatprep.subr.bf16.mxu0 0
        %7880 = vmatpush1.bf16.msra.mxu0 %v7843
        %7881 = vmatprep.subr.bf16.mxu0 0
        %7882 = vmatpush1.bf16.msra.mxu0 %v7844
        %7883 = vmatprep.subr.bf16.mxu0 0
        %7884 = vmatpush1.bf16.msra.mxu0 %v7845
        %7885 = vmatprep.subr.bf16.mxu0 0
        %7886 = vmatpush1.bf16.msra.mxu0 %v7846
        %7887 = vmatprep.subr.bf16.mxu0 0
        %7888 = vmatpush1.bf16.msra.mxu0 %v7847
        %7889 = vmatprep.subr.bf16.mxu0 0
        %7890 = vmatpush1.bf16.msra.mxu0 %v7848
        %7891 = vmatprep.subr.bf16.mxu0 0
        %7892 = vmatpush1.bf16.msra.mxu0 %v7849
        %7893 = vmatprep.subr.bf16.mxu0 0
        %7894 = vmatpush1.bf16.msra.mxu0 %v7850
        %7895 = vmatprep.subr.bf16.mxu0 0
        %7896 = vmatpush1.bf16.msra.mxu0 %v7851
        %7897 = vmatprep.subr.bf16.mxu0 0
        %7898 = vmatpush1.bf16.msra.mxu0 %v7852
        %7899 = vmatprep.subr.bf16.mxu0 0
        %7900 = vmatpush1.bf16.msra.mxu0 %v7853
        %7901 = vmatprep.subr.bf16.mxu0 0
        %7902 = vmatpush1.bf16.msra.mxu0 %v7854
        %7903 = vmatprep.mubr.bf16.mxu0 %v7728
        %7904 = vmatmul.mubr.bf16.gmra.mrb[0].mxu0 %v7727
        %v7905 = vpop.f32.mrb[0].mxu0
        %v7906 = vadd.f32 0.0, %v7905
        %v7907 = vpop.f32.mrb[0].mxu0
        %v7908 = vpop.f32.mrb[0].mxu0
        %v7909 = vadd.f32 0.0, %v7908
        %v7910 = vpop.f32.mrb[0].mxu0
        %7911 = vmatprep.mubr.bf16.mxu0 %v7730
        %7912 = vmatmul.mubr.bf16.gmra.mrb[0].mxu0 %v7729
        %v7913 = vpop.f32.mrb[0].mxu0
        %v7914 = vadd.f32 0.0, %v7913
        %v7915 = vpop.f32.mrb[0].mxu0
        %v7916 = vpop.f32.mrb[0].mxu0
        %v7917 = vadd.f32 0.0, %v7916
        %v7918 = vpop.f32.mrb[0].mxu0
        %7919 = vmatprep.mubr.bf16.mxu0 %v7732
        %7920 = vmatmul.mubr.bf16.gmra.mrb[0].mxu0 %v7731
        %v7921 = vpop.f32.mrb[0].mxu0
        %v7922 = vadd.f32 0.0, %v7921
        %v7923 = vpop.f32.mrb[0].mxu0
        %v7924 = vpop.f32.mrb[0].mxu0
        %v7925 = vadd.f32 0.0, %v7924
        %v7926 = vpop.f32.mrb[0].mxu0
        %7927 = vmatprep.mubr.bf16.mxu0 %v7734
        %7928 = vmatmul.mubr.bf16.gmra.mrb[0].mxu0 %v7733
        %v7929 = vpop.f32.mrb[0].mxu0
        %v7930 = vadd.f32 0.0, %v7929
        %v7931 = vpop.f32.mrb[0].mxu0
        %v7932 = vpop.f32.mrb[0].mxu0
        %v7933 = vadd.f32 0.0, %v7932
        %v7934 = vpop.f32.mrb[0].mxu0
        %7935 = vmatprep.mubr.bf16.mxu0 %v7736
        %7936 = vmatmul.mubr.bf16.gmra.mrb[0].mxu0 %v7735
        %v7937 = vpop.f32.mrb[0].mxu0
        %v7938 = vadd.f32 0.0, %v7937
        %v7939 = vpop.f32.mrb[0].mxu0
        %v7940 = vpop.f32.mrb[0].mxu0
        %v7941 = vadd.f32 0.0, %v7940
        %v7942 = vpop.f32.mrb[0].mxu0
        %7943 = vmatprep.mubr.bf16.mxu0 %v7738
        %7944 = vmatmul.mubr.bf16.gmra.mrb[0].mxu0 %v7737
        %v7945 = vpop.f32.mrb[0].mxu0
        %v7946 = vadd.f32 0.0, %v7945
        %v7947 = vpop.f32.mrb[0].mxu0
        %v7948 = vpop.f32.mrb[0].mxu0
        %v7949 = vadd.f32 0.0, %v7948
        %v7950 = vpop.f32.mrb[0].mxu0
        %7951 = vmatprep.mubr.bf16.mxu0 %v7740
        %7952 = vmatmul.mubr.bf16.gmra.mrb[0].mxu0 %v7739
        %v7953 = vpop.f32.mrb[0].mxu0
        %v7954 = vadd.f32 0.0, %v7953
        %v7955 = vpop.f32.mrb[0].mxu0
        %v7956 = vpop.f32.mrb[0].mxu0
        %v7957 = vadd.f32 0.0, %v7956
        %v7958 = vpop.f32.mrb[0].mxu0
        %7959 = vmatprep.mubr.bf16.mxu0 %v7742
        %7960 = vmatmul.mubr.bf16.gmra.mrb[0].mxu0 %v7741
        %v7961 = vpop.f32.mrb[0].mxu0
        %v7962 = vadd.f32 0.0, %v7961
        %v7963 = vpop.f32.mrb[0].mxu0
        %v7964 = vpop.f32.mrb[0].mxu0
        %v7965 = vadd.f32 0.0, %v7964
        %v7966 = vpop.f32.mrb[0].mxu0
        %7967 = vdwg.mxu0
        %v7968 = vpack.c.bf16 %v7909, %v7906
        %v7969 = vpack.c.bf16 %v7917, %v7914
        %v7970 = vpack.c.bf16 %v7925, %v7922
        %v7971 = vpack.c.bf16 %v7933, %v7930
        %v7972 = vpack.c.bf16 %v7941, %v7938
        %v7973 = vpack.c.bf16 %v7949, %v7946
        %v7974 = vpack.c.bf16 %v7957, %v7954
        %v7975 = vpack.c.bf16 %v7965, %v7962
        %v7984 = vunpack.c.l.b16 %v7968
        %v7985 = vunpack.c.h.b16 %v7968
        %v7986 = vunpack.c.l.b16 %v7969
        %v7987 = vunpack.c.h.b16 %v7969
        %v7988 = vunpack.c.l.b16 %v7970
        %v7989 = vunpack.c.h.b16 %v7970
        %v7990 = vunpack.c.l.b16 %v7971
        %v7991 = vunpack.c.h.b16 %v7971
        %v7992 = vunpack.c.l.b16 %v7972
        %v7993 = vunpack.c.h.b16 %v7972
        %v7994 = vunpack.c.l.b16 %v7973
        %v7995 = vunpack.c.h.b16 %v7973
        %v7996 = vunpack.c.l.b16 %v7974
        %v7997 = vunpack.c.h.b16 %v7974
        %v7998 = vunpack.c.l.b16 %v7975
        %v7999 = vunpack.c.h.b16 %v7975
        %v8000 = vpack.c.b16 %v7984, %v7984
        %v8001 = vpack.c.b16 %v7985, %v7985
        %v8002 = vpack.c.b16 %v7986, %v7986
        %v8003 = vpack.c.b16 %v7987, %v7987
        %v8004 = vpack.c.b16 %v7988, %v7988
        %v8005 = vpack.c.b16 %v7989, %v7989
        %v8006 = vpack.c.b16 %v7990, %v7990
        %v8007 = vpack.c.b16 %v7991, %v7991
        %v8008 = vpack.c.b16 %v7992, %v7992
        %v8009 = vpack.c.b16 %v7993, %v7993
        %v8010 = vpack.c.b16 %v7994, %v7994
        %v8011 = vpack.c.b16 %v7995, %v7995
        %v8012 = vpack.c.b16 %v7996, %v7996
        %v8013 = vpack.c.b16 %v7997, %v7997
        %v8014 = vpack.c.b16 %v7998, %v7998
        %v8015 = vpack.c.b16 %v7999, %v7999
        %8032 = vst [vmem:[%s503] sm:$0xf] %v8000
        %8033 = vst [vmem:[%s503 + $0x4] sm:$0xf] %v8001
        %8034 = vst [vmem:[%s503 + $0x8] sm:$0xf] %v8002
        %8035 = vst [vmem:[%s503 + $0xc] sm:$0xf] %v8003
        %8036 = vst [vmem:[%s503 + $0x10] sm:$0xf] %v8004
        %8037 = vst [vmem:[%s503 + $0x14] sm:$0xf] %v8005
        %8038 = vst [vmem:[%s503 + $0x18] sm:$0xf] %v8006
        %8039 = vst [vmem:[%s503 + $0x1c] sm:$0xf] %v8007
        %8040 = vst [vmem:[%s503 + $0x20] sm:$0xf] %v8008
        %8041 = vst [vmem:[%s503 + $0x24] sm:$0xf] %v8009
        %8042 = vst [vmem:[%s503 + $0x28] sm:$0xf] %v8010
        %8043 = vst [vmem:[%s503 + $0x2c] sm:$0xf] %v8011
        %8044 = vst [vmem:[%s503 + $0x30] sm:$0xf] %v8012
        %8045 = vst [vmem:[%s503 + $0x34] sm:$0xf] %v8013
        %8046 = vst [vmem:[%s503 + $0x38] sm:$0xf] %v8014
        %8047 = vst [vmem:[%s503 + $0x3c] sm:$0xf] %v8015
        %s8048 = sand.u32 %s312, 1
        %s8049 = scalar_lea.sflag [#allocation10], %s8048
        %s8050 = sand.u32 %s312, 1
        %s8051 = smul.addr %s8050, 64
        %s8052 = scalar_lea.vmem [#allocation17], %s8051
        // Predicated region
        $region93: #{tpu_custom_call.1} parent=67 // pred_check
          %p8053 = pneg %p322
        $region94: #{tpu_custom_call.1} parent=67 // pred_check_branch
          %8055 = sbr.rel (%p8053) target = $region96
        $region95: #{tpu_custom_call.1} parent=67 // pred_region
          %s8056 = smul.u32 16, %s36
          %s8058 = ssub.s32 1024, 1024
          %8059 = vsyncadd %s8049, %s8058
          %s8060 = smul.addr %s35, 32
          %s8061 = sadd.s32 %s8056, %s8060
          %s8062 = smul.addr %s8061, 64
          %s8063 = scalar_lea.hbm %s12, %s8062
          %s8064 = sshll.u32 %s8052, 4
          %s8065 = int_to_ptr.vmem [resolvable:$true] %s8064
          %8070 = dma.vmem_to_hbm [thread:$0]  %s8065, 1024, %s8063, %s8049, 64, 64, 4
        $region96: #{tpu_custom_call.1} parent=67 // pred_fallthru
          _
      $region68: #{tpu_custom_call.1} parent=5 // pred_fallthru
        _
      %p8071 = scmp.le.s32.totalorder 2, %s26
      // Predicated region
      $region97: #{tpu_custom_call.1} parent=5 // pred_check
        %p8072 = pneg %p8071
      $region98: #{tpu_custom_call.1} parent=5 // pred_check_branch
        %8074 = sbr.rel (%p8072) target = $region100
      $region99: #{tpu_custom_call.1} parent=5 // pred_region
        %s8075 = ssub.s32 %s26, 2
        // Predicated region
        $region101: #{tpu_custom_call.1} parent=99 // pred_check
          %p8076 = pneg %p328
        $region102: #{tpu_custom_call.1} parent=99 // pred_check_branch
          %8078 = sbr.rel (%p8076) target = $region104
        $region103: #{tpu_custom_call.1} parent=99 // pred_region
          %s8079 = sand.u32 %s313, 1
          %s8080 = scalar_lea.sflag [#allocation10], %s8079
          %s8081 = sand.u32 %s313, 1
          %s8082 = smul.addr %s8081, 64
          %s8083 = scalar_lea.vmem [#allocation17], %s8082
          %8084 = dma.done %s8080, 1024
        $region104: #{tpu_custom_call.1} parent=99 // pred_fallthru
          _
      $region100: #{tpu_custom_call.1} parent=5 // pred_fallthru
        _
    $region6: #{tpu_custom_call.1} parent=1 // loop_footer
      %s30 = sadd.s32 1, %s26
    $region7: #{tpu_custom_call.1} parent=1 // loop_footer_branch
      %25 = sbr.rel target = $region3
    $region8: #{tpu_custom_call.1} parent=1 // loop_exit
      _
    %8085 = vsyncpa [#allocation9], 1
    %s8086 = scalar_lea.sflag [#allocation9], 1
    %8087 = vsyncpa %s8086, 1
    %8088 = vsyncpa [#allocation12], 1
    %8089 = vsyncpa [#allocation15], 1
    %8090 = vsyncpa [#allocation10], 1
    %s8091 = scalar_lea.sflag [#allocation10], 1
    %8092 = vsyncpa %s8091, 1

</llo_original>
